<compile_context>
chip_gen: v6e
topology: v6e:2x2x1
jax: 0.10.0
libtpu: 0.0.40
codegen_flags: <defaults>
</compile_context>

<pallas_src>
import functools

import numpy as np
import jax
import jax.numpy as jnp
from jax.experimental import pallas as pl
from jax.experimental.pallas import tpu as pltpu


# --------------------------- fused conv + relu + maxpool ---------------------------

def _conv_relu_pool_kernel(x_ref, w_ref, b_ref, o_ref, *, Bt, H, W, Cout, K):
    # x_ref : (Bt, H + 2p, Wpad*Cin)   f32, zero padded, minor dim ordered (w, ci)
    # w_ref : (K, Wpad*Cin, W*Cout)    bf16 Toeplitz weights, cols ordered (w%2, w//2, co)
    # b_ref : (1, W*Cout)              f32
    # o_ref : (Bt*H//2, (W//2)*Cout)   f32, rows (b, h//2), cols (w//2, co)
    WpCin = x_ref.shape[-1]
    N = W * Cout

    acc = jnp.zeros((Bt * H, N), jnp.float32)
    for kh in range(K):                                    # K lane-dense MXU matmuls
        slab = x_ref[:, pl.ds(kh, H), :].reshape(Bt * H, WpCin)
        acc = acc + jnp.dot(slab.astype(jnp.bfloat16), w_ref[kh],
                            preferred_element_type=jnp.float32)

    acc = jnp.maximum(acc + b_ref[...], 0.0)               # bias + ReLU (f32)

    # 2x2 / stride-2 max pool, all in registers.
    half = (W // 2) * Cout
    pw = jnp.maximum(acc[:, :half], acc[:, half:])         # pool over w (even/odd halves)
    ph = pw.reshape(Bt * H // 2, 2, half)
    o_ref[...] = jnp.maximum(ph[:, 0, :], ph[:, 1, :]).astype(o_ref.dtype)  # pool over h


def conv_relu_pool(x_merged, w_toep, b_wide, *, W, Cout, K=5, pad=2, batch_tile=None):
    # x_merged: (B, H + 2*pad, (W + 2*pad)*Cin) -> (B*H//2, (W//2)*Cout)
    B, Hpad, WpCin = x_merged.shape
    H = Hpad - 2 * pad
    assert H % 2 == 0 and W % 2 == 0, "max-pool(2) needs even spatial dims"
    Hp, Wp = H // 2, W // 2
    N = W * Cout

    bt = B if batch_tile is None else batch_tile           # whole batch per grid step
    assert B % bt == 0
    kern = functools.partial(_conv_relu_pool_kernel, Bt=bt, H=H, W=W, Cout=Cout, K=K)
    return pl.pallas_call(
        kern,
        out_shape=jax.ShapeDtypeStruct((B * Hp, Wp * Cout), jnp.float32),
        grid_spec=pltpu.PrefetchScalarGridSpec(
            num_scalar_prefetch=0,
            grid=(B // bt,),
            in_specs=[
                pl.BlockSpec((bt, Hpad, WpCin), lambda i: (i, 0, 0)),
                pl.BlockSpec((K, WpCin, N), lambda i: (0, 0, 0)),
                pl.BlockSpec((1, N), lambda i: (0, 0)),
            ],
            out_specs=pl.BlockSpec((bt * Hp, Wp * Cout), lambda i: (i, 0)),
        ),
        compiler_params=pltpu.CompilerParams(
            dimension_semantics=("parallel",)),             # batch-tile axis
    )(x_merged, w_toep, b_wide)


# ----------------------------------- linear ----------------------------------------

def _linear_kernel(x_ref, w_ref, b_ref, o_ref, acc_ref):
    k = pl.program_id(1)

    @pl.when(k == 0)
    def _init():
        acc_ref[...] = jnp.zeros_like(acc_ref)

    acc_ref[...] += jnp.dot(x_ref[...].astype(jnp.bfloat16), w_ref[...],
                            preferred_element_type=jnp.float32)

    @pl.when(k == pl.num_programs(1) - 1)
    def _finalize():
        o_ref[...] = (acc_ref[...] + b_ref[...]).astype(o_ref.dtype)


def _pick_tile(dim, target):
    return target if dim % target == 0 else dim


def linear(x, w_bf16, b, *, tk=512, tn=512):
    B, Din = x.shape
    Dout = w_bf16.shape[1]
    tk = _pick_tile(Din, tk)                                # contraction tile
    tn = _pick_tile(Dout, tn)                               # output tile (parallel)
    return pl.pallas_call(
        _linear_kernel,
        out_shape=jax.ShapeDtypeStruct((B, Dout), jnp.float32),
        grid_spec=pltpu.PrefetchScalarGridSpec(
            num_scalar_prefetch=0,
            grid=(Dout // tn, Din // tk),
            in_specs=[
                pl.BlockSpec((B, tk), lambda j, k: (0, k)),
                pl.BlockSpec((tk, tn), lambda j, k: (k, j)),
                pl.BlockSpec((1, tn), lambda j, k: (0, j)),
            ],
            out_specs=pl.BlockSpec((B, tn), lambda j, k: (0, j)),
            scratch_shapes=[pltpu.VMEM((B, tn), jnp.float32)],
        ),
        compiler_params=pltpu.CompilerParams(
            dimension_semantics=("parallel", "arbitrary")),
    )(x, w_bf16, b.reshape(1, Dout).astype(jnp.float32))


# ------------------------------ parameter handling ----------------------------------

def init_params(key, in_channels, image_size):
    # PyTorch-layout parameters (Conv2d: (Cout, Cin, K, K); Linear: (Dout, Din) with
    # Din indexed in NCHW-flatten order), as in the reference module.
    flat = 32 * (image_size // 4) ** 2
    out_dim = image_size ** 2
    ks = jax.random.split(key, 6)
    return dict(
        conv1_w=0.05 * jax.random.normal(ks[0], (16, in_channels, 5, 5), jnp.float32),
        conv1_b=0.05 * jax.random.normal(ks[1], (16,), jnp.float32),
        conv2_w=0.05 * jax.random.normal(ks[2], (32, 16, 5, 5), jnp.float32),
        conv2_b=0.05 * jax.random.normal(ks[3], (32,), jnp.float32),
        fc_w=0.02 * jax.random.normal(ks[4], (out_dim, flat), jnp.float32),
        fc_b=0.02 * jax.random.normal(ks[5], (out_dim,), jnp.float32),
    )


def _toeplitz_conv_weight(w_oihw, W, pad):
    # Lower a (Cout, Cin, K, K) cross-correlation weight to (K, (W+2p)*Cin, W*Cout)
    # so the conv over one padded row-slab is a single matmul.  Output columns are
    # ordered (w % 2, w // 2, co) so the W-direction 2x max-pool is a max of halves.
    w = np.asarray(w_oihw, np.float32)
    Cout, Cin, K, _ = w.shape
    Wpad, Wp = W + 2 * pad, W // 2
    lowered = np.zeros((K, Wpad, Cin, 2, Wp, Cout), np.float32)
    for kh in range(K):
        for kw in range(K):
            tap = w[:, :, kh, kw].T                         # (Cin, Cout)
            for wcol in range(W):
                lowered[kh, wcol + kw, :, wcol % 2, wcol // 2, :] = tap
    return jnp.asarray(lowered.reshape(K, Wpad * Cin, W * Cout), jnp.bfloat16)


def pack_params(params, in_channels, image_size):
    # Convert PyTorch-layout params to the layouts the kernels consume.
    W1, W2, Wq = image_size, image_size // 2, image_size // 4
    C2 = 32
    Dout = params["fc_w"].shape[0]
    # fc rows permuted from NCHW-flatten to the kernels' NHWC-flatten order, so the
    # conv2 output feeds `linear` directly (no transpose between pallas_calls).
    fc_w = jnp.transpose(params["fc_w"].reshape(Dout, C2, Wq, Wq), (2, 3, 1, 0))
    fc_w = fc_w.reshape(Wq * Wq * C2, Dout)
    return dict(
        conv1_w=_toeplitz_conv_weight(params["conv1_w"], W1, 2),
        conv1_b=jnp.tile(params["conv1_b"], W1).reshape(1, W1 * 16),
        conv2_w=_toeplitz_conv_weight(params["conv2_w"], W2, 2),
        conv2_b=jnp.tile(params["conv2_b"], W2).reshape(1, W2 * 32),
        fc_w=fc_w.astype(jnp.bfloat16),
        fc_b=params["fc_b"],
    )


# --------------------------------- model wrapper ------------------------------------

def _pad_and_merge(x_nhwc, pad):
    # (B, H, W, C) -> (B, H+2p, (W+2p)*C): 'same' zero padding, minor dim (w, c).
    B, H, W, C = x_nhwc.shape
    x = jnp.pad(x_nhwc, ((0, 0), (pad, pad), (pad, pad), (0, 0)))
    return x.reshape(B, H + 2 * pad, (W + 2 * pad) * C)


@jax.jit
def binary_classifier_cnn(packed, x_nchw):
    B, Cin, H, W = x_nchw.shape
    assert H == W and H % 4 == 0
    Hp, Hq = H // 2, H // 4
    C1, C2 = 16, 32

    x = jnp.transpose(x_nchw, (0, 2, 3, 1))                           # NCHW -> NHWC
    y = conv_relu_pool(_pad_and_merge(x, 2),
                       packed["conv1_w"], packed["conv1_b"],
                       W=W, Cout=C1)                                  # (B*Hp, Hp*C1)
    y = y.reshape(B, Hp, Hp, C1)
    y = conv_relu_pool(_pad_and_merge(y, 2),
                       packed["conv2_w"], packed["conv2_b"],
                       W=Hp, Cout=C2)                                 # (B*Hq, Hq*C2)
    y = y.reshape(B, Hq * Hq * C2)                                    # NHWC flatten
    y = linear(y, packed["fc_w"], packed["fc_b"])                     # (B, H*W)
    return y.reshape(-1, 1, 32, 32)                                   # as in the torch module


# ---------------------------------- reference ---------------------------------------

@jax.jit
def reference_forward(params, x_nchw):
    def block(x, w, b):
        y = jax.lax.conv_general_dilated(
            x, w, window_strides=(1, 1), padding=((2, 2), (2, 2)),
            dimension_numbers=("NCHW", "OIHW", "NCHW"))
        y = jnp.maximum(y + b[None, :, None, None], 0.0)
        return jax.lax.reduce_window(y, -jnp.inf, jax.lax.max,
                                     (1, 1, 2, 2), (1, 1, 2, 2), "VALID")
    y = block(x_nchw, params["conv1_w"], params["conv1_b"])
    y = block(y, params["conv2_w"], params["conv2_b"])
    y = y.reshape(y.shape[0], -1)
    y = y @ params["fc_w"].T + params["fc_b"]
    return y.reshape(-1, 1, 32, 32)


if __name__ == "__main__":
    in_channels, image_size, batch = 3, 32, 2   # image_size must be 32: the torch
                                                # module reshapes to (-1, 1, 32, 32).
    key = jax.random.PRNGKey(0)
    pkey, xkey = jax.random.split(key)
    params = init_params(pkey, in_channels, image_size)
    packed = pack_params(params, in_channels, image_size)
    x = jax.random.normal(xkey, (batch, in_channels, image_size, image_size),
                          jnp.float32)

    out = jax.block_until_ready(binary_classifier_cnn(packed, x))
    assert out.shape == (batch, 1, 32, 32), out.shape
    assert out.dtype == jnp.float32

    # Loose tolerance: matmuls use bf16 operands with f32 accumulation.
    ref = jax.block_until_ready(reference_forward(params, x))
    max_err = float(jnp.max(jnp.abs(out - ref)))
    assert max_err < 0.1, f"mismatch vs reference: max abs err {max_err}"
    print("KERNEL_OK")
</pallas_src>

<mosaic_0001>
module attributes {stable_mosaic.version = 11 : i64} {
  func.func @_conv_relu_pool_kernel(%arg0: i32, %arg1: memref<2x36x108xf32, #tpu.memory_space<vmem>>, %arg2: memref<5x108x512xbf16, #tpu.memory_space<vmem>>, %arg3: memref<1x512xf32, #tpu.memory_space<vmem>>, %arg4: memref<32x256xf32, #tpu.memory_space<vmem>>) attributes {dimension_semantics = [#tpu.dimension_semantics<parallel>], iteration_bounds = array<i64: 1>, scalar_prefetch = 0 : i64, scratch_operands = 0 : i64, tpu.core_type = #tpu.core_type<tc>, window_params = [{transform_indices = @transform_0, window_bounds = array<i64: 2, 36, 108>}, {pipeline_mode = #tpu.pipeline_mode<synchronous>, transform_indices = @transform_1, window_bounds = array<i64: 5, 108, 512>}, {pipeline_mode = #tpu.pipeline_mode<synchronous>, transform_indices = @transform_2, window_bounds = array<i64: 1, 512>}, {transform_indices = @transform_3, window_bounds = array<i64: 32, 256>}]} {
    %cst = arith.constant 0.000000e+00 : f32
    %0 = vector.broadcast %cst : f32 to vector<64x512xf32>
    %c0 = arith.constant 0 : index
    %c0_0 = arith.constant 0 : index
    %c0_1 = arith.constant 0 : index
    %1 = vector.load %arg1[%c0, %c0_0, %c0_1] : memref<2x36x108xf32, #tpu.memory_space<vmem>>, vector<2x32x108xf32>
    %2 = vector.shape_cast %1 : vector<2x32x108xf32> to vector<64x108xf32>
    %3 = arith.truncf %2 : vector<64x108xf32> to vector<64x108xbf16>
    %c0_2 = arith.constant 0 : index
    %c0_3 = arith.constant 0 : index
    %c0_4 = arith.constant 0 : index
    %4 = vector.load %arg2[%c0_2, %c0_3, %c0_4] : memref<5x108x512xbf16, #tpu.memory_space<vmem>>, vector<1x108x512xbf16>
    %5 = vector.shape_cast %4 : vector<1x108x512xbf16> to vector<108x512xbf16>
    %cst_5 = arith.constant dense<0.000000e+00> : vector<64x512xf32>
    %6 = tpu.matmul %3, %5, %cst_5 {dimension_numbers = #tpu.dot_dimension_numbers<[1], [0], [0], [1], [0, 0, 1, 1], [], []>} : vector<64x108xbf16>, vector<108x512xbf16>, vector<64x512xf32> -> vector<64x512xf32>
    %7 = arith.addf %0, %6 : vector<64x512xf32>
    %c0_6 = arith.constant 0 : index
    %c1 = arith.constant 1 : index
    %c0_7 = arith.constant 0 : index
    %8 = vector.load %arg1[%c0_6, %c1, %c0_7] : memref<2x36x108xf32, #tpu.memory_space<vmem>>, vector<2x32x108xf32>
    %9 = vector.shape_cast %8 : vector<2x32x108xf32> to vector<64x108xf32>
    %10 = arith.truncf %9 : vector<64x108xf32> to vector<64x108xbf16>
    %c1_8 = arith.constant 1 : index
    %c0_9 = arith.constant 0 : index
    %c0_10 = arith.constant 0 : index
    %11 = vector.load %arg2[%c1_8, %c0_9, %c0_10] : memref<5x108x512xbf16, #tpu.memory_space<vmem>>, vector<1x108x512xbf16>
    %12 = vector.shape_cast %11 : vector<1x108x512xbf16> to vector<108x512xbf16>
    %cst_11 = arith.constant dense<0.000000e+00> : vector<64x512xf32>
    %13 = tpu.matmul %10, %12, %cst_11 {dimension_numbers = #tpu.dot_dimension_numbers<[1], [0], [0], [1], [0, 0, 1, 1], [], []>} : vector<64x108xbf16>, vector<108x512xbf16>, vector<64x512xf32> -> vector<64x512xf32>
    %14 = arith.addf %7, %13 : vector<64x512xf32>
    %c0_12 = arith.constant 0 : index
    %c2 = arith.constant 2 : index
    %c0_13 = arith.constant 0 : index
    %15 = vector.load %arg1[%c0_12, %c2, %c0_13] : memref<2x36x108xf32, #tpu.memory_space<vmem>>, vector<2x32x108xf32>
    %16 = vector.shape_cast %15 : vector<2x32x108xf32> to vector<64x108xf32>
    %17 = arith.truncf %16 : vector<64x108xf32> to vector<64x108xbf16>
    %c2_14 = arith.constant 2 : index
    %c0_15 = arith.constant 0 : index
    %c0_16 = arith.constant 0 : index
    %18 = vector.load %arg2[%c2_14, %c0_15, %c0_16] : memref<5x108x512xbf16, #tpu.memory_space<vmem>>, vector<1x108x512xbf16>
    %19 = vector.shape_cast %18 : vector<1x108x512xbf16> to vector<108x512xbf16>
    %cst_17 = arith.constant dense<0.000000e+00> : vector<64x512xf32>
    %20 = tpu.matmul %17, %19, %cst_17 {dimension_numbers = #tpu.dot_dimension_numbers<[1], [0], [0], [1], [0, 0, 1, 1], [], []>} : vector<64x108xbf16>, vector<108x512xbf16>, vector<64x512xf32> -> vector<64x512xf32>
    %21 = arith.addf %14, %20 : vector<64x512xf32>
    %c0_18 = arith.constant 0 : index
    %c3 = arith.constant 3 : index
    %c0_19 = arith.constant 0 : index
    %22 = vector.load %arg1[%c0_18, %c3, %c0_19] : memref<2x36x108xf32, #tpu.memory_space<vmem>>, vector<2x32x108xf32>
    %23 = vector.shape_cast %22 : vector<2x32x108xf32> to vector<64x108xf32>
    %24 = arith.truncf %23 : vector<64x108xf32> to vector<64x108xbf16>
    %c3_20 = arith.constant 3 : index
    %c0_21 = arith.constant 0 : index
    %c0_22 = arith.constant 0 : index
    %25 = vector.load %arg2[%c3_20, %c0_21, %c0_22] : memref<5x108x512xbf16, #tpu.memory_space<vmem>>, vector<1x108x512xbf16>
    %26 = vector.shape_cast %25 : vector<1x108x512xbf16> to vector<108x512xbf16>
    %cst_23 = arith.constant dense<0.000000e+00> : vector<64x512xf32>
    %27 = tpu.matmul %24, %26, %cst_23 {dimension_numbers = #tpu.dot_dimension_numbers<[1], [0], [0], [1], [0, 0, 1, 1], [], []>} : vector<64x108xbf16>, vector<108x512xbf16>, vector<64x512xf32> -> vector<64x512xf32>
    %28 = arith.addf %21, %27 : vector<64x512xf32>
    %c0_24 = arith.constant 0 : index
    %c4 = arith.constant 4 : index
    %c0_25 = arith.constant 0 : index
    %29 = vector.load %arg1[%c0_24, %c4, %c0_25] : memref<2x36x108xf32, #tpu.memory_space<vmem>>, vector<2x32x108xf32>
    %30 = vector.shape_cast %29 : vector<2x32x108xf32> to vector<64x108xf32>
    %31 = arith.truncf %30 : vector<64x108xf32> to vector<64x108xbf16>
    %c4_26 = arith.constant 4 : index
    %c0_27 = arith.constant 0 : index
    %c0_28 = arith.constant 0 : index
    %32 = vector.load %arg2[%c4_26, %c0_27, %c0_28] : memref<5x108x512xbf16, #tpu.memory_space<vmem>>, vector<1x108x512xbf16>
    %33 = vector.shape_cast %32 : vector<1x108x512xbf16> to vector<108x512xbf16>
    %cst_29 = arith.constant dense<0.000000e+00> : vector<64x512xf32>
    %34 = tpu.matmul %31, %33, %cst_29 {dimension_numbers = #tpu.dot_dimension_numbers<[1], [0], [0], [1], [0, 0, 1, 1], [], []>} : vector<64x108xbf16>, vector<108x512xbf16>, vector<64x512xf32> -> vector<64x512xf32>
    %35 = arith.addf %28, %34 : vector<64x512xf32>
    %c0_30 = arith.constant 0 : index
    %c0_31 = arith.constant 0 : index
    %36 = vector.load %arg3[%c0_30, %c0_31] : memref<1x512xf32, #tpu.memory_space<vmem>>, vector<1x512xf32>
    %37 = vector.broadcast %36 : vector<1x512xf32> to vector<64x512xf32>
    %38 = arith.addf %35, %37 : vector<64x512xf32>
    %cst_32 = arith.constant 0.000000e+00 : f32
    %39 = vector.broadcast %cst_32 : f32 to vector<64x512xf32>
    %40 = arith.maximumf %38, %39 : vector<64x512xf32>
    %41 = vector.extract_strided_slice %40 {offsets = [0, 0], sizes = [64, 256], strides = [1, 1]} : vector<64x512xf32> to vector<64x256xf32>
    %42 = vector.extract_strided_slice %40 {offsets = [0, 256], sizes = [64, 256], strides = [1, 1]} : vector<64x512xf32> to vector<64x256xf32>
    %43 = arith.maximumf %41, %42 : vector<64x256xf32>
    %44 = vector.shape_cast %43 : vector<64x256xf32> to vector<32x2x256xf32>
    %45 = vector.extract_strided_slice %44 {offsets = [0, 0, 0], sizes = [32, 1, 256], strides = [1, 1, 1]} : vector<32x2x256xf32> to vector<32x1x256xf32>
    %46 = vector.shape_cast %45 : vector<32x1x256xf32> to vector<32x256xf32>
    %47 = vector.extract_strided_slice %44 {offsets = [0, 1, 0], sizes = [32, 1, 256], strides = [1, 1, 1]} : vector<32x2x256xf32> to vector<32x1x256xf32>
    %48 = vector.shape_cast %47 : vector<32x1x256xf32> to vector<32x256xf32>
    %49 = arith.maximumf %46, %48 : vector<32x256xf32>
    %c0_33 = arith.constant 0 : index
    %c0_34 = arith.constant 0 : index
    %50 = vector.load %arg4[%c0_33, %c0_34] : memref<32x256xf32, #tpu.memory_space<vmem>>, vector<32x256xf32>
    tpu.vector_store %arg4[%c0_33, %c0_34], %49 {strides = array<i32>} : memref<32x256xf32, #tpu.memory_space<vmem>>, vector<32x256xf32>,
    return
  }
  func.func @transform_0(%arg0: i32) -> (i32, i32, i32) {
    %c0_i32 = arith.constant 0 : i32
    %c0_i32_0 = arith.constant 0 : i32
    %c0_i32_1 = arith.constant 0 : i32
    return %arg0, %c0_i32, %c0_i32_0 : i32, i32, i32
  }
  func.func @transform_1(%arg0: i32) -> (i32, i32, i32) {
    %c0_i32 = arith.constant 0 : i32
    %c0_i32_0 = arith.constant 0 : i32
    %c0_i32_1 = arith.constant 0 : i32
    %c0_i32_2 = arith.constant 0 : i32
    return %c0_i32, %c0_i32_0, %c0_i32_1 : i32, i32, i32
  }
  func.func @transform_2(%arg0: i32) -> (i32, i32) {
    %c0_i32 = arith.constant 0 : i32
    %c0_i32_0 = arith.constant 0 : i32
    %c0_i32_1 = arith.constant 0 : i32
    return %c0_i32, %c0_i32_0 : i32, i32
  }
  func.func @transform_3(%arg0: i32) -> (i32, i32) {
    %c0_i32 = arith.constant 0 : i32
    %c0_i32_0 = arith.constant 0 : i32
    return %arg0, %c0_i32 : i32, i32
  }
}

module attributes {stable_mosaic.version = 11 : i64} {
  func.func @_conv_relu_pool_kernel(%arg0: i32, %arg1: memref<2x20x320xf32, #tpu.memory_space<vmem>>, %arg2: memref<5x320x512xbf16, #tpu.memory_space<vmem>>, %arg3: memref<1x512xf32, #tpu.memory_space<vmem>>, %arg4: memref<16x256xf32, #tpu.memory_space<vmem>>) attributes {dimension_semantics = [#tpu.dimension_semantics<parallel>], iteration_bounds = array<i64: 1>, scalar_prefetch = 0 : i64, scratch_operands = 0 : i64, tpu.core_type = #tpu.core_type<tc>, window_params = [{transform_indices = @transform_0, window_bounds = array<i64: 2, 20, 320>}, {pipeline_mode = #tpu.pipeline_mode<synchronous>, transform_indices = @transform_1, window_bounds = array<i64: 5, 320, 512>}, {pipeline_mode = #tpu.pipeline_mode<synchronous>, transform_indices = @transform_2, window_bounds = array<i64: 1, 512>}, {transform_indices = @transform_3, window_bounds = array<i64: 16, 256>}]} {
    %cst = arith.constant 0.000000e+00 : f32
    %0 = vector.broadcast %cst : f32 to vector<32x512xf32>
    %c0 = arith.constant 0 : index
    %c0_0 = arith.constant 0 : index
    %c0_1 = arith.constant 0 : index
    %1 = vector.load %arg1[%c0, %c0_0, %c0_1] : memref<2x20x320xf32, #tpu.memory_space<vmem>>, vector<2x16x320xf32>
    %2 = vector.shape_cast %1 : vector<2x16x320xf32> to vector<32x320xf32>
    %3 = arith.truncf %2 : vector<32x320xf32> to vector<32x320xbf16>
    %c0_2 = arith.constant 0 : index
    %c0_3 = arith.constant 0 : index
    %c0_4 = arith.constant 0 : index
    %4 = vector.load %arg2[%c0_2, %c0_3, %c0_4] : memref<5x320x512xbf16, #tpu.memory_space<vmem>>, vector<1x320x512xbf16>
    %5 = vector.shape_cast %4 : vector<1x320x512xbf16> to vector<320x512xbf16>
    %cst_5 = arith.constant dense<0.000000e+00> : vector<32x512xf32>
    %6 = tpu.matmul %3, %5, %cst_5 {dimension_numbers = #tpu.dot_dimension_numbers<[1], [0], [0], [1], [0, 0, 1, 1], [], []>} : vector<32x320xbf16>, vector<320x512xbf16>, vector<32x512xf32> -> vector<32x512xf32>
    %7 = arith.addf %0, %6 : vector<32x512xf32>
    %c0_6 = arith.constant 0 : index
    %c1 = arith.constant 1 : index
    %c0_7 = arith.constant 0 : index
    %8 = vector.load %arg1[%c0_6, %c1, %c0_7] : memref<2x20x320xf32, #tpu.memory_space<vmem>>, vector<2x16x320xf32>
    %9 = vector.shape_cast %8 : vector<2x16x320xf32> to vector<32x320xf32>
    %10 = arith.truncf %9 : vector<32x320xf32> to vector<32x320xbf16>
    %c1_8 = arith.constant 1 : index
    %c0_9 = arith.constant 0 : index
    %c0_10 = arith.constant 0 : index
    %11 = vector.load %arg2[%c1_8, %c0_9, %c0_10] : memref<5x320x512xbf16, #tpu.memory_space<vmem>>, vector<1x320x512xbf16>
    %12 = vector.shape_cast %11 : vector<1x320x512xbf16> to vector<320x512xbf16>
    %cst_11 = arith.constant dense<0.000000e+00> : vector<32x512xf32>
    %13 = tpu.matmul %10, %12, %cst_11 {dimension_numbers = #tpu.dot_dimension_numbers<[1], [0], [0], [1], [0, 0, 1, 1], [], []>} : vector<32x320xbf16>, vector<320x512xbf16>, vector<32x512xf32> -> vector<32x512xf32>
    %14 = arith.addf %7, %13 : vector<32x512xf32>
    %c0_12 = arith.constant 0 : index
    %c2 = arith.constant 2 : index
    %c0_13 = arith.constant 0 : index
    %15 = vector.load %arg1[%c0_12, %c2, %c0_13] : memref<2x20x320xf32, #tpu.memory_space<vmem>>, vector<2x16x320xf32>
    %16 = vector.shape_cast %15 : vector<2x16x320xf32> to vector<32x320xf32>
    %17 = arith.truncf %16 : vector<32x320xf32> to vector<32x320xbf16>
    %c2_14 = arith.constant 2 : index
    %c0_15 = arith.constant 0 : index
    %c0_16 = arith.constant 0 : index
    %18 = vector.load %arg2[%c2_14, %c0_15, %c0_16] : memref<5x320x512xbf16, #tpu.memory_space<vmem>>, vector<1x320x512xbf16>
    %19 = vector.shape_cast %18 : vector<1x320x512xbf16> to vector<320x512xbf16>
    %cst_17 = arith.constant dense<0.000000e+00> : vector<32x512xf32>
    %20 = tpu.matmul %17, %19, %cst_17 {dimension_numbers = #tpu.dot_dimension_numbers<[1], [0], [0], [1], [0, 0, 1, 1], [], []>} : vector<32x320xbf16>, vector<320x512xbf16>, vector<32x512xf32> -> vector<32x512xf32>
    %21 = arith.addf %14, %20 : vector<32x512xf32>
    %c0_18 = arith.constant 0 : index
    %c3 = arith.constant 3 : index
    %c0_19 = arith.constant 0 : index
    %22 = vector.load %arg1[%c0_18, %c3, %c0_19] : memref<2x20x320xf32, #tpu.memory_space<vmem>>, vector<2x16x320xf32>
    %23 = vector.shape_cast %22 : vector<2x16x320xf32> to vector<32x320xf32>
    %24 = arith.truncf %23 : vector<32x320xf32> to vector<32x320xbf16>
    %c3_20 = arith.constant 3 : index
    %c0_21 = arith.constant 0 : index
    %c0_22 = arith.constant 0 : index
    %25 = vector.load %arg2[%c3_20, %c0_21, %c0_22] : memref<5x320x512xbf16, #tpu.memory_space<vmem>>, vector<1x320x512xbf16>
    %26 = vector.shape_cast %25 : vector<1x320x512xbf16> to vector<320x512xbf16>
    %cst_23 = arith.constant dense<0.000000e+00> : vector<32x512xf32>
    %27 = tpu.matmul %24, %26, %cst_23 {dimension_numbers = #tpu.dot_dimension_numbers<[1], [0], [0], [1], [0, 0, 1, 1], [], []>} : vector<32x320xbf16>, vector<320x512xbf16>, vector<32x512xf32> -> vector<32x512xf32>
    %28 = arith.addf %21, %27 : vector<32x512xf32>
    %c0_24 = arith.constant 0 : index
    %c4 = arith.constant 4 : index
    %c0_25 = arith.constant 0 : index
    %29 = vector.load %arg1[%c0_24, %c4, %c0_25] : memref<2x20x320xf32, #tpu.memory_space<vmem>>, vector<2x16x320xf32>
    %30 = vector.shape_cast %29 : vector<2x16x320xf32> to vector<32x320xf32>
    %31 = arith.truncf %30 : vector<32x320xf32> to vector<32x320xbf16>
    %c4_26 = arith.constant 4 : index
    %c0_27 = arith.constant 0 : index
    %c0_28 = arith.constant 0 : index
    %32 = vector.load %arg2[%c4_26, %c0_27, %c0_28] : memref<5x320x512xbf16, #tpu.memory_space<vmem>>, vector<1x320x512xbf16>
    %33 = vector.shape_cast %32 : vector<1x320x512xbf16> to vector<320x512xbf16>
    %cst_29 = arith.constant dense<0.000000e+00> : vector<32x512xf32>
    %34 = tpu.matmul %31, %33, %cst_29 {dimension_numbers = #tpu.dot_dimension_numbers<[1], [0], [0], [1], [0, 0, 1, 1], [], []>} : vector<32x320xbf16>, vector<320x512xbf16>, vector<32x512xf32> -> vector<32x512xf32>
    %35 = arith.addf %28, %34 : vector<32x512xf32>
    %c0_30 = arith.constant 0 : index
    %c0_31 = arith.constant 0 : index
    %36 = vector.load %arg3[%c0_30, %c0_31] : memref<1x512xf32, #tpu.memory_space<vmem>>, vector<1x512xf32>
    %37 = vector.broadcast %36 : vector<1x512xf32> to vector<32x512xf32>
    %38 = arith.addf %35, %37 : vector<32x512xf32>
    %cst_32 = arith.constant 0.000000e+00 : f32
    %39 = vector.broadcast %cst_32 : f32 to vector<32x512xf32>
    %40 = arith.maximumf %38, %39 : vector<32x512xf32>
    %41 = vector.extract_strided_slice %40 {offsets = [0, 0], sizes = [32, 256], strides = [1, 1]} : vector<32x512xf32> to vector<32x256xf32>
    %42 = vector.extract_strided_slice %40 {offsets = [0, 256], sizes = [32, 256], strides = [1, 1]} : vector<32x512xf32> to vector<32x256xf32>
    %43 = arith.maximumf %41, %42 : vector<32x256xf32>
    %44 = vector.shape_cast %43 : vector<32x256xf32> to vector<16x2x256xf32>
    %45 = vector.extract_strided_slice %44 {offsets = [0, 0, 0], sizes = [16, 1, 256], strides = [1, 1, 1]} : vector<16x2x256xf32> to vector<16x1x256xf32>
    %46 = vector.shape_cast %45 : vector<16x1x256xf32> to vector<16x256xf32>
    %47 = vector.extract_strided_slice %44 {offsets = [0, 1, 0], sizes = [16, 1, 256], strides = [1, 1, 1]} : vector<16x2x256xf32> to vector<16x1x256xf32>
    %48 = vector.shape_cast %47 : vector<16x1x256xf32> to vector<16x256xf32>
    %49 = arith.maximumf %46, %48 : vector<16x256xf32>
    %c0_33 = arith.constant 0 : index
    %c0_34 = arith.constant 0 : index
    %50 = vector.load %arg4[%c0_33, %c0_34] : memref<16x256xf32, #tpu.memory_space<vmem>>, vector<16x256xf32>
    tpu.vector_store %arg4[%c0_33, %c0_34], %49 {strides = array<i32>} : memref<16x256xf32, #tpu.memory_space<vmem>>, vector<16x256xf32>,
    return
  }
  func.func @transform_0(%arg0: i32) -> (i32, i32, i32) {
    %c0_i32 = arith.constant 0 : i32
    %c0_i32_0 = arith.constant 0 : i32
    %c0_i32_1 = arith.constant 0 : i32
    return %arg0, %c0_i32, %c0_i32_0 : i32, i32, i32
  }
  func.func @transform_1(%arg0: i32) -> (i32, i32, i32) {
    %c0_i32 = arith.constant 0 : i32
    %c0_i32_0 = arith.constant 0 : i32
    %c0_i32_1 = arith.constant 0 : i32
    %c0_i32_2 = arith.constant 0 : i32
    return %c0_i32, %c0_i32_0, %c0_i32_1 : i32, i32, i32
  }
  func.func @transform_2(%arg0: i32) -> (i32, i32) {
    %c0_i32 = arith.constant 0 : i32
    %c0_i32_0 = arith.constant 0 : i32
    %c0_i32_1 = arith.constant 0 : i32
    return %c0_i32, %c0_i32_0 : i32, i32
  }
  func.func @transform_3(%arg0: i32) -> (i32, i32) {
    %c0_i32 = arith.constant 0 : i32
    %c0_i32_0 = arith.constant 0 : i32
    return %arg0, %c0_i32 : i32, i32
  }
}

module attributes {stable_mosaic.version = 11 : i64} {
  func.func @_linear_kernel(%arg0: i32, %arg1: i32, %arg2: memref<2x512xf32, #tpu.memory_space<vmem>>, %arg3: memref<512x512xbf16, #tpu.memory_space<vmem>>, %arg4: memref<1x512xf32, #tpu.memory_space<vmem>>, %arg5: memref<2x512xf32, #tpu.memory_space<vmem>>, %arg6: memref<2x512xf32, #tpu.memory_space<vmem>>) attributes {dimension_semantics = [#tpu.dimension_semantics<parallel>, #tpu.dimension_semantics<arbitrary>], iteration_bounds = array<i64: 2, 4>, scalar_prefetch = 0 : i64, scratch_operands = 1 : i64, tpu.core_type = #tpu.core_type<tc>, window_params = [{transform_indices = @transform_0, window_bounds = array<i64: 2, 512>}, {transform_indices = @transform_1, window_bounds = array<i64: 512, 512>}, {transform_indices = @transform_2, window_bounds = array<i64: 1, 512>}, {transform_indices = @transform_3, window_bounds = array<i64: 2, 512>}]} {
    %c0_i32 = arith.constant 0 : i32
    %0 = arith.cmpi eq, %arg1, %c0_i32 : i32
    %1 = arith.extui %0 : i1 to i32
    %c0_i32_0 = arith.constant 0 : i32
    %2 = arith.cmpi ne, %1, %c0_i32_0 : i32
    scf.if %2 {
      %cst_9 = arith.constant 0.000000e+00 : f32
      %13 = vector.broadcast %cst_9 : f32 to vector<2x512xf32>
      %c0_10 = arith.constant 0 : index
      %c0_11 = arith.constant 0 : index
      %14 = vector.load %arg6[%c0_10, %c0_11] : memref<2x512xf32, #tpu.memory_space<vmem>>, vector<2x512xf32>
      tpu.vector_store %arg6[%c0_10, %c0_11], %13 {strides = array<i32>} : memref<2x512xf32, #tpu.memory_space<vmem>>, vector<2x512xf32>,
    } else {
    }
    %c0 = arith.constant 0 : index
    %c0_1 = arith.constant 0 : index
    %3 = vector.load %arg6[%c0, %c0_1] : memref<2x512xf32, #tpu.memory_space<vmem>>, vector<2x512xf32>
    %c0_2 = arith.constant 0 : index
    %c0_3 = arith.constant 0 : index
    %4 = vector.load %arg2[%c0_2, %c0_3] : memref<2x512xf32, #tpu.memory_space<vmem>>, vector<2x512xf32>
    %5 = arith.truncf %4 : vector<2x512xf32> to vector<2x512xbf16>
    %c0_4 = arith.constant 0 : index
    %c0_5 = arith.constant 0 : index
    %6 = vector.load %arg3[%c0_4, %c0_5] : memref<512x512xbf16, #tpu.memory_space<vmem>>, vector<512x512xbf16>
    %cst = arith.constant dense<0.000000e+00> : vector<2x512xf32>
    %7 = tpu.matmul %5, %6, %cst {dimension_numbers = #tpu.dot_dimension_numbers<[1], [0], [0], [1], [0, 0, 1, 1], [], []>} : vector<2x512xbf16>, vector<512x512xbf16>, vector<2x512xf32> -> vector<2x512xf32>
    %8 = arith.addf %3, %7 : vector<2x512xf32>
    %c0_6 = arith.constant 0 : index
    %c0_7 = arith.constant 0 : index
    %9 = vector.load %arg6[%c0_6, %c0_7] : memref<2x512xf32, #tpu.memory_space<vmem>>, vector<2x512xf32>
    tpu.vector_store %arg6[%c0_6, %c0_7], %8 {strides = array<i32>} : memref<2x512xf32, #tpu.memory_space<vmem>>, vector<2x512xf32>,
    %c3_i32 = arith.constant 3 : i32
    %10 = arith.cmpi eq, %arg1, %c3_i32 : i32
    %11 = arith.extui %10 : i1 to i32
    %c0_i32_8 = arith.constant 0 : i32
    %12 = arith.cmpi ne, %11, %c0_i32_8 : i32
    scf.if %12 {
      %c0_9 = arith.constant 0 : index
      %c0_10 = arith.constant 0 : index
      %13 = vector.load %arg6[%c0_9, %c0_10] : memref<2x512xf32, #tpu.memory_space<vmem>>, vector<2x512xf32>
      %c0_11 = arith.constant 0 : index
      %c0_12 = arith.constant 0 : index
      %14 = vector.load %arg4[%c0_11, %c0_12] : memref<1x512xf32, #tpu.memory_space<vmem>>, vector<1x512xf32>
      %15 = vector.broadcast %14 : vector<1x512xf32> to vector<2x512xf32>
      %16 = arith.addf %13, %15 : vector<2x512xf32>
      %c0_13 = arith.constant 0 : index
      %c0_14 = arith.constant 0 : index
      %17 = vector.load %arg5[%c0_13, %c0_14] : memref<2x512xf32, #tpu.memory_space<vmem>>, vector<2x512xf32>
      tpu.vector_store %arg5[%c0_13, %c0_14], %16 {strides = array<i32>} : memref<2x512xf32, #tpu.memory_space<vmem>>, vector<2x512xf32>,
    } else {
    }
    return
  }
  func.func @transform_0(%arg0: i32, %arg1: i32) -> (i32, i32) {
    %c0_i32 = arith.constant 0 : i32
    %c0_i32_0 = arith.constant 0 : i32
    return %c0_i32, %arg1 : i32, i32
  }
  func.func @transform_1(%arg0: i32, %arg1: i32) -> (i32, i32) {
    %c0_i32 = arith.constant 0 : i32
    return %arg1, %arg0 : i32, i32
  }
  func.func @transform_2(%arg0: i32, %arg1: i32) -> (i32, i32) {
    %c0_i32 = arith.constant 0 : i32
    %c0_i32_0 = arith.constant 0 : i32
    return %c0_i32, %arg0 : i32, i32
  }
  func.func @transform_3(%arg0: i32, %arg1: i32) -> (i32, i32) {
    %c0_i32 = arith.constant 0 : i32
    %c0_i32_0 = arith.constant 0 : i32
    return %c0_i32, %arg0 : i32, i32
  }
}

</mosaic_0001>

<llo_original>
// kernel: binary_classifier_cnn.3
$region0: #{binary_classifier_cnn.3}
  #allocation0 [shape = 'u32[]', space=smem, size = 0x4, offset = 0x4, fixed_abs, tag = 'smem constant byte address 0x4 - core index']
  #allocation1 [shape = 'u32[144,128]{1,0:T(1,128)}', space=vmem, size = 0x12000, scoped, tag = 'internal scratch']
  %s0 = inlined_call_operand.vmem [shape: f32[2,36,108], index: 0, kind: input, shape index: {}]
  %s1 = inlined_call_operand.hbm [shape: bf16[5,108,512], index: 1, kind: input, shape index: {}]
  %s2 = inlined_call_operand.hbm [shape: f32[1,512], index: 2, kind: input, shape index: {}]
  %s3 = inlined_call_operand.vmem [shape: f32[32,256], index: 3, kind: output, shape index: {}]
  %s4 = sld [smem:[#allocation0]]
  $region30: #{binary_classifier_cnn.3} parent=0
    _
  %s6 = ssub.s32 1, %s4
  %s7 = scalar_select 0, %s6, %s4
  $region1: #{binary_classifier_cnn.3} parent=0
    #allocation2 [shape = 'u8[573440]{0}', space=vmem, size = 0x8c000, scoped, tag = 'input window, operand 1, single buffered']
    #allocation3 [shape = 's32[1]{0}', space=sflag, size = 0x4, scoped, tag = 'scoped memory for binary_classifier_cnn.3']
    #allocation4 [shape = 'u8[2048]{0}', space=vmem, size = 0x800, scoped, tag = 'input window, operand 2, single buffered']
    #allocation5 [shape = 's32[1]{0}', space=sflag, size = 0x4, scoped, tag = 'scoped memory for binary_classifier_cnn.3']
    %8 = vsyncpa [#allocation3], 0
    %9 = vsyncpa [#allocation5], 0
    // Predicated region
    $region2: #{binary_classifier_cnn.3} parent=1 // pred_check
      _
    $region3: #{binary_classifier_cnn.3} parent=1 // pred_check_branch
      %11 = sbr.rel (0) target = $region5
    $region4: #{binary_classifier_cnn.3} parent=1 // pred_region
      _
    $region5: #{binary_classifier_cnn.3} parent=1 // pred_fallthru
      _
    // Predicated region
    $region6: #{binary_classifier_cnn.3} parent=1 // pred_check
      _
    $region7: #{binary_classifier_cnn.3} parent=1 // pred_check_branch
      %13 = sbr.rel (0) target = $region9
    $region8: #{binary_classifier_cnn.3} parent=1 // pred_region
      %s15 = ssub.s32 17920, 17920
      %16 = vsyncadd [#allocation3], %s15
      %s17 = sshll.u32 [#allocation2], 4
      %s18 = int_to_ptr.vmem [resolvable:$true] %s17
      %23 = dma.hbm_to_vmem [thread:$0]  %s1, 17920, %s18, [#allocation3], 256, 256, 16
    $region9: #{binary_classifier_cnn.3} parent=1 // pred_fallthru
      _
    // Predicated region
    $region10: #{binary_classifier_cnn.3} parent=1 // pred_check
      _
    $region11: #{binary_classifier_cnn.3} parent=1 // pred_check_branch
      %25 = sbr.rel (0) target = $region13
    $region12: #{binary_classifier_cnn.3} parent=1 // pred_region
      %s27 = ssub.s32 64, 64
      %28 = vsyncadd [#allocation5], %s27
      %s30 = sshll.u32 [#allocation4], 4
      %s31 = int_to_ptr.vmem [resolvable:$true] %s30
      %33 = dma.hbm_to_vmem [thread:$0]  %s2, 64, %s31, [#allocation5]
    $region13: #{binary_classifier_cnn.3} parent=1 // pred_fallthru
      _
    // Predicated region
    $region14: #{binary_classifier_cnn.3} parent=1 // pred_check
      _
    $region15: #{binary_classifier_cnn.3} parent=1 // pred_check_branch
      %35 = sbr.rel (0) target = $region17
    $region16: #{binary_classifier_cnn.3} parent=1 // pred_region
      %36 = dma.done [#allocation3], 17920
    $region17: #{binary_classifier_cnn.3} parent=1 // pred_fallthru
      _
    // Predicated region
    $region18: #{binary_classifier_cnn.3} parent=1 // pred_check
      _
    $region19: #{binary_classifier_cnn.3} parent=1 // pred_check_branch
      %38 = sbr.rel (0) target = $region21
    $region20: #{binary_classifier_cnn.3} parent=1 // pred_region
      %39 = dma.done [#allocation5], 64
    $region21: #{binary_classifier_cnn.3} parent=1 // pred_fallthru
      _
    %v41 = vld [vmem:[%s0] sm:$0xff]
    %v42 = vld [vmem:[%s0 + $0x8] sm:$0xff]
    %v43 = vld [vmem:[%s0 + $0x10] sm:$0xff]
    %v44 = vld [vmem:[%s0 + $0x18] sm:$0xff]
    %v45 = vld [vmem:[%s0 + $0x28] sm:$0xff]
    %v46 = vld [vmem:[%s0 + $0x30] sm:$0xff]
    %v47 = vld [vmem:[%s0 + $0x38] sm:$0xff]
    %v48 = vld [vmem:[%s0 + $0x40] sm:$0xff]
    %v49 = vpack.c.bf16 %v42, %v41
    %v50 = vpack.c.bf16 %v44, %v43
    %v51 = vpack.c.bf16 %v46, %v45
    %v52 = vpack.c.bf16 %v48, %v47
    %v53 = vld [vmem:[#allocation2] sm:$0xff]
    %v54 = vld [vmem:[#allocation2 + $0x8] sm:$0xff]
    %v55 = vld [vmem:[#allocation2 + $0x10] sm:$0xff]
    %v56 = vld [vmem:[#allocation2 + $0x18] sm:$0xff]
    %v57 = vld [vmem:[#allocation2 + $0x20] sm:$0xff]
    %v58 = vld [vmem:[#allocation2 + $0x28] sm:$0xff]
    %v59 = vld [vmem:[#allocation2 + $0x30] sm:$0xff]
    %v60 = vld [vmem:[#allocation2 + $0x38] sm:$0xff]
    %v61 = vld [vmem:[#allocation2 + $0x40] sm:$0xff]
    %v62 = vld [vmem:[#allocation2 + $0x48] sm:$0xff]
    %v63 = vld [vmem:[#allocation2 + $0x50] sm:$0xff]
    %v64 = vld [vmem:[#allocation2 + $0x58] sm:$0xff]
    %v65 = vld [vmem:[#allocation2 + $0x60] sm:$0xff]
    %v66 = vld [vmem:[#allocation2 + $0x68] sm:$0xff]
    %v67 = vld [vmem:[#allocation2 + $0x70] sm:$0xff]
    %v68 = vld [vmem:[#allocation2 + $0x78] sm:$0xff]
    %v69 = vld [vmem:[#allocation2 + $0x80] sm:$0xff]
    %v70 = vld [vmem:[#allocation2 + $0x88] sm:$0xff]
    %v71 = vld [vmem:[#allocation2 + $0x90] sm:$0xff]
    %v72 = vld [vmem:[#allocation2 + $0x98] sm:$0xff]
    %v73 = vld [vmem:[#allocation2 + $0xa0] sm:$0xff]
    %v74 = vld [vmem:[#allocation2 + $0xa8] sm:$0xff]
    %v75 = vld [vmem:[#allocation2 + $0xb0] sm:$0xff]
    %v76 = vld [vmem:[#allocation2 + $0xb8] sm:$0xff]
    %v77 = vld [vmem:[#allocation2 + $0xc0] sm:$0xff]
    %v78 = vld [vmem:[#allocation2 + $0xc8] sm:$0xff]
    %v79 = vld [vmem:[#allocation2 + $0xd0] sm:$0x33]
    %v80 = vld [vmem:[#allocation2 + $0xd8] sm:$0x33]
    %v81 = vld [vmem:[%s0 + $0x1] sm:$0xff]
    %v82 = vld [vmem:[%s0 + $0x9] sm:$0xff]
    %v83 = vld [vmem:[%s0 + $0x11] sm:$0xff]
    %v84 = vld [vmem:[%s0 + $0x19] sm:$0xff]
    %v85 = vld [vmem:[%s0 + $0x29] sm:$0xff]
    %v86 = vld [vmem:[%s0 + $0x31] sm:$0xff]
    %v87 = vld [vmem:[%s0 + $0x39] sm:$0xff]
    %v88 = vld [vmem:[%s0 + $0x41] sm:$0xff]
    %v89 = vpack.c.bf16 %v82, %v81
    %v90 = vpack.c.bf16 %v84, %v83
    %v91 = vpack.c.bf16 %v86, %v85
    %v92 = vpack.c.bf16 %v88, %v87
    %s93 = scalar_lea.vmem [#allocation2], 224
    %v94 = vld [vmem:[%s93] sm:$0xff]
    %v95 = vld [vmem:[%s93 + $0x8] sm:$0xff]
    %v96 = vld [vmem:[%s93 + $0x10] sm:$0xff]
    %v97 = vld [vmem:[%s93 + $0x18] sm:$0xff]
    %v98 = vld [vmem:[%s93 + $0x20] sm:$0xff]
    %v99 = vld [vmem:[%s93 + $0x28] sm:$0xff]
    %v100 = vld [vmem:[%s93 + $0x30] sm:$0xff]
    %v101 = vld [vmem:[%s93 + $0x38] sm:$0xff]
    %v102 = vld [vmem:[%s93 + $0x40] sm:$0xff]
    %v103 = vld [vmem:[%s93 + $0x48] sm:$0xff]
    %v104 = vld [vmem:[%s93 + $0x50] sm:$0xff]
    %v105 = vld [vmem:[%s93 + $0x58] sm:$0xff]
    %v106 = vld [vmem:[%s93 + $0x60] sm:$0xff]
    %v107 = vld [vmem:[%s93 + $0x68] sm:$0xff]
    %v108 = vld [vmem:[%s93 + $0x70] sm:$0xff]
    %v109 = vld [vmem:[%s93 + $0x78] sm:$0xff]
    %v110 = vld [vmem:[%s93 + $0x80] sm:$0xff]
    %v111 = vld [vmem:[%s93 + $0x88] sm:$0xff]
    %v112 = vld [vmem:[%s93 + $0x90] sm:$0xff]
    %v113 = vld [vmem:[%s93 + $0x98] sm:$0xff]
    %v114 = vld [vmem:[%s93 + $0xa0] sm:$0xff]
    %v115 = vld [vmem:[%s93 + $0xa8] sm:$0xff]
    %v116 = vld [vmem:[%s93 + $0xb0] sm:$0xff]
    %v117 = vld [vmem:[%s93 + $0xb8] sm:$0xff]
    %v118 = vld [vmem:[%s93 + $0xc0] sm:$0xff]
    %v119 = vld [vmem:[%s93 + $0xc8] sm:$0xff]
    %v120 = vld [vmem:[%s93 + $0xd0] sm:$0x33]
    %v121 = vld [vmem:[%s93 + $0xd8] sm:$0x33]
    %v150 = vunpack.c.l.b16 %v94
    %v151 = vunpack.c.h.b16 %v94
    %v152 = vunpack.c.l.b16 %v95
    %v153 = vunpack.c.h.b16 %v95
    %v154 = vunpack.c.l.b16 %v96
    %v155 = vunpack.c.h.b16 %v96
    %v156 = vunpack.c.l.b16 %v97
    %v157 = vunpack.c.h.b16 %v97
    %v158 = vunpack.c.l.b16 %v98
    %v159 = vunpack.c.h.b16 %v98
    %v160 = vunpack.c.l.b16 %v99
    %v161 = vunpack.c.h.b16 %v99
    %v162 = vunpack.c.l.b16 %v100
    %v163 = vunpack.c.h.b16 %v100
    %v164 = vunpack.c.l.b16 %v101
    %v165 = vunpack.c.h.b16 %v101
    %v166 = vunpack.c.l.b16 %v102
    %v167 = vunpack.c.h.b16 %v102
    %v168 = vunpack.c.l.b16 %v103
    %v169 = vunpack.c.h.b16 %v103
    %v170 = vunpack.c.l.b16 %v104
    %v171 = vunpack.c.h.b16 %v104
    %v172 = vunpack.c.l.b16 %v105
    %v173 = vunpack.c.h.b16 %v105
    %v174 = vunpack.c.l.b16 %v106
    %v175 = vunpack.c.h.b16 %v106
    %v176 = vunpack.c.l.b16 %v107
    %v177 = vunpack.c.h.b16 %v107
    %v178 = vunpack.c.l.b16 %v108
    %v179 = vunpack.c.h.b16 %v108
    %v180 = vunpack.c.l.b16 %v109
    %v181 = vunpack.c.h.b16 %v109
    %v182 = vunpack.c.l.b16 %v110
    %v183 = vunpack.c.h.b16 %v110
    %v184 = vunpack.c.l.b16 %v111
    %v185 = vunpack.c.h.b16 %v111
    %v186 = vunpack.c.l.b16 %v112
    %v187 = vunpack.c.h.b16 %v112
    %v188 = vunpack.c.l.b16 %v113
    %v189 = vunpack.c.h.b16 %v113
    %v190 = vunpack.c.l.b16 %v114
    %v191 = vunpack.c.h.b16 %v114
    %v192 = vunpack.c.l.b16 %v115
    %v193 = vunpack.c.h.b16 %v115
    %v194 = vunpack.c.l.b16 %v116
    %v195 = vunpack.c.h.b16 %v116
    %v196 = vunpack.c.l.b16 %v117
    %v197 = vunpack.c.h.b16 %v117
    %v198 = vunpack.c.l.b16 %v118
    %v199 = vunpack.c.h.b16 %v118
    %v200 = vunpack.c.l.b16 %v119
    %v201 = vunpack.c.h.b16 %v119
    %v202 = vunpack.c.l.b16 %v120
    %v203 = vunpack.c.h.b16 %v120
    %v204 = vunpack.c.l.b16 %v121
    %v205 = vunpack.c.h.b16 %v121
    %v206 = vpack.c.b16 %v154, %v150
    %v207 = vpack.c.b16 %v155, %v151
    %v208 = vpack.c.b16 %v156, %v152
    %v209 = vpack.c.b16 %v157, %v153
    %v210 = vpack.c.b16 %v162, %v158
    %v211 = vpack.c.b16 %v163, %v159
    %v212 = vpack.c.b16 %v164, %v160
    %v213 = vpack.c.b16 %v165, %v161
    %v214 = vpack.c.b16 %v170, %v166
    %v215 = vpack.c.b16 %v171, %v167
    %v216 = vpack.c.b16 %v172, %v168
    %v217 = vpack.c.b16 %v173, %v169
    %v218 = vpack.c.b16 %v178, %v174
    %v219 = vpack.c.b16 %v179, %v175
    %v220 = vpack.c.b16 %v180, %v176
    %v221 = vpack.c.b16 %v181, %v177
    %v222 = vpack.c.b16 %v186, %v182
    %v223 = vpack.c.b16 %v187, %v183
    %v224 = vpack.c.b16 %v188, %v184
    %v225 = vpack.c.b16 %v189, %v185
    %v226 = vpack.c.b16 %v194, %v190
    %v227 = vpack.c.b16 %v195, %v191
    %v228 = vpack.c.b16 %v196, %v192
    %v229 = vpack.c.b16 %v197, %v193
    %v230 = vpack.c.b16 %v202, %v198
    %v231 = vpack.c.b16 %v203, %v199
    %v232 = vpack.c.b16 %v204, %v200
    %v233 = vpack.c.b16 %v205, %v201
    %vm258 = vcmask 883712
    %v260 = vsel %vm258, %v89, 0
    %v263 = vsel %vm258, %v90, 0
    %v266 = vsel %vm258, %v91, 0
    %v269 = vsel %vm258, %v92, 0
    %vm271 = vcmask 1045504
    %v273 = vsel %vm271, %v230, 0
    %v276 = vsel %vm271, %v231, 0
    %v279 = vsel %vm271, %v232, 0
    %v282 = vsel %vm271, %v233, 0
    %284 = vmatprep.subr.bf16.mxu0 0
    %285 = vmatpush1.bf16.msra.mxu0 0
    %286 = vmatprep.subr.bf16.mxu0 %v276
    %287 = vmatpush1.bf16.msra.mxu0 %v273
    %288 = vmatprep.subr.bf16.mxu0 %v227
    %289 = vmatpush1.bf16.msra.mxu0 %v226
    %290 = vmatprep.subr.bf16.mxu0 %v223
    %291 = vmatpush1.bf16.msra.mxu0 %v222
    %292 = vmatprep.subr.bf16.mxu0 %v219
    %293 = vmatpush1.bf16.msra.mxu0 %v218
    %294 = vmatprep.subr.bf16.mxu0 %v215
    %295 = vmatpush1.bf16.msra.mxu0 %v214
    %296 = vmatprep.subr.bf16.mxu0 %v211
    %297 = vmatpush1.bf16.msra.mxu0 %v210
    %298 = vmatprep.subr.bf16.mxu0 %v207
    %299 = vmatpush1.bf16.msra.mxu0 %v206
    %300 = vmatprep.subr.bf16.mxu0 0
    %301 = vmatpush2.bf16.msra.mxu0 0
    %302 = vmatprep.subr.bf16.mxu0 0
    %303 = vmatpush2.bf16.msra.mxu0 0
    %304 = vmatprep.subr.bf16.mxu0 0
    %305 = vmatpush2.bf16.msra.mxu0 0
    %306 = vmatprep.subr.bf16.mxu0 0
    %307 = vmatpush2.bf16.msra.mxu0 0
    %308 = vmatprep.subr.bf16.mxu0 0
    %309 = vmatpush2.bf16.msra.mxu0 0
    %310 = vmatprep.subr.bf16.mxu0 0
    %311 = vmatpush2.bf16.msra.mxu0 0
    %312 = vmatprep.subr.bf16.mxu0 0
    %313 = vmatpush2.bf16.msra.mxu0 0
    %314 = vmatprep.subr.bf16.mxu0 0
    %315 = vmatpush2.bf16.msra.mxu0 0
    %316 = vmatprep.mubr.bf16.mxu0 0
    %317 = vmatmul.mubr.bf16.gmra.mxu0 %v260
    %v318 = vpop.f32.mrf.mxu0
    %v319 = vadd.f32 0.0, %v318
    %v320 = vpop.f32.mrf.mxu0
    %v321 = vadd.f32 0.0, %v320
    %v322 = vpop.f32.mrf.mxu0
    %v323 = vadd.f32 0.0, %v322
    %v324 = vpop.f32.mrf.mxu0
    %v325 = vadd.f32 0.0, %v324
    %326 = vmatprep.mubr.bf16.mxu0 0
    %327 = vmatmul.mubr.bf16.gmra.mxu0 %v263
    %v328 = vpop.f32.mrf.mxu0
    %v329 = vadd.f32 0.0, %v328
    %v330 = vpop.f32.mrf.mxu0
    %v331 = vadd.f32 0.0, %v330
    %v332 = vpop.f32.mrf.mxu0
    %v333 = vadd.f32 0.0, %v332
    %v334 = vpop.f32.mrf.mxu0
    %v335 = vadd.f32 0.0, %v334
    %336 = vmatprep.mubr.bf16.mxu0 0
    %337 = vmatmul.mubr.bf16.gmra.mxu0 %v266
    %v338 = vpop.f32.mrf.mxu0
    %v339 = vadd.f32 0.0, %v338
    %v340 = vpop.f32.mrf.mxu0
    %v341 = vadd.f32 0.0, %v340
    %v342 = vpop.f32.mrf.mxu0
    %v343 = vadd.f32 0.0, %v342
    %v344 = vpop.f32.mrf.mxu0
    %v345 = vadd.f32 0.0, %v344
    %346 = vmatprep.mubr.bf16.mxu0 0
    %347 = vmatmul.mubr.bf16.gmra.mxu0 %v269
    %v348 = vpop.f32.mrf.mxu0
    %v349 = vadd.f32 0.0, %v348
    %v350 = vpop.f32.mrf.mxu0
    %v351 = vadd.f32 0.0, %v350
    %v352 = vpop.f32.mrf.mxu0
    %v353 = vadd.f32 0.0, %v352
    %v354 = vpop.f32.mrf.mxu0
    %v355 = vadd.f32 0.0, %v354
    %356 = vdwg.mxu0
    %357 = vmatprep.subr.bf16.mxu0 0
    %358 = vmatpush1.bf16.msra.mxu0 0
    %359 = vmatprep.subr.bf16.mxu0 %v282
    %360 = vmatpush1.bf16.msra.mxu0 %v279
    %361 = vmatprep.subr.bf16.mxu0 %v229
    %362 = vmatpush1.bf16.msra.mxu0 %v228
    %363 = vmatprep.subr.bf16.mxu0 %v225
    %364 = vmatpush1.bf16.msra.mxu0 %v224
    %365 = vmatprep.subr.bf16.mxu0 %v221
    %366 = vmatpush1.bf16.msra.mxu0 %v220
    %367 = vmatprep.subr.bf16.mxu0 %v217
    %368 = vmatpush1.bf16.msra.mxu0 %v216
    %369 = vmatprep.subr.bf16.mxu0 %v213
    %370 = vmatpush1.bf16.msra.mxu0 %v212
    %371 = vmatprep.subr.bf16.mxu0 %v209
    %372 = vmatpush1.bf16.msra.mxu0 %v208
    %373 = vmatprep.subr.bf16.mxu0 0
    %374 = vmatpush2.bf16.msra.mxu0 0
    %375 = vmatprep.subr.bf16.mxu0 0
    %376 = vmatpush2.bf16.msra.mxu0 0
    %377 = vmatprep.subr.bf16.mxu0 0
    %378 = vmatpush2.bf16.msra.mxu0 0
    %379 = vmatprep.subr.bf16.mxu0 0
    %380 = vmatpush2.bf16.msra.mxu0 0
    %381 = vmatprep.subr.bf16.mxu0 0
    %382 = vmatpush2.bf16.msra.mxu0 0
    %383 = vmatprep.subr.bf16.mxu0 0
    %384 = vmatpush2.bf16.msra.mxu0 0
    %385 = vmatprep.subr.bf16.mxu0 0
    %386 = vmatpush2.bf16.msra.mxu0 0
    %387 = vmatprep.subr.bf16.mxu0 0
    %388 = vmatpush2.bf16.msra.mxu0 0
    %389 = vmatprep.mubr.bf16.mxu0 0
    %390 = vmatmul.mubr.bf16.gmra.mxu0 %v260
    %v391 = vpop.f32.mrf.mxu0
    %v392 = vadd.f32 0.0, %v391
    %v393 = vpop.f32.mrf.mxu0
    %v394 = vadd.f32 0.0, %v393
    %v395 = vpop.f32.mrf.mxu0
    %v396 = vadd.f32 0.0, %v395
    %v397 = vpop.f32.mrf.mxu0
    %v398 = vadd.f32 0.0, %v397
    %399 = vmatprep.mubr.bf16.mxu0 0
    %400 = vmatmul.mubr.bf16.gmra.mxu0 %v263
    %v401 = vpop.f32.mrf.mxu0
    %v402 = vadd.f32 0.0, %v401
    %v403 = vpop.f32.mrf.mxu0
    %v404 = vadd.f32 0.0, %v403
    %v405 = vpop.f32.mrf.mxu0
    %v406 = vadd.f32 0.0, %v405
    %v407 = vpop.f32.mrf.mxu0
    %v408 = vadd.f32 0.0, %v407
    %409 = vmatprep.mubr.bf16.mxu0 0
    %410 = vmatmul.mubr.bf16.gmra.mxu0 %v266
    %v411 = vpop.f32.mrf.mxu0
    %v412 = vadd.f32 0.0, %v411
    %v413 = vpop.f32.mrf.mxu0
    %v414 = vadd.f32 0.0, %v413
    %v415 = vpop.f32.mrf.mxu0
    %v416 = vadd.f32 0.0, %v415
    %v417 = vpop.f32.mrf.mxu0
    %v418 = vadd.f32 0.0, %v417
    %419 = vmatprep.mubr.bf16.mxu0 0
    %420 = vmatmul.mubr.bf16.gmra.mxu0 %v269
    %v421 = vpop.f32.mrf.mxu0
    %v422 = vadd.f32 0.0, %v421
    %v423 = vpop.f32.mrf.mxu0
    %v424 = vadd.f32 0.0, %v423
    %v425 = vpop.f32.mrf.mxu0
    %v426 = vadd.f32 0.0, %v425
    %v427 = vpop.f32.mrf.mxu0
    %v428 = vadd.f32 0.0, %v427
    %429 = vdwg.mxu0
    %v458 = vunpack.c.l.b16 %v53
    %v459 = vunpack.c.h.b16 %v53
    %v460 = vunpack.c.l.b16 %v54
    %v461 = vunpack.c.h.b16 %v54
    %v462 = vunpack.c.l.b16 %v55
    %v463 = vunpack.c.h.b16 %v55
    %v464 = vunpack.c.l.b16 %v56
    %v465 = vunpack.c.h.b16 %v56
    %v466 = vunpack.c.l.b16 %v57
    %v467 = vunpack.c.h.b16 %v57
    %v468 = vunpack.c.l.b16 %v58
    %v469 = vunpack.c.h.b16 %v58
    %v470 = vunpack.c.l.b16 %v59
    %v471 = vunpack.c.h.b16 %v59
    %v472 = vunpack.c.l.b16 %v60
    %v473 = vunpack.c.h.b16 %v60
    %v474 = vunpack.c.l.b16 %v61
    %v475 = vunpack.c.h.b16 %v61
    %v476 = vunpack.c.l.b16 %v62
    %v477 = vunpack.c.h.b16 %v62
    %v478 = vunpack.c.l.b16 %v63
    %v479 = vunpack.c.h.b16 %v63
    %v480 = vunpack.c.l.b16 %v64
    %v481 = vunpack.c.h.b16 %v64
    %v482 = vunpack.c.l.b16 %v65
    %v483 = vunpack.c.h.b16 %v65
    %v484 = vunpack.c.l.b16 %v66
    %v485 = vunpack.c.h.b16 %v66
    %v486 = vunpack.c.l.b16 %v67
    %v487 = vunpack.c.h.b16 %v67
    %v488 = vunpack.c.l.b16 %v68
    %v489 = vunpack.c.h.b16 %v68
    %v490 = vunpack.c.l.b16 %v69
    %v491 = vunpack.c.h.b16 %v69
    %v492 = vunpack.c.l.b16 %v70
    %v493 = vunpack.c.h.b16 %v70
    %v494 = vunpack.c.l.b16 %v71
    %v495 = vunpack.c.h.b16 %v71
    %v496 = vunpack.c.l.b16 %v72
    %v497 = vunpack.c.h.b16 %v72
    %v498 = vunpack.c.l.b16 %v73
    %v499 = vunpack.c.h.b16 %v73
    %v500 = vunpack.c.l.b16 %v74
    %v501 = vunpack.c.h.b16 %v74
    %v502 = vunpack.c.l.b16 %v75
    %v503 = vunpack.c.h.b16 %v75
    %v504 = vunpack.c.l.b16 %v76
    %v505 = vunpack.c.h.b16 %v76
    %v506 = vunpack.c.l.b16 %v77
    %v507 = vunpack.c.h.b16 %v77
    %v508 = vunpack.c.l.b16 %v78
    %v509 = vunpack.c.h.b16 %v78
    %v510 = vunpack.c.l.b16 %v79
    %v511 = vunpack.c.h.b16 %v79
    %v512 = vunpack.c.l.b16 %v80
    %v513 = vunpack.c.h.b16 %v80
    %v514 = vpack.c.b16 %v462, %v458
    %v515 = vpack.c.b16 %v463, %v459
    %v516 = vpack.c.b16 %v464, %v460
    %v517 = vpack.c.b16 %v465, %v461
    %v518 = vpack.c.b16 %v470, %v466
    %v519 = vpack.c.b16 %v471, %v467
    %v520 = vpack.c.b16 %v472, %v468
    %v521 = vpack.c.b16 %v473, %v469
    %v522 = vpack.c.b16 %v478, %v474
    %v523 = vpack.c.b16 %v479, %v475
    %v524 = vpack.c.b16 %v480, %v476
    %v525 = vpack.c.b16 %v481, %v477
    %v526 = vpack.c.b16 %v486, %v482
    %v527 = vpack.c.b16 %v487, %v483
    %v528 = vpack.c.b16 %v488, %v484
    %v529 = vpack.c.b16 %v489, %v485
    %v530 = vpack.c.b16 %v494, %v490
    %v531 = vpack.c.b16 %v495, %v491
    %v532 = vpack.c.b16 %v496, %v492
    %v533 = vpack.c.b16 %v497, %v493
    %v534 = vpack.c.b16 %v502, %v498
    %v535 = vpack.c.b16 %v503, %v499
    %v536 = vpack.c.b16 %v504, %v500
    %v537 = vpack.c.b16 %v505, %v501
    %v538 = vpack.c.b16 %v510, %v506
    %v539 = vpack.c.b16 %v511, %v507
    %v540 = vpack.c.b16 %v512, %v508
    %v541 = vpack.c.b16 %v513, %v509
    %v567 = vsel %vm258, %v49, 0
    %v570 = vsel %vm258, %v50, 0
    %v573 = vsel %vm258, %v51, 0
    %v576 = vsel %vm258, %v52, 0
    %v579 = vsel %vm271, %v538, 0
    %v582 = vsel %vm271, %v539, 0
    %v585 = vsel %vm271, %v540, 0
    %v588 = vsel %vm271, %v541, 0
    %590 = vmatprep.subr.bf16.mxu0 0
    %591 = vmatpush1.bf16.msra.mxu0 0
    %592 = vmatprep.subr.bf16.mxu0 %v582
    %593 = vmatpush1.bf16.msra.mxu0 %v579
    %594 = vmatprep.subr.bf16.mxu0 %v535
    %595 = vmatpush1.bf16.msra.mxu0 %v534
    %596 = vmatprep.subr.bf16.mxu0 %v531
    %597 = vmatpush1.bf16.msra.mxu0 %v530
    %598 = vmatprep.subr.bf16.mxu0 %v527
    %599 = vmatpush1.bf16.msra.mxu0 %v526
    %600 = vmatprep.subr.bf16.mxu0 %v523
    %601 = vmatpush1.bf16.msra.mxu0 %v522
    %602 = vmatprep.subr.bf16.mxu0 %v519
    %603 = vmatpush1.bf16.msra.mxu0 %v518
    %604 = vmatprep.subr.bf16.mxu0 %v515
    %605 = vmatpush1.bf16.msra.mxu0 %v514
    %606 = vmatprep.subr.bf16.mxu0 0
    %607 = vmatpush2.bf16.msra.mxu0 0
    %608 = vmatprep.subr.bf16.mxu0 0
    %609 = vmatpush2.bf16.msra.mxu0 0
    %610 = vmatprep.subr.bf16.mxu0 0
    %611 = vmatpush2.bf16.msra.mxu0 0
    %612 = vmatprep.subr.bf16.mxu0 0
    %613 = vmatpush2.bf16.msra.mxu0 0
    %614 = vmatprep.subr.bf16.mxu0 0
    %615 = vmatpush2.bf16.msra.mxu0 0
    %616 = vmatprep.subr.bf16.mxu0 0
    %617 = vmatpush2.bf16.msra.mxu0 0
    %618 = vmatprep.subr.bf16.mxu0 0
    %619 = vmatpush2.bf16.msra.mxu0 0
    %620 = vmatprep.subr.bf16.mxu0 0
    %621 = vmatpush2.bf16.msra.mxu0 0
    %622 = vmatprep.mubr.bf16.mxu0 0
    %623 = vmatmul.mubr.bf16.gmra.mxu0 %v567
    %v624 = vpop.f32.mrf.mxu0
    %v625 = vadd.f32 %v319, %v624
    %v626 = vpop.f32.mrf.mxu0
    %v627 = vadd.f32 %v321, %v626
    %v628 = vpop.f32.mrf.mxu0
    %v629 = vadd.f32 %v323, %v628
    %v630 = vpop.f32.mrf.mxu0
    %v631 = vadd.f32 %v325, %v630
    %632 = vmatprep.mubr.bf16.mxu0 0
    %633 = vmatmul.mubr.bf16.gmra.mxu0 %v570
    %v634 = vpop.f32.mrf.mxu0
    %v635 = vadd.f32 %v329, %v634
    %v636 = vpop.f32.mrf.mxu0
    %v637 = vadd.f32 %v331, %v636
    %v638 = vpop.f32.mrf.mxu0
    %v639 = vadd.f32 %v333, %v638
    %v640 = vpop.f32.mrf.mxu0
    %v641 = vadd.f32 %v335, %v640
    %642 = vmatprep.mubr.bf16.mxu0 0
    %643 = vmatmul.mubr.bf16.gmra.mxu0 %v573
    %v644 = vpop.f32.mrf.mxu0
    %v645 = vadd.f32 %v339, %v644
    %v646 = vpop.f32.mrf.mxu0
    %v647 = vadd.f32 %v341, %v646
    %v648 = vpop.f32.mrf.mxu0
    %v649 = vadd.f32 %v343, %v648
    %v650 = vpop.f32.mrf.mxu0
    %v651 = vadd.f32 %v345, %v650
    %652 = vmatprep.mubr.bf16.mxu0 0
    %653 = vmatmul.mubr.bf16.gmra.mxu0 %v576
    %v654 = vpop.f32.mrf.mxu0
    %v655 = vadd.f32 %v349, %v654
    %v656 = vpop.f32.mrf.mxu0
    %v657 = vadd.f32 %v351, %v656
    %v658 = vpop.f32.mrf.mxu0
    %v659 = vadd.f32 %v353, %v658
    %v660 = vpop.f32.mrf.mxu0
    %v661 = vadd.f32 %v355, %v660
    %662 = vdwg.mxu0
    %663 = vmatprep.subr.bf16.mxu0 0
    %664 = vmatpush1.bf16.msra.mxu0 0
    %665 = vmatprep.subr.bf16.mxu0 %v588
    %666 = vmatpush1.bf16.msra.mxu0 %v585
    %667 = vmatprep.subr.bf16.mxu0 %v537
    %668 = vmatpush1.bf16.msra.mxu0 %v536
    %669 = vmatprep.subr.bf16.mxu0 %v533
    %670 = vmatpush1.bf16.msra.mxu0 %v532
    %671 = vmatprep.subr.bf16.mxu0 %v529
    %672 = vmatpush1.bf16.msra.mxu0 %v528
    %673 = vmatprep.subr.bf16.mxu0 %v525
    %674 = vmatpush1.bf16.msra.mxu0 %v524
    %675 = vmatprep.subr.bf16.mxu0 %v521
    %676 = vmatpush1.bf16.msra.mxu0 %v520
    %677 = vmatprep.subr.bf16.mxu0 %v517
    %678 = vmatpush1.bf16.msra.mxu0 %v516
    %679 = vmatprep.subr.bf16.mxu0 0
    %680 = vmatpush2.bf16.msra.mxu0 0
    %681 = vmatprep.subr.bf16.mxu0 0
    %682 = vmatpush2.bf16.msra.mxu0 0
    %683 = vmatprep.subr.bf16.mxu0 0
    %684 = vmatpush2.bf16.msra.mxu0 0
    %685 = vmatprep.subr.bf16.mxu0 0
    %686 = vmatpush2.bf16.msra.mxu0 0
    %687 = vmatprep.subr.bf16.mxu0 0
    %688 = vmatpush2.bf16.msra.mxu0 0
    %689 = vmatprep.subr.bf16.mxu0 0
    %690 = vmatpush2.bf16.msra.mxu0 0
    %691 = vmatprep.subr.bf16.mxu0 0
    %692 = vmatpush2.bf16.msra.mxu0 0
    %693 = vmatprep.subr.bf16.mxu0 0
    %694 = vmatpush2.bf16.msra.mxu0 0
    %695 = vmatprep.mubr.bf16.mxu0 0
    %696 = vmatmul.mubr.bf16.gmra.mxu0 %v567
    %v697 = vpop.f32.mrf.mxu0
    %v698 = vadd.f32 %v392, %v697
    %v699 = vpop.f32.mrf.mxu0
    %v700 = vadd.f32 %v394, %v699
    %v701 = vpop.f32.mrf.mxu0
    %v702 = vadd.f32 %v396, %v701
    %v703 = vpop.f32.mrf.mxu0
    %v704 = vadd.f32 %v398, %v703
    %705 = vmatprep.mubr.bf16.mxu0 0
    %706 = vmatmul.mubr.bf16.gmra.mxu0 %v570
    %v707 = vpop.f32.mrf.mxu0
    %v708 = vadd.f32 %v402, %v707
    %v709 = vpop.f32.mrf.mxu0
    %v710 = vadd.f32 %v404, %v709
    %v711 = vpop.f32.mrf.mxu0
    %v712 = vadd.f32 %v406, %v711
    %v713 = vpop.f32.mrf.mxu0
    %v714 = vadd.f32 %v408, %v713
    %715 = vmatprep.mubr.bf16.mxu0 0
    %716 = vmatmul.mubr.bf16.gmra.mxu0 %v573
    %v717 = vpop.f32.mrf.mxu0
    %v718 = vadd.f32 %v412, %v717
    %v719 = vpop.f32.mrf.mxu0
    %v720 = vadd.f32 %v414, %v719
    %v721 = vpop.f32.mrf.mxu0
    %v722 = vadd.f32 %v416, %v721
    %v723 = vpop.f32.mrf.mxu0
    %v724 = vadd.f32 %v418, %v723
    %725 = vmatprep.mubr.bf16.mxu0 0
    %726 = vmatmul.mubr.bf16.gmra.mxu0 %v576
    %v727 = vpop.f32.mrf.mxu0
    %v728 = vadd.f32 %v422, %v727
    %v729 = vpop.f32.mrf.mxu0
    %v730 = vadd.f32 %v424, %v729
    %v731 = vpop.f32.mrf.mxu0
    %v732 = vadd.f32 %v426, %v731
    %v733 = vpop.f32.mrf.mxu0
    %v734 = vadd.f32 %v428, %v733
    %735 = vdwg.mxu0
    %v736 = vld [vmem:[%s0 + $0x2] sm:$0xff]
    %v737 = vld [vmem:[%s0 + $0xa] sm:$0xff]
    %v738 = vld [vmem:[%s0 + $0x12] sm:$0xff]
    %v739 = vld [vmem:[%s0 + $0x1a] sm:$0xff]
    %v740 = vld [vmem:[%s0 + $0x2a] sm:$0xff]
    %v741 = vld [vmem:[%s0 + $0x32] sm:$0xff]
    %v742 = vld [vmem:[%s0 + $0x3a] sm:$0xff]
    %v743 = vld [vmem:[%s0 + $0x42] sm:$0xff]
    %v744 = vpack.c.bf16 %v737, %v736
    %v745 = vpack.c.bf16 %v739, %v738
    %v746 = vpack.c.bf16 %v741, %v740
    %v747 = vpack.c.bf16 %v743, %v742
    %s748 = scalar_lea.vmem [#allocation2], 448
    %v749 = vld [vmem:[%s748] sm:$0xff]
    %v750 = vld [vmem:[%s748 + $0x8] sm:$0xff]
    %v751 = vld [vmem:[%s748 + $0x10] sm:$0xff]
    %v752 = vld [vmem:[%s748 + $0x18] sm:$0xff]
    %v753 = vld [vmem:[%s748 + $0x20] sm:$0xff]
    %v754 = vld [vmem:[%s748 + $0x28] sm:$0xff]
    %v755 = vld [vmem:[%s748 + $0x30] sm:$0xff]
    %v756 = vld [vmem:[%s748 + $0x38] sm:$0xff]
    %v757 = vld [vmem:[%s748 + $0x40] sm:$0xff]
    %v758 = vld [vmem:[%s748 + $0x48] sm:$0xff]
    %v759 = vld [vmem:[%s748 + $0x50] sm:$0xff]
    %v760 = vld [vmem:[%s748 + $0x58] sm:$0xff]
    %v761 = vld [vmem:[%s748 + $0x60] sm:$0xff]
    %v762 = vld [vmem:[%s748 + $0x68] sm:$0xff]
    %v763 = vld [vmem:[%s748 + $0x70] sm:$0xff]
    %v764 = vld [vmem:[%s748 + $0x78] sm:$0xff]
    %v765 = vld [vmem:[%s748 + $0x80] sm:$0xff]
    %v766 = vld [vmem:[%s748 + $0x88] sm:$0xff]
    %v767 = vld [vmem:[%s748 + $0x90] sm:$0xff]
    %v768 = vld [vmem:[%s748 + $0x98] sm:$0xff]
    %v769 = vld [vmem:[%s748 + $0xa0] sm:$0xff]
    %v770 = vld [vmem:[%s748 + $0xa8] sm:$0xff]
    %v771 = vld [vmem:[%s748 + $0xb0] sm:$0xff]
    %v772 = vld [vmem:[%s748 + $0xb8] sm:$0xff]
    %v773 = vld [vmem:[%s748 + $0xc0] sm:$0xff]
    %v774 = vld [vmem:[%s748 + $0xc8] sm:$0xff]
    %v775 = vld [vmem:[%s748 + $0xd0] sm:$0x33]
    %v776 = vld [vmem:[%s748 + $0xd8] sm:$0x33]
    %v805 = vunpack.c.l.b16 %v749
    %v806 = vunpack.c.h.b16 %v749
    %v807 = vunpack.c.l.b16 %v750
    %v808 = vunpack.c.h.b16 %v750
    %v809 = vunpack.c.l.b16 %v751
    %v810 = vunpack.c.h.b16 %v751
    %v811 = vunpack.c.l.b16 %v752
    %v812 = vunpack.c.h.b16 %v752
    %v813 = vunpack.c.l.b16 %v753
    %v814 = vunpack.c.h.b16 %v753
    %v815 = vunpack.c.l.b16 %v754
    %v816 = vunpack.c.h.b16 %v754
    %v817 = vunpack.c.l.b16 %v755
    %v818 = vunpack.c.h.b16 %v755
    %v819 = vunpack.c.l.b16 %v756
    %v820 = vunpack.c.h.b16 %v756
    %v821 = vunpack.c.l.b16 %v757
    %v822 = vunpack.c.h.b16 %v757
    %v823 = vunpack.c.l.b16 %v758
    %v824 = vunpack.c.h.b16 %v758
    %v825 = vunpack.c.l.b16 %v759
    %v826 = vunpack.c.h.b16 %v759
    %v827 = vunpack.c.l.b16 %v760
    %v828 = vunpack.c.h.b16 %v760
    %v829 = vunpack.c.l.b16 %v761
    %v830 = vunpack.c.h.b16 %v761
    %v831 = vunpack.c.l.b16 %v762
    %v832 = vunpack.c.h.b16 %v762
    %v833 = vunpack.c.l.b16 %v763
    %v834 = vunpack.c.h.b16 %v763
    %v835 = vunpack.c.l.b16 %v764
    %v836 = vunpack.c.h.b16 %v764
    %v837 = vunpack.c.l.b16 %v765
    %v838 = vunpack.c.h.b16 %v765
    %v839 = vunpack.c.l.b16 %v766
    %v840 = vunpack.c.h.b16 %v766
    %v841 = vunpack.c.l.b16 %v767
    %v842 = vunpack.c.h.b16 %v767
    %v843 = vunpack.c.l.b16 %v768
    %v844 = vunpack.c.h.b16 %v768
    %v845 = vunpack.c.l.b16 %v769
    %v846 = vunpack.c.h.b16 %v769
    %v847 = vunpack.c.l.b16 %v770
    %v848 = vunpack.c.h.b16 %v770
    %v849 = vunpack.c.l.b16 %v771
    %v850 = vunpack.c.h.b16 %v771
    %v851 = vunpack.c.l.b16 %v772
    %v852 = vunpack.c.h.b16 %v772
    %v853 = vunpack.c.l.b16 %v773
    %v854 = vunpack.c.h.b16 %v773
    %v855 = vunpack.c.l.b16 %v774
    %v856 = vunpack.c.h.b16 %v774
    %v857 = vunpack.c.l.b16 %v775
    %v858 = vunpack.c.h.b16 %v775
    %v859 = vunpack.c.l.b16 %v776
    %v860 = vunpack.c.h.b16 %v776
    %v861 = vpack.c.b16 %v809, %v805
    %v862 = vpack.c.b16 %v810, %v806
    %v863 = vpack.c.b16 %v811, %v807
    %v864 = vpack.c.b16 %v812, %v808
    %v865 = vpack.c.b16 %v817, %v813
    %v866 = vpack.c.b16 %v818, %v814
    %v867 = vpack.c.b16 %v819, %v815
    %v868 = vpack.c.b16 %v820, %v816
    %v869 = vpack.c.b16 %v825, %v821
    %v870 = vpack.c.b16 %v826, %v822
    %v871 = vpack.c.b16 %v827, %v823
    %v872 = vpack.c.b16 %v828, %v824
    %v873 = vpack.c.b16 %v833, %v829
    %v874 = vpack.c.b16 %v834, %v830
    %v875 = vpack.c.b16 %v835, %v831
    %v876 = vpack.c.b16 %v836, %v832
    %v877 = vpack.c.b16 %v841, %v837
    %v878 = vpack.c.b16 %v842, %v838
    %v879 = vpack.c.b16 %v843, %v839
    %v880 = vpack.c.b16 %v844, %v840
    %v881 = vpack.c.b16 %v849, %v845
    %v882 = vpack.c.b16 %v850, %v846
    %v883 = vpack.c.b16 %v851, %v847
    %v884 = vpack.c.b16 %v852, %v848
    %v885 = vpack.c.b16 %v857, %v853
    %v886 = vpack.c.b16 %v858, %v854
    %v887 = vpack.c.b16 %v859, %v855
    %v888 = vpack.c.b16 %v860, %v856
    %v914 = vsel %vm258, %v744, 0
    %v917 = vsel %vm258, %v745, 0
    %v920 = vsel %vm258, %v746, 0
    %v923 = vsel %vm258, %v747, 0
    %v926 = vsel %vm271, %v885, 0
    %v929 = vsel %vm271, %v886, 0
    %v932 = vsel %vm271, %v887, 0
    %v935 = vsel %vm271, %v888, 0
    %937 = vmatprep.subr.bf16.mxu0 0
    %938 = vmatpush1.bf16.msra.mxu0 0
    %939 = vmatprep.subr.bf16.mxu0 %v929
    %940 = vmatpush1.bf16.msra.mxu0 %v926
    %941 = vmatprep.subr.bf16.mxu0 %v882
    %942 = vmatpush1.bf16.msra.mxu0 %v881
    %943 = vmatprep.subr.bf16.mxu0 %v878
    %944 = vmatpush1.bf16.msra.mxu0 %v877
    %945 = vmatprep.subr.bf16.mxu0 %v874
    %946 = vmatpush1.bf16.msra.mxu0 %v873
    %947 = vmatprep.subr.bf16.mxu0 %v870
    %948 = vmatpush1.bf16.msra.mxu0 %v869
    %949 = vmatprep.subr.bf16.mxu0 %v866
    %950 = vmatpush1.bf16.msra.mxu0 %v865
    %951 = vmatprep.subr.bf16.mxu0 %v862
    %952 = vmatpush1.bf16.msra.mxu0 %v861
    %953 = vmatprep.subr.bf16.mxu0 0
    %954 = vmatpush2.bf16.msra.mxu0 0
    %955 = vmatprep.subr.bf16.mxu0 0
    %956 = vmatpush2.bf16.msra.mxu0 0
    %957 = vmatprep.subr.bf16.mxu0 0
    %958 = vmatpush2.bf16.msra.mxu0 0
    %959 = vmatprep.subr.bf16.mxu0 0
    %960 = vmatpush2.bf16.msra.mxu0 0
    %961 = vmatprep.subr.bf16.mxu0 0
    %962 = vmatpush2.bf16.msra.mxu0 0
    %963 = vmatprep.subr.bf16.mxu0 0
    %964 = vmatpush2.bf16.msra.mxu0 0
    %965 = vmatprep.subr.bf16.mxu0 0
    %966 = vmatpush2.bf16.msra.mxu0 0
    %967 = vmatprep.subr.bf16.mxu0 0
    %968 = vmatpush2.bf16.msra.mxu0 0
    %969 = vmatprep.mubr.bf16.mxu0 0
    %970 = vmatmul.mubr.bf16.gmra.mxu0 %v914
    %v971 = vpop.f32.mrf.mxu0
    %v972 = vadd.f32 0.0, %v971
    %v973 = vpop.f32.mrf.mxu0
    %v974 = vadd.f32 0.0, %v973
    %v975 = vpop.f32.mrf.mxu0
    %v976 = vadd.f32 0.0, %v975
    %v977 = vpop.f32.mrf.mxu0
    %v978 = vadd.f32 0.0, %v977
    %979 = vmatprep.mubr.bf16.mxu0 0
    %980 = vmatmul.mubr.bf16.gmra.mxu0 %v917
    %v981 = vpop.f32.mrf.mxu0
    %v982 = vadd.f32 0.0, %v981
    %v983 = vpop.f32.mrf.mxu0
    %v984 = vadd.f32 0.0, %v983
    %v985 = vpop.f32.mrf.mxu0
    %v986 = vadd.f32 0.0, %v985
    %v987 = vpop.f32.mrf.mxu0
    %v988 = vadd.f32 0.0, %v987
    %989 = vmatprep.mubr.bf16.mxu0 0
    %990 = vmatmul.mubr.bf16.gmra.mxu0 %v920
    %v991 = vpop.f32.mrf.mxu0
    %v992 = vadd.f32 0.0, %v991
    %v993 = vpop.f32.mrf.mxu0
    %v994 = vadd.f32 0.0, %v993
    %v995 = vpop.f32.mrf.mxu0
    %v996 = vadd.f32 0.0, %v995
    %v997 = vpop.f32.mrf.mxu0
    %v998 = vadd.f32 0.0, %v997
    %999 = vmatprep.mubr.bf16.mxu0 0
    %1000 = vmatmul.mubr.bf16.gmra.mxu0 %v923
    %v1001 = vpop.f32.mrf.mxu0
    %v1002 = vadd.f32 0.0, %v1001
    %v1003 = vpop.f32.mrf.mxu0
    %v1004 = vadd.f32 0.0, %v1003
    %v1005 = vpop.f32.mrf.mxu0
    %v1006 = vadd.f32 0.0, %v1005
    %v1007 = vpop.f32.mrf.mxu0
    %v1008 = vadd.f32 0.0, %v1007
    %1009 = vdwg.mxu0
    %1010 = vmatprep.subr.bf16.mxu0 0
    %1011 = vmatpush1.bf16.msra.mxu0 0
    %1012 = vmatprep.subr.bf16.mxu0 %v935
    %1013 = vmatpush1.bf16.msra.mxu0 %v932
    %1014 = vmatprep.subr.bf16.mxu0 %v884
    %1015 = vmatpush1.bf16.msra.mxu0 %v883
    %1016 = vmatprep.subr.bf16.mxu0 %v880
    %1017 = vmatpush1.bf16.msra.mxu0 %v879
    %1018 = vmatprep.subr.bf16.mxu0 %v876
    %1019 = vmatpush1.bf16.msra.mxu0 %v875
    %1020 = vmatprep.subr.bf16.mxu0 %v872
    %1021 = vmatpush1.bf16.msra.mxu0 %v871
    %1022 = vmatprep.subr.bf16.mxu0 %v868
    %1023 = vmatpush1.bf16.msra.mxu0 %v867
    %1024 = vmatprep.subr.bf16.mxu0 %v864
    %1025 = vmatpush1.bf16.msra.mxu0 %v863
    %1026 = vmatprep.subr.bf16.mxu0 0
    %1027 = vmatpush2.bf16.msra.mxu0 0
    %1028 = vmatprep.subr.bf16.mxu0 0
    %1029 = vmatpush2.bf16.msra.mxu0 0
    %1030 = vmatprep.subr.bf16.mxu0 0
    %1031 = vmatpush2.bf16.msra.mxu0 0
    %1032 = vmatprep.subr.bf16.mxu0 0
    %1033 = vmatpush2.bf16.msra.mxu0 0
    %1034 = vmatprep.subr.bf16.mxu0 0
    %1035 = vmatpush2.bf16.msra.mxu0 0
    %1036 = vmatprep.subr.bf16.mxu0 0
    %1037 = vmatpush2.bf16.msra.mxu0 0
    %1038 = vmatprep.subr.bf16.mxu0 0
    %1039 = vmatpush2.bf16.msra.mxu0 0
    %1040 = vmatprep.subr.bf16.mxu0 0
    %1041 = vmatpush2.bf16.msra.mxu0 0
    %1042 = vmatprep.mubr.bf16.mxu0 0
    %1043 = vmatmul.mubr.bf16.gmra.mxu0 %v914
    %v1044 = vpop.f32.mrf.mxu0
    %v1045 = vadd.f32 0.0, %v1044
    %v1046 = vpop.f32.mrf.mxu0
    %v1047 = vadd.f32 0.0, %v1046
    %v1048 = vpop.f32.mrf.mxu0
    %v1049 = vadd.f32 0.0, %v1048
    %v1050 = vpop.f32.mrf.mxu0
    %v1051 = vadd.f32 0.0, %v1050
    %1052 = vmatprep.mubr.bf16.mxu0 0
    %1053 = vmatmul.mubr.bf16.gmra.mxu0 %v917
    %v1054 = vpop.f32.mrf.mxu0
    %v1055 = vadd.f32 0.0, %v1054
    %v1056 = vpop.f32.mrf.mxu0
    %v1057 = vadd.f32 0.0, %v1056
    %v1058 = vpop.f32.mrf.mxu0
    %v1059 = vadd.f32 0.0, %v1058
    %v1060 = vpop.f32.mrf.mxu0
    %v1061 = vadd.f32 0.0, %v1060
    %1062 = vmatprep.mubr.bf16.mxu0 0
    %1063 = vmatmul.mubr.bf16.gmra.mxu0 %v920
    %v1064 = vpop.f32.mrf.mxu0
    %v1065 = vadd.f32 0.0, %v1064
    %v1066 = vpop.f32.mrf.mxu0
    %v1067 = vadd.f32 0.0, %v1066
    %v1068 = vpop.f32.mrf.mxu0
    %v1069 = vadd.f32 0.0, %v1068
    %v1070 = vpop.f32.mrf.mxu0
    %v1071 = vadd.f32 0.0, %v1070
    %1072 = vmatprep.mubr.bf16.mxu0 0
    %1073 = vmatmul.mubr.bf16.gmra.mxu0 %v923
    %v1074 = vpop.f32.mrf.mxu0
    %v1075 = vadd.f32 0.0, %v1074
    %v1076 = vpop.f32.mrf.mxu0
    %v1077 = vadd.f32 0.0, %v1076
    %v1078 = vpop.f32.mrf.mxu0
    %v1079 = vadd.f32 0.0, %v1078
    %v1080 = vpop.f32.mrf.mxu0
    %v1081 = vadd.f32 0.0, %v1080
    %1082 = vdwg.mxu0
    %v1083 = vadd.f32 %v625, %v972
    %v1084 = vadd.f32 %v627, %v974
    %v1085 = vadd.f32 %v698, %v1045
    %v1086 = vadd.f32 %v700, %v1047
    %v1087 = vadd.f32 %v629, %v976
    %v1088 = vadd.f32 %v631, %v978
    %v1089 = vadd.f32 %v702, %v1049
    %v1090 = vadd.f32 %v704, %v1051
    %v1091 = vadd.f32 %v635, %v982
    %v1092 = vadd.f32 %v637, %v984
    %v1093 = vadd.f32 %v708, %v1055
    %v1094 = vadd.f32 %v710, %v1057
    %v1095 = vadd.f32 %v639, %v986
    %v1096 = vadd.f32 %v641, %v988
    %v1097 = vadd.f32 %v712, %v1059
    %v1098 = vadd.f32 %v714, %v1061
    %v1099 = vadd.f32 %v645, %v992
    %v1100 = vadd.f32 %v647, %v994
    %v1101 = vadd.f32 %v718, %v1065
    %v1102 = vadd.f32 %v720, %v1067
    %v1103 = vadd.f32 %v649, %v996
    %v1104 = vadd.f32 %v651, %v998
    %v1105 = vadd.f32 %v722, %v1069
    %v1106 = vadd.f32 %v724, %v1071
    %v1107 = vadd.f32 %v655, %v1002
    %v1108 = vadd.f32 %v657, %v1004
    %v1109 = vadd.f32 %v728, %v1075
    %v1110 = vadd.f32 %v730, %v1077
    %v1111 = vadd.f32 %v659, %v1006
    %v1112 = vadd.f32 %v661, %v1008
    %v1113 = vadd.f32 %v732, %v1079
    %v1114 = vadd.f32 %v734, %v1081
    %v1115 = vld [vmem:[%s0 + $0x3] sm:$0xff]
    %v1116 = vld [vmem:[%s0 + $0xb] sm:$0xff]
    %v1117 = vld [vmem:[%s0 + $0x13] sm:$0xff]
    %v1118 = vld [vmem:[%s0 + $0x1b] sm:$0xff]
    %v1119 = vld [vmem:[%s0 + $0x2b] sm:$0xff]
    %v1120 = vld [vmem:[%s0 + $0x33] sm:$0xff]
    %v1121 = vld [vmem:[%s0 + $0x3b] sm:$0xff]
    %v1122 = vld [vmem:[%s0 + $0x43] sm:$0xff]
    %v1123 = vpack.c.bf16 %v1116, %v1115
    %v1124 = vpack.c.bf16 %v1118, %v1117
    %v1125 = vpack.c.bf16 %v1120, %v1119
    %v1126 = vpack.c.bf16 %v1122, %v1121
    %s1127 = scalar_lea.vmem [#allocation2], 672
    %v1128 = vld [vmem:[%s1127] sm:$0xff]
    %v1129 = vld [vmem:[%s1127 + $0x8] sm:$0xff]
    %v1130 = vld [vmem:[%s1127 + $0x10] sm:$0xff]
    %v1131 = vld [vmem:[%s1127 + $0x18] sm:$0xff]
    %v1132 = vld [vmem:[%s1127 + $0x20] sm:$0xff]
    %v1133 = vld [vmem:[%s1127 + $0x28] sm:$0xff]
    %v1134 = vld [vmem:[%s1127 + $0x30] sm:$0xff]
    %v1135 = vld [vmem:[%s1127 + $0x38] sm:$0xff]
    %v1136 = vld [vmem:[%s1127 + $0x40] sm:$0xff]
    %v1137 = vld [vmem:[%s1127 + $0x48] sm:$0xff]
    %v1138 = vld [vmem:[%s1127 + $0x50] sm:$0xff]
    %v1139 = vld [vmem:[%s1127 + $0x58] sm:$0xff]
    %v1140 = vld [vmem:[%s1127 + $0x60] sm:$0xff]
    %v1141 = vld [vmem:[%s1127 + $0x68] sm:$0xff]
    %v1142 = vld [vmem:[%s1127 + $0x70] sm:$0xff]
    %v1143 = vld [vmem:[%s1127 + $0x78] sm:$0xff]
    %v1144 = vld [vmem:[%s1127 + $0x80] sm:$0xff]
    %v1145 = vld [vmem:[%s1127 + $0x88] sm:$0xff]
    %v1146 = vld [vmem:[%s1127 + $0x90] sm:$0xff]
    %v1147 = vld [vmem:[%s1127 + $0x98] sm:$0xff]
    %v1148 = vld [vmem:[%s1127 + $0xa0] sm:$0xff]
    %v1149 = vld [vmem:[%s1127 + $0xa8] sm:$0xff]
    %v1150 = vld [vmem:[%s1127 + $0xb0] sm:$0xff]
    %v1151 = vld [vmem:[%s1127 + $0xb8] sm:$0xff]
    %v1152 = vld [vmem:[%s1127 + $0xc0] sm:$0xff]
    %v1153 = vld [vmem:[%s1127 + $0xc8] sm:$0xff]
    %v1154 = vld [vmem:[%s1127 + $0xd0] sm:$0x33]
    %v1155 = vld [vmem:[%s1127 + $0xd8] sm:$0x33]
    %v1184 = vunpack.c.l.b16 %v1128
    %v1185 = vunpack.c.h.b16 %v1128
    %v1186 = vunpack.c.l.b16 %v1129
    %v1187 = vunpack.c.h.b16 %v1129
    %v1188 = vunpack.c.l.b16 %v1130
    %v1189 = vunpack.c.h.b16 %v1130
    %v1190 = vunpack.c.l.b16 %v1131
    %v1191 = vunpack.c.h.b16 %v1131
    %v1192 = vunpack.c.l.b16 %v1132
    %v1193 = vunpack.c.h.b16 %v1132
    %v1194 = vunpack.c.l.b16 %v1133
    %v1195 = vunpack.c.h.b16 %v1133
    %v1196 = vunpack.c.l.b16 %v1134
    %v1197 = vunpack.c.h.b16 %v1134
    %v1198 = vunpack.c.l.b16 %v1135
    %v1199 = vunpack.c.h.b16 %v1135
    %v1200 = vunpack.c.l.b16 %v1136
    %v1201 = vunpack.c.h.b16 %v1136
    %v1202 = vunpack.c.l.b16 %v1137
    %v1203 = vunpack.c.h.b16 %v1137
    %v1204 = vunpack.c.l.b16 %v1138
    %v1205 = vunpack.c.h.b16 %v1138
    %v1206 = vunpack.c.l.b16 %v1139
    %v1207 = vunpack.c.h.b16 %v1139
    %v1208 = vunpack.c.l.b16 %v1140
    %v1209 = vunpack.c.h.b16 %v1140
    %v1210 = vunpack.c.l.b16 %v1141
    %v1211 = vunpack.c.h.b16 %v1141
    %v1212 = vunpack.c.l.b16 %v1142
    %v1213 = vunpack.c.h.b16 %v1142
    %v1214 = vunpack.c.l.b16 %v1143
    %v1215 = vunpack.c.h.b16 %v1143
    %v1216 = vunpack.c.l.b16 %v1144
    %v1217 = vunpack.c.h.b16 %v1144
    %v1218 = vunpack.c.l.b16 %v1145
    %v1219 = vunpack.c.h.b16 %v1145
    %v1220 = vunpack.c.l.b16 %v1146
    %v1221 = vunpack.c.h.b16 %v1146
    %v1222 = vunpack.c.l.b16 %v1147
    %v1223 = vunpack.c.h.b16 %v1147
    %v1224 = vunpack.c.l.b16 %v1148
    %v1225 = vunpack.c.h.b16 %v1148
    %v1226 = vunpack.c.l.b16 %v1149
    %v1227 = vunpack.c.h.b16 %v1149
    %v1228 = vunpack.c.l.b16 %v1150
    %v1229 = vunpack.c.h.b16 %v1150
    %v1230 = vunpack.c.l.b16 %v1151
    %v1231 = vunpack.c.h.b16 %v1151
    %v1232 = vunpack.c.l.b16 %v1152
    %v1233 = vunpack.c.h.b16 %v1152
    %v1234 = vunpack.c.l.b16 %v1153
    %v1235 = vunpack.c.h.b16 %v1153
    %v1236 = vunpack.c.l.b16 %v1154
    %v1237 = vunpack.c.h.b16 %v1154
    %v1238 = vunpack.c.l.b16 %v1155
    %v1239 = vunpack.c.h.b16 %v1155
    %v1240 = vpack.c.b16 %v1188, %v1184
    %v1241 = vpack.c.b16 %v1189, %v1185
    %v1242 = vpack.c.b16 %v1190, %v1186
    %v1243 = vpack.c.b16 %v1191, %v1187
    %v1244 = vpack.c.b16 %v1196, %v1192
    %v1245 = vpack.c.b16 %v1197, %v1193
    %v1246 = vpack.c.b16 %v1198, %v1194
    %v1247 = vpack.c.b16 %v1199, %v1195
    %v1248 = vpack.c.b16 %v1204, %v1200
    %v1249 = vpack.c.b16 %v1205, %v1201
    %v1250 = vpack.c.b16 %v1206, %v1202
    %v1251 = vpack.c.b16 %v1207, %v1203
    %v1252 = vpack.c.b16 %v1212, %v1208
    %v1253 = vpack.c.b16 %v1213, %v1209
    %v1254 = vpack.c.b16 %v1214, %v1210
    %v1255 = vpack.c.b16 %v1215, %v1211
    %v1256 = vpack.c.b16 %v1220, %v1216
    %v1257 = vpack.c.b16 %v1221, %v1217
    %v1258 = vpack.c.b16 %v1222, %v1218
    %v1259 = vpack.c.b16 %v1223, %v1219
    %v1260 = vpack.c.b16 %v1228, %v1224
    %v1261 = vpack.c.b16 %v1229, %v1225
    %v1262 = vpack.c.b16 %v1230, %v1226
    %v1263 = vpack.c.b16 %v1231, %v1227
    %v1264 = vpack.c.b16 %v1236, %v1232
    %v1265 = vpack.c.b16 %v1237, %v1233
    %v1266 = vpack.c.b16 %v1238, %v1234
    %v1267 = vpack.c.b16 %v1239, %v1235
    %v1293 = vsel %vm258, %v1123, 0
    %v1296 = vsel %vm258, %v1124, 0
    %v1299 = vsel %vm258, %v1125, 0
    %v1302 = vsel %vm258, %v1126, 0
    %v1305 = vsel %vm271, %v1264, 0
    %v1308 = vsel %vm271, %v1265, 0
    %v1311 = vsel %vm271, %v1266, 0
    %v1314 = vsel %vm271, %v1267, 0
    %1316 = vmatprep.subr.bf16.mxu0 0
    %1317 = vmatpush1.bf16.msra.mxu0 0
    %1318 = vmatprep.subr.bf16.mxu0 %v1308
    %1319 = vmatpush1.bf16.msra.mxu0 %v1305
    %1320 = vmatprep.subr.bf16.mxu0 %v1261
    %1321 = vmatpush1.bf16.msra.mxu0 %v1260
    %1322 = vmatprep.subr.bf16.mxu0 %v1257
    %1323 = vmatpush1.bf16.msra.mxu0 %v1256
    %1324 = vmatprep.subr.bf16.mxu0 %v1253
    %1325 = vmatpush1.bf16.msra.mxu0 %v1252
    %1326 = vmatprep.subr.bf16.mxu0 %v1249
    %1327 = vmatpush1.bf16.msra.mxu0 %v1248
    %1328 = vmatprep.subr.bf16.mxu0 %v1245
    %1329 = vmatpush1.bf16.msra.mxu0 %v1244
    %1330 = vmatprep.subr.bf16.mxu0 %v1241
    %1331 = vmatpush1.bf16.msra.mxu0 %v1240
    %1332 = vmatprep.subr.bf16.mxu0 0
    %1333 = vmatpush2.bf16.msra.mxu0 0
    %1334 = vmatprep.subr.bf16.mxu0 0
    %1335 = vmatpush2.bf16.msra.mxu0 0
    %1336 = vmatprep.subr.bf16.mxu0 0
    %1337 = vmatpush2.bf16.msra.mxu0 0
    %1338 = vmatprep.subr.bf16.mxu0 0
    %1339 = vmatpush2.bf16.msra.mxu0 0
    %1340 = vmatprep.subr.bf16.mxu0 0
    %1341 = vmatpush2.bf16.msra.mxu0 0
    %1342 = vmatprep.subr.bf16.mxu0 0
    %1343 = vmatpush2.bf16.msra.mxu0 0
    %1344 = vmatprep.subr.bf16.mxu0 0
    %1345 = vmatpush2.bf16.msra.mxu0 0
    %1346 = vmatprep.subr.bf16.mxu0 0
    %1347 = vmatpush2.bf16.msra.mxu0 0
    %1348 = vmatprep.mubr.bf16.mxu0 0
    %1349 = vmatmul.mubr.bf16.gmra.mxu0 %v1293
    %v1350 = vpop.f32.mrf.mxu0
    %v1351 = vadd.f32 0.0, %v1350
    %v1352 = vpop.f32.mrf.mxu0
    %v1353 = vadd.f32 0.0, %v1352
    %v1354 = vpop.f32.mrf.mxu0
    %v1355 = vadd.f32 0.0, %v1354
    %v1356 = vpop.f32.mrf.mxu0
    %v1357 = vadd.f32 0.0, %v1356
    %1358 = vmatprep.mubr.bf16.mxu0 0
    %1359 = vmatmul.mubr.bf16.gmra.mxu0 %v1296
    %v1360 = vpop.f32.mrf.mxu0
    %v1361 = vadd.f32 0.0, %v1360
    %v1362 = vpop.f32.mrf.mxu0
    %v1363 = vadd.f32 0.0, %v1362
    %v1364 = vpop.f32.mrf.mxu0
    %v1365 = vadd.f32 0.0, %v1364
    %v1366 = vpop.f32.mrf.mxu0
    %v1367 = vadd.f32 0.0, %v1366
    %1368 = vmatprep.mubr.bf16.mxu0 0
    %1369 = vmatmul.mubr.bf16.gmra.mxu0 %v1299
    %v1370 = vpop.f32.mrf.mxu0
    %v1371 = vadd.f32 0.0, %v1370
    %v1372 = vpop.f32.mrf.mxu0
    %v1373 = vadd.f32 0.0, %v1372
    %v1374 = vpop.f32.mrf.mxu0
    %v1375 = vadd.f32 0.0, %v1374
    %v1376 = vpop.f32.mrf.mxu0
    %v1377 = vadd.f32 0.0, %v1376
    %1378 = vmatprep.mubr.bf16.mxu0 0
    %1379 = vmatmul.mubr.bf16.gmra.mxu0 %v1302
    %v1380 = vpop.f32.mrf.mxu0
    %v1381 = vadd.f32 0.0, %v1380
    %v1382 = vpop.f32.mrf.mxu0
    %v1383 = vadd.f32 0.0, %v1382
    %v1384 = vpop.f32.mrf.mxu0
    %v1385 = vadd.f32 0.0, %v1384
    %v1386 = vpop.f32.mrf.mxu0
    %v1387 = vadd.f32 0.0, %v1386
    %1388 = vdwg.mxu0
    %1389 = vmatprep.subr.bf16.mxu0 0
    %1390 = vmatpush1.bf16.msra.mxu0 0
    %1391 = vmatprep.subr.bf16.mxu0 %v1314
    %1392 = vmatpush1.bf16.msra.mxu0 %v1311
    %1393 = vmatprep.subr.bf16.mxu0 %v1263
    %1394 = vmatpush1.bf16.msra.mxu0 %v1262
    %1395 = vmatprep.subr.bf16.mxu0 %v1259
    %1396 = vmatpush1.bf16.msra.mxu0 %v1258
    %1397 = vmatprep.subr.bf16.mxu0 %v1255
    %1398 = vmatpush1.bf16.msra.mxu0 %v1254
    %1399 = vmatprep.subr.bf16.mxu0 %v1251
    %1400 = vmatpush1.bf16.msra.mxu0 %v1250
    %1401 = vmatprep.subr.bf16.mxu0 %v1247
    %1402 = vmatpush1.bf16.msra.mxu0 %v1246
    %1403 = vmatprep.subr.bf16.mxu0 %v1243
    %1404 = vmatpush1.bf16.msra.mxu0 %v1242
    %1405 = vmatprep.subr.bf16.mxu0 0
    %1406 = vmatpush2.bf16.msra.mxu0 0
    %1407 = vmatprep.subr.bf16.mxu0 0
    %1408 = vmatpush2.bf16.msra.mxu0 0
    %1409 = vmatprep.subr.bf16.mxu0 0
    %1410 = vmatpush2.bf16.msra.mxu0 0
    %1411 = vmatprep.subr.bf16.mxu0 0
    %1412 = vmatpush2.bf16.msra.mxu0 0
    %1413 = vmatprep.subr.bf16.mxu0 0
    %1414 = vmatpush2.bf16.msra.mxu0 0
    %1415 = vmatprep.subr.bf16.mxu0 0
    %1416 = vmatpush2.bf16.msra.mxu0 0
    %1417 = vmatprep.subr.bf16.mxu0 0
    %1418 = vmatpush2.bf16.msra.mxu0 0
    %1419 = vmatprep.subr.bf16.mxu0 0
    %1420 = vmatpush2.bf16.msra.mxu0 0
    %1421 = vmatprep.mubr.bf16.mxu0 0
    %1422 = vmatmul.mubr.bf16.gmra.mxu0 %v1293
    %v1423 = vpop.f32.mrf.mxu0
    %v1424 = vadd.f32 0.0, %v1423
    %v1425 = vpop.f32.mrf.mxu0
    %v1426 = vadd.f32 0.0, %v1425
    %v1427 = vpop.f32.mrf.mxu0
    %v1428 = vadd.f32 0.0, %v1427
    %v1429 = vpop.f32.mrf.mxu0
    %v1430 = vadd.f32 0.0, %v1429
    %1431 = vmatprep.mubr.bf16.mxu0 0
    %1432 = vmatmul.mubr.bf16.gmra.mxu0 %v1296
    %v1433 = vpop.f32.mrf.mxu0
    %v1434 = vadd.f32 0.0, %v1433
    %v1435 = vpop.f32.mrf.mxu0
    %v1436 = vadd.f32 0.0, %v1435
    %v1437 = vpop.f32.mrf.mxu0
    %v1438 = vadd.f32 0.0, %v1437
    %v1439 = vpop.f32.mrf.mxu0
    %v1440 = vadd.f32 0.0, %v1439
    %1441 = vmatprep.mubr.bf16.mxu0 0
    %1442 = vmatmul.mubr.bf16.gmra.mxu0 %v1299
    %v1443 = vpop.f32.mrf.mxu0
    %v1444 = vadd.f32 0.0, %v1443
    %v1445 = vpop.f32.mrf.mxu0
    %v1446 = vadd.f32 0.0, %v1445
    %v1447 = vpop.f32.mrf.mxu0
    %v1448 = vadd.f32 0.0, %v1447
    %v1449 = vpop.f32.mrf.mxu0
    %v1450 = vadd.f32 0.0, %v1449
    %1451 = vmatprep.mubr.bf16.mxu0 0
    %1452 = vmatmul.mubr.bf16.gmra.mxu0 %v1302
    %v1453 = vpop.f32.mrf.mxu0
    %v1454 = vadd.f32 0.0, %v1453
    %v1455 = vpop.f32.mrf.mxu0
    %v1456 = vadd.f32 0.0, %v1455
    %v1457 = vpop.f32.mrf.mxu0
    %v1458 = vadd.f32 0.0, %v1457
    %v1459 = vpop.f32.mrf.mxu0
    %v1460 = vadd.f32 0.0, %v1459
    %1461 = vdwg.mxu0
    %v1462 = vadd.f32 %v1083, %v1351
    %v1463 = vadd.f32 %v1084, %v1353
    %v1464 = vadd.f32 %v1085, %v1424
    %v1465 = vadd.f32 %v1086, %v1426
    %v1466 = vadd.f32 %v1087, %v1355
    %v1467 = vadd.f32 %v1088, %v1357
    %v1468 = vadd.f32 %v1089, %v1428
    %v1469 = vadd.f32 %v1090, %v1430
    %v1470 = vadd.f32 %v1091, %v1361
    %v1471 = vadd.f32 %v1092, %v1363
    %v1472 = vadd.f32 %v1093, %v1434
    %v1473 = vadd.f32 %v1094, %v1436
    %v1474 = vadd.f32 %v1095, %v1365
    %v1475 = vadd.f32 %v1096, %v1367
    %v1476 = vadd.f32 %v1097, %v1438
    %v1477 = vadd.f32 %v1098, %v1440
    %v1478 = vadd.f32 %v1099, %v1371
    %v1479 = vadd.f32 %v1100, %v1373
    %v1480 = vadd.f32 %v1101, %v1444
    %v1481 = vadd.f32 %v1102, %v1446
    %v1482 = vadd.f32 %v1103, %v1375
    %v1483 = vadd.f32 %v1104, %v1377
    %v1484 = vadd.f32 %v1105, %v1448
    %v1485 = vadd.f32 %v1106, %v1450
    %v1486 = vadd.f32 %v1107, %v1381
    %v1487 = vadd.f32 %v1108, %v1383
    %v1488 = vadd.f32 %v1109, %v1454
    %v1489 = vadd.f32 %v1110, %v1456
    %v1490 = vadd.f32 %v1111, %v1385
    %v1491 = vadd.f32 %v1112, %v1387
    %v1492 = vadd.f32 %v1113, %v1458
    %v1493 = vadd.f32 %v1114, %v1460
    %v1494 = vld [vmem:[%s0 + $0x4] sm:$0xff]
    %v1495 = vld [vmem:[%s0 + $0xc] sm:$0xff]
    %v1496 = vld [vmem:[%s0 + $0x14] sm:$0xff]
    %v1497 = vld [vmem:[%s0 + $0x1c] sm:$0xff]
    %v1498 = vld [vmem:[%s0 + $0x2c] sm:$0xff]
    %v1499 = vld [vmem:[%s0 + $0x34] sm:$0xff]
    %v1500 = vld [vmem:[%s0 + $0x3c] sm:$0xff]
    %v1501 = vld [vmem:[%s0 + $0x44] sm:$0xff]
    %v1502 = vpack.c.bf16 %v1495, %v1494
    %v1503 = vpack.c.bf16 %v1497, %v1496
    %v1504 = vpack.c.bf16 %v1499, %v1498
    %v1505 = vpack.c.bf16 %v1501, %v1500
    %s1506 = scalar_lea.vmem [#allocation2], 896
    %v1507 = vld [vmem:[%s1506] sm:$0xff]
    %v1508 = vld [vmem:[%s1506 + $0x8] sm:$0xff]
    %v1509 = vld [vmem:[%s1506 + $0x10] sm:$0xff]
    %v1510 = vld [vmem:[%s1506 + $0x18] sm:$0xff]
    %v1511 = vld [vmem:[%s1506 + $0x20] sm:$0xff]
    %v1512 = vld [vmem:[%s1506 + $0x28] sm:$0xff]
    %v1513 = vld [vmem:[%s1506 + $0x30] sm:$0xff]
    %v1514 = vld [vmem:[%s1506 + $0x38] sm:$0xff]
    %v1515 = vld [vmem:[%s1506 + $0x40] sm:$0xff]
    %v1516 = vld [vmem:[%s1506 + $0x48] sm:$0xff]
    %v1517 = vld [vmem:[%s1506 + $0x50] sm:$0xff]
    %v1518 = vld [vmem:[%s1506 + $0x58] sm:$0xff]
    %v1519 = vld [vmem:[%s1506 + $0x60] sm:$0xff]
    %v1520 = vld [vmem:[%s1506 + $0x68] sm:$0xff]
    %v1521 = vld [vmem:[%s1506 + $0x70] sm:$0xff]
    %v1522 = vld [vmem:[%s1506 + $0x78] sm:$0xff]
    %v1523 = vld [vmem:[%s1506 + $0x80] sm:$0xff]
    %v1524 = vld [vmem:[%s1506 + $0x88] sm:$0xff]
    %v1525 = vld [vmem:[%s1506 + $0x90] sm:$0xff]
    %v1526 = vld [vmem:[%s1506 + $0x98] sm:$0xff]
    %v1527 = vld [vmem:[%s1506 + $0xa0] sm:$0xff]
    %v1528 = vld [vmem:[%s1506 + $0xa8] sm:$0xff]
    %v1529 = vld [vmem:[%s1506 + $0xb0] sm:$0xff]
    %v1530 = vld [vmem:[%s1506 + $0xb8] sm:$0xff]
    %v1531 = vld [vmem:[%s1506 + $0xc0] sm:$0xff]
    %v1532 = vld [vmem:[%s1506 + $0xc8] sm:$0xff]
    %v1533 = vld [vmem:[%s1506 + $0xd0] sm:$0x33]
    %v1534 = vld [vmem:[%s1506 + $0xd8] sm:$0x33]
    %v1563 = vunpack.c.l.b16 %v1507
    %v1564 = vunpack.c.h.b16 %v1507
    %v1565 = vunpack.c.l.b16 %v1508
    %v1566 = vunpack.c.h.b16 %v1508
    %v1567 = vunpack.c.l.b16 %v1509
    %v1568 = vunpack.c.h.b16 %v1509
    %v1569 = vunpack.c.l.b16 %v1510
    %v1570 = vunpack.c.h.b16 %v1510
    %v1571 = vunpack.c.l.b16 %v1511
    %v1572 = vunpack.c.h.b16 %v1511
    %v1573 = vunpack.c.l.b16 %v1512
    %v1574 = vunpack.c.h.b16 %v1512
    %v1575 = vunpack.c.l.b16 %v1513
    %v1576 = vunpack.c.h.b16 %v1513
    %v1577 = vunpack.c.l.b16 %v1514
    %v1578 = vunpack.c.h.b16 %v1514
    %v1579 = vunpack.c.l.b16 %v1515
    %v1580 = vunpack.c.h.b16 %v1515
    %v1581 = vunpack.c.l.b16 %v1516
    %v1582 = vunpack.c.h.b16 %v1516
    %v1583 = vunpack.c.l.b16 %v1517
    %v1584 = vunpack.c.h.b16 %v1517
    %v1585 = vunpack.c.l.b16 %v1518
    %v1586 = vunpack.c.h.b16 %v1518
    %v1587 = vunpack.c.l.b16 %v1519
    %v1588 = vunpack.c.h.b16 %v1519
    %v1589 = vunpack.c.l.b16 %v1520
    %v1590 = vunpack.c.h.b16 %v1520
    %v1591 = vunpack.c.l.b16 %v1521
    %v1592 = vunpack.c.h.b16 %v1521
    %v1593 = vunpack.c.l.b16 %v1522
    %v1594 = vunpack.c.h.b16 %v1522
    %v1595 = vunpack.c.l.b16 %v1523
    %v1596 = vunpack.c.h.b16 %v1523
    %v1597 = vunpack.c.l.b16 %v1524
    %v1598 = vunpack.c.h.b16 %v1524
    %v1599 = vunpack.c.l.b16 %v1525
    %v1600 = vunpack.c.h.b16 %v1525
    %v1601 = vunpack.c.l.b16 %v1526
    %v1602 = vunpack.c.h.b16 %v1526
    %v1603 = vunpack.c.l.b16 %v1527
    %v1604 = vunpack.c.h.b16 %v1527
    %v1605 = vunpack.c.l.b16 %v1528
    %v1606 = vunpack.c.h.b16 %v1528
    %v1607 = vunpack.c.l.b16 %v1529
    %v1608 = vunpack.c.h.b16 %v1529
    %v1609 = vunpack.c.l.b16 %v1530
    %v1610 = vunpack.c.h.b16 %v1530
    %v1611 = vunpack.c.l.b16 %v1531
    %v1612 = vunpack.c.h.b16 %v1531
    %v1613 = vunpack.c.l.b16 %v1532
    %v1614 = vunpack.c.h.b16 %v1532
    %v1615 = vunpack.c.l.b16 %v1533
    %v1616 = vunpack.c.h.b16 %v1533
    %v1617 = vunpack.c.l.b16 %v1534
    %v1618 = vunpack.c.h.b16 %v1534
    %v1619 = vpack.c.b16 %v1567, %v1563
    %v1620 = vpack.c.b16 %v1568, %v1564
    %v1621 = vpack.c.b16 %v1569, %v1565
    %v1622 = vpack.c.b16 %v1570, %v1566
    %v1623 = vpack.c.b16 %v1575, %v1571
    %v1624 = vpack.c.b16 %v1576, %v1572
    %v1625 = vpack.c.b16 %v1577, %v1573
    %v1626 = vpack.c.b16 %v1578, %v1574
    %v1627 = vpack.c.b16 %v1583, %v1579
    %v1628 = vpack.c.b16 %v1584, %v1580
    %v1629 = vpack.c.b16 %v1585, %v1581
    %v1630 = vpack.c.b16 %v1586, %v1582
    %v1631 = vpack.c.b16 %v1591, %v1587
    %v1632 = vpack.c.b16 %v1592, %v1588
    %v1633 = vpack.c.b16 %v1593, %v1589
    %v1634 = vpack.c.b16 %v1594, %v1590
    %v1635 = vpack.c.b16 %v1599, %v1595
    %v1636 = vpack.c.b16 %v1600, %v1596
    %v1637 = vpack.c.b16 %v1601, %v1597
    %v1638 = vpack.c.b16 %v1602, %v1598
    %v1639 = vpack.c.b16 %v1607, %v1603
    %v1640 = vpack.c.b16 %v1608, %v1604
    %v1641 = vpack.c.b16 %v1609, %v1605
    %v1642 = vpack.c.b16 %v1610, %v1606
    %v1643 = vpack.c.b16 %v1615, %v1611
    %v1644 = vpack.c.b16 %v1616, %v1612
    %v1645 = vpack.c.b16 %v1617, %v1613
    %v1646 = vpack.c.b16 %v1618, %v1614
    %v1672 = vsel %vm258, %v1502, 0
    %v1675 = vsel %vm258, %v1503, 0
    %v1678 = vsel %vm258, %v1504, 0
    %v1681 = vsel %vm258, %v1505, 0
    %v1684 = vsel %vm271, %v1643, 0
    %v1687 = vsel %vm271, %v1644, 0
    %v1690 = vsel %vm271, %v1645, 0
    %v1693 = vsel %vm271, %v1646, 0
    %1695 = vmatprep.subr.bf16.mxu0 0
    %1696 = vmatpush1.bf16.msra.mxu0 0
    %1697 = vmatprep.subr.bf16.mxu0 %v1687
    %1698 = vmatpush1.bf16.msra.mxu0 %v1684
    %1699 = vmatprep.subr.bf16.mxu0 %v1640
    %1700 = vmatpush1.bf16.msra.mxu0 %v1639
    %1701 = vmatprep.subr.bf16.mxu0 %v1636
    %1702 = vmatpush1.bf16.msra.mxu0 %v1635
    %1703 = vmatprep.subr.bf16.mxu0 %v1632
    %1704 = vmatpush1.bf16.msra.mxu0 %v1631
    %1705 = vmatprep.subr.bf16.mxu0 %v1628
    %1706 = vmatpush1.bf16.msra.mxu0 %v1627
    %1707 = vmatprep.subr.bf16.mxu0 %v1624
    %1708 = vmatpush1.bf16.msra.mxu0 %v1623
    %1709 = vmatprep.subr.bf16.mxu0 %v1620
    %1710 = vmatpush1.bf16.msra.mxu0 %v1619
    %1711 = vmatprep.subr.bf16.mxu0 0
    %1712 = vmatpush2.bf16.msra.mxu0 0
    %1713 = vmatprep.subr.bf16.mxu0 0
    %1714 = vmatpush2.bf16.msra.mxu0 0
    %1715 = vmatprep.subr.bf16.mxu0 0
    %1716 = vmatpush2.bf16.msra.mxu0 0
    %1717 = vmatprep.subr.bf16.mxu0 0
    %1718 = vmatpush2.bf16.msra.mxu0 0
    %1719 = vmatprep.subr.bf16.mxu0 0
    %1720 = vmatpush2.bf16.msra.mxu0 0
    %1721 = vmatprep.subr.bf16.mxu0 0
    %1722 = vmatpush2.bf16.msra.mxu0 0
    %1723 = vmatprep.subr.bf16.mxu0 0
    %1724 = vmatpush2.bf16.msra.mxu0 0
    %1725 = vmatprep.subr.bf16.mxu0 0
    %1726 = vmatpush2.bf16.msra.mxu0 0
    %1727 = vmatprep.mubr.bf16.mxu0 0
    %1728 = vmatmul.mubr.bf16.gmra.mxu0 %v1672
    %v1729 = vpop.f32.mrf.mxu0
    %v1730 = vadd.f32 0.0, %v1729
    %v1731 = vpop.f32.mrf.mxu0
    %v1732 = vadd.f32 0.0, %v1731
    %v1733 = vpop.f32.mrf.mxu0
    %v1734 = vadd.f32 0.0, %v1733
    %v1735 = vpop.f32.mrf.mxu0
    %v1736 = vadd.f32 0.0, %v1735
    %1737 = vmatprep.mubr.bf16.mxu0 0
    %1738 = vmatmul.mubr.bf16.gmra.mxu0 %v1675
    %v1739 = vpop.f32.mrf.mxu0
    %v1740 = vadd.f32 0.0, %v1739
    %v1741 = vpop.f32.mrf.mxu0
    %v1742 = vadd.f32 0.0, %v1741
    %v1743 = vpop.f32.mrf.mxu0
    %v1744 = vadd.f32 0.0, %v1743
    %v1745 = vpop.f32.mrf.mxu0
    %v1746 = vadd.f32 0.0, %v1745
    %1747 = vmatprep.mubr.bf16.mxu0 0
    %1748 = vmatmul.mubr.bf16.gmra.mxu0 %v1678
    %v1749 = vpop.f32.mrf.mxu0
    %v1750 = vadd.f32 0.0, %v1749
    %v1751 = vpop.f32.mrf.mxu0
    %v1752 = vadd.f32 0.0, %v1751
    %v1753 = vpop.f32.mrf.mxu0
    %v1754 = vadd.f32 0.0, %v1753
    %v1755 = vpop.f32.mrf.mxu0
    %v1756 = vadd.f32 0.0, %v1755
    %1757 = vmatprep.mubr.bf16.mxu0 0
    %1758 = vmatmul.mubr.bf16.gmra.mxu0 %v1681
    %v1759 = vpop.f32.mrf.mxu0
    %v1760 = vadd.f32 0.0, %v1759
    %v1761 = vpop.f32.mrf.mxu0
    %v1762 = vadd.f32 0.0, %v1761
    %v1763 = vpop.f32.mrf.mxu0
    %v1764 = vadd.f32 0.0, %v1763
    %v1765 = vpop.f32.mrf.mxu0
    %v1766 = vadd.f32 0.0, %v1765
    %1767 = vdwg.mxu0
    %1768 = vmatprep.subr.bf16.mxu0 0
    %1769 = vmatpush1.bf16.msra.mxu0 0
    %1770 = vmatprep.subr.bf16.mxu0 %v1693
    %1771 = vmatpush1.bf16.msra.mxu0 %v1690
    %1772 = vmatprep.subr.bf16.mxu0 %v1642
    %1773 = vmatpush1.bf16.msra.mxu0 %v1641
    %1774 = vmatprep.subr.bf16.mxu0 %v1638
    %1775 = vmatpush1.bf16.msra.mxu0 %v1637
    %1776 = vmatprep.subr.bf16.mxu0 %v1634
    %1777 = vmatpush1.bf16.msra.mxu0 %v1633
    %1778 = vmatprep.subr.bf16.mxu0 %v1630
    %1779 = vmatpush1.bf16.msra.mxu0 %v1629
    %1780 = vmatprep.subr.bf16.mxu0 %v1626
    %1781 = vmatpush1.bf16.msra.mxu0 %v1625
    %1782 = vmatprep.subr.bf16.mxu0 %v1622
    %1783 = vmatpush1.bf16.msra.mxu0 %v1621
    %1784 = vmatprep.subr.bf16.mxu0 0
    %1785 = vmatpush2.bf16.msra.mxu0 0
    %1786 = vmatprep.subr.bf16.mxu0 0
    %1787 = vmatpush2.bf16.msra.mxu0 0
    %1788 = vmatprep.subr.bf16.mxu0 0
    %1789 = vmatpush2.bf16.msra.mxu0 0
    %1790 = vmatprep.subr.bf16.mxu0 0
    %1791 = vmatpush2.bf16.msra.mxu0 0
    %1792 = vmatprep.subr.bf16.mxu0 0
    %1793 = vmatpush2.bf16.msra.mxu0 0
    %1794 = vmatprep.subr.bf16.mxu0 0
    %1795 = vmatpush2.bf16.msra.mxu0 0
    %1796 = vmatprep.subr.bf16.mxu0 0
    %1797 = vmatpush2.bf16.msra.mxu0 0
    %1798 = vmatprep.subr.bf16.mxu0 0
    %1799 = vmatpush2.bf16.msra.mxu0 0
    %1800 = vmatprep.mubr.bf16.mxu0 0
    %1801 = vmatmul.mubr.bf16.gmra.mxu0 %v1672
    %v1802 = vpop.f32.mrf.mxu0
    %v1803 = vadd.f32 0.0, %v1802
    %v1804 = vpop.f32.mrf.mxu0
    %v1805 = vadd.f32 0.0, %v1804
    %v1806 = vpop.f32.mrf.mxu0
    %v1807 = vadd.f32 0.0, %v1806
    %v1808 = vpop.f32.mrf.mxu0
    %v1809 = vadd.f32 0.0, %v1808
    %1810 = vmatprep.mubr.bf16.mxu0 0
    %1811 = vmatmul.mubr.bf16.gmra.mxu0 %v1675
    %v1812 = vpop.f32.mrf.mxu0
    %v1813 = vadd.f32 0.0, %v1812
    %v1814 = vpop.f32.mrf.mxu0
    %v1815 = vadd.f32 0.0, %v1814
    %v1816 = vpop.f32.mrf.mxu0
    %v1817 = vadd.f32 0.0, %v1816
    %v1818 = vpop.f32.mrf.mxu0
    %v1819 = vadd.f32 0.0, %v1818
    %1820 = vmatprep.mubr.bf16.mxu0 0
    %1821 = vmatmul.mubr.bf16.gmra.mxu0 %v1678
    %v1822 = vpop.f32.mrf.mxu0
    %v1823 = vadd.f32 0.0, %v1822
    %v1824 = vpop.f32.mrf.mxu0
    %v1825 = vadd.f32 0.0, %v1824
    %v1826 = vpop.f32.mrf.mxu0
    %v1827 = vadd.f32 0.0, %v1826
    %v1828 = vpop.f32.mrf.mxu0
    %v1829 = vadd.f32 0.0, %v1828
    %1830 = vmatprep.mubr.bf16.mxu0 0
    %1831 = vmatmul.mubr.bf16.gmra.mxu0 %v1681
    %v1832 = vpop.f32.mrf.mxu0
    %v1833 = vadd.f32 0.0, %v1832
    %v1834 = vpop.f32.mrf.mxu0
    %v1835 = vadd.f32 0.0, %v1834
    %v1836 = vpop.f32.mrf.mxu0
    %v1837 = vadd.f32 0.0, %v1836
    %v1838 = vpop.f32.mrf.mxu0
    %v1839 = vadd.f32 0.0, %v1838
    %1840 = vdwg.mxu0
    %v1841 = vadd.f32 %v1462, %v1730
    %v1842 = vadd.f32 %v1463, %v1732
    %v1843 = vadd.f32 %v1464, %v1803
    %v1844 = vadd.f32 %v1465, %v1805
    %v1845 = vadd.f32 %v1466, %v1734
    %v1846 = vadd.f32 %v1467, %v1736
    %v1847 = vadd.f32 %v1468, %v1807
    %v1848 = vadd.f32 %v1469, %v1809
    %v1849 = vadd.f32 %v1470, %v1740
    %v1850 = vadd.f32 %v1471, %v1742
    %v1851 = vadd.f32 %v1472, %v1813
    %v1852 = vadd.f32 %v1473, %v1815
    %v1853 = vadd.f32 %v1474, %v1744
    %v1854 = vadd.f32 %v1475, %v1746
    %v1855 = vadd.f32 %v1476, %v1817
    %v1856 = vadd.f32 %v1477, %v1819
    %v1857 = vadd.f32 %v1478, %v1750
    %v1858 = vadd.f32 %v1479, %v1752
    %v1859 = vadd.f32 %v1480, %v1823
    %v1860 = vadd.f32 %v1481, %v1825
    %v1861 = vadd.f32 %v1482, %v1754
    %v1862 = vadd.f32 %v1483, %v1756
    %v1863 = vadd.f32 %v1484, %v1827
    %v1864 = vadd.f32 %v1485, %v1829
    %v1865 = vadd.f32 %v1486, %v1760
    %v1866 = vadd.f32 %v1487, %v1762
    %v1867 = vadd.f32 %v1488, %v1833
    %v1868 = vadd.f32 %v1489, %v1835
    %v1869 = vadd.f32 %v1490, %v1764
    %v1870 = vadd.f32 %v1491, %v1766
    %v1871 = vadd.f32 %v1492, %v1837
    %v1872 = vadd.f32 %v1493, %v1839
    %v1873 = vld [vmem:[#allocation4] sm:$0xf]
    %v1875 = vlaneseq
    %v1876 = vshrl.u32 %v1875, 7
    %v1877 = vsub.s32 0, %v1876
    %v1878 = vrot.slane %v1873, %v1877
    %v1879 = vlaneseq
    %v1880 = vshrl.u32 %v1879, 7
    %v1881 = vsub.s32 1, %v1880
    %v1882 = vrot.slane %v1873, %v1881
    %v1883 = vlaneseq
    %v1884 = vshrl.u32 %v1883, 7
    %v1885 = vsub.s32 2, %v1884
    %v1886 = vrot.slane %v1873, %v1885
    %v1887 = vlaneseq
    %v1888 = vshrl.u32 %v1887, 7
    %v1889 = vsub.s32 3, %v1888
    %v1890 = vrot.slane %v1873, %v1889
    %v1895 = vadd.f32 %v1841, %v1878
    %v1896 = vadd.f32 %v1842, %v1882
    %v1897 = vadd.f32 %v1843, %v1886
    %v1898 = vadd.f32 %v1844, %v1890
    %v1899 = vadd.f32 %v1845, %v1878
    %v1900 = vadd.f32 %v1846, %v1882
    %v1901 = vadd.f32 %v1847, %v1886
    %v1902 = vadd.f32 %v1848, %v1890
    %v1903 = vadd.f32 %v1849, %v1878
    %v1904 = vadd.f32 %v1850, %v1882
    %v1905 = vadd.f32 %v1851, %v1886
    %v1906 = vadd.f32 %v1852, %v1890
    %v1907 = vadd.f32 %v1853, %v1878
    %v1908 = vadd.f32 %v1854, %v1882
    %v1909 = vadd.f32 %v1855, %v1886
    %v1910 = vadd.f32 %v1856, %v1890
    %v1911 = vadd.f32 %v1857, %v1878
    %v1912 = vadd.f32 %v1858, %v1882
    %v1913 = vadd.f32 %v1859, %v1886
    %v1914 = vadd.f32 %v1860, %v1890
    %v1915 = vadd.f32 %v1861, %v1878
    %v1916 = vadd.f32 %v1862, %v1882
    %v1917 = vadd.f32 %v1863, %v1886
    %v1918 = vadd.f32 %v1864, %v1890
    %v1919 = vadd.f32 %v1865, %v1878
    %v1920 = vadd.f32 %v1866, %v1882
    %v1921 = vadd.f32 %v1867, %v1886
    %v1922 = vadd.f32 %v1868, %v1890
    %v1923 = vadd.f32 %v1869, %v1878
    %v1924 = vadd.f32 %v1870, %v1882
    %v1925 = vadd.f32 %v1871, %v1886
    %v1926 = vadd.f32 %v1872, %v1890
    %v1927 = vmax.f32 %v1895, 0.0
    %v1928 = vmax.f32 %v1896, 0.0
    %v1929 = vmax.f32 %v1897, 0.0
    %v1930 = vmax.f32 %v1898, 0.0
    %v1931 = vmax.f32 %v1899, 0.0
    %v1932 = vmax.f32 %v1900, 0.0
    %v1933 = vmax.f32 %v1901, 0.0
    %v1934 = vmax.f32 %v1902, 0.0
    %v1935 = vmax.f32 %v1903, 0.0
    %v1936 = vmax.f32 %v1904, 0.0
    %v1937 = vmax.f32 %v1905, 0.0
    %v1938 = vmax.f32 %v1906, 0.0
    %v1939 = vmax.f32 %v1907, 0.0
    %v1940 = vmax.f32 %v1908, 0.0
    %v1941 = vmax.f32 %v1909, 0.0
    %v1942 = vmax.f32 %v1910, 0.0
    %v1943 = vmax.f32 %v1911, 0.0
    %v1944 = vmax.f32 %v1912, 0.0
    %v1945 = vmax.f32 %v1913, 0.0
    %v1946 = vmax.f32 %v1914, 0.0
    %v1947 = vmax.f32 %v1915, 0.0
    %v1948 = vmax.f32 %v1916, 0.0
    %v1949 = vmax.f32 %v1917, 0.0
    %v1950 = vmax.f32 %v1918, 0.0
    %v1951 = vmax.f32 %v1919, 0.0
    %v1952 = vmax.f32 %v1920, 0.0
    %v1953 = vmax.f32 %v1921, 0.0
    %v1954 = vmax.f32 %v1922, 0.0
    %v1955 = vmax.f32 %v1923, 0.0
    %v1956 = vmax.f32 %v1924, 0.0
    %v1957 = vmax.f32 %v1925, 0.0
    %v1958 = vmax.f32 %v1926, 0.0
    %v1959 = vmax.f32 %v1927, %v1929
    %v1960 = vmax.f32 %v1928, %v1930
    %v1961 = vmax.f32 %v1931, %v1933
    %v1962 = vmax.f32 %v1932, %v1934
    %v1963 = vmax.f32 %v1935, %v1937
    %v1964 = vmax.f32 %v1936, %v1938
    %v1965 = vmax.f32 %v1939, %v1941
    %v1966 = vmax.f32 %v1940, %v1942
    %v1967 = vmax.f32 %v1943, %v1945
    %v1968 = vmax.f32 %v1944, %v1946
    %v1969 = vmax.f32 %v1947, %v1949
    %v1970 = vmax.f32 %v1948, %v1950
    %v1971 = vmax.f32 %v1951, %v1953
    %v1972 = vmax.f32 %v1952, %v1954
    %v1973 = vmax.f32 %v1955, %v1957
    %v1974 = vmax.f32 %v1956, %v1958
    %v1991 = vcombine.low %v1959, %v1960
    %v1992 = vcombine.high %v1959, %v1960
    %v1994 = vunpack.c.l.s4 1983009808
    %v1995 = vunpack.c.0.s8 %v1994
    %v1996 = vlaneseq
    %v1997 = vshrl.u32 %v1996, 7
    %v1998 = vsub.s32 %v1995, %v1997
    %v1999 = vrot.slane %v1991, %v1998
    %v2001 = vunpack.c.l.s4 1983009808
    %v2002 = vunpack.c.0.s8 %v2001
    %v2003 = vlaneseq
    %v2004 = vshrl.u32 %v2003, 7
    %v2005 = vsub.s32 %v2002, %v2004
    %v2006 = vrot.slane %v1992, %v2005
    %v2007 = vcombine.high %v1999, %v1999
    %v2008 = vcombine.high %v2006, %v2006
    %v2009 = vcombine.low %v1961, %v1962
    %v2010 = vcombine.high %v1961, %v1962
    %v2012 = vunpack.c.l.s4 1983009808
    %v2013 = vunpack.c.0.s8 %v2012
    %v2014 = vlaneseq
    %v2015 = vshrl.u32 %v2014, 7
    %v2016 = vsub.s32 %v2013, %v2015
    %v2017 = vrot.slane %v2009, %v2016
    %v2019 = vunpack.c.l.s4 1983009808
    %v2020 = vunpack.c.0.s8 %v2019
    %v2021 = vlaneseq
    %v2022 = vshrl.u32 %v2021, 7
    %v2023 = vsub.s32 %v2020, %v2022
    %v2024 = vrot.slane %v2010, %v2023
    %v2025 = vcombine.high %v2017, %v2017
    %v2026 = vcombine.high %v2024, %v2024
    %v2027 = vcombine.low %v1963, %v1964
    %v2028 = vcombine.high %v1963, %v1964
    %v2030 = vunpack.c.l.s4 1983009808
    %v2031 = vunpack.c.0.s8 %v2030
    %v2032 = vlaneseq
    %v2033 = vshrl.u32 %v2032, 7
    %v2034 = vsub.s32 %v2031, %v2033
    %v2035 = vrot.slane %v2027, %v2034
    %v2037 = vunpack.c.l.s4 1983009808
    %v2038 = vunpack.c.0.s8 %v2037
    %v2039 = vlaneseq
    %v2040 = vshrl.u32 %v2039, 7
    %v2041 = vsub.s32 %v2038, %v2040
    %v2042 = vrot.slane %v2028, %v2041
    %v2043 = vcombine.high %v2035, %v2035
    %v2044 = vcombine.high %v2042, %v2042
    %v2045 = vcombine.low %v1965, %v1966
    %v2046 = vcombine.high %v1965, %v1966
    %v2048 = vunpack.c.l.s4 1983009808
    %v2049 = vunpack.c.0.s8 %v2048
    %v2050 = vlaneseq
    %v2051 = vshrl.u32 %v2050, 7
    %v2052 = vsub.s32 %v2049, %v2051
    %v2053 = vrot.slane %v2045, %v2052
    %v2055 = vunpack.c.l.s4 1983009808
    %v2056 = vunpack.c.0.s8 %v2055
    %v2057 = vlaneseq
    %v2058 = vshrl.u32 %v2057, 7
    %v2059 = vsub.s32 %v2056, %v2058
    %v2060 = vrot.slane %v2046, %v2059
    %v2061 = vcombine.high %v2053, %v2053
    %v2062 = vcombine.high %v2060, %v2060
    %v2063 = vcombine.low %v1967, %v1968
    %v2064 = vcombine.high %v1967, %v1968
    %v2066 = vunpack.c.l.s4 1983009808
    %v2067 = vunpack.c.0.s8 %v2066
    %v2068 = vlaneseq
    %v2069 = vshrl.u32 %v2068, 7
    %v2070 = vsub.s32 %v2067, %v2069
    %v2071 = vrot.slane %v2063, %v2070
    %v2073 = vunpack.c.l.s4 1983009808
    %v2074 = vunpack.c.0.s8 %v2073
    %v2075 = vlaneseq
    %v2076 = vshrl.u32 %v2075, 7
    %v2077 = vsub.s32 %v2074, %v2076
    %v2078 = vrot.slane %v2064, %v2077
    %v2079 = vcombine.high %v2071, %v2071
    %v2080 = vcombine.high %v2078, %v2078
    %v2081 = vcombine.low %v1969, %v1970
    %v2082 = vcombine.high %v1969, %v1970
    %v2084 = vunpack.c.l.s4 1983009808
    %v2085 = vunpack.c.0.s8 %v2084
    %v2086 = vlaneseq
    %v2087 = vshrl.u32 %v2086, 7
    %v2088 = vsub.s32 %v2085, %v2087
    %v2089 = vrot.slane %v2081, %v2088
    %v2091 = vunpack.c.l.s4 1983009808
    %v2092 = vunpack.c.0.s8 %v2091
    %v2093 = vlaneseq
    %v2094 = vshrl.u32 %v2093, 7
    %v2095 = vsub.s32 %v2092, %v2094
    %v2096 = vrot.slane %v2082, %v2095
    %v2097 = vcombine.high %v2089, %v2089
    %v2098 = vcombine.high %v2096, %v2096
    %v2099 = vcombine.low %v1971, %v1972
    %v2100 = vcombine.high %v1971, %v1972
    %v2102 = vunpack.c.l.s4 1983009808
    %v2103 = vunpack.c.0.s8 %v2102
    %v2104 = vlaneseq
    %v2105 = vshrl.u32 %v2104, 7
    %v2106 = vsub.s32 %v2103, %v2105
    %v2107 = vrot.slane %v2099, %v2106
    %v2109 = vunpack.c.l.s4 1983009808
    %v2110 = vunpack.c.0.s8 %v2109
    %v2111 = vlaneseq
    %v2112 = vshrl.u32 %v2111, 7
    %v2113 = vsub.s32 %v2110, %v2112
    %v2114 = vrot.slane %v2100, %v2113
    %v2115 = vcombine.high %v2107, %v2107
    %v2116 = vcombine.high %v2114, %v2114
    %v2117 = vcombine.low %v1973, %v1974
    %v2118 = vcombine.high %v1973, %v1974
    %v2120 = vunpack.c.l.s4 1983009808
    %v2121 = vunpack.c.0.s8 %v2120
    %v2122 = vlaneseq
    %v2123 = vshrl.u32 %v2122, 7
    %v2124 = vsub.s32 %v2121, %v2123
    %v2125 = vrot.slane %v2117, %v2124
    %v2127 = vunpack.c.l.s4 1983009808
    %v2128 = vunpack.c.0.s8 %v2127
    %v2129 = vlaneseq
    %v2130 = vshrl.u32 %v2129, 7
    %v2131 = vsub.s32 %v2128, %v2130
    %v2132 = vrot.slane %v2118, %v2131
    %v2133 = vcombine.high %v2125, %v2125
    %v2134 = vcombine.high %v2132, %v2132
    %v2167 = vrot.slane %v1999, 7
    %v2168 = vrot.slane %v2167, 2
    %v2169 = vrot.slane %v2007, 7
    %v2170 = vrot.slane %v2169, 2
    %v2171 = vrot.slane %v2006, 7
    %v2172 = vrot.slane %v2171, 2
    %v2173 = vrot.slane %v2008, 7
    %v2174 = vrot.slane %v2173, 2
    %v2175 = vrot.slane %v2017, 7
    %v2176 = vrot.slane %v2175, 2
    %v2177 = vrot.slane %v2025, 7
    %v2178 = vrot.slane %v2177, 2
    %v2179 = vrot.slane %v2024, 7
    %v2180 = vrot.slane %v2179, 2
    %v2181 = vrot.slane %v2026, 7
    %v2182 = vrot.slane %v2181, 2
    %v2183 = vrot.slane %v2035, 7
    %v2184 = vrot.slane %v2183, 2
    %v2185 = vrot.slane %v2043, 7
    %v2186 = vrot.slane %v2185, 2
    %v2187 = vrot.slane %v2042, 7
    %v2188 = vrot.slane %v2187, 2
    %v2189 = vrot.slane %v2044, 7
    %v2190 = vrot.slane %v2189, 2
    %v2191 = vrot.slane %v2053, 7
    %v2192 = vrot.slane %v2191, 2
    %v2193 = vrot.slane %v2061, 7
    %v2194 = vrot.slane %v2193, 2
    %v2195 = vrot.slane %v2060, 7
    %v2196 = vrot.slane %v2195, 2
    %v2197 = vrot.slane %v2062, 7
    %v2198 = vrot.slane %v2197, 2
    %v2199 = vrot.slane %v2071, 7
    %v2200 = vrot.slane %v2199, 2
    %v2201 = vrot.slane %v2079, 7
    %v2202 = vrot.slane %v2201, 2
    %v2203 = vrot.slane %v2078, 7
    %v2204 = vrot.slane %v2203, 2
    %v2205 = vrot.slane %v2080, 7
    %v2206 = vrot.slane %v2205, 2
    %v2207 = vrot.slane %v2089, 7
    %v2208 = vrot.slane %v2207, 2
    %v2209 = vrot.slane %v2097, 7
    %v2210 = vrot.slane %v2209, 2
    %v2211 = vrot.slane %v2096, 7
    %v2212 = vrot.slane %v2211, 2
    %v2213 = vrot.slane %v2098, 7
    %v2214 = vrot.slane %v2213, 2
    %v2215 = vrot.slane %v2107, 7
    %v2216 = vrot.slane %v2215, 2
    %v2217 = vrot.slane %v2115, 7
    %v2218 = vrot.slane %v2217, 2
    %v2219 = vrot.slane %v2114, 7
    %v2220 = vrot.slane %v2219, 2
    %v2221 = vrot.slane %v2116, 7
    %v2222 = vrot.slane %v2221, 2
    %v2223 = vrot.slane %v2125, 7
    %v2224 = vrot.slane %v2223, 2
    %v2225 = vrot.slane %v2133, 7
    %v2226 = vrot.slane %v2225, 2
    %v2227 = vrot.slane %v2132, 7
    %v2228 = vrot.slane %v2227, 2
    %v2229 = vrot.slane %v2134, 7
    %v2230 = vrot.slane %v2229, 2
    %v2263 = vmax.f32 %v1999, %v2168
    %v2264 = vmax.f32 %v2007, %v2170
    %v2265 = vmax.f32 %v2006, %v2172
    %v2266 = vmax.f32 %v2008, %v2174
    %v2267 = vmax.f32 %v2017, %v2176
    %v2268 = vmax.f32 %v2025, %v2178
    %v2269 = vmax.f32 %v2024, %v2180
    %v2270 = vmax.f32 %v2026, %v2182
    %v2271 = vmax.f32 %v2035, %v2184
    %v2272 = vmax.f32 %v2043, %v2186
    %v2273 = vmax.f32 %v2042, %v2188
    %v2274 = vmax.f32 %v2044, %v2190
    %v2275 = vmax.f32 %v2053, %v2192
    %v2276 = vmax.f32 %v2061, %v2194
    %v2277 = vmax.f32 %v2060, %v2196
    %v2278 = vmax.f32 %v2062, %v2198
    %v2279 = vmax.f32 %v2071, %v2200
    %v2280 = vmax.f32 %v2079, %v2202
    %v2281 = vmax.f32 %v2078, %v2204
    %v2282 = vmax.f32 %v2080, %v2206
    %v2283 = vmax.f32 %v2089, %v2208
    %v2284 = vmax.f32 %v2097, %v2210
    %v2285 = vmax.f32 %v2096, %v2212
    %v2286 = vmax.f32 %v2098, %v2214
    %v2287 = vmax.f32 %v2107, %v2216
    %v2288 = vmax.f32 %v2115, %v2218
    %v2289 = vmax.f32 %v2114, %v2220
    %v2290 = vmax.f32 %v2116, %v2222
    %v2291 = vmax.f32 %v2125, %v2224
    %v2292 = vmax.f32 %v2133, %v2226
    %v2293 = vmax.f32 %v2132, %v2228
    %v2294 = vmax.f32 %v2134, %v2230
    %v2327 = vlaneseq
    %v2328 = vshrl.u32 %v2327, 7
    %v2329 = vsub.s32 0, %v2328
    %v2330 = vrot.slane %v2263, %v2329
    %v2331 = vlaneseq
    %v2332 = vshrl.u32 %v2331, 7
    %v2333 = vsub.s32 2, %v2332
    %v2334 = vrot.slane %v2263, %v2333
    %v2335 = vlaneseq
    %v2336 = vshrl.u32 %v2335, 7
    %v2337 = vsub.s32 0, %v2336
    %v2338 = vrot.slane %v2264, %v2337
    %v2339 = vlaneseq
    %v2340 = vshrl.u32 %v2339, 7
    %v2341 = vsub.s32 2, %v2340
    %v2342 = vrot.slane %v2264, %v2341
    %v2343 = vlaneseq
    %v2344 = vshrl.u32 %v2343, 7
    %v2345 = vsub.s32 0, %v2344
    %v2346 = vrot.slane %v2265, %v2345
    %v2347 = vlaneseq
    %v2348 = vshrl.u32 %v2347, 7
    %v2349 = vsub.s32 2, %v2348
    %v2350 = vrot.slane %v2265, %v2349
    %v2351 = vlaneseq
    %v2352 = vshrl.u32 %v2351, 7
    %v2353 = vsub.s32 0, %v2352
    %v2354 = vrot.slane %v2266, %v2353
    %v2355 = vlaneseq
    %v2356 = vshrl.u32 %v2355, 7
    %v2357 = vsub.s32 2, %v2356
    %v2358 = vrot.slane %v2266, %v2357
    %v2359 = vlaneseq
    %v2360 = vshrl.u32 %v2359, 7
    %v2361 = vsub.s32 0, %v2360
    %v2362 = vrot.slane %v2267, %v2361
    %v2363 = vlaneseq
    %v2364 = vshrl.u32 %v2363, 7
    %v2365 = vsub.s32 2, %v2364
    %v2366 = vrot.slane %v2267, %v2365
    %v2367 = vlaneseq
    %v2368 = vshrl.u32 %v2367, 7
    %v2369 = vsub.s32 0, %v2368
    %v2370 = vrot.slane %v2268, %v2369
    %v2371 = vlaneseq
    %v2372 = vshrl.u32 %v2371, 7
    %v2373 = vsub.s32 2, %v2372
    %v2374 = vrot.slane %v2268, %v2373
    %v2375 = vlaneseq
    %v2376 = vshrl.u32 %v2375, 7
    %v2377 = vsub.s32 0, %v2376
    %v2378 = vrot.slane %v2269, %v2377
    %v2379 = vlaneseq
    %v2380 = vshrl.u32 %v2379, 7
    %v2381 = vsub.s32 2, %v2380
    %v2382 = vrot.slane %v2269, %v2381
    %v2383 = vlaneseq
    %v2384 = vshrl.u32 %v2383, 7
    %v2385 = vsub.s32 0, %v2384
    %v2386 = vrot.slane %v2270, %v2385
    %v2387 = vlaneseq
    %v2388 = vshrl.u32 %v2387, 7
    %v2389 = vsub.s32 2, %v2388
    %v2390 = vrot.slane %v2270, %v2389
    %v2391 = vlaneseq
    %v2392 = vshrl.u32 %v2391, 7
    %v2393 = vsub.s32 0, %v2392
    %v2394 = vrot.slane %v2271, %v2393
    %v2395 = vlaneseq
    %v2396 = vshrl.u32 %v2395, 7
    %v2397 = vsub.s32 2, %v2396
    %v2398 = vrot.slane %v2271, %v2397
    %v2399 = vlaneseq
    %v2400 = vshrl.u32 %v2399, 7
    %v2401 = vsub.s32 0, %v2400
    %v2402 = vrot.slane %v2272, %v2401
    %v2403 = vlaneseq
    %v2404 = vshrl.u32 %v2403, 7
    %v2405 = vsub.s32 2, %v2404
    %v2406 = vrot.slane %v2272, %v2405
    %v2407 = vlaneseq
    %v2408 = vshrl.u32 %v2407, 7
    %v2409 = vsub.s32 0, %v2408
    %v2410 = vrot.slane %v2273, %v2409
    %v2411 = vlaneseq
    %v2412 = vshrl.u32 %v2411, 7
    %v2413 = vsub.s32 2, %v2412
    %v2414 = vrot.slane %v2273, %v2413
    %v2415 = vlaneseq
    %v2416 = vshrl.u32 %v2415, 7
    %v2417 = vsub.s32 0, %v2416
    %v2418 = vrot.slane %v2274, %v2417
    %v2419 = vlaneseq
    %v2420 = vshrl.u32 %v2419, 7
    %v2421 = vsub.s32 2, %v2420
    %v2422 = vrot.slane %v2274, %v2421
    %v2423 = vlaneseq
    %v2424 = vshrl.u32 %v2423, 7
    %v2425 = vsub.s32 0, %v2424
    %v2426 = vrot.slane %v2275, %v2425
    %v2427 = vlaneseq
    %v2428 = vshrl.u32 %v2427, 7
    %v2429 = vsub.s32 2, %v2428
    %v2430 = vrot.slane %v2275, %v2429
    %v2431 = vlaneseq
    %v2432 = vshrl.u32 %v2431, 7
    %v2433 = vsub.s32 0, %v2432
    %v2434 = vrot.slane %v2276, %v2433
    %v2435 = vlaneseq
    %v2436 = vshrl.u32 %v2435, 7
    %v2437 = vsub.s32 2, %v2436
    %v2438 = vrot.slane %v2276, %v2437
    %v2439 = vlaneseq
    %v2440 = vshrl.u32 %v2439, 7
    %v2441 = vsub.s32 0, %v2440
    %v2442 = vrot.slane %v2277, %v2441
    %v2443 = vlaneseq
    %v2444 = vshrl.u32 %v2443, 7
    %v2445 = vsub.s32 2, %v2444
    %v2446 = vrot.slane %v2277, %v2445
    %v2447 = vlaneseq
    %v2448 = vshrl.u32 %v2447, 7
    %v2449 = vsub.s32 0, %v2448
    %v2450 = vrot.slane %v2278, %v2449
    %v2451 = vlaneseq
    %v2452 = vshrl.u32 %v2451, 7
    %v2453 = vsub.s32 2, %v2452
    %v2454 = vrot.slane %v2278, %v2453
    %v2455 = vlaneseq
    %v2456 = vshrl.u32 %v2455, 7
    %v2457 = vsub.s32 0, %v2456
    %v2458 = vrot.slane %v2279, %v2457
    %v2459 = vlaneseq
    %v2460 = vshrl.u32 %v2459, 7
    %v2461 = vsub.s32 2, %v2460
    %v2462 = vrot.slane %v2279, %v2461
    %v2463 = vlaneseq
    %v2464 = vshrl.u32 %v2463, 7
    %v2465 = vsub.s32 0, %v2464
    %v2466 = vrot.slane %v2280, %v2465
    %v2467 = vlaneseq
    %v2468 = vshrl.u32 %v2467, 7
    %v2469 = vsub.s32 2, %v2468
    %v2470 = vrot.slane %v2280, %v2469
    %v2471 = vlaneseq
    %v2472 = vshrl.u32 %v2471, 7
    %v2473 = vsub.s32 0, %v2472
    %v2474 = vrot.slane %v2281, %v2473
    %v2475 = vlaneseq
    %v2476 = vshrl.u32 %v2475, 7
    %v2477 = vsub.s32 2, %v2476
    %v2478 = vrot.slane %v2281, %v2477
    %v2479 = vlaneseq
    %v2480 = vshrl.u32 %v2479, 7
    %v2481 = vsub.s32 0, %v2480
    %v2482 = vrot.slane %v2282, %v2481
    %v2483 = vlaneseq
    %v2484 = vshrl.u32 %v2483, 7
    %v2485 = vsub.s32 2, %v2484
    %v2486 = vrot.slane %v2282, %v2485
    %v2487 = vlaneseq
    %v2488 = vshrl.u32 %v2487, 7
    %v2489 = vsub.s32 0, %v2488
    %v2490 = vrot.slane %v2283, %v2489
    %v2491 = vlaneseq
    %v2492 = vshrl.u32 %v2491, 7
    %v2493 = vsub.s32 2, %v2492
    %v2494 = vrot.slane %v2283, %v2493
    %v2495 = vlaneseq
    %v2496 = vshrl.u32 %v2495, 7
    %v2497 = vsub.s32 0, %v2496
    %v2498 = vrot.slane %v2284, %v2497
    %v2499 = vlaneseq
    %v2500 = vshrl.u32 %v2499, 7
    %v2501 = vsub.s32 2, %v2500
    %v2502 = vrot.slane %v2284, %v2501
    %v2503 = vlaneseq
    %v2504 = vshrl.u32 %v2503, 7
    %v2505 = vsub.s32 0, %v2504
    %v2506 = vrot.slane %v2285, %v2505
    %v2507 = vlaneseq
    %v2508 = vshrl.u32 %v2507, 7
    %v2509 = vsub.s32 2, %v2508
    %v2510 = vrot.slane %v2285, %v2509
    %v2511 = vlaneseq
    %v2512 = vshrl.u32 %v2511, 7
    %v2513 = vsub.s32 0, %v2512
    %v2514 = vrot.slane %v2286, %v2513
    %v2515 = vlaneseq
    %v2516 = vshrl.u32 %v2515, 7
    %v2517 = vsub.s32 2, %v2516
    %v2518 = vrot.slane %v2286, %v2517
    %v2519 = vlaneseq
    %v2520 = vshrl.u32 %v2519, 7
    %v2521 = vsub.s32 0, %v2520
    %v2522 = vrot.slane %v2287, %v2521
    %v2523 = vlaneseq
    %v2524 = vshrl.u32 %v2523, 7
    %v2525 = vsub.s32 2, %v2524
    %v2526 = vrot.slane %v2287, %v2525
    %v2527 = vlaneseq
    %v2528 = vshrl.u32 %v2527, 7
    %v2529 = vsub.s32 0, %v2528
    %v2530 = vrot.slane %v2288, %v2529
    %v2531 = vlaneseq
    %v2532 = vshrl.u32 %v2531, 7
    %v2533 = vsub.s32 2, %v2532
    %v2534 = vrot.slane %v2288, %v2533
    %v2535 = vlaneseq
    %v2536 = vshrl.u32 %v2535, 7
    %v2537 = vsub.s32 0, %v2536
    %v2538 = vrot.slane %v2289, %v2537
    %v2539 = vlaneseq
    %v2540 = vshrl.u32 %v2539, 7
    %v2541 = vsub.s32 2, %v2540
    %v2542 = vrot.slane %v2289, %v2541
    %v2543 = vlaneseq
    %v2544 = vshrl.u32 %v2543, 7
    %v2545 = vsub.s32 0, %v2544
    %v2546 = vrot.slane %v2290, %v2545
    %v2547 = vlaneseq
    %v2548 = vshrl.u32 %v2547, 7
    %v2549 = vsub.s32 2, %v2548
    %v2550 = vrot.slane %v2290, %v2549
    %v2551 = vlaneseq
    %v2552 = vshrl.u32 %v2551, 7
    %v2553 = vsub.s32 0, %v2552
    %v2554 = vrot.slane %v2291, %v2553
    %v2555 = vlaneseq
    %v2556 = vshrl.u32 %v2555, 7
    %v2557 = vsub.s32 2, %v2556
    %v2558 = vrot.slane %v2291, %v2557
    %v2559 = vlaneseq
    %v2560 = vshrl.u32 %v2559, 7
    %v2561 = vsub.s32 0, %v2560
    %v2562 = vrot.slane %v2292, %v2561
    %v2563 = vlaneseq
    %v2564 = vshrl.u32 %v2563, 7
    %v2565 = vsub.s32 2, %v2564
    %v2566 = vrot.slane %v2292, %v2565
    %v2567 = vlaneseq
    %v2568 = vshrl.u32 %v2567, 7
    %v2569 = vsub.s32 0, %v2568
    %v2570 = vrot.slane %v2293, %v2569
    %v2571 = vlaneseq
    %v2572 = vshrl.u32 %v2571, 7
    %v2573 = vsub.s32 2, %v2572
    %v2574 = vrot.slane %v2293, %v2573
    %v2575 = vlaneseq
    %v2576 = vshrl.u32 %v2575, 7
    %v2577 = vsub.s32 0, %v2576
    %v2578 = vrot.slane %v2294, %v2577
    %v2579 = vlaneseq
    %v2580 = vshrl.u32 %v2579, 7
    %v2581 = vsub.s32 2, %v2580
    %v2582 = vrot.slane %v2294, %v2581
    %vm2583 = vcmask 1041409
    %v2584 = vsel %vm2583, %v2338, %v2330
    %vm2585 = vcmask 1042434
    %v2586 = vsel %vm2585, %v2346, %v2584
    %vm2587 = vcmask 1043459
    %v2588 = vsel %vm2587, %v2354, %v2586
    %vm2589 = vcmask 1044484
    %v2590 = vsel %vm2589, %v2362, %v2588
    %vm2591 = vcmask 1045509
    %v2592 = vsel %vm2591, %v2370, %v2590
    %vm2593 = vcmask 1046534
    %v2594 = vsel %vm2593, %v2378, %v2592
    %vm2595 = vcmask 1047559
    %v2596 = vsel %vm2595, %v2386, %v2594
    %v2597 = vsel %vm2583, %v2342, %v2334
    %v2598 = vsel %vm2585, %v2350, %v2597
    %v2599 = vsel %vm2587, %v2358, %v2598
    %v2600 = vsel %vm2589, %v2366, %v2599
    %v2601 = vsel %vm2591, %v2374, %v2600
    %v2602 = vsel %vm2593, %v2382, %v2601
    %v2603 = vsel %vm2595, %v2390, %v2602
    %v2604 = vsel %vm2583, %v2402, %v2394
    %v2605 = vsel %vm2585, %v2410, %v2604
    %v2606 = vsel %vm2587, %v2418, %v2605
    %v2607 = vsel %vm2589, %v2426, %v2606
    %v2608 = vsel %vm2591, %v2434, %v2607
    %v2609 = vsel %vm2593, %v2442, %v2608
    %v2610 = vsel %vm2595, %v2450, %v2609
    %v2611 = vsel %vm2583, %v2406, %v2398
    %v2612 = vsel %vm2585, %v2414, %v2611
    %v2613 = vsel %vm2587, %v2422, %v2612
    %v2614 = vsel %vm2589, %v2430, %v2613
    %v2615 = vsel %vm2591, %v2438, %v2614
    %v2616 = vsel %vm2593, %v2446, %v2615
    %v2617 = vsel %vm2595, %v2454, %v2616
    %v2618 = vsel %vm2583, %v2466, %v2458
    %v2619 = vsel %vm2585, %v2474, %v2618
    %v2620 = vsel %vm2587, %v2482, %v2619
    %v2621 = vsel %vm2589, %v2490, %v2620
    %v2622 = vsel %vm2591, %v2498, %v2621
    %v2623 = vsel %vm2593, %v2506, %v2622
    %v2624 = vsel %vm2595, %v2514, %v2623
    %v2625 = vsel %vm2583, %v2470, %v2462
    %v2626 = vsel %vm2585, %v2478, %v2625
    %v2627 = vsel %vm2587, %v2486, %v2626
    %v2628 = vsel %vm2589, %v2494, %v2627
    %v2629 = vsel %vm2591, %v2502, %v2628
    %v2630 = vsel %vm2593, %v2510, %v2629
    %v2631 = vsel %vm2595, %v2518, %v2630
    %v2632 = vsel %vm2583, %v2530, %v2522
    %v2633 = vsel %vm2585, %v2538, %v2632
    %v2634 = vsel %vm2587, %v2546, %v2633
    %v2635 = vsel %vm2589, %v2554, %v2634
    %v2636 = vsel %vm2591, %v2562, %v2635
    %v2637 = vsel %vm2593, %v2570, %v2636
    %v2638 = vsel %vm2595, %v2578, %v2637
    %v2639 = vsel %vm2583, %v2534, %v2526
    %v2640 = vsel %vm2585, %v2542, %v2639
    %v2641 = vsel %vm2587, %v2550, %v2640
    %v2642 = vsel %vm2589, %v2558, %v2641
    %v2643 = vsel %vm2591, %v2566, %v2642
    %v2644 = vsel %vm2593, %v2574, %v2643
    %v2645 = vsel %vm2595, %v2582, %v2644
    %2654 = vst [vmem:[%s3] sm:$0xff] %v2596
    %2655 = vst [vmem:[%s3 + $0x8] sm:$0xff] %v2603
    %2656 = vst [vmem:[%s3 + $0x10] sm:$0xff] %v2610
    %2657 = vst [vmem:[%s3 + $0x18] sm:$0xff] %v2617
    %2658 = vst [vmem:[%s3 + $0x20] sm:$0xff] %v2624
    %2659 = vst [vmem:[%s3 + $0x28] sm:$0xff] %v2631
    %2660 = vst [vmem:[%s3 + $0x30] sm:$0xff] %v2638
    %2661 = vst [vmem:[%s3 + $0x38] sm:$0xff] %v2645
    // Predicated region
    $region22: #{binary_classifier_cnn.3} parent=1 // pred_check
      _
    $region23: #{binary_classifier_cnn.3} parent=1 // pred_check_branch
      %2663 = sbr.rel (0) target = $region25
    $region24: #{binary_classifier_cnn.3} parent=1 // pred_region
      _
    $region25: #{binary_classifier_cnn.3} parent=1 // pred_fallthru
      _
    // Predicated region
    $region26: #{binary_classifier_cnn.3} parent=1 // pred_check
      _
    $region27: #{binary_classifier_cnn.3} parent=1 // pred_check_branch
      %2665 = sbr.rel (0) target = $region29
    $region28: #{binary_classifier_cnn.3} parent=1 // pred_region
      _
    $region29: #{binary_classifier_cnn.3} parent=1 // pred_fallthru
      _
    %2666 = vsyncpa [#allocation3], 1
    %2667 = vsyncpa [#allocation5], 1

// kernel: binary_classifier_cnn.5
$region0: #{binary_classifier_cnn.5}
  #allocation0 [shape = 'u32[]', space=smem, size = 0x4, offset = 0x4, fixed_abs, tag = 'smem constant byte address 0x4 - core index']
  #allocation1 [shape = 'u32[144,128]{1,0:T(1,128)}', space=vmem, size = 0x12000, scoped, tag = 'internal scratch']
  #allocation2 [shape = 'f32[2,512]{1,0:T(2,128)}', space=vmem, size = 0x1000, scoped, tag = 'scratch operand']
  %s0 = inlined_call_operand.vmem [shape: f32[2,2048], index: 0, kind: input, shape index: {}]
  %s1 = inlined_call_operand.vmem [shape: bf16[2048,1024], index: 1, kind: input, shape index: {}]
  %s2 = inlined_call_operand.vmem [shape: f32[1,1024], index: 2, kind: input, shape index: {}]
  %s3 = inlined_call_operand.vmem [shape: f32[2,1024], index: 3, kind: output, shape index: {}]
  %s4 = sld [smem:[#allocation0]]
  $region76: #{binary_classifier_cnn.5} parent=0
    _
  %s6 = ssub.s32 1, %s4
  %s7 = scalar_select 0, %s6, %s4
  $region1: #{binary_classifier_cnn.5} parent=0
    #allocation3 [shape = 'u8[1048576]{0}', space=vmem, size = 0x100000, scoped, tag = 'input window, operand 1']
    loop: start=0, step=1, limit=10
    $region2: #{binary_classifier_cnn.5} parent=1 // loop_pre_header
      _
    $region3: #{binary_classifier_cnn.5} parent=1 // loop_header
      %s9 = sphi 0, %s13
      %p10 = scmp.ge.s32.totalorder %s9, 10
      %s16 = sphi 0, %s28
      %s17 = sphi 0, %s24
      %s18 = sphi 0, %s16
      %s19 = sphi 0, %s17
      %s20 = sphi 0, %s18
      %s21 = sphi 0, %s19
      %s31 = sphi 0, %s33
      %s34 = sphi 0, %s31
      %s35 = sphi 0, %s34
      %s51 = sphi 0, %s35
      %s59 = sphi 0, %s61
      %s62 = sphi 0, %s59
      %s63 = sphi 0, %s62
      %s79 = sphi 0, %s63
      %s85 = sphi 0, %s87
      %s88 = sphi 0, %s85
      %s89 = sphi 0, %s88
      %s105 = sphi 0, %s89
      %s111 = sphi 0, %s113
      %s114 = sphi 0, %s111
      %s115 = sphi 0, %s114
      %s131 = sphi 0, %s115
    $region4: #{binary_classifier_cnn.5} parent=1 // loop_header_branch
      %12 = sbr.rel (%p10) target = $region8
    $region5: #{binary_classifier_cnn.5} parent=1 // loop_body
      %s14 = ssub.s32 %s9, 1
      %s15 = ssub.s32 %s9, 2
      %s22 = sadd.s32 1, %s17
      %p23 = scmp.ge.s32.totalorder %s22, 4
      %s24 = scalar_select %p23, 0, %s22
      %s25 = sadd.s32 1, %s16
      %s26 = scalar_select %p23, %s25, %s16
      %p27 = scmp.ge.s32.totalorder %s26, 2
      %s28 = scalar_select %p27, 0, %s26
      %s29 = ssub.s32 %s17, %s24
      %p30 = scmp.eq.s32.totalorder %s29, 0
      %s32 = sadd.s32 %s31, 1
      %s33 = scalar_select %p30, %s31, %s32
      %p36 = pneg %p30
      %p37 = scmp.eq.s32.totalorder %s9, 7
      %p38 = por %p36, %p37
      %p39 = scmp.ne.s32.totalorder %s31, %s34
      %p40 = scmp.eq.s32.totalorder %s9, 0
      %p41 = por %p39, %p40
      %p42 = scmp.ne.s32.totalorder %s31, %s34
      %p43 = scmp.eq.s32.totalorder %s14, 7
      %p44 = por %p42, %p43
      %p45 = scmp.ne.s32.totalorder %s34, %s35
      %p46 = scmp.eq.s32.totalorder %s14, 0
      %p47 = por %p45, %p46
      %p48 = scmp.ne.s32.totalorder %s34, %s35
      %p49 = scmp.eq.s32.totalorder %s15, 7
      %p50 = por %p48, %p49
      %p52 = scmp.ne.s32.totalorder %s35, %s51
      %p53 = scmp.eq.s32.totalorder %s15, 0
      %p54 = por %p52, %p53
      %s55 = ssub.s32 %s17, %s24
      %s56 = ssub.s32 %s16, %s28
      %s57 = sor.u32 %s55, %s56
      %p58 = scmp.eq.s32.totalorder %s57, 0
      %s60 = sadd.s32 %s59, 1
      %s61 = scalar_select %p58, %s59, %s60
      %p64 = pneg %p58
      %p65 = scmp.eq.s32.totalorder %s9, 7
      %p66 = por %p64, %p65
      %p67 = scmp.ne.s32.totalorder %s59, %s62
      %p68 = scmp.eq.s32.totalorder %s9, 0
      %p69 = por %p67, %p68
      %p70 = scmp.ne.s32.totalorder %s59, %s62
      %p71 = scmp.eq.s32.totalorder %s14, 7
      %p72 = por %p70, %p71
      %p73 = scmp.ne.s32.totalorder %s62, %s63
      %p74 = scmp.eq.s32.totalorder %s14, 0
      %p75 = por %p73, %p74
      %p76 = scmp.ne.s32.totalorder %s62, %s63
      %p77 = scmp.eq.s32.totalorder %s15, 7
      %p78 = por %p76, %p77
      %p80 = scmp.ne.s32.totalorder %s63, %s79
      %p81 = scmp.eq.s32.totalorder %s15, 0
      %p82 = por %p80, %p81
      %s83 = ssub.s32 %s16, %s28
      %p84 = scmp.eq.s32.totalorder %s83, 0
      %s86 = sadd.s32 %s85, 1
      %s87 = scalar_select %p84, %s85, %s86
      %p90 = pneg %p84
      %p91 = scmp.eq.s32.totalorder %s9, 7
      %p92 = por %p90, %p91
      %p93 = scmp.ne.s32.totalorder %s85, %s88
      %p94 = scmp.eq.s32.totalorder %s9, 0
      %p95 = por %p93, %p94
      %p96 = scmp.ne.s32.totalorder %s85, %s88
      %p97 = scmp.eq.s32.totalorder %s14, 7
      %p98 = por %p96, %p97
      %p99 = scmp.ne.s32.totalorder %s88, %s89
      %p100 = scmp.eq.s32.totalorder %s14, 0
      %p101 = por %p99, %p100
      %p102 = scmp.ne.s32.totalorder %s88, %s89
      %p103 = scmp.eq.s32.totalorder %s15, 7
      %p104 = por %p102, %p103
      %p106 = scmp.ne.s32.totalorder %s89, %s105
      %p107 = scmp.eq.s32.totalorder %s15, 0
      %p108 = por %p106, %p107
      %s109 = ssub.s32 %s16, %s28
      %p110 = scmp.eq.s32.totalorder %s109, 0
      %s112 = sadd.s32 %s111, 1
      %s113 = scalar_select %p110, %s111, %s112
      %p116 = pneg %p110
      %p117 = scmp.eq.s32.totalorder %s9, 7
      %p118 = por %p116, %p117
      %p119 = scmp.ne.s32.totalorder %s111, %s114
      %p120 = scmp.eq.s32.totalorder %s9, 0
      %p121 = por %p119, %p120
      %p122 = scmp.ne.s32.totalorder %s111, %s114
      %p123 = scmp.eq.s32.totalorder %s14, 7
      %p124 = por %p122, %p123
      %p125 = scmp.ne.s32.totalorder %s114, %s115
      %p126 = scmp.eq.s32.totalorder %s14, 0
      %p127 = por %p125, %p126
      %p128 = scmp.ne.s32.totalorder %s114, %s115
      %p129 = scmp.eq.s32.totalorder %s15, 7
      %p130 = por %p128, %p129
      %p132 = scmp.ne.s32.totalorder %s115, %s131
      %p133 = scmp.eq.s32.totalorder %s15, 0
      %p134 = por %p132, %p133
      %p135 = scmp.le.s32.totalorder 1, %s9
      %p136 = scmp.lt.s32.totalorder %s9, 9
      %p137 = pnand %p135, %p136
      %p138 = pneg %p137
      // Predicated region
      $region9: #{binary_classifier_cnn.5} parent=5 // pred_check
        _
      $region10: #{binary_classifier_cnn.5} parent=5 // pred_check_branch
        %140 = sbr.rel (%p137) target = $region12
      $region11: #{binary_classifier_cnn.5} parent=5 // pred_region
        %s141 = ssub.s32 %s9, 1
      $region12: #{binary_classifier_cnn.5} parent=5 // pred_fallthru
        _
      %p142 = scmp.lt.s32.totalorder %s9, 8
      // Predicated region
      $region13: #{binary_classifier_cnn.5} parent=5 // pred_check
        %p143 = pneg %p142
      $region14: #{binary_classifier_cnn.5} parent=5 // pred_check_branch
        %145 = sbr.rel (%p143) target = $region16
      $region15: #{binary_classifier_cnn.5} parent=5 // pred_region
        // Predicated region
        $region17: #{binary_classifier_cnn.5} parent=15 // pred_check
          %p146 = pneg %p41
        $region18: #{binary_classifier_cnn.5} parent=15 // pred_check_branch
          %148 = sbr.rel (%p146) target = $region20
        $region19: #{binary_classifier_cnn.5} parent=15 // pred_region
          %s149 = smul.u32 4, %s17
          %p150 = scmp.lt.s32.totalorder %s149, 15
          %s151 = scalar_select %p150, %s149, 15
          %s152 = smul.addr %s151, 2
          %s153 = scalar_lea.vmem %s0, %s152
          %s154 = smul.u32 4, %s17
        $region20: #{binary_classifier_cnn.5} parent=15 // pred_fallthru
          _
        // Predicated region
        $region21: #{binary_classifier_cnn.5} parent=15 // pred_check
          %p155 = pneg %p69
        $region22: #{binary_classifier_cnn.5} parent=15 // pred_check_branch
          %157 = sbr.rel (%p155) target = $region24
        $region23: #{binary_classifier_cnn.5} parent=15 // pred_region
          %s158 = sand.u32 %s59, 1
          %s159 = sand.u32 %s59, 1
          %s160 = smul.addr %s159, 1024
          %s161 = scalar_lea.vmem [#allocation3], %s160
          %s162 = smul.u32 64, %s17
          %s163 = smul.u32 4, %s16
          %s164 = smul.addr %s162, 8
          %s165 = sadd.s32 %s163, %s164
          %s166 = smul.addr %s165, 4
          %s167 = scalar_lea.vmem %s1, %s166
          // Predicated region
          $region25: #{binary_classifier_cnn.5} parent=23 // pred_check
            _
          $region26: #{binary_classifier_cnn.5} parent=23 // pred_check_branch
            %169 = sbr.rel (0) target = $region28
          $region27: #{binary_classifier_cnn.5} parent=23 // pred_region
            // Predicated region
            $region29: #{binary_classifier_cnn.5} parent=27 // pred_check
              _
            $region30: #{binary_classifier_cnn.5} parent=27 // pred_check_branch
              %171 = sbr.rel (0) target = $region32
            $region31: #{binary_classifier_cnn.5} parent=27 // pred_region
              loop: start=0, step=1, limit=1
              $region33: #{binary_classifier_cnn.5} parent=31 // loop_pre_header
                _
              $region34: #{binary_classifier_cnn.5} parent=31 // loop_header
                %s173 = sphi 0, %s177
                %p174 = scmp.ge.s32.totalorder %s173, 1
                %s178 = sphi %s167, %s167
                %s179 = sphi %s161, %s161
              $region35: #{binary_classifier_cnn.5} parent=31 // loop_header_branch
                %176 = sbr.rel (%p174) target = $region39
              $region36: #{binary_classifier_cnn.5} parent=31 // loop_body
                %v180 = vld [vmem:[%s178] sm:$0xff]
                %181 = vst [vmem:[%s179] sm:$0xff] %v180
                %v182 = vld [vmem:[%s178 + $0x8] sm:$0xff]
                %183 = vst [vmem:[%s179 + $0x8] sm:$0xff] %v182
                %v184 = vld [vmem:[%s178 + $0x20] sm:$0xff]
                %185 = vst [vmem:[%s179 + $0x10] sm:$0xff] %v184
                %v186 = vld [vmem:[%s178 + $0x28] sm:$0xff]
                %187 = vst [vmem:[%s179 + $0x18] sm:$0xff] %v186
                %v188 = vld [vmem:[%s178 + $0x40] sm:$0xff]
                %189 = vst [vmem:[%s179 + $0x20] sm:$0xff] %v188
                %v190 = vld [vmem:[%s178 + $0x48] sm:$0xff]
                %191 = vst [vmem:[%s179 + $0x28] sm:$0xff] %v190
                %v192 = vld [vmem:[%s178 + $0x60] sm:$0xff]
                %193 = vst [vmem:[%s179 + $0x30] sm:$0xff] %v192
                %v194 = vld [vmem:[%s178 + $0x68] sm:$0xff]
                %195 = vst [vmem:[%s179 + $0x38] sm:$0xff] %v194
                %v196 = vld [vmem:[%s178 + $0x80] sm:$0xff]
                %197 = vst [vmem:[%s179 + $0x40] sm:$0xff] %v196
                %v198 = vld [vmem:[%s178 + $0x88] sm:$0xff]
                %199 = vst [vmem:[%s179 + $0x48] sm:$0xff] %v198
                %v200 = vld [vmem:[%s178 + $0xa0] sm:$0xff]
                %201 = vst [vmem:[%s179 + $0x50] sm:$0xff] %v200
                %v202 = vld [vmem:[%s178 + $0xa8] sm:$0xff]
                %203 = vst [vmem:[%s179 + $0x58] sm:$0xff] %v202
                %v204 = vld [vmem:[%s178 + $0xc0] sm:$0xff]
                %205 = vst [vmem:[%s179 + $0x60] sm:$0xff] %v204
                %v206 = vld [vmem:[%s178 + $0xc8] sm:$0xff]
                %207 = vst [vmem:[%s179 + $0x68] sm:$0xff] %v206
                %v208 = vld [vmem:[%s178 + $0xe0] sm:$0xff]
                %209 = vst [vmem:[%s179 + $0x70] sm:$0xff] %v208
                %v210 = vld [vmem:[%s178 + $0xe8] sm:$0xff]
                %211 = vst [vmem:[%s179 + $0x78] sm:$0xff] %v210
                %v212 = vld [vmem:[%s178 + $0x100] sm:$0xff]
                %213 = vst [vmem:[%s179 + $0x80] sm:$0xff] %v212
                %v214 = vld [vmem:[%s178 + $0x108] sm:$0xff]
                %215 = vst [vmem:[%s179 + $0x88] sm:$0xff] %v214
                %v216 = vld [vmem:[%s178 + $0x120] sm:$0xff]
                %217 = vst [vmem:[%s179 + $0x90] sm:$0xff] %v216
                %v218 = vld [vmem:[%s178 + $0x128] sm:$0xff]
                %219 = vst [vmem:[%s179 + $0x98] sm:$0xff] %v218
                %v220 = vld [vmem:[%s178 + $0x140] sm:$0xff]
                %221 = vst [vmem:[%s179 + $0xa0] sm:$0xff] %v220
                %v222 = vld [vmem:[%s178 + $0x148] sm:$0xff]
                %223 = vst [vmem:[%s179 + $0xa8] sm:$0xff] %v222
                %v224 = vld [vmem:[%s178 + $0x160] sm:$0xff]
                %225 = vst [vmem:[%s179 + $0xb0] sm:$0xff] %v224
                %v226 = vld [vmem:[%s178 + $0x168] sm:$0xff]
                %227 = vst [vmem:[%s179 + $0xb8] sm:$0xff] %v226
                %v228 = vld [vmem:[%s178 + $0x180] sm:$0xff]
                %229 = vst [vmem:[%s179 + $0xc0] sm:$0xff] %v228
                %v230 = vld [vmem:[%s178 + $0x188] sm:$0xff]
                %231 = vst [vmem:[%s179 + $0xc8] sm:$0xff] %v230
                %v232 = vld [vmem:[%s178 + $0x1a0] sm:$0xff]
                %233 = vst [vmem:[%s179 + $0xd0] sm:$0xff] %v232
                %v234 = vld [vmem:[%s178 + $0x1a8] sm:$0xff]
                %235 = vst [vmem:[%s179 + $0xd8] sm:$0xff] %v234
                %v236 = vld [vmem:[%s178 + $0x1c0] sm:$0xff]
                %237 = vst [vmem:[%s179 + $0xe0] sm:$0xff] %v236
                %v238 = vld [vmem:[%s178 + $0x1c8] sm:$0xff]
                %239 = vst [vmem:[%s179 + $0xe8] sm:$0xff] %v238
                %v240 = vld [vmem:[%s178 + $0x1e0] sm:$0xff]
                %241 = vst [vmem:[%s179 + $0xf0] sm:$0xff] %v240
                %v242 = vld [vmem:[%s178 + $0x1e8] sm:$0xff]
                %243 = vst [vmem:[%s179 + $0xf8] sm:$0xff] %v242
                %v244 = vld [vmem:[%s178 + $0x200] sm:$0xff]
                %245 = vst [vmem:[%s179 + $0x100] sm:$0xff] %v244
                %v246 = vld [vmem:[%s178 + $0x208] sm:$0xff]
                %247 = vst [vmem:[%s179 + $0x108] sm:$0xff] %v246
                %v248 = vld [vmem:[%s178 + $0x220] sm:$0xff]
                %249 = vst [vmem:[%s179 + $0x110] sm:$0xff] %v248
                %v250 = vld [vmem:[%s178 + $0x228] sm:$0xff]
                %251 = vst [vmem:[%s179 + $0x118] sm:$0xff] %v250
                %v252 = vld [vmem:[%s178 + $0x240] sm:$0xff]
                %253 = vst [vmem:[%s179 + $0x120] sm:$0xff] %v252
                %v254 = vld [vmem:[%s178 + $0x248] sm:$0xff]
                %255 = vst [vmem:[%s179 + $0x128] sm:$0xff] %v254
                %v256 = vld [vmem:[%s178 + $0x260] sm:$0xff]
                %257 = vst [vmem:[%s179 + $0x130] sm:$0xff] %v256
                %v258 = vld [vmem:[%s178 + $0x268] sm:$0xff]
                %259 = vst [vmem:[%s179 + $0x138] sm:$0xff] %v258
                %v260 = vld [vmem:[%s178 + $0x280] sm:$0xff]
                %261 = vst [vmem:[%s179 + $0x140] sm:$0xff] %v260
                %v262 = vld [vmem:[%s178 + $0x288] sm:$0xff]
                %263 = vst [vmem:[%s179 + $0x148] sm:$0xff] %v262
                %v264 = vld [vmem:[%s178 + $0x2a0] sm:$0xff]
                %265 = vst [vmem:[%s179 + $0x150] sm:$0xff] %v264
                %v266 = vld [vmem:[%s178 + $0x2a8] sm:$0xff]
                %267 = vst [vmem:[%s179 + $0x158] sm:$0xff] %v266
                %v268 = vld [vmem:[%s178 + $0x2c0] sm:$0xff]
                %269 = vst [vmem:[%s179 + $0x160] sm:$0xff] %v268
                %v270 = vld [vmem:[%s178 + $0x2c8] sm:$0xff]
                %271 = vst [vmem:[%s179 + $0x168] sm:$0xff] %v270
                %v272 = vld [vmem:[%s178 + $0x2e0] sm:$0xff]
                %273 = vst [vmem:[%s179 + $0x170] sm:$0xff] %v272
                %v274 = vld [vmem:[%s178 + $0x2e8] sm:$0xff]
                %275 = vst [vmem:[%s179 + $0x178] sm:$0xff] %v274
                %v276 = vld [vmem:[%s178 + $0x300] sm:$0xff]
                %277 = vst [vmem:[%s179 + $0x180] sm:$0xff] %v276
                %v278 = vld [vmem:[%s178 + $0x308] sm:$0xff]
                %279 = vst [vmem:[%s179 + $0x188] sm:$0xff] %v278
                %v280 = vld [vmem:[%s178 + $0x320] sm:$0xff]
                %281 = vst [vmem:[%s179 + $0x190] sm:$0xff] %v280
                %v282 = vld [vmem:[%s178 + $0x328] sm:$0xff]
                %283 = vst [vmem:[%s179 + $0x198] sm:$0xff] %v282
                %v284 = vld [vmem:[%s178 + $0x340] sm:$0xff]
                %285 = vst [vmem:[%s179 + $0x1a0] sm:$0xff] %v284
                %v286 = vld [vmem:[%s178 + $0x348] sm:$0xff]
                %287 = vst [vmem:[%s179 + $0x1a8] sm:$0xff] %v286
                %v288 = vld [vmem:[%s178 + $0x360] sm:$0xff]
                %289 = vst [vmem:[%s179 + $0x1b0] sm:$0xff] %v288
                %v290 = vld [vmem:[%s178 + $0x368] sm:$0xff]
                %291 = vst [vmem:[%s179 + $0x1b8] sm:$0xff] %v290
                %v292 = vld [vmem:[%s178 + $0x380] sm:$0xff]
                %293 = vst [vmem:[%s179 + $0x1c0] sm:$0xff] %v292
                %v294 = vld [vmem:[%s178 + $0x388] sm:$0xff]
                %295 = vst [vmem:[%s179 + $0x1c8] sm:$0xff] %v294
                %v296 = vld [vmem:[%s178 + $0x3a0] sm:$0xff]
                %297 = vst [vmem:[%s179 + $0x1d0] sm:$0xff] %v296
                %v298 = vld [vmem:[%s178 + $0x3a8] sm:$0xff]
                %299 = vst [vmem:[%s179 + $0x1d8] sm:$0xff] %v298
                %v300 = vld [vmem:[%s178 + $0x3c0] sm:$0xff]
                %301 = vst [vmem:[%s179 + $0x1e0] sm:$0xff] %v300
                %v302 = vld [vmem:[%s178 + $0x3c8] sm:$0xff]
                %303 = vst [vmem:[%s179 + $0x1e8] sm:$0xff] %v302
                %v304 = vld [vmem:[%s178 + $0x3e0] sm:$0xff]
                %305 = vst [vmem:[%s179 + $0x1f0] sm:$0xff] %v304
                %v306 = vld [vmem:[%s178 + $0x3e8] sm:$0xff]
                %307 = vst [vmem:[%s179 + $0x1f8] sm:$0xff] %v306
                %v308 = vld [vmem:[%s178 + $0x400] sm:$0xff]
                %309 = vst [vmem:[%s179 + $0x200] sm:$0xff] %v308
                %v310 = vld [vmem:[%s178 + $0x408] sm:$0xff]
                %311 = vst [vmem:[%s179 + $0x208] sm:$0xff] %v310
                %v312 = vld [vmem:[%s178 + $0x420] sm:$0xff]
                %313 = vst [vmem:[%s179 + $0x210] sm:$0xff] %v312
                %v314 = vld [vmem:[%s178 + $0x428] sm:$0xff]
                %315 = vst [vmem:[%s179 + $0x218] sm:$0xff] %v314
                %v316 = vld [vmem:[%s178 + $0x440] sm:$0xff]
                %317 = vst [vmem:[%s179 + $0x220] sm:$0xff] %v316
                %v318 = vld [vmem:[%s178 + $0x448] sm:$0xff]
                %319 = vst [vmem:[%s179 + $0x228] sm:$0xff] %v318
                %v320 = vld [vmem:[%s178 + $0x460] sm:$0xff]
                %321 = vst [vmem:[%s179 + $0x230] sm:$0xff] %v320
                %v322 = vld [vmem:[%s178 + $0x468] sm:$0xff]
                %323 = vst [vmem:[%s179 + $0x238] sm:$0xff] %v322
                %v324 = vld [vmem:[%s178 + $0x480] sm:$0xff]
                %325 = vst [vmem:[%s179 + $0x240] sm:$0xff] %v324
                %v326 = vld [vmem:[%s178 + $0x488] sm:$0xff]
                %327 = vst [vmem:[%s179 + $0x248] sm:$0xff] %v326
                %v328 = vld [vmem:[%s178 + $0x4a0] sm:$0xff]
                %329 = vst [vmem:[%s179 + $0x250] sm:$0xff] %v328
                %v330 = vld [vmem:[%s178 + $0x4a8] sm:$0xff]
                %331 = vst [vmem:[%s179 + $0x258] sm:$0xff] %v330
                %v332 = vld [vmem:[%s178 + $0x4c0] sm:$0xff]
                %333 = vst [vmem:[%s179 + $0x260] sm:$0xff] %v332
                %v334 = vld [vmem:[%s178 + $0x4c8] sm:$0xff]
                %335 = vst [vmem:[%s179 + $0x268] sm:$0xff] %v334
                %v336 = vld [vmem:[%s178 + $0x4e0] sm:$0xff]
                %337 = vst [vmem:[%s179 + $0x270] sm:$0xff] %v336
                %v338 = vld [vmem:[%s178 + $0x4e8] sm:$0xff]
                %339 = vst [vmem:[%s179 + $0x278] sm:$0xff] %v338
                %v340 = vld [vmem:[%s178 + $0x500] sm:$0xff]
                %341 = vst [vmem:[%s179 + $0x280] sm:$0xff] %v340
                %v342 = vld [vmem:[%s178 + $0x508] sm:$0xff]
                %343 = vst [vmem:[%s179 + $0x288] sm:$0xff] %v342
                %v344 = vld [vmem:[%s178 + $0x520] sm:$0xff]
                %345 = vst [vmem:[%s179 + $0x290] sm:$0xff] %v344
                %v346 = vld [vmem:[%s178 + $0x528] sm:$0xff]
                %347 = vst [vmem:[%s179 + $0x298] sm:$0xff] %v346
                %v348 = vld [vmem:[%s178 + $0x540] sm:$0xff]
                %349 = vst [vmem:[%s179 + $0x2a0] sm:$0xff] %v348
                %v350 = vld [vmem:[%s178 + $0x548] sm:$0xff]
                %351 = vst [vmem:[%s179 + $0x2a8] sm:$0xff] %v350
                %v352 = vld [vmem:[%s178 + $0x560] sm:$0xff]
                %353 = vst [vmem:[%s179 + $0x2b0] sm:$0xff] %v352
                %v354 = vld [vmem:[%s178 + $0x568] sm:$0xff]
                %355 = vst [vmem:[%s179 + $0x2b8] sm:$0xff] %v354
                %v356 = vld [vmem:[%s178 + $0x580] sm:$0xff]
                %357 = vst [vmem:[%s179 + $0x2c0] sm:$0xff] %v356
                %v358 = vld [vmem:[%s178 + $0x588] sm:$0xff]
                %359 = vst [vmem:[%s179 + $0x2c8] sm:$0xff] %v358
                %v360 = vld [vmem:[%s178 + $0x5a0] sm:$0xff]
                %361 = vst [vmem:[%s179 + $0x2d0] sm:$0xff] %v360
                %v362 = vld [vmem:[%s178 + $0x5a8] sm:$0xff]
                %363 = vst [vmem:[%s179 + $0x2d8] sm:$0xff] %v362
                %v364 = vld [vmem:[%s178 + $0x5c0] sm:$0xff]
                %365 = vst [vmem:[%s179 + $0x2e0] sm:$0xff] %v364
                %v366 = vld [vmem:[%s178 + $0x5c8] sm:$0xff]
                %367 = vst [vmem:[%s179 + $0x2e8] sm:$0xff] %v366
                %v368 = vld [vmem:[%s178 + $0x5e0] sm:$0xff]
                %369 = vst [vmem:[%s179 + $0x2f0] sm:$0xff] %v368
                %v370 = vld [vmem:[%s178 + $0x5e8] sm:$0xff]
                %371 = vst [vmem:[%s179 + $0x2f8] sm:$0xff] %v370
                %v372 = vld [vmem:[%s178 + $0x600] sm:$0xff]
                %373 = vst [vmem:[%s179 + $0x300] sm:$0xff] %v372
                %v374 = vld [vmem:[%s178 + $0x608] sm:$0xff]
                %375 = vst [vmem:[%s179 + $0x308] sm:$0xff] %v374
                %v376 = vld [vmem:[%s178 + $0x620] sm:$0xff]
                %377 = vst [vmem:[%s179 + $0x310] sm:$0xff] %v376
                %v378 = vld [vmem:[%s178 + $0x628] sm:$0xff]
                %379 = vst [vmem:[%s179 + $0x318] sm:$0xff] %v378
                %v380 = vld [vmem:[%s178 + $0x640] sm:$0xff]
                %381 = vst [vmem:[%s179 + $0x320] sm:$0xff] %v380
                %v382 = vld [vmem:[%s178 + $0x648] sm:$0xff]
                %383 = vst [vmem:[%s179 + $0x328] sm:$0xff] %v382
                %v384 = vld [vmem:[%s178 + $0x660] sm:$0xff]
                %385 = vst [vmem:[%s179 + $0x330] sm:$0xff] %v384
                %v386 = vld [vmem:[%s178 + $0x668] sm:$0xff]
                %387 = vst [vmem:[%s179 + $0x338] sm:$0xff] %v386
                %v388 = vld [vmem:[%s178 + $0x680] sm:$0xff]
                %389 = vst [vmem:[%s179 + $0x340] sm:$0xff] %v388
                %v390 = vld [vmem:[%s178 + $0x688] sm:$0xff]
                %391 = vst [vmem:[%s179 + $0x348] sm:$0xff] %v390
                %v392 = vld [vmem:[%s178 + $0x6a0] sm:$0xff]
                %393 = vst [vmem:[%s179 + $0x350] sm:$0xff] %v392
                %v394 = vld [vmem:[%s178 + $0x6a8] sm:$0xff]
                %395 = vst [vmem:[%s179 + $0x358] sm:$0xff] %v394
                %v396 = vld [vmem:[%s178 + $0x6c0] sm:$0xff]
                %397 = vst [vmem:[%s179 + $0x360] sm:$0xff] %v396
                %v398 = vld [vmem:[%s178 + $0x6c8] sm:$0xff]
                %399 = vst [vmem:[%s179 + $0x368] sm:$0xff] %v398
                %v400 = vld [vmem:[%s178 + $0x6e0] sm:$0xff]
                %401 = vst [vmem:[%s179 + $0x370] sm:$0xff] %v400
                %v402 = vld [vmem:[%s178 + $0x6e8] sm:$0xff]
                %403 = vst [vmem:[%s179 + $0x378] sm:$0xff] %v402
                %v404 = vld [vmem:[%s178 + $0x700] sm:$0xff]
                %405 = vst [vmem:[%s179 + $0x380] sm:$0xff] %v404
                %v406 = vld [vmem:[%s178 + $0x708] sm:$0xff]
                %407 = vst [vmem:[%s179 + $0x388] sm:$0xff] %v406
                %v408 = vld [vmem:[%s178 + $0x720] sm:$0xff]
                %409 = vst [vmem:[%s179 + $0x390] sm:$0xff] %v408
                %v410 = vld [vmem:[%s178 + $0x728] sm:$0xff]
                %411 = vst [vmem:[%s179 + $0x398] sm:$0xff] %v410
                %v412 = vld [vmem:[%s178 + $0x740] sm:$0xff]
                %413 = vst [vmem:[%s179 + $0x3a0] sm:$0xff] %v412
                %v414 = vld [vmem:[%s178 + $0x748] sm:$0xff]
                %415 = vst [vmem:[%s179 + $0x3a8] sm:$0xff] %v414
                %v416 = vld [vmem:[%s178 + $0x760] sm:$0xff]
                %417 = vst [vmem:[%s179 + $0x3b0] sm:$0xff] %v416
                %v418 = vld [vmem:[%s178 + $0x768] sm:$0xff]
                %419 = vst [vmem:[%s179 + $0x3b8] sm:$0xff] %v418
                %v420 = vld [vmem:[%s178 + $0x780] sm:$0xff]
                %421 = vst [vmem:[%s179 + $0x3c0] sm:$0xff] %v420
                %v422 = vld [vmem:[%s178 + $0x788] sm:$0xff]
                %423 = vst [vmem:[%s179 + $0x3c8] sm:$0xff] %v422
                %v424 = vld [vmem:[%s178 + $0x7a0] sm:$0xff]
                %425 = vst [vmem:[%s179 + $0x3d0] sm:$0xff] %v424
                %v426 = vld [vmem:[%s178 + $0x7a8] sm:$0xff]
                %427 = vst [vmem:[%s179 + $0x3d8] sm:$0xff] %v426
                %v428 = vld [vmem:[%s178 + $0x7c0] sm:$0xff]
                %429 = vst [vmem:[%s179 + $0x3e0] sm:$0xff] %v428
                %v430 = vld [vmem:[%s178 + $0x7c8] sm:$0xff]
                %431 = vst [vmem:[%s179 + $0x3e8] sm:$0xff] %v430
                %v432 = vld [vmem:[%s178 + $0x7e0] sm:$0xff]
                %433 = vst [vmem:[%s179 + $0x3f0] sm:$0xff] %v432
                %v434 = vld [vmem:[%s178 + $0x7e8] sm:$0xff]
                %435 = vst [vmem:[%s179 + $0x3f8] sm:$0xff] %v434
              $region37: #{binary_classifier_cnn.5} parent=31 // loop_footer
                %s177 = sadd.s32 1, %s173
              $region38: #{binary_classifier_cnn.5} parent=31 // loop_footer_branch
                %172 = sbr.rel target = $region34
              $region39: #{binary_classifier_cnn.5} parent=31 // loop_exit
                _
            $region32: #{binary_classifier_cnn.5} parent=27 // pred_fallthru
              _
            // Predicated region
            $region40: #{binary_classifier_cnn.5} parent=27 // pred_check
              _
            $region41: #{binary_classifier_cnn.5} parent=27 // pred_check_branch
              %437 = sbr.rel target = $region43
            $region42: #{binary_classifier_cnn.5} parent=27 // pred_region
              _
            $region43: #{binary_classifier_cnn.5} parent=27 // pred_fallthru
              _
          $region28: #{binary_classifier_cnn.5} parent=23 // pred_fallthru
            _
          %438 = vnop
        $region24: #{binary_classifier_cnn.5} parent=15 // pred_fallthru
          _
        // Predicated region
        $region44: #{binary_classifier_cnn.5} parent=15 // pred_check
          %p439 = pneg %p95
        $region45: #{binary_classifier_cnn.5} parent=15 // pred_check_branch
          %441 = sbr.rel (%p439) target = $region47
        $region46: #{binary_classifier_cnn.5} parent=15 // pred_region
          %s442 = smul.u32 4, %s16
          %p443 = scmp.lt.s32.totalorder %s442, 7
          %s444 = scalar_select %p443, %s442, 7
          %s445 = scalar_lea.vmem %s2, %s444
          %s446 = smul.u32 4, %s16
        $region47: #{binary_classifier_cnn.5} parent=15 // pred_fallthru
          _
      $region16: #{binary_classifier_cnn.5} parent=5 // pred_fallthru
        _
      %p447 = scmp.le.s32.totalorder 1, %s9
      %p448 = scmp.lt.s32.totalorder %s9, 9
      %p449 = pnand %p447, %p448
      %p450 = pneg %p449
      // Predicated region
      $region48: #{binary_classifier_cnn.5} parent=5 // pred_check
        _
      $region49: #{binary_classifier_cnn.5} parent=5 // pred_check_branch
        %452 = sbr.rel (%p449) target = $region51
      $region50: #{binary_classifier_cnn.5} parent=5 // pred_region
        %s453 = ssub.s32 %s9, 1
        %s454 = sand.u32 %s62, 1
        %s455 = sand.u32 %s62, 1
        %s456 = smul.addr %s455, 1024
        %s457 = scalar_lea.vmem [#allocation3], %s456
        // Predicated region
        $region52: #{binary_classifier_cnn.5} parent=50 // pred_check
          %p458 = pneg %p75
        $region53: #{binary_classifier_cnn.5} parent=50 // pred_check_branch
          %460 = sbr.rel (%p458) target = $region55
        $region54: #{binary_classifier_cnn.5} parent=50 // pred_region
          _
        $region55: #{binary_classifier_cnn.5} parent=50 // pred_fallthru
          _
        %s461 = smul.u32 4, %s19
        %p462 = scmp.lt.s32.totalorder %s461, 15
        %s463 = scalar_select %p462, %s461, 15
        %s464 = smul.addr %s463, 2
        %s465 = scalar_lea.vmem %s0, %s464
        %p466 = pneg %p47
        %p467 = pneg %p44
        %s468 = sand.u32 %s62, 1
        %s469 = sand.u32 %s62, 1
        %s470 = smul.addr %s469, 1024
        %s471 = scalar_lea.vmem [#allocation3], %s470
        %p472 = pneg %p75
        %p473 = pneg %p72
        %s474 = smul.u32 4, %s18
        %p475 = scmp.lt.s32.totalorder %s474, 7
        %s476 = scalar_select %p475, %s474, 7
        %s477 = scalar_lea.vmem %s2, %s476
        %p478 = pneg %p101
        %p479 = pneg %p98
        %p480 = pneg %p127
        %p481 = pneg %p124
        %s482 = smul.u32 4, %s18
        %p483 = scmp.lt.s32.totalorder %s482, 7
        %s484 = scalar_select %p483, %s482, 7
        %s485 = smul.addr %s484, 2
        %s486 = scalar_lea.vmem %s3, %s485
        %s487 = smul.u32 4, %s19
        %p488 = scmp.lt.s32.totalorder %s487, 15
        %s489 = scalar_select %p488, %s487, 15
        %s490 = smul.addr %s489, 2
        %s491 = scalar_lea.vmem %s0, %s490
        %s492 = smul.u32 4, %s19
        %s493 = smul.u32 64, %s19
        %s494 = smul.u32 4, %s18
        %s495 = smul.u32 4, %s18
        %p496 = scmp.lt.s32.totalorder %s495, 7
        %s497 = scalar_select %p496, %s495, 7
        %s498 = scalar_lea.vmem %s2, %s497
        %s499 = smul.u32 4, %s18
        %s500 = smul.u32 4, %s18
        %p501 = scmp.lt.s32.totalorder %s500, 7
        %s502 = scalar_select %p501, %s500, 7
        %s503 = smul.addr %s502, 2
        %s504 = scalar_lea.vmem %s3, %s503
        %s505 = smul.u32 4, %s18
        %p506 = scmp.eq.s32.totalorder %s19, 0
        // Predicated region
        $region56: #{binary_classifier_cnn.5} parent=50 // pred_check
          %p507 = pneg %p506
        $region57: #{binary_classifier_cnn.5} parent=50 // pred_check_branch
          %509 = sbr.rel (%p507) target = $region59
        $region58: #{binary_classifier_cnn.5} parent=50 // pred_region
          %510 = vst [vmem:[#allocation2] sm:$0xff] 0.0
        $region59: #{binary_classifier_cnn.5} parent=50 // pred_fallthru
          _
        %v511 = vld [vmem:[#allocation2] sm:$0xff]
        %v512 = vld [vmem:[%s491] sm:$0xff]
        %v514 = vcombine.high %v512, %v512
        %v516 = vunpack.c.l.s4 1983009808
        %v517 = vunpack.c.0.s8 %v516
        %v518 = vlaneseq
        %v519 = vshrl.u32 %v518, 7
        %v520 = vsub.s32 %v517, %v519
        %v521 = vrot.slane %v512, %v520
        %v523 = vunpack.c.l.s4 1983009808
        %v524 = vunpack.c.0.s8 %v523
        %v525 = vlaneseq
        %v526 = vshrl.u32 %v525, 7
        %v527 = vsub.s32 %v524, %v526
        %v528 = vrot.slane %v514, %v527
        %v529 = vcombine.high %v521, %v521
        %v530 = vcombine.high %v528, %v528
        %v535 = vpack.c.bf16 %v521, %v521
        %v536 = vpack.c.bf16 %v529, %v529
        %v537 = vpack.c.bf16 %v528, %v528
        %v538 = vpack.c.bf16 %v530, %v530
        %v539 = vld [vmem:[%s457] sm:$0xff]
        %v540 = vld [vmem:[%s457 + $0x8] sm:$0xff]
        %v541 = vld [vmem:[%s457 + $0x10] sm:$0xff]
        %v542 = vld [vmem:[%s457 + $0x18] sm:$0xff]
        %v543 = vld [vmem:[%s457 + $0x20] sm:$0xff]
        %v544 = vld [vmem:[%s457 + $0x28] sm:$0xff]
        %v545 = vld [vmem:[%s457 + $0x30] sm:$0xff]
        %v546 = vld [vmem:[%s457 + $0x38] sm:$0xff]
        %v547 = vld [vmem:[%s457 + $0x40] sm:$0xff]
        %v548 = vld [vmem:[%s457 + $0x48] sm:$0xff]
        %v549 = vld [vmem:[%s457 + $0x50] sm:$0xff]
        %v550 = vld [vmem:[%s457 + $0x58] sm:$0xff]
        %v551 = vld [vmem:[%s457 + $0x60] sm:$0xff]
        %v552 = vld [vmem:[%s457 + $0x68] sm:$0xff]
        %v553 = vld [vmem:[%s457 + $0x70] sm:$0xff]
        %v554 = vld [vmem:[%s457 + $0x78] sm:$0xff]
        %v555 = vld [vmem:[%s457 + $0x80] sm:$0xff]
        %v556 = vld [vmem:[%s457 + $0x88] sm:$0xff]
        %v557 = vld [vmem:[%s457 + $0x90] sm:$0xff]
        %v558 = vld [vmem:[%s457 + $0x98] sm:$0xff]
        %v559 = vld [vmem:[%s457 + $0xa0] sm:$0xff]
        %v560 = vld [vmem:[%s457 + $0xa8] sm:$0xff]
        %v561 = vld [vmem:[%s457 + $0xb0] sm:$0xff]
        %v562 = vld [vmem:[%s457 + $0xb8] sm:$0xff]
        %v563 = vld [vmem:[%s457 + $0xc0] sm:$0xff]
        %v564 = vld [vmem:[%s457 + $0xc8] sm:$0xff]
        %v565 = vld [vmem:[%s457 + $0xd0] sm:$0xff]
        %v566 = vld [vmem:[%s457 + $0xd8] sm:$0xff]
        %v567 = vld [vmem:[%s457 + $0xe0] sm:$0xff]
        %v568 = vld [vmem:[%s457 + $0xe8] sm:$0xff]
        %v569 = vld [vmem:[%s457 + $0xf0] sm:$0xff]
        %v570 = vld [vmem:[%s457 + $0xf8] sm:$0xff]
        %v571 = vld [vmem:[%s457 + $0x100] sm:$0xff]
        %v572 = vld [vmem:[%s457 + $0x108] sm:$0xff]
        %v573 = vld [vmem:[%s457 + $0x110] sm:$0xff]
        %v574 = vld [vmem:[%s457 + $0x118] sm:$0xff]
        %v575 = vld [vmem:[%s457 + $0x120] sm:$0xff]
        %v576 = vld [vmem:[%s457 + $0x128] sm:$0xff]
        %v577 = vld [vmem:[%s457 + $0x130] sm:$0xff]
        %v578 = vld [vmem:[%s457 + $0x138] sm:$0xff]
        %v579 = vld [vmem:[%s457 + $0x140] sm:$0xff]
        %v580 = vld [vmem:[%s457 + $0x148] sm:$0xff]
        %v581 = vld [vmem:[%s457 + $0x150] sm:$0xff]
        %v582 = vld [vmem:[%s457 + $0x158] sm:$0xff]
        %v583 = vld [vmem:[%s457 + $0x160] sm:$0xff]
        %v584 = vld [vmem:[%s457 + $0x168] sm:$0xff]
        %v585 = vld [vmem:[%s457 + $0x170] sm:$0xff]
        %v586 = vld [vmem:[%s457 + $0x178] sm:$0xff]
        %v587 = vld [vmem:[%s457 + $0x180] sm:$0xff]
        %v588 = vld [vmem:[%s457 + $0x188] sm:$0xff]
        %v589 = vld [vmem:[%s457 + $0x190] sm:$0xff]
        %v590 = vld [vmem:[%s457 + $0x198] sm:$0xff]
        %v591 = vld [vmem:[%s457 + $0x1a0] sm:$0xff]
        %v592 = vld [vmem:[%s457 + $0x1a8] sm:$0xff]
        %v593 = vld [vmem:[%s457 + $0x1b0] sm:$0xff]
        %v594 = vld [vmem:[%s457 + $0x1b8] sm:$0xff]
        %v595 = vld [vmem:[%s457 + $0x1c0] sm:$0xff]
        %v596 = vld [vmem:[%s457 + $0x1c8] sm:$0xff]
        %v597 = vld [vmem:[%s457 + $0x1d0] sm:$0xff]
        %v598 = vld [vmem:[%s457 + $0x1d8] sm:$0xff]
        %v599 = vld [vmem:[%s457 + $0x1e0] sm:$0xff]
        %v600 = vld [vmem:[%s457 + $0x1e8] sm:$0xff]
        %v601 = vld [vmem:[%s457 + $0x1f0] sm:$0xff]
        %v602 = vld [vmem:[%s457 + $0x1f8] sm:$0xff]
        %v603 = vld [vmem:[%s457 + $0x200] sm:$0xff]
        %v604 = vld [vmem:[%s457 + $0x208] sm:$0xff]
        %v605 = vld [vmem:[%s457 + $0x210] sm:$0xff]
        %v606 = vld [vmem:[%s457 + $0x218] sm:$0xff]
        %v607 = vld [vmem:[%s457 + $0x220] sm:$0xff]
        %v608 = vld [vmem:[%s457 + $0x228] sm:$0xff]
        %v609 = vld [vmem:[%s457 + $0x230] sm:$0xff]
        %v610 = vld [vmem:[%s457 + $0x238] sm:$0xff]
        %v611 = vld [vmem:[%s457 + $0x240] sm:$0xff]
        %v612 = vld [vmem:[%s457 + $0x248] sm:$0xff]
        %v613 = vld [vmem:[%s457 + $0x250] sm:$0xff]
        %v614 = vld [vmem:[%s457 + $0x258] sm:$0xff]
        %v615 = vld [vmem:[%s457 + $0x260] sm:$0xff]
        %v616 = vld [vmem:[%s457 + $0x268] sm:$0xff]
        %v617 = vld [vmem:[%s457 + $0x270] sm:$0xff]
        %v618 = vld [vmem:[%s457 + $0x278] sm:$0xff]
        %v619 = vld [vmem:[%s457 + $0x280] sm:$0xff]
        %v620 = vld [vmem:[%s457 + $0x288] sm:$0xff]
        %v621 = vld [vmem:[%s457 + $0x290] sm:$0xff]
        %v622 = vld [vmem:[%s457 + $0x298] sm:$0xff]
        %v623 = vld [vmem:[%s457 + $0x2a0] sm:$0xff]
        %v624 = vld [vmem:[%s457 + $0x2a8] sm:$0xff]
        %v625 = vld [vmem:[%s457 + $0x2b0] sm:$0xff]
        %v626 = vld [vmem:[%s457 + $0x2b8] sm:$0xff]
        %v627 = vld [vmem:[%s457 + $0x2c0] sm:$0xff]
        %v628 = vld [vmem:[%s457 + $0x2c8] sm:$0xff]
        %v629 = vld [vmem:[%s457 + $0x2d0] sm:$0xff]
        %v630 = vld [vmem:[%s457 + $0x2d8] sm:$0xff]
        %v631 = vld [vmem:[%s457 + $0x2e0] sm:$0xff]
        %v632 = vld [vmem:[%s457 + $0x2e8] sm:$0xff]
        %v633 = vld [vmem:[%s457 + $0x2f0] sm:$0xff]
        %v634 = vld [vmem:[%s457 + $0x2f8] sm:$0xff]
        %v635 = vld [vmem:[%s457 + $0x300] sm:$0xff]
        %v636 = vld [vmem:[%s457 + $0x308] sm:$0xff]
        %v637 = vld [vmem:[%s457 + $0x310] sm:$0xff]
        %v638 = vld [vmem:[%s457 + $0x318] sm:$0xff]
        %v639 = vld [vmem:[%s457 + $0x320] sm:$0xff]
        %v640 = vld [vmem:[%s457 + $0x328] sm:$0xff]
        %v641 = vld [vmem:[%s457 + $0x330] sm:$0xff]
        %v642 = vld [vmem:[%s457 + $0x338] sm:$0xff]
        %v643 = vld [vmem:[%s457 + $0x340] sm:$0xff]
        %v644 = vld [vmem:[%s457 + $0x348] sm:$0xff]
        %v645 = vld [vmem:[%s457 + $0x350] sm:$0xff]
        %v646 = vld [vmem:[%s457 + $0x358] sm:$0xff]
        %v647 = vld [vmem:[%s457 + $0x360] sm:$0xff]
        %v648 = vld [vmem:[%s457 + $0x368] sm:$0xff]
        %v649 = vld [vmem:[%s457 + $0x370] sm:$0xff]
        %v650 = vld [vmem:[%s457 + $0x378] sm:$0xff]
        %v651 = vld [vmem:[%s457 + $0x380] sm:$0xff]
        %v652 = vld [vmem:[%s457 + $0x388] sm:$0xff]
        %v653 = vld [vmem:[%s457 + $0x390] sm:$0xff]
        %v654 = vld [vmem:[%s457 + $0x398] sm:$0xff]
        %v655 = vld [vmem:[%s457 + $0x3a0] sm:$0xff]
        %v656 = vld [vmem:[%s457 + $0x3a8] sm:$0xff]
        %v657 = vld [vmem:[%s457 + $0x3b0] sm:$0xff]
        %v658 = vld [vmem:[%s457 + $0x3b8] sm:$0xff]
        %v659 = vld [vmem:[%s457 + $0x3c0] sm:$0xff]
        %v660 = vld [vmem:[%s457 + $0x3c8] sm:$0xff]
        %v661 = vld [vmem:[%s457 + $0x3d0] sm:$0xff]
        %v662 = vld [vmem:[%s457 + $0x3d8] sm:$0xff]
        %v663 = vld [vmem:[%s457 + $0x3e0] sm:$0xff]
        %v664 = vld [vmem:[%s457 + $0x3e8] sm:$0xff]
        %v665 = vld [vmem:[%s457 + $0x3f0] sm:$0xff]
        %v666 = vld [vmem:[%s457 + $0x3f8] sm:$0xff]
        %v795 = vunpack.c.l.b16 %v539
        %v796 = vunpack.c.h.b16 %v539
        %v797 = vunpack.c.l.b16 %v540
        %v798 = vunpack.c.h.b16 %v540
        %v799 = vunpack.c.l.b16 %v541
        %v800 = vunpack.c.h.b16 %v541
        %v801 = vunpack.c.l.b16 %v542
        %v802 = vunpack.c.h.b16 %v542
        %v803 = vunpack.c.l.b16 %v543
        %v804 = vunpack.c.h.b16 %v543
        %v805 = vunpack.c.l.b16 %v544
        %v806 = vunpack.c.h.b16 %v544
        %v807 = vunpack.c.l.b16 %v545
        %v808 = vunpack.c.h.b16 %v545
        %v809 = vunpack.c.l.b16 %v546
        %v810 = vunpack.c.h.b16 %v546
        %v811 = vunpack.c.l.b16 %v547
        %v812 = vunpack.c.h.b16 %v547
        %v813 = vunpack.c.l.b16 %v548
        %v814 = vunpack.c.h.b16 %v548
        %v815 = vunpack.c.l.b16 %v549
        %v816 = vunpack.c.h.b16 %v549
        %v817 = vunpack.c.l.b16 %v550
        %v818 = vunpack.c.h.b16 %v550
        %v819 = vunpack.c.l.b16 %v551
        %v820 = vunpack.c.h.b16 %v551
        %v821 = vunpack.c.l.b16 %v552
        %v822 = vunpack.c.h.b16 %v552
        %v823 = vunpack.c.l.b16 %v553
        %v824 = vunpack.c.h.b16 %v553
        %v825 = vunpack.c.l.b16 %v554
        %v826 = vunpack.c.h.b16 %v554
        %v827 = vunpack.c.l.b16 %v555
        %v828 = vunpack.c.h.b16 %v555
        %v829 = vunpack.c.l.b16 %v556
        %v830 = vunpack.c.h.b16 %v556
        %v831 = vunpack.c.l.b16 %v557
        %v832 = vunpack.c.h.b16 %v557
        %v833 = vunpack.c.l.b16 %v558
        %v834 = vunpack.c.h.b16 %v558
        %v835 = vunpack.c.l.b16 %v559
        %v836 = vunpack.c.h.b16 %v559
        %v837 = vunpack.c.l.b16 %v560
        %v838 = vunpack.c.h.b16 %v560
        %v839 = vunpack.c.l.b16 %v561
        %v840 = vunpack.c.h.b16 %v561
        %v841 = vunpack.c.l.b16 %v562
        %v842 = vunpack.c.h.b16 %v562
        %v843 = vunpack.c.l.b16 %v563
        %v844 = vunpack.c.h.b16 %v563
        %v845 = vunpack.c.l.b16 %v564
        %v846 = vunpack.c.h.b16 %v564
        %v847 = vunpack.c.l.b16 %v565
        %v848 = vunpack.c.h.b16 %v565
        %v849 = vunpack.c.l.b16 %v566
        %v850 = vunpack.c.h.b16 %v566
        %v851 = vunpack.c.l.b16 %v567
        %v852 = vunpack.c.h.b16 %v567
        %v853 = vunpack.c.l.b16 %v568
        %v854 = vunpack.c.h.b16 %v568
        %v855 = vunpack.c.l.b16 %v569
        %v856 = vunpack.c.h.b16 %v569
        %v857 = vunpack.c.l.b16 %v570
        %v858 = vunpack.c.h.b16 %v570
        %v859 = vunpack.c.l.b16 %v571
        %v860 = vunpack.c.h.b16 %v571
        %v861 = vunpack.c.l.b16 %v572
        %v862 = vunpack.c.h.b16 %v572
        %v863 = vunpack.c.l.b16 %v573
        %v864 = vunpack.c.h.b16 %v573
        %v865 = vunpack.c.l.b16 %v574
        %v866 = vunpack.c.h.b16 %v574
        %v867 = vunpack.c.l.b16 %v575
        %v868 = vunpack.c.h.b16 %v575
        %v869 = vunpack.c.l.b16 %v576
        %v870 = vunpack.c.h.b16 %v576
        %v871 = vunpack.c.l.b16 %v577
        %v872 = vunpack.c.h.b16 %v577
        %v873 = vunpack.c.l.b16 %v578
        %v874 = vunpack.c.h.b16 %v578
        %v875 = vunpack.c.l.b16 %v579
        %v876 = vunpack.c.h.b16 %v579
        %v877 = vunpack.c.l.b16 %v580
        %v878 = vunpack.c.h.b16 %v580
        %v879 = vunpack.c.l.b16 %v581
        %v880 = vunpack.c.h.b16 %v581
        %v881 = vunpack.c.l.b16 %v582
        %v882 = vunpack.c.h.b16 %v582
        %v883 = vunpack.c.l.b16 %v583
        %v884 = vunpack.c.h.b16 %v583
        %v885 = vunpack.c.l.b16 %v584
        %v886 = vunpack.c.h.b16 %v584
        %v887 = vunpack.c.l.b16 %v585
        %v888 = vunpack.c.h.b16 %v585
        %v889 = vunpack.c.l.b16 %v586
        %v890 = vunpack.c.h.b16 %v586
        %v891 = vunpack.c.l.b16 %v587
        %v892 = vunpack.c.h.b16 %v587
        %v893 = vunpack.c.l.b16 %v588
        %v894 = vunpack.c.h.b16 %v588
        %v895 = vunpack.c.l.b16 %v589
        %v896 = vunpack.c.h.b16 %v589
        %v897 = vunpack.c.l.b16 %v590
        %v898 = vunpack.c.h.b16 %v590
        %v899 = vunpack.c.l.b16 %v591
        %v900 = vunpack.c.h.b16 %v591
        %v901 = vunpack.c.l.b16 %v592
        %v902 = vunpack.c.h.b16 %v592
        %v903 = vunpack.c.l.b16 %v593
        %v904 = vunpack.c.h.b16 %v593
        %v905 = vunpack.c.l.b16 %v594
        %v906 = vunpack.c.h.b16 %v594
        %v907 = vunpack.c.l.b16 %v595
        %v908 = vunpack.c.h.b16 %v595
        %v909 = vunpack.c.l.b16 %v596
        %v910 = vunpack.c.h.b16 %v596
        %v911 = vunpack.c.l.b16 %v597
        %v912 = vunpack.c.h.b16 %v597
        %v913 = vunpack.c.l.b16 %v598
        %v914 = vunpack.c.h.b16 %v598
        %v915 = vunpack.c.l.b16 %v599
        %v916 = vunpack.c.h.b16 %v599
        %v917 = vunpack.c.l.b16 %v600
        %v918 = vunpack.c.h.b16 %v600
        %v919 = vunpack.c.l.b16 %v601
        %v920 = vunpack.c.h.b16 %v601
        %v921 = vunpack.c.l.b16 %v602
        %v922 = vunpack.c.h.b16 %v602
        %v923 = vunpack.c.l.b16 %v603
        %v924 = vunpack.c.h.b16 %v603
        %v925 = vunpack.c.l.b16 %v604
        %v926 = vunpack.c.h.b16 %v604
        %v927 = vunpack.c.l.b16 %v605
        %v928 = vunpack.c.h.b16 %v605
        %v929 = vunpack.c.l.b16 %v606
        %v930 = vunpack.c.h.b16 %v606
        %v931 = vunpack.c.l.b16 %v607
        %v932 = vunpack.c.h.b16 %v607
        %v933 = vunpack.c.l.b16 %v608
        %v934 = vunpack.c.h.b16 %v608
        %v935 = vunpack.c.l.b16 %v609
        %v936 = vunpack.c.h.b16 %v609
        %v937 = vunpack.c.l.b16 %v610
        %v938 = vunpack.c.h.b16 %v610
        %v939 = vunpack.c.l.b16 %v611
        %v940 = vunpack.c.h.b16 %v611
        %v941 = vunpack.c.l.b16 %v612
        %v942 = vunpack.c.h.b16 %v612
        %v943 = vunpack.c.l.b16 %v613
        %v944 = vunpack.c.h.b16 %v613
        %v945 = vunpack.c.l.b16 %v614
        %v946 = vunpack.c.h.b16 %v614
        %v947 = vunpack.c.l.b16 %v615
        %v948 = vunpack.c.h.b16 %v615
        %v949 = vunpack.c.l.b16 %v616
        %v950 = vunpack.c.h.b16 %v616
        %v951 = vunpack.c.l.b16 %v617
        %v952 = vunpack.c.h.b16 %v617
        %v953 = vunpack.c.l.b16 %v618
        %v954 = vunpack.c.h.b16 %v618
        %v955 = vunpack.c.l.b16 %v619
        %v956 = vunpack.c.h.b16 %v619
        %v957 = vunpack.c.l.b16 %v620
        %v958 = vunpack.c.h.b16 %v620
        %v959 = vunpack.c.l.b16 %v621
        %v960 = vunpack.c.h.b16 %v621
        %v961 = vunpack.c.l.b16 %v622
        %v962 = vunpack.c.h.b16 %v622
        %v963 = vunpack.c.l.b16 %v623
        %v964 = vunpack.c.h.b16 %v623
        %v965 = vunpack.c.l.b16 %v624
        %v966 = vunpack.c.h.b16 %v624
        %v967 = vunpack.c.l.b16 %v625
        %v968 = vunpack.c.h.b16 %v625
        %v969 = vunpack.c.l.b16 %v626
        %v970 = vunpack.c.h.b16 %v626
        %v971 = vunpack.c.l.b16 %v627
        %v972 = vunpack.c.h.b16 %v627
        %v973 = vunpack.c.l.b16 %v628
        %v974 = vunpack.c.h.b16 %v628
        %v975 = vunpack.c.l.b16 %v629
        %v976 = vunpack.c.h.b16 %v629
        %v977 = vunpack.c.l.b16 %v630
        %v978 = vunpack.c.h.b16 %v630
        %v979 = vunpack.c.l.b16 %v631
        %v980 = vunpack.c.h.b16 %v631
        %v981 = vunpack.c.l.b16 %v632
        %v982 = vunpack.c.h.b16 %v632
        %v983 = vunpack.c.l.b16 %v633
        %v984 = vunpack.c.h.b16 %v633
        %v985 = vunpack.c.l.b16 %v634
        %v986 = vunpack.c.h.b16 %v634
        %v987 = vunpack.c.l.b16 %v635
        %v988 = vunpack.c.h.b16 %v635
        %v989 = vunpack.c.l.b16 %v636
        %v990 = vunpack.c.h.b16 %v636
        %v991 = vunpack.c.l.b16 %v637
        %v992 = vunpack.c.h.b16 %v637
        %v993 = vunpack.c.l.b16 %v638
        %v994 = vunpack.c.h.b16 %v638
        %v995 = vunpack.c.l.b16 %v639
        %v996 = vunpack.c.h.b16 %v639
        %v997 = vunpack.c.l.b16 %v640
        %v998 = vunpack.c.h.b16 %v640
        %v999 = vunpack.c.l.b16 %v641
        %v1000 = vunpack.c.h.b16 %v641
        %v1001 = vunpack.c.l.b16 %v642
        %v1002 = vunpack.c.h.b16 %v642
        %v1003 = vunpack.c.l.b16 %v643
        %v1004 = vunpack.c.h.b16 %v643
        %v1005 = vunpack.c.l.b16 %v644
        %v1006 = vunpack.c.h.b16 %v644
        %v1007 = vunpack.c.l.b16 %v645
        %v1008 = vunpack.c.h.b16 %v645
        %v1009 = vunpack.c.l.b16 %v646
        %v1010 = vunpack.c.h.b16 %v646
        %v1011 = vunpack.c.l.b16 %v647
        %v1012 = vunpack.c.h.b16 %v647
        %v1013 = vunpack.c.l.b16 %v648
        %v1014 = vunpack.c.h.b16 %v648
        %v1015 = vunpack.c.l.b16 %v649
        %v1016 = vunpack.c.h.b16 %v649
        %v1017 = vunpack.c.l.b16 %v650
        %v1018 = vunpack.c.h.b16 %v650
        %v1019 = vunpack.c.l.b16 %v651
        %v1020 = vunpack.c.h.b16 %v651
        %v1021 = vunpack.c.l.b16 %v652
        %v1022 = vunpack.c.h.b16 %v652
        %v1023 = vunpack.c.l.b16 %v653
        %v1024 = vunpack.c.h.b16 %v653
        %v1025 = vunpack.c.l.b16 %v654
        %v1026 = vunpack.c.h.b16 %v654
        %v1027 = vunpack.c.l.b16 %v655
        %v1028 = vunpack.c.h.b16 %v655
        %v1029 = vunpack.c.l.b16 %v656
        %v1030 = vunpack.c.h.b16 %v656
        %v1031 = vunpack.c.l.b16 %v657
        %v1032 = vunpack.c.h.b16 %v657
        %v1033 = vunpack.c.l.b16 %v658
        %v1034 = vunpack.c.h.b16 %v658
        %v1035 = vunpack.c.l.b16 %v659
        %v1036 = vunpack.c.h.b16 %v659
        %v1037 = vunpack.c.l.b16 %v660
        %v1038 = vunpack.c.h.b16 %v660
        %v1039 = vunpack.c.l.b16 %v661
        %v1040 = vunpack.c.h.b16 %v661
        %v1041 = vunpack.c.l.b16 %v662
        %v1042 = vunpack.c.h.b16 %v662
        %v1043 = vunpack.c.l.b16 %v663
        %v1044 = vunpack.c.h.b16 %v663
        %v1045 = vunpack.c.l.b16 %v664
        %v1046 = vunpack.c.h.b16 %v664
        %v1047 = vunpack.c.l.b16 %v665
        %v1048 = vunpack.c.h.b16 %v665
        %v1049 = vunpack.c.l.b16 %v666
        %v1050 = vunpack.c.h.b16 %v666
        %v1051 = vpack.c.b16 %v799, %v795
        %v1052 = vpack.c.b16 %v800, %v796
        %v1053 = vpack.c.b16 %v801, %v797
        %v1054 = vpack.c.b16 %v802, %v798
        %v1055 = vpack.c.b16 %v807, %v803
        %v1056 = vpack.c.b16 %v808, %v804
        %v1057 = vpack.c.b16 %v809, %v805
        %v1058 = vpack.c.b16 %v810, %v806
        %v1059 = vpack.c.b16 %v815, %v811
        %v1060 = vpack.c.b16 %v816, %v812
        %v1061 = vpack.c.b16 %v817, %v813
        %v1062 = vpack.c.b16 %v818, %v814
        %v1063 = vpack.c.b16 %v823, %v819
        %v1064 = vpack.c.b16 %v824, %v820
        %v1065 = vpack.c.b16 %v825, %v821
        %v1066 = vpack.c.b16 %v826, %v822
        %v1067 = vpack.c.b16 %v831, %v827
        %v1068 = vpack.c.b16 %v832, %v828
        %v1069 = vpack.c.b16 %v833, %v829
        %v1070 = vpack.c.b16 %v834, %v830
        %v1071 = vpack.c.b16 %v839, %v835
        %v1072 = vpack.c.b16 %v840, %v836
        %v1073 = vpack.c.b16 %v841, %v837
        %v1074 = vpack.c.b16 %v842, %v838
        %v1075 = vpack.c.b16 %v847, %v843
        %v1076 = vpack.c.b16 %v848, %v844
        %v1077 = vpack.c.b16 %v849, %v845
        %v1078 = vpack.c.b16 %v850, %v846
        %v1079 = vpack.c.b16 %v855, %v851
        %v1080 = vpack.c.b16 %v856, %v852
        %v1081 = vpack.c.b16 %v857, %v853
        %v1082 = vpack.c.b16 %v858, %v854
        %v1083 = vpack.c.b16 %v863, %v859
        %v1084 = vpack.c.b16 %v864, %v860
        %v1085 = vpack.c.b16 %v865, %v861
        %v1086 = vpack.c.b16 %v866, %v862
        %v1087 = vpack.c.b16 %v871, %v867
        %v1088 = vpack.c.b16 %v872, %v868
        %v1089 = vpack.c.b16 %v873, %v869
        %v1090 = vpack.c.b16 %v874, %v870
        %v1091 = vpack.c.b16 %v879, %v875
        %v1092 = vpack.c.b16 %v880, %v876
        %v1093 = vpack.c.b16 %v881, %v877
        %v1094 = vpack.c.b16 %v882, %v878
        %v1095 = vpack.c.b16 %v887, %v883
        %v1096 = vpack.c.b16 %v888, %v884
        %v1097 = vpack.c.b16 %v889, %v885
        %v1098 = vpack.c.b16 %v890, %v886
        %v1099 = vpack.c.b16 %v895, %v891
        %v1100 = vpack.c.b16 %v896, %v892
        %v1101 = vpack.c.b16 %v897, %v893
        %v1102 = vpack.c.b16 %v898, %v894
        %v1103 = vpack.c.b16 %v903, %v899
        %v1104 = vpack.c.b16 %v904, %v900
        %v1105 = vpack.c.b16 %v905, %v901
        %v1106 = vpack.c.b16 %v906, %v902
        %v1107 = vpack.c.b16 %v911, %v907
        %v1108 = vpack.c.b16 %v912, %v908
        %v1109 = vpack.c.b16 %v913, %v909
        %v1110 = vpack.c.b16 %v914, %v910
        %v1111 = vpack.c.b16 %v919, %v915
        %v1112 = vpack.c.b16 %v920, %v916
        %v1113 = vpack.c.b16 %v921, %v917
        %v1114 = vpack.c.b16 %v922, %v918
        %v1115 = vpack.c.b16 %v927, %v923
        %v1116 = vpack.c.b16 %v928, %v924
        %v1117 = vpack.c.b16 %v929, %v925
        %v1118 = vpack.c.b16 %v930, %v926
        %v1119 = vpack.c.b16 %v935, %v931
        %v1120 = vpack.c.b16 %v936, %v932
        %v1121 = vpack.c.b16 %v937, %v933
        %v1122 = vpack.c.b16 %v938, %v934
        %v1123 = vpack.c.b16 %v943, %v939
        %v1124 = vpack.c.b16 %v944, %v940
        %v1125 = vpack.c.b16 %v945, %v941
        %v1126 = vpack.c.b16 %v946, %v942
        %v1127 = vpack.c.b16 %v951, %v947
        %v1128 = vpack.c.b16 %v952, %v948
        %v1129 = vpack.c.b16 %v953, %v949
        %v1130 = vpack.c.b16 %v954, %v950
        %v1131 = vpack.c.b16 %v959, %v955
        %v1132 = vpack.c.b16 %v960, %v956
        %v1133 = vpack.c.b16 %v961, %v957
        %v1134 = vpack.c.b16 %v962, %v958
        %v1135 = vpack.c.b16 %v967, %v963
        %v1136 = vpack.c.b16 %v968, %v964
        %v1137 = vpack.c.b16 %v969, %v965
        %v1138 = vpack.c.b16 %v970, %v966
        %v1139 = vpack.c.b16 %v975, %v971
        %v1140 = vpack.c.b16 %v976, %v972
        %v1141 = vpack.c.b16 %v977, %v973
        %v1142 = vpack.c.b16 %v978, %v974
        %v1143 = vpack.c.b16 %v983, %v979
        %v1144 = vpack.c.b16 %v984, %v980
        %v1145 = vpack.c.b16 %v985, %v981
        %v1146 = vpack.c.b16 %v986, %v982
        %v1147 = vpack.c.b16 %v991, %v987
        %v1148 = vpack.c.b16 %v992, %v988
        %v1149 = vpack.c.b16 %v993, %v989
        %v1150 = vpack.c.b16 %v994, %v990
        %v1151 = vpack.c.b16 %v999, %v995
        %v1152 = vpack.c.b16 %v1000, %v996
        %v1153 = vpack.c.b16 %v1001, %v997
        %v1154 = vpack.c.b16 %v1002, %v998
        %v1155 = vpack.c.b16 %v1007, %v1003
        %v1156 = vpack.c.b16 %v1008, %v1004
        %v1157 = vpack.c.b16 %v1009, %v1005
        %v1158 = vpack.c.b16 %v1010, %v1006
        %v1159 = vpack.c.b16 %v1015, %v1011
        %v1160 = vpack.c.b16 %v1016, %v1012
        %v1161 = vpack.c.b16 %v1017, %v1013
        %v1162 = vpack.c.b16 %v1018, %v1014
        %v1163 = vpack.c.b16 %v1023, %v1019
        %v1164 = vpack.c.b16 %v1024, %v1020
        %v1165 = vpack.c.b16 %v1025, %v1021
        %v1166 = vpack.c.b16 %v1026, %v1022
        %v1167 = vpack.c.b16 %v1031, %v1027
        %v1168 = vpack.c.b16 %v1032, %v1028
        %v1169 = vpack.c.b16 %v1033, %v1029
        %v1170 = vpack.c.b16 %v1034, %v1030
        %v1171 = vpack.c.b16 %v1039, %v1035
        %v1172 = vpack.c.b16 %v1040, %v1036
        %v1173 = vpack.c.b16 %v1041, %v1037
        %v1174 = vpack.c.b16 %v1042, %v1038
        %v1175 = vpack.c.b16 %v1047, %v1043
        %v1176 = vpack.c.b16 %v1048, %v1044
        %v1177 = vpack.c.b16 %v1049, %v1045
        %v1178 = vpack.c.b16 %v1050, %v1046
        %1307 = vmatprep.subr.bf16.mxu0 %v1080
        %1308 = vmatpush1.bf16.msra.mxu0 %v1079
        %1309 = vmatprep.subr.bf16.mxu0 %v1076
        %1310 = vmatpush1.bf16.msra.mxu0 %v1075
        %1311 = vmatprep.subr.bf16.mxu0 %v1072
        %1312 = vmatpush1.bf16.msra.mxu0 %v1071
        %1313 = vmatprep.subr.bf16.mxu0 %v1068
        %1314 = vmatpush1.bf16.msra.mxu0 %v1067
        %1315 = vmatprep.subr.bf16.mxu0 %v1064
        %1316 = vmatpush1.bf16.msra.mxu0 %v1063
        %1317 = vmatprep.subr.bf16.mxu0 %v1060
        %1318 = vmatpush1.bf16.msra.mxu0 %v1059
        %1319 = vmatprep.subr.bf16.mxu0 %v1056
        %1320 = vmatpush1.bf16.msra.mxu0 %v1055
        %1321 = vmatprep.subr.bf16.mxu0 %v1052
        %1322 = vmatpush1.bf16.msra.mxu0 %v1051
        %1323 = vmatprep.subr.bf16.mxu0 %v1112
        %1324 = vmatpush2.bf16.msra.mxu0 %v1111
        %1325 = vmatprep.subr.bf16.mxu0 %v1108
        %1326 = vmatpush2.bf16.msra.mxu0 %v1107
        %1327 = vmatprep.subr.bf16.mxu0 %v1104
        %1328 = vmatpush2.bf16.msra.mxu0 %v1103
        %1329 = vmatprep.subr.bf16.mxu0 %v1100
        %1330 = vmatpush2.bf16.msra.mxu0 %v1099
        %1331 = vmatprep.subr.bf16.mxu0 %v1096
        %1332 = vmatpush2.bf16.msra.mxu0 %v1095
        %1333 = vmatprep.subr.bf16.mxu0 %v1092
        %1334 = vmatpush2.bf16.msra.mxu0 %v1091
        %1335 = vmatprep.subr.bf16.mxu0 %v1088
        %1336 = vmatpush2.bf16.msra.mxu0 %v1087
        %1337 = vmatprep.subr.bf16.mxu0 %v1084
        %1338 = vmatpush2.bf16.msra.mxu0 %v1083
        %1339 = vmatprep.mubr.bf16.mxu0 %v536
        %1340 = vmatmul.mubr.bf16.gmra.mxu0 %v535
        %v1341 = vpop.f32.mrf.mxu0
        %v1342 = vadd.f32 0.0, %v1341
        %v1343 = vpop.f32.mrf.mxu0
        %v1344 = vadd.f32 0.0, %v1343
        %v1345 = vpop.f32.mrf.mxu0
        %v1346 = vpop.f32.mrf.mxu0
        %1347 = vdwg.mxu0
        %1348 = vmatprep.subr.bf16.mxu0 %v1144
        %1349 = vmatpush1.bf16.msra.mxu0 %v1143
        %1350 = vmatprep.subr.bf16.mxu0 %v1140
        %1351 = vmatpush1.bf16.msra.mxu0 %v1139
        %1352 = vmatprep.subr.bf16.mxu0 %v1136
        %1353 = vmatpush1.bf16.msra.mxu0 %v1135
        %1354 = vmatprep.subr.bf16.mxu0 %v1132
        %1355 = vmatpush1.bf16.msra.mxu0 %v1131
        %1356 = vmatprep.subr.bf16.mxu0 %v1128
        %1357 = vmatpush1.bf16.msra.mxu0 %v1127
        %1358 = vmatprep.subr.bf16.mxu0 %v1124
        %1359 = vmatpush1.bf16.msra.mxu0 %v1123
        %1360 = vmatprep.subr.bf16.mxu0 %v1120
        %1361 = vmatpush1.bf16.msra.mxu0 %v1119
        %1362 = vmatprep.subr.bf16.mxu0 %v1116
        %1363 = vmatpush1.bf16.msra.mxu0 %v1115
        %1364 = vmatprep.subr.bf16.mxu0 %v1176
        %1365 = vmatpush2.bf16.msra.mxu0 %v1175
        %1366 = vmatprep.subr.bf16.mxu0 %v1172
        %1367 = vmatpush2.bf16.msra.mxu0 %v1171
        %1368 = vmatprep.subr.bf16.mxu0 %v1168
        %1369 = vmatpush2.bf16.msra.mxu0 %v1167
        %1370 = vmatprep.subr.bf16.mxu0 %v1164
        %1371 = vmatpush2.bf16.msra.mxu0 %v1163
        %1372 = vmatprep.subr.bf16.mxu0 %v1160
        %1373 = vmatpush2.bf16.msra.mxu0 %v1159
        %1374 = vmatprep.subr.bf16.mxu0 %v1156
        %1375 = vmatpush2.bf16.msra.mxu0 %v1155
        %1376 = vmatprep.subr.bf16.mxu0 %v1152
        %1377 = vmatpush2.bf16.msra.mxu0 %v1151
        %1378 = vmatprep.subr.bf16.mxu0 %v1148
        %1379 = vmatpush2.bf16.msra.mxu0 %v1147
        %1380 = vmatprep.mubr.bf16.mxu0 %v538
        %1381 = vmatmul.mubr.bf16.gmra.mxu0 %v537
        %v1382 = vpop.f32.mrf.mxu0
        %v1383 = vadd.f32 %v1342, %v1382
        %v1384 = vpop.f32.mrf.mxu0
        %v1385 = vadd.f32 %v1344, %v1384
        %v1386 = vpop.f32.mrf.mxu0
        %v1387 = vpop.f32.mrf.mxu0
        %1388 = vdwg.mxu0
        %1389 = vmatprep.subr.bf16.mxu0 %v1082
        %1390 = vmatpush1.bf16.msra.mxu0 %v1081
        %1391 = vmatprep.subr.bf16.mxu0 %v1078
        %1392 = vmatpush1.bf16.msra.mxu0 %v1077
        %1393 = vmatprep.subr.bf16.mxu0 %v1074
        %1394 = vmatpush1.bf16.msra.mxu0 %v1073
        %1395 = vmatprep.subr.bf16.mxu0 %v1070
        %1396 = vmatpush1.bf16.msra.mxu0 %v1069
        %1397 = vmatprep.subr.bf16.mxu0 %v1066
        %1398 = vmatpush1.bf16.msra.mxu0 %v1065
        %1399 = vmatprep.subr.bf16.mxu0 %v1062
        %1400 = vmatpush1.bf16.msra.mxu0 %v1061
        %1401 = vmatprep.subr.bf16.mxu0 %v1058
        %1402 = vmatpush1.bf16.msra.mxu0 %v1057
        %1403 = vmatprep.subr.bf16.mxu0 %v1054
        %1404 = vmatpush1.bf16.msra.mxu0 %v1053
        %1405 = vmatprep.subr.bf16.mxu0 %v1114
        %1406 = vmatpush2.bf16.msra.mxu0 %v1113
        %1407 = vmatprep.subr.bf16.mxu0 %v1110
        %1408 = vmatpush2.bf16.msra.mxu0 %v1109
        %1409 = vmatprep.subr.bf16.mxu0 %v1106
        %1410 = vmatpush2.bf16.msra.mxu0 %v1105
        %1411 = vmatprep.subr.bf16.mxu0 %v1102
        %1412 = vmatpush2.bf16.msra.mxu0 %v1101
        %1413 = vmatprep.subr.bf16.mxu0 %v1098
        %1414 = vmatpush2.bf16.msra.mxu0 %v1097
        %1415 = vmatprep.subr.bf16.mxu0 %v1094
        %1416 = vmatpush2.bf16.msra.mxu0 %v1093
        %1417 = vmatprep.subr.bf16.mxu0 %v1090
        %1418 = vmatpush2.bf16.msra.mxu0 %v1089
        %1419 = vmatprep.subr.bf16.mxu0 %v1086
        %1420 = vmatpush2.bf16.msra.mxu0 %v1085
        %1421 = vmatprep.mubr.bf16.mxu0 %v536
        %1422 = vmatmul.mubr.bf16.gmra.mxu0 %v535
        %v1423 = vpop.f32.mrf.mxu0
        %v1424 = vadd.f32 0.0, %v1423
        %v1425 = vpop.f32.mrf.mxu0
        %v1426 = vadd.f32 0.0, %v1425
        %v1427 = vpop.f32.mrf.mxu0
        %v1428 = vpop.f32.mrf.mxu0
        %1429 = vdwg.mxu0
        %1430 = vmatprep.subr.bf16.mxu0 %v1146
        %1431 = vmatpush1.bf16.msra.mxu0 %v1145
        %1432 = vmatprep.subr.bf16.mxu0 %v1142
        %1433 = vmatpush1.bf16.msra.mxu0 %v1141
        %1434 = vmatprep.subr.bf16.mxu0 %v1138
        %1435 = vmatpush1.bf16.msra.mxu0 %v1137
        %1436 = vmatprep.subr.bf16.mxu0 %v1134
        %1437 = vmatpush1.bf16.msra.mxu0 %v1133
        %1438 = vmatprep.subr.bf16.mxu0 %v1130
        %1439 = vmatpush1.bf16.msra.mxu0 %v1129
        %1440 = vmatprep.subr.bf16.mxu0 %v1126
        %1441 = vmatpush1.bf16.msra.mxu0 %v1125
        %1442 = vmatprep.subr.bf16.mxu0 %v1122
        %1443 = vmatpush1.bf16.msra.mxu0 %v1121
        %1444 = vmatprep.subr.bf16.mxu0 %v1118
        %1445 = vmatpush1.bf16.msra.mxu0 %v1117
        %1446 = vmatprep.subr.bf16.mxu0 %v1178
        %1447 = vmatpush2.bf16.msra.mxu0 %v1177
        %1448 = vmatprep.subr.bf16.mxu0 %v1174
        %1449 = vmatpush2.bf16.msra.mxu0 %v1173
        %1450 = vmatprep.subr.bf16.mxu0 %v1170
        %1451 = vmatpush2.bf16.msra.mxu0 %v1169
        %1452 = vmatprep.subr.bf16.mxu0 %v1166
        %1453 = vmatpush2.bf16.msra.mxu0 %v1165
        %1454 = vmatprep.subr.bf16.mxu0 %v1162
        %1455 = vmatpush2.bf16.msra.mxu0 %v1161
        %1456 = vmatprep.subr.bf16.mxu0 %v1158
        %1457 = vmatpush2.bf16.msra.mxu0 %v1157
        %1458 = vmatprep.subr.bf16.mxu0 %v1154
        %1459 = vmatpush2.bf16.msra.mxu0 %v1153
        %1460 = vmatprep.subr.bf16.mxu0 %v1150
        %1461 = vmatpush2.bf16.msra.mxu0 %v1149
        %1462 = vmatprep.mubr.bf16.mxu0 %v538
        %1463 = vmatmul.mubr.bf16.gmra.mxu0 %v537
        %v1464 = vpop.f32.mrf.mxu0
        %v1465 = vadd.f32 %v1424, %v1464
        %v1466 = vpop.f32.mrf.mxu0
        %v1467 = vadd.f32 %v1426, %v1466
        %v1468 = vpop.f32.mrf.mxu0
        %v1469 = vpop.f32.mrf.mxu0
        %1470 = vdwg.mxu0
        %v1475 = vcombine.low %v1383, %v1385
        %v1476 = vcombine.low %v1465, %v1467
        %v1478 = vunpack.c.l.s4 1983009808
        %v1479 = vunpack.c.0.s8 %v1478
        %v1480 = vlaneseq
        %v1481 = vshrl.u32 %v1480, 7
        %v1482 = vsub.s32 %v1479, %v1481
        %v1483 = vrot.slane %v1475, %v1482
        %v1485 = vunpack.c.l.s4 1983009808
        %v1486 = vunpack.c.0.s8 %v1485
        %v1487 = vlaneseq
        %v1488 = vshrl.u32 %v1487, 7
        %v1489 = vsub.s32 %v1486, %v1488
        %v1490 = vrot.slane %v1476, %v1489
        %v1491 = vcombine.low %v1483, %v1490
        %v1493 = vadd.f32 %v511, %v1491
        %1494 = vst [vmem:[#allocation2] sm:$0xff] %v1493
        %p1495 = scmp.eq.s32.totalorder %s19, 3
        // Predicated region
        $region60: #{binary_classifier_cnn.5} parent=50 // pred_check
          %p1496 = pneg %p1495
        $region61: #{binary_classifier_cnn.5} parent=50 // pred_check_branch
          %1498 = sbr.rel (%p1496) target = $region63
        $region62: #{binary_classifier_cnn.5} parent=50 // pred_region
          %v1499 = vld [vmem:[#allocation2] sm:$0xff]
          %v1500 = vld [vmem:[%s498] sm:$0xf]
          %v1502 = vlaneseq
          %v1503 = vshrl.u32 %v1502, 7
          %v1504 = vsub.s32 0, %v1503
          %v1505 = vrot.slane %v1500, %v1504
          %v1506 = vlaneseq
          %v1507 = vshrl.u32 %v1506, 7
          %v1508 = vsub.s32 1, %v1507
          %v1509 = vrot.slane %v1500, %v1508
          %v1510 = vlaneseq
          %v1511 = vshrl.u32 %v1510, 7
          %v1512 = vsub.s32 2, %v1511
          %v1513 = vrot.slane %v1500, %v1512
          %v1514 = vlaneseq
          %v1515 = vshrl.u32 %v1514, 7
          %v1516 = vsub.s32 3, %v1515
          %v1517 = vrot.slane %v1500, %v1516
          %v1518 = vcombine.low %v1505, %v1509
          %v1519 = vcombine.low %v1513, %v1517
          %v1521 = vunpack.c.l.s4 1983009808
          %v1522 = vunpack.c.0.s8 %v1521
          %v1523 = vlaneseq
          %v1524 = vshrl.u32 %v1523, 7
          %v1525 = vsub.s32 %v1522, %v1524
          %v1526 = vrot.slane %v1518, %v1525
          %v1528 = vunpack.c.l.s4 1983009808
          %v1529 = vunpack.c.0.s8 %v1528
          %v1530 = vlaneseq
          %v1531 = vshrl.u32 %v1530, 7
          %v1532 = vsub.s32 %v1529, %v1531
          %v1533 = vrot.slane %v1519, %v1532
          %v1534 = vcombine.low %v1526, %v1533
          %v1536 = vadd.f32 %v1499, %v1534
          %1537 = vst [vmem:[%s504] sm:$0xff] %v1536
        $region63: #{binary_classifier_cnn.5} parent=50 // pred_fallthru
          _
        %s1538 = smul.u32 4, %s18
        %p1539 = scmp.lt.s32.totalorder %s1538, 7
        %s1540 = scalar_select %p1539, %s1538, 7
        %s1541 = smul.addr %s1540, 2
        %s1542 = scalar_lea.vmem %s3, %s1541
        // Predicated region
        $region64: #{binary_classifier_cnn.5} parent=50 // pred_check
          %p1543 = pneg %p124
        $region65: #{binary_classifier_cnn.5} parent=50 // pred_check_branch
          %1545 = sbr.rel (%p1543) target = $region67
        $region66: #{binary_classifier_cnn.5} parent=50 // pred_region
          %s1546 = smul.u32 4, %s18
        $region67: #{binary_classifier_cnn.5} parent=50 // pred_fallthru
          _
      $region51: #{binary_classifier_cnn.5} parent=5 // pred_fallthru
        _
      %p1547 = scmp.le.s32.totalorder 2, %s9
      // Predicated region
      $region68: #{binary_classifier_cnn.5} parent=5 // pred_check
        %p1548 = pneg %p1547
      $region69: #{binary_classifier_cnn.5} parent=5 // pred_check_branch
        %1550 = sbr.rel (%p1548) target = $region71
      $region70: #{binary_classifier_cnn.5} parent=5 // pred_region
        %s1551 = ssub.s32 %s9, 2
        // Predicated region
        $region72: #{binary_classifier_cnn.5} parent=70 // pred_check
          %p1552 = pneg %p130
        $region73: #{binary_classifier_cnn.5} parent=70 // pred_check_branch
          %1554 = sbr.rel (%p1552) target = $region75
        $region74: #{binary_classifier_cnn.5} parent=70 // pred_region
          %s1555 = smul.u32 4, %s20
          %p1556 = scmp.lt.s32.totalorder %s1555, 7
          %s1557 = scalar_select %p1556, %s1555, 7
          %s1558 = smul.addr %s1557, 2
          %s1559 = scalar_lea.vmem %s3, %s1558
        $region75: #{binary_classifier_cnn.5} parent=70 // pred_fallthru
          _
      $region71: #{binary_classifier_cnn.5} parent=5 // pred_fallthru
        _
    $region6: #{binary_classifier_cnn.5} parent=1 // loop_footer
      %s13 = sadd.s32 1, %s9
    $region7: #{binary_classifier_cnn.5} parent=1 // loop_footer_branch
      %8 = sbr.rel target = $region3
    $region8: #{binary_classifier_cnn.5} parent=1 // loop_exit
      _

// kernel: binary_classifier_cnn.4
$region0: #{binary_classifier_cnn.4}
  #allocation0 [shape = 'u32[]', space=smem, size = 0x4, offset = 0x4, fixed_abs, tag = 'smem constant byte address 0x4 - core index']
  #allocation1 [shape = 'u32[144,128]{1,0:T(1,128)}', space=vmem, size = 0x12000, scoped, tag = 'internal scratch']
  %s0 = inlined_call_operand.vmem [shape: f32[2,20,320], index: 0, kind: input, shape index: {}]
  %s1 = inlined_call_operand.hbm [shape: bf16[5,320,512], index: 1, kind: input, shape index: {}]
  %s2 = inlined_call_operand.hbm [shape: f32[1,512], index: 2, kind: input, shape index: {}]
  %s3 = inlined_call_operand.vmem [shape: f32[16,256], index: 3, kind: output, shape index: {}]
  %s4 = sld [smem:[#allocation0]]
  $region30: #{binary_classifier_cnn.4} parent=0
    _
  %s6 = ssub.s32 1, %s4
  %s7 = scalar_select 0, %s6, %s4
  $region1: #{binary_classifier_cnn.4} parent=0
    #allocation2 [shape = 'u8[1638400]{0}', space=vmem, size = 0x190000, scoped, tag = 'input window, operand 1, single buffered']
    #allocation3 [shape = 's32[1]{0}', space=sflag, size = 0x4, scoped, tag = 'scoped memory for binary_classifier_cnn.4']
    #allocation4 [shape = 'u8[2048]{0}', space=vmem, size = 0x800, scoped, tag = 'input window, operand 2, single buffered']
    #allocation5 [shape = 's32[1]{0}', space=sflag, size = 0x4, scoped, tag = 'scoped memory for binary_classifier_cnn.4']
    %8 = vsyncpa [#allocation3], 0
    %9 = vsyncpa [#allocation5], 0
    // Predicated region
    $region2: #{binary_classifier_cnn.4} parent=1 // pred_check
      _
    $region3: #{binary_classifier_cnn.4} parent=1 // pred_check_branch
      %11 = sbr.rel (0) target = $region5
    $region4: #{binary_classifier_cnn.4} parent=1 // pred_region
      _
    $region5: #{binary_classifier_cnn.4} parent=1 // pred_fallthru
      _
    // Predicated region
    $region6: #{binary_classifier_cnn.4} parent=1 // pred_check
      _
    $region7: #{binary_classifier_cnn.4} parent=1 // pred_check_branch
      %13 = sbr.rel (0) target = $region9
    $region8: #{binary_classifier_cnn.4} parent=1 // pred_region
      %s15 = ssub.s32 51200, 51200
      %16 = vsyncadd [#allocation3], %s15
      %s17 = sshll.u32 [#allocation2], 4
      %s18 = int_to_ptr.vmem [resolvable:$true] %s17
      %23 = dma.hbm_to_vmem [thread:$0]  %s1, 51200, %s18, [#allocation3], 256, 256, 16
    $region9: #{binary_classifier_cnn.4} parent=1 // pred_fallthru
      _
    // Predicated region
    $region10: #{binary_classifier_cnn.4} parent=1 // pred_check
      _
    $region11: #{binary_classifier_cnn.4} parent=1 // pred_check_branch
      %25 = sbr.rel (0) target = $region13
    $region12: #{binary_classifier_cnn.4} parent=1 // pred_region
      %s27 = ssub.s32 64, 64
      %28 = vsyncadd [#allocation5], %s27
      %s30 = sshll.u32 [#allocation4], 4
      %s31 = int_to_ptr.vmem [resolvable:$true] %s30
      %33 = dma.hbm_to_vmem [thread:$0]  %s2, 64, %s31, [#allocation5]
    $region13: #{binary_classifier_cnn.4} parent=1 // pred_fallthru
      _
    // Predicated region
    $region14: #{binary_classifier_cnn.4} parent=1 // pred_check
      _
    $region15: #{binary_classifier_cnn.4} parent=1 // pred_check_branch
      %35 = sbr.rel (0) target = $region17
    $region16: #{binary_classifier_cnn.4} parent=1 // pred_region
      %36 = dma.done [#allocation3], 51200
    $region17: #{binary_classifier_cnn.4} parent=1 // pred_fallthru
      _
    // Predicated region
    $region18: #{binary_classifier_cnn.4} parent=1 // pred_check
      _
    $region19: #{binary_classifier_cnn.4} parent=1 // pred_check_branch
      %38 = sbr.rel (0) target = $region21
    $region20: #{binary_classifier_cnn.4} parent=1 // pred_region
      %39 = dma.done [#allocation5], 64
    $region21: #{binary_classifier_cnn.4} parent=1 // pred_fallthru
      _
    %v41 = vld [vmem:[%s0] sm:$0xff]
    %v42 = vld [vmem:[%s0 + $0x8] sm:$0xff]
    %v43 = vld [vmem:[%s0 + $0x10] sm:$0xff]
    %v44 = vld [vmem:[%s0 + $0x18] sm:$0xff]
    %v45 = vld [vmem:[%s0 + $0x20] sm:$0xff]
    %v46 = vld [vmem:[%s0 + $0x28] sm:$0xff]
    %v47 = vld [vmem:[%s0 + $0x48] sm:$0xff]
    %v48 = vld [vmem:[%s0 + $0x50] sm:$0xff]
    %v49 = vld [vmem:[%s0 + $0x58] sm:$0xff]
    %v50 = vld [vmem:[%s0 + $0x60] sm:$0xff]
    %v51 = vld [vmem:[%s0 + $0x68] sm:$0xff]
    %v52 = vld [vmem:[%s0 + $0x70] sm:$0xff]
    %v53 = vpack.c.bf16 %v44, %v41
    %v54 = vpack.c.bf16 %v45, %v42
    %v55 = vpack.c.bf16 %v46, %v43
    %v56 = vpack.c.bf16 %v50, %v47
    %v57 = vpack.c.bf16 %v51, %v48
    %v58 = vpack.c.bf16 %v52, %v49
    %v59 = vld [vmem:[#allocation2] sm:$0xff]
    %v60 = vld [vmem:[#allocation2 + $0x8] sm:$0xff]
    %v61 = vld [vmem:[#allocation2 + $0x10] sm:$0xff]
    %v62 = vld [vmem:[#allocation2 + $0x18] sm:$0xff]
    %v63 = vld [vmem:[#allocation2 + $0x20] sm:$0xff]
    %v64 = vld [vmem:[#allocation2 + $0x28] sm:$0xff]
    %v65 = vld [vmem:[#allocation2 + $0x30] sm:$0xff]
    %v66 = vld [vmem:[#allocation2 + $0x38] sm:$0xff]
    %v67 = vld [vmem:[#allocation2 + $0x40] sm:$0xff]
    %v68 = vld [vmem:[#allocation2 + $0x48] sm:$0xff]
    %v69 = vld [vmem:[#allocation2 + $0x50] sm:$0xff]
    %v70 = vld [vmem:[#allocation2 + $0x58] sm:$0xff]
    %v71 = vld [vmem:[#allocation2 + $0x60] sm:$0xff]
    %v72 = vld [vmem:[#allocation2 + $0x68] sm:$0xff]
    %v73 = vld [vmem:[#allocation2 + $0x70] sm:$0xff]
    %v74 = vld [vmem:[#allocation2 + $0x78] sm:$0xff]
    %v75 = vld [vmem:[#allocation2 + $0x80] sm:$0xff]
    %v76 = vld [vmem:[#allocation2 + $0x88] sm:$0xff]
    %v77 = vld [vmem:[#allocation2 + $0x90] sm:$0xff]
    %v78 = vld [vmem:[#allocation2 + $0x98] sm:$0xff]
    %v79 = vld [vmem:[#allocation2 + $0xa0] sm:$0xff]
    %v80 = vld [vmem:[#allocation2 + $0xa8] sm:$0xff]
    %v81 = vld [vmem:[#allocation2 + $0xb0] sm:$0xff]
    %v82 = vld [vmem:[#allocation2 + $0xb8] sm:$0xff]
    %v83 = vld [vmem:[#allocation2 + $0xc0] sm:$0xff]
    %v84 = vld [vmem:[#allocation2 + $0xc8] sm:$0xff]
    %v85 = vld [vmem:[#allocation2 + $0xd0] sm:$0xff]
    %v86 = vld [vmem:[#allocation2 + $0xd8] sm:$0xff]
    %v87 = vld [vmem:[#allocation2 + $0xe0] sm:$0xff]
    %v88 = vld [vmem:[#allocation2 + $0xe8] sm:$0xff]
    %v89 = vld [vmem:[#allocation2 + $0xf0] sm:$0xff]
    %v90 = vld [vmem:[#allocation2 + $0xf8] sm:$0xff]
    %v91 = vld [vmem:[#allocation2 + $0x100] sm:$0xff]
    %v92 = vld [vmem:[#allocation2 + $0x108] sm:$0xff]
    %v93 = vld [vmem:[#allocation2 + $0x110] sm:$0xff]
    %v94 = vld [vmem:[#allocation2 + $0x118] sm:$0xff]
    %v95 = vld [vmem:[#allocation2 + $0x120] sm:$0xff]
    %v96 = vld [vmem:[#allocation2 + $0x128] sm:$0xff]
    %v97 = vld [vmem:[#allocation2 + $0x130] sm:$0xff]
    %v98 = vld [vmem:[#allocation2 + $0x138] sm:$0xff]
    %v99 = vld [vmem:[#allocation2 + $0x140] sm:$0xff]
    %v100 = vld [vmem:[#allocation2 + $0x148] sm:$0xff]
    %v101 = vld [vmem:[#allocation2 + $0x150] sm:$0xff]
    %v102 = vld [vmem:[#allocation2 + $0x158] sm:$0xff]
    %v103 = vld [vmem:[#allocation2 + $0x160] sm:$0xff]
    %v104 = vld [vmem:[#allocation2 + $0x168] sm:$0xff]
    %v105 = vld [vmem:[#allocation2 + $0x170] sm:$0xff]
    %v106 = vld [vmem:[#allocation2 + $0x178] sm:$0xff]
    %v107 = vld [vmem:[#allocation2 + $0x180] sm:$0xff]
    %v108 = vld [vmem:[#allocation2 + $0x188] sm:$0xff]
    %v109 = vld [vmem:[#allocation2 + $0x190] sm:$0xff]
    %v110 = vld [vmem:[#allocation2 + $0x198] sm:$0xff]
    %v111 = vld [vmem:[#allocation2 + $0x1a0] sm:$0xff]
    %v112 = vld [vmem:[#allocation2 + $0x1a8] sm:$0xff]
    %v113 = vld [vmem:[#allocation2 + $0x1b0] sm:$0xff]
    %v114 = vld [vmem:[#allocation2 + $0x1b8] sm:$0xff]
    %v115 = vld [vmem:[#allocation2 + $0x1c0] sm:$0xff]
    %v116 = vld [vmem:[#allocation2 + $0x1c8] sm:$0xff]
    %v117 = vld [vmem:[#allocation2 + $0x1d0] sm:$0xff]
    %v118 = vld [vmem:[#allocation2 + $0x1d8] sm:$0xff]
    %v119 = vld [vmem:[#allocation2 + $0x1e0] sm:$0xff]
    %v120 = vld [vmem:[#allocation2 + $0x1e8] sm:$0xff]
    %v121 = vld [vmem:[#allocation2 + $0x1f0] sm:$0xff]
    %v122 = vld [vmem:[#allocation2 + $0x1f8] sm:$0xff]
    %v123 = vld [vmem:[#allocation2 + $0x200] sm:$0xff]
    %v124 = vld [vmem:[#allocation2 + $0x208] sm:$0xff]
    %v125 = vld [vmem:[#allocation2 + $0x210] sm:$0xff]
    %v126 = vld [vmem:[#allocation2 + $0x218] sm:$0xff]
    %v127 = vld [vmem:[#allocation2 + $0x220] sm:$0xff]
    %v128 = vld [vmem:[#allocation2 + $0x228] sm:$0xff]
    %v129 = vld [vmem:[#allocation2 + $0x230] sm:$0xff]
    %v130 = vld [vmem:[#allocation2 + $0x238] sm:$0xff]
    %v131 = vld [vmem:[#allocation2 + $0x240] sm:$0xff]
    %v132 = vld [vmem:[#allocation2 + $0x248] sm:$0xff]
    %v133 = vld [vmem:[#allocation2 + $0x250] sm:$0xff]
    %v134 = vld [vmem:[#allocation2 + $0x258] sm:$0xff]
    %v135 = vld [vmem:[#allocation2 + $0x260] sm:$0xff]
    %v136 = vld [vmem:[#allocation2 + $0x268] sm:$0xff]
    %v137 = vld [vmem:[#allocation2 + $0x270] sm:$0xff]
    %v138 = vld [vmem:[#allocation2 + $0x278] sm:$0xff]
    %v139 = vld [vmem:[%s0] sm:$0xfe]
    %v140 = vld [vmem:[%s0 + $0x8] sm:$0xfe]
    %v141 = vld [vmem:[%s0 + $0x10] sm:$0xfe]
    %v142 = vld [vmem:[%s0 + $0x30] sm:$0x1]
    %v143 = vld [vmem:[%s0 + $0x38] sm:$0x1]
    %v144 = vld [vmem:[%s0 + $0x40] sm:$0x1]
    %v145 = vld [vmem:[%s0 + $0x48] sm:$0xfe]
    %v146 = vld [vmem:[%s0 + $0x50] sm:$0xfe]
    %v147 = vld [vmem:[%s0 + $0x58] sm:$0xfe]
    %v148 = vld [vmem:[%s0 + $0x78] sm:$0x1]
    %v149 = vld [vmem:[%s0 + $0x80] sm:$0x1]
    %v150 = vld [vmem:[%s0 + $0x88] sm:$0x1]
    %vm169 = vcmask 1046528
    %v170 = vrot.slane %v139, 1
    %v171 = vrot.slane %v44, 1
    %v172 = vsel %vm169, %v170, %v171
    %v173 = vrot.slane %v140, 1
    %v174 = vrot.slane %v45, 1
    %v175 = vsel %vm169, %v173, %v174
    %v176 = vrot.slane %v141, 1
    %v177 = vrot.slane %v46, 1
    %v178 = vsel %vm169, %v176, %v177
    %v179 = vrot.slane %v142, 1
    %v180 = vsel %vm169, %v171, %v179
    %v181 = vrot.slane %v143, 1
    %v182 = vsel %vm169, %v174, %v181
    %v183 = vrot.slane %v144, 1
    %v184 = vsel %vm169, %v177, %v183
    %v185 = vrot.slane %v145, 1
    %v186 = vrot.slane %v50, 1
    %v187 = vsel %vm169, %v185, %v186
    %v188 = vrot.slane %v146, 1
    %v189 = vrot.slane %v51, 1
    %v190 = vsel %vm169, %v188, %v189
    %v191 = vrot.slane %v147, 1
    %v192 = vrot.slane %v52, 1
    %v193 = vsel %vm169, %v191, %v192
    %v194 = vrot.slane %v148, 1
    %v195 = vsel %vm169, %v186, %v194
    %v196 = vrot.slane %v149, 1
    %v197 = vsel %vm169, %v189, %v196
    %v198 = vrot.slane %v150, 1
    %v199 = vsel %vm169, %v192, %v198
    %v212 = vpack.c.bf16 %v180, %v172
    %v213 = vpack.c.bf16 %v182, %v175
    %v214 = vpack.c.bf16 %v184, %v178
    %v215 = vpack.c.bf16 %v195, %v187
    %v216 = vpack.c.bf16 %v197, %v190
    %v217 = vpack.c.bf16 %v199, %v193
    %s218 = scalar_lea.vmem [#allocation2], 640
    %v219 = vld [vmem:[%s218] sm:$0xff]
    %v220 = vld [vmem:[%s218 + $0x8] sm:$0xff]
    %v221 = vld [vmem:[%s218 + $0x10] sm:$0xff]
    %v222 = vld [vmem:[%s218 + $0x18] sm:$0xff]
    %v223 = vld [vmem:[%s218 + $0x20] sm:$0xff]
    %v224 = vld [vmem:[%s218 + $0x28] sm:$0xff]
    %v225 = vld [vmem:[%s218 + $0x30] sm:$0xff]
    %v226 = vld [vmem:[%s218 + $0x38] sm:$0xff]
    %v227 = vld [vmem:[%s218 + $0x40] sm:$0xff]
    %v228 = vld [vmem:[%s218 + $0x48] sm:$0xff]
    %v229 = vld [vmem:[%s218 + $0x50] sm:$0xff]
    %v230 = vld [vmem:[%s218 + $0x58] sm:$0xff]
    %v231 = vld [vmem:[%s218 + $0x60] sm:$0xff]
    %v232 = vld [vmem:[%s218 + $0x68] sm:$0xff]
    %v233 = vld [vmem:[%s218 + $0x70] sm:$0xff]
    %v234 = vld [vmem:[%s218 + $0x78] sm:$0xff]
    %v235 = vld [vmem:[%s218 + $0x80] sm:$0xff]
    %v236 = vld [vmem:[%s218 + $0x88] sm:$0xff]
    %v237 = vld [vmem:[%s218 + $0x90] sm:$0xff]
    %v238 = vld [vmem:[%s218 + $0x98] sm:$0xff]
    %v239 = vld [vmem:[%s218 + $0xa0] sm:$0xff]
    %v240 = vld [vmem:[%s218 + $0xa8] sm:$0xff]
    %v241 = vld [vmem:[%s218 + $0xb0] sm:$0xff]
    %v242 = vld [vmem:[%s218 + $0xb8] sm:$0xff]
    %v243 = vld [vmem:[%s218 + $0xc0] sm:$0xff]
    %v244 = vld [vmem:[%s218 + $0xc8] sm:$0xff]
    %v245 = vld [vmem:[%s218 + $0xd0] sm:$0xff]
    %v246 = vld [vmem:[%s218 + $0xd8] sm:$0xff]
    %v247 = vld [vmem:[%s218 + $0xe0] sm:$0xff]
    %v248 = vld [vmem:[%s218 + $0xe8] sm:$0xff]
    %v249 = vld [vmem:[%s218 + $0xf0] sm:$0xff]
    %v250 = vld [vmem:[%s218 + $0xf8] sm:$0xff]
    %v251 = vld [vmem:[%s218 + $0x100] sm:$0xff]
    %v252 = vld [vmem:[%s218 + $0x108] sm:$0xff]
    %v253 = vld [vmem:[%s218 + $0x110] sm:$0xff]
    %v254 = vld [vmem:[%s218 + $0x118] sm:$0xff]
    %v255 = vld [vmem:[%s218 + $0x120] sm:$0xff]
    %v256 = vld [vmem:[%s218 + $0x128] sm:$0xff]
    %v257 = vld [vmem:[%s218 + $0x130] sm:$0xff]
    %v258 = vld [vmem:[%s218 + $0x138] sm:$0xff]
    %v259 = vld [vmem:[%s218 + $0x140] sm:$0xff]
    %v260 = vld [vmem:[%s218 + $0x148] sm:$0xff]
    %v261 = vld [vmem:[%s218 + $0x150] sm:$0xff]
    %v262 = vld [vmem:[%s218 + $0x158] sm:$0xff]
    %v263 = vld [vmem:[%s218 + $0x160] sm:$0xff]
    %v264 = vld [vmem:[%s218 + $0x168] sm:$0xff]
    %v265 = vld [vmem:[%s218 + $0x170] sm:$0xff]
    %v266 = vld [vmem:[%s218 + $0x178] sm:$0xff]
    %v267 = vld [vmem:[%s218 + $0x180] sm:$0xff]
    %v268 = vld [vmem:[%s218 + $0x188] sm:$0xff]
    %v269 = vld [vmem:[%s218 + $0x190] sm:$0xff]
    %v270 = vld [vmem:[%s218 + $0x198] sm:$0xff]
    %v271 = vld [vmem:[%s218 + $0x1a0] sm:$0xff]
    %v272 = vld [vmem:[%s218 + $0x1a8] sm:$0xff]
    %v273 = vld [vmem:[%s218 + $0x1b0] sm:$0xff]
    %v274 = vld [vmem:[%s218 + $0x1b8] sm:$0xff]
    %v275 = vld [vmem:[%s218 + $0x1c0] sm:$0xff]
    %v276 = vld [vmem:[%s218 + $0x1c8] sm:$0xff]
    %v277 = vld [vmem:[%s218 + $0x1d0] sm:$0xff]
    %v278 = vld [vmem:[%s218 + $0x1d8] sm:$0xff]
    %v279 = vld [vmem:[%s218 + $0x1e0] sm:$0xff]
    %v280 = vld [vmem:[%s218 + $0x1e8] sm:$0xff]
    %v281 = vld [vmem:[%s218 + $0x1f0] sm:$0xff]
    %v282 = vld [vmem:[%s218 + $0x1f8] sm:$0xff]
    %v283 = vld [vmem:[%s218 + $0x200] sm:$0xff]
    %v284 = vld [vmem:[%s218 + $0x208] sm:$0xff]
    %v285 = vld [vmem:[%s218 + $0x210] sm:$0xff]
    %v286 = vld [vmem:[%s218 + $0x218] sm:$0xff]
    %v287 = vld [vmem:[%s218 + $0x220] sm:$0xff]
    %v288 = vld [vmem:[%s218 + $0x228] sm:$0xff]
    %v289 = vld [vmem:[%s218 + $0x230] sm:$0xff]
    %v290 = vld [vmem:[%s218 + $0x238] sm:$0xff]
    %v291 = vld [vmem:[%s218 + $0x240] sm:$0xff]
    %v292 = vld [vmem:[%s218 + $0x248] sm:$0xff]
    %v293 = vld [vmem:[%s218 + $0x250] sm:$0xff]
    %v294 = vld [vmem:[%s218 + $0x258] sm:$0xff]
    %v295 = vld [vmem:[%s218 + $0x260] sm:$0xff]
    %v296 = vld [vmem:[%s218 + $0x268] sm:$0xff]
    %v297 = vld [vmem:[%s218 + $0x270] sm:$0xff]
    %v298 = vld [vmem:[%s218 + $0x278] sm:$0xff]
    %v379 = vunpack.c.l.b16 %v219
    %v380 = vunpack.c.h.b16 %v219
    %v381 = vunpack.c.l.b16 %v220
    %v382 = vunpack.c.h.b16 %v220
    %v383 = vunpack.c.l.b16 %v221
    %v384 = vunpack.c.h.b16 %v221
    %v385 = vunpack.c.l.b16 %v222
    %v386 = vunpack.c.h.b16 %v222
    %v387 = vunpack.c.l.b16 %v223
    %v388 = vunpack.c.h.b16 %v223
    %v389 = vunpack.c.l.b16 %v224
    %v390 = vunpack.c.h.b16 %v224
    %v391 = vunpack.c.l.b16 %v225
    %v392 = vunpack.c.h.b16 %v225
    %v393 = vunpack.c.l.b16 %v226
    %v394 = vunpack.c.h.b16 %v226
    %v395 = vunpack.c.l.b16 %v227
    %v396 = vunpack.c.h.b16 %v227
    %v397 = vunpack.c.l.b16 %v228
    %v398 = vunpack.c.h.b16 %v228
    %v399 = vunpack.c.l.b16 %v229
    %v400 = vunpack.c.h.b16 %v229
    %v401 = vunpack.c.l.b16 %v230
    %v402 = vunpack.c.h.b16 %v230
    %v403 = vunpack.c.l.b16 %v231
    %v404 = vunpack.c.h.b16 %v231
    %v405 = vunpack.c.l.b16 %v232
    %v406 = vunpack.c.h.b16 %v232
    %v407 = vunpack.c.l.b16 %v233
    %v408 = vunpack.c.h.b16 %v233
    %v409 = vunpack.c.l.b16 %v234
    %v410 = vunpack.c.h.b16 %v234
    %v411 = vunpack.c.l.b16 %v235
    %v412 = vunpack.c.h.b16 %v235
    %v413 = vunpack.c.l.b16 %v236
    %v414 = vunpack.c.h.b16 %v236
    %v415 = vunpack.c.l.b16 %v237
    %v416 = vunpack.c.h.b16 %v237
    %v417 = vunpack.c.l.b16 %v238
    %v418 = vunpack.c.h.b16 %v238
    %v419 = vunpack.c.l.b16 %v239
    %v420 = vunpack.c.h.b16 %v239
    %v421 = vunpack.c.l.b16 %v240
    %v422 = vunpack.c.h.b16 %v240
    %v423 = vunpack.c.l.b16 %v241
    %v424 = vunpack.c.h.b16 %v241
    %v425 = vunpack.c.l.b16 %v242
    %v426 = vunpack.c.h.b16 %v242
    %v427 = vunpack.c.l.b16 %v243
    %v428 = vunpack.c.h.b16 %v243
    %v429 = vunpack.c.l.b16 %v244
    %v430 = vunpack.c.h.b16 %v244
    %v431 = vunpack.c.l.b16 %v245
    %v432 = vunpack.c.h.b16 %v245
    %v433 = vunpack.c.l.b16 %v246
    %v434 = vunpack.c.h.b16 %v246
    %v435 = vunpack.c.l.b16 %v247
    %v436 = vunpack.c.h.b16 %v247
    %v437 = vunpack.c.l.b16 %v248
    %v438 = vunpack.c.h.b16 %v248
    %v439 = vunpack.c.l.b16 %v249
    %v440 = vunpack.c.h.b16 %v249
    %v441 = vunpack.c.l.b16 %v250
    %v442 = vunpack.c.h.b16 %v250
    %v443 = vunpack.c.l.b16 %v251
    %v444 = vunpack.c.h.b16 %v251
    %v445 = vunpack.c.l.b16 %v252
    %v446 = vunpack.c.h.b16 %v252
    %v447 = vunpack.c.l.b16 %v253
    %v448 = vunpack.c.h.b16 %v253
    %v449 = vunpack.c.l.b16 %v254
    %v450 = vunpack.c.h.b16 %v254
    %v451 = vunpack.c.l.b16 %v255
    %v452 = vunpack.c.h.b16 %v255
    %v453 = vunpack.c.l.b16 %v256
    %v454 = vunpack.c.h.b16 %v256
    %v455 = vunpack.c.l.b16 %v257
    %v456 = vunpack.c.h.b16 %v257
    %v457 = vunpack.c.l.b16 %v258
    %v458 = vunpack.c.h.b16 %v258
    %v459 = vunpack.c.l.b16 %v259
    %v460 = vunpack.c.h.b16 %v259
    %v461 = vunpack.c.l.b16 %v260
    %v462 = vunpack.c.h.b16 %v260
    %v463 = vunpack.c.l.b16 %v261
    %v464 = vunpack.c.h.b16 %v261
    %v465 = vunpack.c.l.b16 %v262
    %v466 = vunpack.c.h.b16 %v262
    %v467 = vunpack.c.l.b16 %v263
    %v468 = vunpack.c.h.b16 %v263
    %v469 = vunpack.c.l.b16 %v264
    %v470 = vunpack.c.h.b16 %v264
    %v471 = vunpack.c.l.b16 %v265
    %v472 = vunpack.c.h.b16 %v265
    %v473 = vunpack.c.l.b16 %v266
    %v474 = vunpack.c.h.b16 %v266
    %v475 = vunpack.c.l.b16 %v267
    %v476 = vunpack.c.h.b16 %v267
    %v477 = vunpack.c.l.b16 %v268
    %v478 = vunpack.c.h.b16 %v268
    %v479 = vunpack.c.l.b16 %v269
    %v480 = vunpack.c.h.b16 %v269
    %v481 = vunpack.c.l.b16 %v270
    %v482 = vunpack.c.h.b16 %v270
    %v483 = vunpack.c.l.b16 %v271
    %v484 = vunpack.c.h.b16 %v271
    %v485 = vunpack.c.l.b16 %v272
    %v486 = vunpack.c.h.b16 %v272
    %v487 = vunpack.c.l.b16 %v273
    %v488 = vunpack.c.h.b16 %v273
    %v489 = vunpack.c.l.b16 %v274
    %v490 = vunpack.c.h.b16 %v274
    %v491 = vunpack.c.l.b16 %v275
    %v492 = vunpack.c.h.b16 %v275
    %v493 = vunpack.c.l.b16 %v276
    %v494 = vunpack.c.h.b16 %v276
    %v495 = vunpack.c.l.b16 %v277
    %v496 = vunpack.c.h.b16 %v277
    %v497 = vunpack.c.l.b16 %v278
    %v498 = vunpack.c.h.b16 %v278
    %v499 = vunpack.c.l.b16 %v279
    %v500 = vunpack.c.h.b16 %v279
    %v501 = vunpack.c.l.b16 %v280
    %v502 = vunpack.c.h.b16 %v280
    %v503 = vunpack.c.l.b16 %v281
    %v504 = vunpack.c.h.b16 %v281
    %v505 = vunpack.c.l.b16 %v282
    %v506 = vunpack.c.h.b16 %v282
    %v507 = vunpack.c.l.b16 %v283
    %v508 = vunpack.c.h.b16 %v283
    %v509 = vunpack.c.l.b16 %v284
    %v510 = vunpack.c.h.b16 %v284
    %v511 = vunpack.c.l.b16 %v285
    %v512 = vunpack.c.h.b16 %v285
    %v513 = vunpack.c.l.b16 %v286
    %v514 = vunpack.c.h.b16 %v286
    %v515 = vunpack.c.l.b16 %v287
    %v516 = vunpack.c.h.b16 %v287
    %v517 = vunpack.c.l.b16 %v288
    %v518 = vunpack.c.h.b16 %v288
    %v519 = vunpack.c.l.b16 %v289
    %v520 = vunpack.c.h.b16 %v289
    %v521 = vunpack.c.l.b16 %v290
    %v522 = vunpack.c.h.b16 %v290
    %v523 = vunpack.c.l.b16 %v291
    %v524 = vunpack.c.h.b16 %v291
    %v525 = vunpack.c.l.b16 %v292
    %v526 = vunpack.c.h.b16 %v292
    %v527 = vunpack.c.l.b16 %v293
    %v528 = vunpack.c.h.b16 %v293
    %v529 = vunpack.c.l.b16 %v294
    %v530 = vunpack.c.h.b16 %v294
    %v531 = vunpack.c.l.b16 %v295
    %v532 = vunpack.c.h.b16 %v295
    %v533 = vunpack.c.l.b16 %v296
    %v534 = vunpack.c.h.b16 %v296
    %v535 = vunpack.c.l.b16 %v297
    %v536 = vunpack.c.h.b16 %v297
    %v537 = vunpack.c.l.b16 %v298
    %v538 = vunpack.c.h.b16 %v298
    %v539 = vpack.c.b16 %v383, %v379
    %v540 = vpack.c.b16 %v384, %v380
    %v541 = vpack.c.b16 %v385, %v381
    %v542 = vpack.c.b16 %v386, %v382
    %v543 = vpack.c.b16 %v391, %v387
    %v544 = vpack.c.b16 %v392, %v388
    %v545 = vpack.c.b16 %v393, %v389
    %v546 = vpack.c.b16 %v394, %v390
    %v547 = vpack.c.b16 %v399, %v395
    %v548 = vpack.c.b16 %v400, %v396
    %v549 = vpack.c.b16 %v401, %v397
    %v550 = vpack.c.b16 %v402, %v398
    %v551 = vpack.c.b16 %v407, %v403
    %v552 = vpack.c.b16 %v408, %v404
    %v553 = vpack.c.b16 %v409, %v405
    %v554 = vpack.c.b16 %v410, %v406
    %v555 = vpack.c.b16 %v415, %v411
    %v556 = vpack.c.b16 %v416, %v412
    %v557 = vpack.c.b16 %v417, %v413
    %v558 = vpack.c.b16 %v418, %v414
    %v559 = vpack.c.b16 %v423, %v419
    %v560 = vpack.c.b16 %v424, %v420
    %v561 = vpack.c.b16 %v425, %v421
    %v562 = vpack.c.b16 %v426, %v422
    %v563 = vpack.c.b16 %v431, %v427
    %v564 = vpack.c.b16 %v432, %v428
    %v565 = vpack.c.b16 %v433, %v429
    %v566 = vpack.c.b16 %v434, %v430
    %v567 = vpack.c.b16 %v439, %v435
    %v568 = vpack.c.b16 %v440, %v436
    %v569 = vpack.c.b16 %v441, %v437
    %v570 = vpack.c.b16 %v442, %v438
    %v571 = vpack.c.b16 %v447, %v443
    %v572 = vpack.c.b16 %v448, %v444
    %v573 = vpack.c.b16 %v449, %v445
    %v574 = vpack.c.b16 %v450, %v446
    %v575 = vpack.c.b16 %v455, %v451
    %v576 = vpack.c.b16 %v456, %v452
    %v577 = vpack.c.b16 %v457, %v453
    %v578 = vpack.c.b16 %v458, %v454
    %v579 = vpack.c.b16 %v463, %v459
    %v580 = vpack.c.b16 %v464, %v460
    %v581 = vpack.c.b16 %v465, %v461
    %v582 = vpack.c.b16 %v466, %v462
    %v583 = vpack.c.b16 %v471, %v467
    %v584 = vpack.c.b16 %v472, %v468
    %v585 = vpack.c.b16 %v473, %v469
    %v586 = vpack.c.b16 %v474, %v470
    %v587 = vpack.c.b16 %v479, %v475
    %v588 = vpack.c.b16 %v480, %v476
    %v589 = vpack.c.b16 %v481, %v477
    %v590 = vpack.c.b16 %v482, %v478
    %v591 = vpack.c.b16 %v487, %v483
    %v592 = vpack.c.b16 %v488, %v484
    %v593 = vpack.c.b16 %v489, %v485
    %v594 = vpack.c.b16 %v490, %v486
    %v595 = vpack.c.b16 %v495, %v491
    %v596 = vpack.c.b16 %v496, %v492
    %v597 = vpack.c.b16 %v497, %v493
    %v598 = vpack.c.b16 %v498, %v494
    %v599 = vpack.c.b16 %v503, %v499
    %v600 = vpack.c.b16 %v504, %v500
    %v601 = vpack.c.b16 %v505, %v501
    %v602 = vpack.c.b16 %v506, %v502
    %v603 = vpack.c.b16 %v511, %v507
    %v604 = vpack.c.b16 %v512, %v508
    %v605 = vpack.c.b16 %v513, %v509
    %v606 = vpack.c.b16 %v514, %v510
    %v607 = vpack.c.b16 %v519, %v515
    %v608 = vpack.c.b16 %v520, %v516
    %v609 = vpack.c.b16 %v521, %v517
    %v610 = vpack.c.b16 %v522, %v518
    %v611 = vpack.c.b16 %v527, %v523
    %v612 = vpack.c.b16 %v528, %v524
    %v613 = vpack.c.b16 %v529, %v525
    %v614 = vpack.c.b16 %v530, %v526
    %v615 = vpack.c.b16 %v535, %v531
    %v616 = vpack.c.b16 %v536, %v532
    %v617 = vpack.c.b16 %v537, %v533
    %v618 = vpack.c.b16 %v538, %v534
    %vm699 = vcmask 523264
    %v701 = vsel %vm699, %v214, 0
    %v704 = vsel %vm699, %v217, 0
    %706 = vmatprep.subr.bf16.mxu0 %v568
    %707 = vmatpush1.bf16.msra.mxu0 %v567
    %708 = vmatprep.subr.bf16.mxu0 %v564
    %709 = vmatpush1.bf16.msra.mxu0 %v563
    %710 = vmatprep.subr.bf16.mxu0 %v560
    %711 = vmatpush1.bf16.msra.mxu0 %v559
    %712 = vmatprep.subr.bf16.mxu0 %v556
    %713 = vmatpush1.bf16.msra.mxu0 %v555
    %714 = vmatprep.subr.bf16.mxu0 %v552
    %715 = vmatpush1.bf16.msra.mxu0 %v551
    %716 = vmatprep.subr.bf16.mxu0 %v548
    %717 = vmatpush1.bf16.msra.mxu0 %v547
    %718 = vmatprep.subr.bf16.mxu0 %v544
    %719 = vmatpush1.bf16.msra.mxu0 %v543
    %720 = vmatprep.subr.bf16.mxu0 %v540
    %721 = vmatpush1.bf16.msra.mxu0 %v539
    %722 = vmatprep.subr.bf16.mxu0 %v600
    %723 = vmatpush2.bf16.msra.mxu0 %v599
    %724 = vmatprep.subr.bf16.mxu0 %v596
    %725 = vmatpush2.bf16.msra.mxu0 %v595
    %726 = vmatprep.subr.bf16.mxu0 %v592
    %727 = vmatpush2.bf16.msra.mxu0 %v591
    %728 = vmatprep.subr.bf16.mxu0 %v588
    %729 = vmatpush2.bf16.msra.mxu0 %v587
    %730 = vmatprep.subr.bf16.mxu0 %v584
    %731 = vmatpush2.bf16.msra.mxu0 %v583
    %732 = vmatprep.subr.bf16.mxu0 %v580
    %733 = vmatpush2.bf16.msra.mxu0 %v579
    %734 = vmatprep.subr.bf16.mxu0 %v576
    %735 = vmatpush2.bf16.msra.mxu0 %v575
    %736 = vmatprep.subr.bf16.mxu0 %v572
    %737 = vmatpush2.bf16.msra.mxu0 %v571
    %738 = vmatprep.mubr.bf16.mxu0 %v213
    %739 = vmatmul.mubr.bf16.gmra.mxu0 %v212
    %v740 = vpop.f32.mrf.mxu0
    %v741 = vadd.f32 0.0, %v740
    %v742 = vpop.f32.mrf.mxu0
    %v743 = vadd.f32 0.0, %v742
    %v744 = vpop.f32.mrf.mxu0
    %v745 = vadd.f32 0.0, %v744
    %v746 = vpop.f32.mrf.mxu0
    %v747 = vadd.f32 0.0, %v746
    %748 = vmatprep.mubr.bf16.mxu0 %v216
    %749 = vmatmul.mubr.bf16.gmra.mxu0 %v215
    %v750 = vpop.f32.mrf.mxu0
    %v751 = vadd.f32 0.0, %v750
    %v752 = vpop.f32.mrf.mxu0
    %v753 = vadd.f32 0.0, %v752
    %v754 = vpop.f32.mrf.mxu0
    %v755 = vadd.f32 0.0, %v754
    %v756 = vpop.f32.mrf.mxu0
    %v757 = vadd.f32 0.0, %v756
    %758 = vdwg.mxu0
    %759 = vmatprep.subr.bf16.mxu0 0
    %760 = vmatpush1.bf16.msra.mxu0 0
    %761 = vmatprep.subr.bf16.mxu0 0
    %762 = vmatpush1.bf16.msra.mxu0 0
    %763 = vmatprep.subr.bf16.mxu0 0
    %764 = vmatpush1.bf16.msra.mxu0 0
    %765 = vmatprep.subr.bf16.mxu0 0
    %766 = vmatpush1.bf16.msra.mxu0 0
    %767 = vmatprep.subr.bf16.mxu0 %v616
    %768 = vmatpush1.bf16.msra.mxu0 %v615
    %769 = vmatprep.subr.bf16.mxu0 %v612
    %770 = vmatpush1.bf16.msra.mxu0 %v611
    %771 = vmatprep.subr.bf16.mxu0 %v608
    %772 = vmatpush1.bf16.msra.mxu0 %v607
    %773 = vmatprep.subr.bf16.mxu0 %v604
    %774 = vmatpush1.bf16.msra.mxu0 %v603
    %775 = vmatprep.subr.bf16.mxu0 0
    %776 = vmatpush2.bf16.msra.mxu0 0
    %777 = vmatprep.subr.bf16.mxu0 0
    %778 = vmatpush2.bf16.msra.mxu0 0
    %779 = vmatprep.subr.bf16.mxu0 0
    %780 = vmatpush2.bf16.msra.mxu0 0
    %781 = vmatprep.subr.bf16.mxu0 0
    %782 = vmatpush2.bf16.msra.mxu0 0
    %783 = vmatprep.subr.bf16.mxu0 0
    %784 = vmatpush2.bf16.msra.mxu0 0
    %785 = vmatprep.subr.bf16.mxu0 0
    %786 = vmatpush2.bf16.msra.mxu0 0
    %787 = vmatprep.subr.bf16.mxu0 0
    %788 = vmatpush2.bf16.msra.mxu0 0
    %789 = vmatprep.subr.bf16.mxu0 0
    %790 = vmatpush2.bf16.msra.mxu0 0
    %791 = vmatprep.mubr.bf16.mxu0 0
    %792 = vmatmul.mubr.bf16.gmra.mxu0 %v701
    %v793 = vpop.f32.mrf.mxu0
    %v794 = vadd.f32 %v741, %v793
    %v795 = vpop.f32.mrf.mxu0
    %v796 = vadd.f32 %v743, %v795
    %v797 = vpop.f32.mrf.mxu0
    %v798 = vadd.f32 %v745, %v797
    %v799 = vpop.f32.mrf.mxu0
    %v800 = vadd.f32 %v747, %v799
    %801 = vmatprep.mubr.bf16.mxu0 0
    %802 = vmatmul.mubr.bf16.gmra.mxu0 %v704
    %v803 = vpop.f32.mrf.mxu0
    %v804 = vadd.f32 %v751, %v803
    %v805 = vpop.f32.mrf.mxu0
    %v806 = vadd.f32 %v753, %v805
    %v807 = vpop.f32.mrf.mxu0
    %v808 = vadd.f32 %v755, %v807
    %v809 = vpop.f32.mrf.mxu0
    %v810 = vadd.f32 %v757, %v809
    %811 = vdwg.mxu0
    %812 = vmatprep.subr.bf16.mxu0 %v570
    %813 = vmatpush1.bf16.msra.mxu0 %v569
    %814 = vmatprep.subr.bf16.mxu0 %v566
    %815 = vmatpush1.bf16.msra.mxu0 %v565
    %816 = vmatprep.subr.bf16.mxu0 %v562
    %817 = vmatpush1.bf16.msra.mxu0 %v561
    %818 = vmatprep.subr.bf16.mxu0 %v558
    %819 = vmatpush1.bf16.msra.mxu0 %v557
    %820 = vmatprep.subr.bf16.mxu0 %v554
    %821 = vmatpush1.bf16.msra.mxu0 %v553
    %822 = vmatprep.subr.bf16.mxu0 %v550
    %823 = vmatpush1.bf16.msra.mxu0 %v549
    %824 = vmatprep.subr.bf16.mxu0 %v546
    %825 = vmatpush1.bf16.msra.mxu0 %v545
    %826 = vmatprep.subr.bf16.mxu0 %v542
    %827 = vmatpush1.bf16.msra.mxu0 %v541
    %828 = vmatprep.subr.bf16.mxu0 %v602
    %829 = vmatpush2.bf16.msra.mxu0 %v601
    %830 = vmatprep.subr.bf16.mxu0 %v598
    %831 = vmatpush2.bf16.msra.mxu0 %v597
    %832 = vmatprep.subr.bf16.mxu0 %v594
    %833 = vmatpush2.bf16.msra.mxu0 %v593
    %834 = vmatprep.subr.bf16.mxu0 %v590
    %835 = vmatpush2.bf16.msra.mxu0 %v589
    %836 = vmatprep.subr.bf16.mxu0 %v586
    %837 = vmatpush2.bf16.msra.mxu0 %v585
    %838 = vmatprep.subr.bf16.mxu0 %v582
    %839 = vmatpush2.bf16.msra.mxu0 %v581
    %840 = vmatprep.subr.bf16.mxu0 %v578
    %841 = vmatpush2.bf16.msra.mxu0 %v577
    %842 = vmatprep.subr.bf16.mxu0 %v574
    %843 = vmatpush2.bf16.msra.mxu0 %v573
    %844 = vmatprep.mubr.bf16.mxu0 %v213
    %845 = vmatmul.mubr.bf16.gmra.mxu0 %v212
    %v846 = vpop.f32.mrf.mxu0
    %v847 = vadd.f32 0.0, %v846
    %v848 = vpop.f32.mrf.mxu0
    %v849 = vadd.f32 0.0, %v848
    %v850 = vpop.f32.mrf.mxu0
    %v851 = vadd.f32 0.0, %v850
    %v852 = vpop.f32.mrf.mxu0
    %v853 = vadd.f32 0.0, %v852
    %854 = vmatprep.mubr.bf16.mxu0 %v216
    %855 = vmatmul.mubr.bf16.gmra.mxu0 %v215
    %v856 = vpop.f32.mrf.mxu0
    %v857 = vadd.f32 0.0, %v856
    %v858 = vpop.f32.mrf.mxu0
    %v859 = vadd.f32 0.0, %v858
    %v860 = vpop.f32.mrf.mxu0
    %v861 = vadd.f32 0.0, %v860
    %v862 = vpop.f32.mrf.mxu0
    %v863 = vadd.f32 0.0, %v862
    %864 = vdwg.mxu0
    %865 = vmatprep.subr.bf16.mxu0 0
    %866 = vmatpush1.bf16.msra.mxu0 0
    %867 = vmatprep.subr.bf16.mxu0 0
    %868 = vmatpush1.bf16.msra.mxu0 0
    %869 = vmatprep.subr.bf16.mxu0 0
    %870 = vmatpush1.bf16.msra.mxu0 0
    %871 = vmatprep.subr.bf16.mxu0 0
    %872 = vmatpush1.bf16.msra.mxu0 0
    %873 = vmatprep.subr.bf16.mxu0 %v618
    %874 = vmatpush1.bf16.msra.mxu0 %v617
    %875 = vmatprep.subr.bf16.mxu0 %v614
    %876 = vmatpush1.bf16.msra.mxu0 %v613
    %877 = vmatprep.subr.bf16.mxu0 %v610
    %878 = vmatpush1.bf16.msra.mxu0 %v609
    %879 = vmatprep.subr.bf16.mxu0 %v606
    %880 = vmatpush1.bf16.msra.mxu0 %v605
    %881 = vmatprep.subr.bf16.mxu0 0
    %882 = vmatpush2.bf16.msra.mxu0 0
    %883 = vmatprep.subr.bf16.mxu0 0
    %884 = vmatpush2.bf16.msra.mxu0 0
    %885 = vmatprep.subr.bf16.mxu0 0
    %886 = vmatpush2.bf16.msra.mxu0 0
    %887 = vmatprep.subr.bf16.mxu0 0
    %888 = vmatpush2.bf16.msra.mxu0 0
    %889 = vmatprep.subr.bf16.mxu0 0
    %890 = vmatpush2.bf16.msra.mxu0 0
    %891 = vmatprep.subr.bf16.mxu0 0
    %892 = vmatpush2.bf16.msra.mxu0 0
    %893 = vmatprep.subr.bf16.mxu0 0
    %894 = vmatpush2.bf16.msra.mxu0 0
    %895 = vmatprep.subr.bf16.mxu0 0
    %896 = vmatpush2.bf16.msra.mxu0 0
    %897 = vmatprep.mubr.bf16.mxu0 0
    %898 = vmatmul.mubr.bf16.gmra.mxu0 %v701
    %v899 = vpop.f32.mrf.mxu0
    %v900 = vadd.f32 %v847, %v899
    %v901 = vpop.f32.mrf.mxu0
    %v902 = vadd.f32 %v849, %v901
    %v903 = vpop.f32.mrf.mxu0
    %v904 = vadd.f32 %v851, %v903
    %v905 = vpop.f32.mrf.mxu0
    %v906 = vadd.f32 %v853, %v905
    %907 = vmatprep.mubr.bf16.mxu0 0
    %908 = vmatmul.mubr.bf16.gmra.mxu0 %v704
    %v909 = vpop.f32.mrf.mxu0
    %v910 = vadd.f32 %v857, %v909
    %v911 = vpop.f32.mrf.mxu0
    %v912 = vadd.f32 %v859, %v911
    %v913 = vpop.f32.mrf.mxu0
    %v914 = vadd.f32 %v861, %v913
    %v915 = vpop.f32.mrf.mxu0
    %v916 = vadd.f32 %v863, %v915
    %917 = vdwg.mxu0
    %v998 = vunpack.c.l.b16 %v59
    %v999 = vunpack.c.h.b16 %v59
    %v1000 = vunpack.c.l.b16 %v60
    %v1001 = vunpack.c.h.b16 %v60
    %v1002 = vunpack.c.l.b16 %v61
    %v1003 = vunpack.c.h.b16 %v61
    %v1004 = vunpack.c.l.b16 %v62
    %v1005 = vunpack.c.h.b16 %v62
    %v1006 = vunpack.c.l.b16 %v63
    %v1007 = vunpack.c.h.b16 %v63
    %v1008 = vunpack.c.l.b16 %v64
    %v1009 = vunpack.c.h.b16 %v64
    %v1010 = vunpack.c.l.b16 %v65
    %v1011 = vunpack.c.h.b16 %v65
    %v1012 = vunpack.c.l.b16 %v66
    %v1013 = vunpack.c.h.b16 %v66
    %v1014 = vunpack.c.l.b16 %v67
    %v1015 = vunpack.c.h.b16 %v67
    %v1016 = vunpack.c.l.b16 %v68
    %v1017 = vunpack.c.h.b16 %v68
    %v1018 = vunpack.c.l.b16 %v69
    %v1019 = vunpack.c.h.b16 %v69
    %v1020 = vunpack.c.l.b16 %v70
    %v1021 = vunpack.c.h.b16 %v70
    %v1022 = vunpack.c.l.b16 %v71
    %v1023 = vunpack.c.h.b16 %v71
    %v1024 = vunpack.c.l.b16 %v72
    %v1025 = vunpack.c.h.b16 %v72
    %v1026 = vunpack.c.l.b16 %v73
    %v1027 = vunpack.c.h.b16 %v73
    %v1028 = vunpack.c.l.b16 %v74
    %v1029 = vunpack.c.h.b16 %v74
    %v1030 = vunpack.c.l.b16 %v75
    %v1031 = vunpack.c.h.b16 %v75
    %v1032 = vunpack.c.l.b16 %v76
    %v1033 = vunpack.c.h.b16 %v76
    %v1034 = vunpack.c.l.b16 %v77
    %v1035 = vunpack.c.h.b16 %v77
    %v1036 = vunpack.c.l.b16 %v78
    %v1037 = vunpack.c.h.b16 %v78
    %v1038 = vunpack.c.l.b16 %v79
    %v1039 = vunpack.c.h.b16 %v79
    %v1040 = vunpack.c.l.b16 %v80
    %v1041 = vunpack.c.h.b16 %v80
    %v1042 = vunpack.c.l.b16 %v81
    %v1043 = vunpack.c.h.b16 %v81
    %v1044 = vunpack.c.l.b16 %v82
    %v1045 = vunpack.c.h.b16 %v82
    %v1046 = vunpack.c.l.b16 %v83
    %v1047 = vunpack.c.h.b16 %v83
    %v1048 = vunpack.c.l.b16 %v84
    %v1049 = vunpack.c.h.b16 %v84
    %v1050 = vunpack.c.l.b16 %v85
    %v1051 = vunpack.c.h.b16 %v85
    %v1052 = vunpack.c.l.b16 %v86
    %v1053 = vunpack.c.h.b16 %v86
    %v1054 = vunpack.c.l.b16 %v87
    %v1055 = vunpack.c.h.b16 %v87
    %v1056 = vunpack.c.l.b16 %v88
    %v1057 = vunpack.c.h.b16 %v88
    %v1058 = vunpack.c.l.b16 %v89
    %v1059 = vunpack.c.h.b16 %v89
    %v1060 = vunpack.c.l.b16 %v90
    %v1061 = vunpack.c.h.b16 %v90
    %v1062 = vunpack.c.l.b16 %v91
    %v1063 = vunpack.c.h.b16 %v91
    %v1064 = vunpack.c.l.b16 %v92
    %v1065 = vunpack.c.h.b16 %v92
    %v1066 = vunpack.c.l.b16 %v93
    %v1067 = vunpack.c.h.b16 %v93
    %v1068 = vunpack.c.l.b16 %v94
    %v1069 = vunpack.c.h.b16 %v94
    %v1070 = vunpack.c.l.b16 %v95
    %v1071 = vunpack.c.h.b16 %v95
    %v1072 = vunpack.c.l.b16 %v96
    %v1073 = vunpack.c.h.b16 %v96
    %v1074 = vunpack.c.l.b16 %v97
    %v1075 = vunpack.c.h.b16 %v97
    %v1076 = vunpack.c.l.b16 %v98
    %v1077 = vunpack.c.h.b16 %v98
    %v1078 = vunpack.c.l.b16 %v99
    %v1079 = vunpack.c.h.b16 %v99
    %v1080 = vunpack.c.l.b16 %v100
    %v1081 = vunpack.c.h.b16 %v100
    %v1082 = vunpack.c.l.b16 %v101
    %v1083 = vunpack.c.h.b16 %v101
    %v1084 = vunpack.c.l.b16 %v102
    %v1085 = vunpack.c.h.b16 %v102
    %v1086 = vunpack.c.l.b16 %v103
    %v1087 = vunpack.c.h.b16 %v103
    %v1088 = vunpack.c.l.b16 %v104
    %v1089 = vunpack.c.h.b16 %v104
    %v1090 = vunpack.c.l.b16 %v105
    %v1091 = vunpack.c.h.b16 %v105
    %v1092 = vunpack.c.l.b16 %v106
    %v1093 = vunpack.c.h.b16 %v106
    %v1094 = vunpack.c.l.b16 %v107
    %v1095 = vunpack.c.h.b16 %v107
    %v1096 = vunpack.c.l.b16 %v108
    %v1097 = vunpack.c.h.b16 %v108
    %v1098 = vunpack.c.l.b16 %v109
    %v1099 = vunpack.c.h.b16 %v109
    %v1100 = vunpack.c.l.b16 %v110
    %v1101 = vunpack.c.h.b16 %v110
    %v1102 = vunpack.c.l.b16 %v111
    %v1103 = vunpack.c.h.b16 %v111
    %v1104 = vunpack.c.l.b16 %v112
    %v1105 = vunpack.c.h.b16 %v112
    %v1106 = vunpack.c.l.b16 %v113
    %v1107 = vunpack.c.h.b16 %v113
    %v1108 = vunpack.c.l.b16 %v114
    %v1109 = vunpack.c.h.b16 %v114
    %v1110 = vunpack.c.l.b16 %v115
    %v1111 = vunpack.c.h.b16 %v115
    %v1112 = vunpack.c.l.b16 %v116
    %v1113 = vunpack.c.h.b16 %v116
    %v1114 = vunpack.c.l.b16 %v117
    %v1115 = vunpack.c.h.b16 %v117
    %v1116 = vunpack.c.l.b16 %v118
    %v1117 = vunpack.c.h.b16 %v118
    %v1118 = vunpack.c.l.b16 %v119
    %v1119 = vunpack.c.h.b16 %v119
    %v1120 = vunpack.c.l.b16 %v120
    %v1121 = vunpack.c.h.b16 %v120
    %v1122 = vunpack.c.l.b16 %v121
    %v1123 = vunpack.c.h.b16 %v121
    %v1124 = vunpack.c.l.b16 %v122
    %v1125 = vunpack.c.h.b16 %v122
    %v1126 = vunpack.c.l.b16 %v123
    %v1127 = vunpack.c.h.b16 %v123
    %v1128 = vunpack.c.l.b16 %v124
    %v1129 = vunpack.c.h.b16 %v124
    %v1130 = vunpack.c.l.b16 %v125
    %v1131 = vunpack.c.h.b16 %v125
    %v1132 = vunpack.c.l.b16 %v126
    %v1133 = vunpack.c.h.b16 %v126
    %v1134 = vunpack.c.l.b16 %v127
    %v1135 = vunpack.c.h.b16 %v127
    %v1136 = vunpack.c.l.b16 %v128
    %v1137 = vunpack.c.h.b16 %v128
    %v1138 = vunpack.c.l.b16 %v129
    %v1139 = vunpack.c.h.b16 %v129
    %v1140 = vunpack.c.l.b16 %v130
    %v1141 = vunpack.c.h.b16 %v130
    %v1142 = vunpack.c.l.b16 %v131
    %v1143 = vunpack.c.h.b16 %v131
    %v1144 = vunpack.c.l.b16 %v132
    %v1145 = vunpack.c.h.b16 %v132
    %v1146 = vunpack.c.l.b16 %v133
    %v1147 = vunpack.c.h.b16 %v133
    %v1148 = vunpack.c.l.b16 %v134
    %v1149 = vunpack.c.h.b16 %v134
    %v1150 = vunpack.c.l.b16 %v135
    %v1151 = vunpack.c.h.b16 %v135
    %v1152 = vunpack.c.l.b16 %v136
    %v1153 = vunpack.c.h.b16 %v136
    %v1154 = vunpack.c.l.b16 %v137
    %v1155 = vunpack.c.h.b16 %v137
    %v1156 = vunpack.c.l.b16 %v138
    %v1157 = vunpack.c.h.b16 %v138
    %v1158 = vpack.c.b16 %v1002, %v998
    %v1159 = vpack.c.b16 %v1003, %v999
    %v1160 = vpack.c.b16 %v1004, %v1000
    %v1161 = vpack.c.b16 %v1005, %v1001
    %v1162 = vpack.c.b16 %v1010, %v1006
    %v1163 = vpack.c.b16 %v1011, %v1007
    %v1164 = vpack.c.b16 %v1012, %v1008
    %v1165 = vpack.c.b16 %v1013, %v1009
    %v1166 = vpack.c.b16 %v1018, %v1014
    %v1167 = vpack.c.b16 %v1019, %v1015
    %v1168 = vpack.c.b16 %v1020, %v1016
    %v1169 = vpack.c.b16 %v1021, %v1017
    %v1170 = vpack.c.b16 %v1026, %v1022
    %v1171 = vpack.c.b16 %v1027, %v1023
    %v1172 = vpack.c.b16 %v1028, %v1024
    %v1173 = vpack.c.b16 %v1029, %v1025
    %v1174 = vpack.c.b16 %v1034, %v1030
    %v1175 = vpack.c.b16 %v1035, %v1031
    %v1176 = vpack.c.b16 %v1036, %v1032
    %v1177 = vpack.c.b16 %v1037, %v1033
    %v1178 = vpack.c.b16 %v1042, %v1038
    %v1179 = vpack.c.b16 %v1043, %v1039
    %v1180 = vpack.c.b16 %v1044, %v1040
    %v1181 = vpack.c.b16 %v1045, %v1041
    %v1182 = vpack.c.b16 %v1050, %v1046
    %v1183 = vpack.c.b16 %v1051, %v1047
    %v1184 = vpack.c.b16 %v1052, %v1048
    %v1185 = vpack.c.b16 %v1053, %v1049
    %v1186 = vpack.c.b16 %v1058, %v1054
    %v1187 = vpack.c.b16 %v1059, %v1055
    %v1188 = vpack.c.b16 %v1060, %v1056
    %v1189 = vpack.c.b16 %v1061, %v1057
    %v1190 = vpack.c.b16 %v1066, %v1062
    %v1191 = vpack.c.b16 %v1067, %v1063
    %v1192 = vpack.c.b16 %v1068, %v1064
    %v1193 = vpack.c.b16 %v1069, %v1065
    %v1194 = vpack.c.b16 %v1074, %v1070
    %v1195 = vpack.c.b16 %v1075, %v1071
    %v1196 = vpack.c.b16 %v1076, %v1072
    %v1197 = vpack.c.b16 %v1077, %v1073
    %v1198 = vpack.c.b16 %v1082, %v1078
    %v1199 = vpack.c.b16 %v1083, %v1079
    %v1200 = vpack.c.b16 %v1084, %v1080
    %v1201 = vpack.c.b16 %v1085, %v1081
    %v1202 = vpack.c.b16 %v1090, %v1086
    %v1203 = vpack.c.b16 %v1091, %v1087
    %v1204 = vpack.c.b16 %v1092, %v1088
    %v1205 = vpack.c.b16 %v1093, %v1089
    %v1206 = vpack.c.b16 %v1098, %v1094
    %v1207 = vpack.c.b16 %v1099, %v1095
    %v1208 = vpack.c.b16 %v1100, %v1096
    %v1209 = vpack.c.b16 %v1101, %v1097
    %v1210 = vpack.c.b16 %v1106, %v1102
    %v1211 = vpack.c.b16 %v1107, %v1103
    %v1212 = vpack.c.b16 %v1108, %v1104
    %v1213 = vpack.c.b16 %v1109, %v1105
    %v1214 = vpack.c.b16 %v1114, %v1110
    %v1215 = vpack.c.b16 %v1115, %v1111
    %v1216 = vpack.c.b16 %v1116, %v1112
    %v1217 = vpack.c.b16 %v1117, %v1113
    %v1218 = vpack.c.b16 %v1122, %v1118
    %v1219 = vpack.c.b16 %v1123, %v1119
    %v1220 = vpack.c.b16 %v1124, %v1120
    %v1221 = vpack.c.b16 %v1125, %v1121
    %v1222 = vpack.c.b16 %v1130, %v1126
    %v1223 = vpack.c.b16 %v1131, %v1127
    %v1224 = vpack.c.b16 %v1132, %v1128
    %v1225 = vpack.c.b16 %v1133, %v1129
    %v1226 = vpack.c.b16 %v1138, %v1134
    %v1227 = vpack.c.b16 %v1139, %v1135
    %v1228 = vpack.c.b16 %v1140, %v1136
    %v1229 = vpack.c.b16 %v1141, %v1137
    %v1230 = vpack.c.b16 %v1146, %v1142
    %v1231 = vpack.c.b16 %v1147, %v1143
    %v1232 = vpack.c.b16 %v1148, %v1144
    %v1233 = vpack.c.b16 %v1149, %v1145
    %v1234 = vpack.c.b16 %v1154, %v1150
    %v1235 = vpack.c.b16 %v1155, %v1151
    %v1236 = vpack.c.b16 %v1156, %v1152
    %v1237 = vpack.c.b16 %v1157, %v1153
    %v1319 = vsel %vm699, %v55, 0
    %v1322 = vsel %vm699, %v58, 0
    %1324 = vmatprep.subr.bf16.mxu0 %v1187
    %1325 = vmatpush1.bf16.msra.mxu0 %v1186
    %1326 = vmatprep.subr.bf16.mxu0 %v1183
    %1327 = vmatpush1.bf16.msra.mxu0 %v1182
    %1328 = vmatprep.subr.bf16.mxu0 %v1179
    %1329 = vmatpush1.bf16.msra.mxu0 %v1178
    %1330 = vmatprep.subr.bf16.mxu0 %v1175
    %1331 = vmatpush1.bf16.msra.mxu0 %v1174
    %1332 = vmatprep.subr.bf16.mxu0 %v1171
    %1333 = vmatpush1.bf16.msra.mxu0 %v1170
    %1334 = vmatprep.subr.bf16.mxu0 %v1167
    %1335 = vmatpush1.bf16.msra.mxu0 %v1166
    %1336 = vmatprep.subr.bf16.mxu0 %v1163
    %1337 = vmatpush1.bf16.msra.mxu0 %v1162
    %1338 = vmatprep.subr.bf16.mxu0 %v1159
    %1339 = vmatpush1.bf16.msra.mxu0 %v1158
    %1340 = vmatprep.subr.bf16.mxu0 %v1219
    %1341 = vmatpush2.bf16.msra.mxu0 %v1218
    %1342 = vmatprep.subr.bf16.mxu0 %v1215
    %1343 = vmatpush2.bf16.msra.mxu0 %v1214
    %1344 = vmatprep.subr.bf16.mxu0 %v1211
    %1345 = vmatpush2.bf16.msra.mxu0 %v1210
    %1346 = vmatprep.subr.bf16.mxu0 %v1207
    %1347 = vmatpush2.bf16.msra.mxu0 %v1206
    %1348 = vmatprep.subr.bf16.mxu0 %v1203
    %1349 = vmatpush2.bf16.msra.mxu0 %v1202
    %1350 = vmatprep.subr.bf16.mxu0 %v1199
    %1351 = vmatpush2.bf16.msra.mxu0 %v1198
    %1352 = vmatprep.subr.bf16.mxu0 %v1195
    %1353 = vmatpush2.bf16.msra.mxu0 %v1194
    %1354 = vmatprep.subr.bf16.mxu0 %v1191
    %1355 = vmatpush2.bf16.msra.mxu0 %v1190
    %1356 = vmatprep.mubr.bf16.mxu0 %v54
    %1357 = vmatmul.mubr.bf16.gmra.mxu0 %v53
    %v1358 = vpop.f32.mrf.mxu0
    %v1359 = vadd.f32 %v794, %v1358
    %v1360 = vpop.f32.mrf.mxu0
    %v1361 = vadd.f32 %v796, %v1360
    %v1362 = vpop.f32.mrf.mxu0
    %v1363 = vadd.f32 %v798, %v1362
    %v1364 = vpop.f32.mrf.mxu0
    %v1365 = vadd.f32 %v800, %v1364
    %1366 = vmatprep.mubr.bf16.mxu0 %v57
    %1367 = vmatmul.mubr.bf16.gmra.mxu0 %v56
    %v1368 = vpop.f32.mrf.mxu0
    %v1369 = vadd.f32 %v804, %v1368
    %v1370 = vpop.f32.mrf.mxu0
    %v1371 = vadd.f32 %v806, %v1370
    %v1372 = vpop.f32.mrf.mxu0
    %v1373 = vadd.f32 %v808, %v1372
    %v1374 = vpop.f32.mrf.mxu0
    %v1375 = vadd.f32 %v810, %v1374
    %1376 = vdwg.mxu0
    %1377 = vmatprep.subr.bf16.mxu0 0
    %1378 = vmatpush1.bf16.msra.mxu0 0
    %1379 = vmatprep.subr.bf16.mxu0 0
    %1380 = vmatpush1.bf16.msra.mxu0 0
    %1381 = vmatprep.subr.bf16.mxu0 0
    %1382 = vmatpush1.bf16.msra.mxu0 0
    %1383 = vmatprep.subr.bf16.mxu0 0
    %1384 = vmatpush1.bf16.msra.mxu0 0
    %1385 = vmatprep.subr.bf16.mxu0 %v1235
    %1386 = vmatpush1.bf16.msra.mxu0 %v1234
    %1387 = vmatprep.subr.bf16.mxu0 %v1231
    %1388 = vmatpush1.bf16.msra.mxu0 %v1230
    %1389 = vmatprep.subr.bf16.mxu0 %v1227
    %1390 = vmatpush1.bf16.msra.mxu0 %v1226
    %1391 = vmatprep.subr.bf16.mxu0 %v1223
    %1392 = vmatpush1.bf16.msra.mxu0 %v1222
    %1393 = vmatprep.subr.bf16.mxu0 0
    %1394 = vmatpush2.bf16.msra.mxu0 0
    %1395 = vmatprep.subr.bf16.mxu0 0
    %1396 = vmatpush2.bf16.msra.mxu0 0
    %1397 = vmatprep.subr.bf16.mxu0 0
    %1398 = vmatpush2.bf16.msra.mxu0 0
    %1399 = vmatprep.subr.bf16.mxu0 0
    %1400 = vmatpush2.bf16.msra.mxu0 0
    %1401 = vmatprep.subr.bf16.mxu0 0
    %1402 = vmatpush2.bf16.msra.mxu0 0
    %1403 = vmatprep.subr.bf16.mxu0 0
    %1404 = vmatpush2.bf16.msra.mxu0 0
    %1405 = vmatprep.subr.bf16.mxu0 0
    %1406 = vmatpush2.bf16.msra.mxu0 0
    %1407 = vmatprep.subr.bf16.mxu0 0
    %1408 = vmatpush2.bf16.msra.mxu0 0
    %1409 = vmatprep.mubr.bf16.mxu0 0
    %1410 = vmatmul.mubr.bf16.gmra.mxu0 %v1319
    %v1411 = vpop.f32.mrf.mxu0
    %v1412 = vadd.f32 %v1359, %v1411
    %v1413 = vpop.f32.mrf.mxu0
    %v1414 = vadd.f32 %v1361, %v1413
    %v1415 = vpop.f32.mrf.mxu0
    %v1416 = vadd.f32 %v1363, %v1415
    %v1417 = vpop.f32.mrf.mxu0
    %v1418 = vadd.f32 %v1365, %v1417
    %1419 = vmatprep.mubr.bf16.mxu0 0
    %1420 = vmatmul.mubr.bf16.gmra.mxu0 %v1322
    %v1421 = vpop.f32.mrf.mxu0
    %v1422 = vadd.f32 %v1369, %v1421
    %v1423 = vpop.f32.mrf.mxu0
    %v1424 = vadd.f32 %v1371, %v1423
    %v1425 = vpop.f32.mrf.mxu0
    %v1426 = vadd.f32 %v1373, %v1425
    %v1427 = vpop.f32.mrf.mxu0
    %v1428 = vadd.f32 %v1375, %v1427
    %1429 = vdwg.mxu0
    %1430 = vmatprep.subr.bf16.mxu0 %v1189
    %1431 = vmatpush1.bf16.msra.mxu0 %v1188
    %1432 = vmatprep.subr.bf16.mxu0 %v1185
    %1433 = vmatpush1.bf16.msra.mxu0 %v1184
    %1434 = vmatprep.subr.bf16.mxu0 %v1181
    %1435 = vmatpush1.bf16.msra.mxu0 %v1180
    %1436 = vmatprep.subr.bf16.mxu0 %v1177
    %1437 = vmatpush1.bf16.msra.mxu0 %v1176
    %1438 = vmatprep.subr.bf16.mxu0 %v1173
    %1439 = vmatpush1.bf16.msra.mxu0 %v1172
    %1440 = vmatprep.subr.bf16.mxu0 %v1169
    %1441 = vmatpush1.bf16.msra.mxu0 %v1168
    %1442 = vmatprep.subr.bf16.mxu0 %v1165
    %1443 = vmatpush1.bf16.msra.mxu0 %v1164
    %1444 = vmatprep.subr.bf16.mxu0 %v1161
    %1445 = vmatpush1.bf16.msra.mxu0 %v1160
    %1446 = vmatprep.subr.bf16.mxu0 %v1221
    %1447 = vmatpush2.bf16.msra.mxu0 %v1220
    %1448 = vmatprep.subr.bf16.mxu0 %v1217
    %1449 = vmatpush2.bf16.msra.mxu0 %v1216
    %1450 = vmatprep.subr.bf16.mxu0 %v1213
    %1451 = vmatpush2.bf16.msra.mxu0 %v1212
    %1452 = vmatprep.subr.bf16.mxu0 %v1209
    %1453 = vmatpush2.bf16.msra.mxu0 %v1208
    %1454 = vmatprep.subr.bf16.mxu0 %v1205
    %1455 = vmatpush2.bf16.msra.mxu0 %v1204
    %1456 = vmatprep.subr.bf16.mxu0 %v1201
    %1457 = vmatpush2.bf16.msra.mxu0 %v1200
    %1458 = vmatprep.subr.bf16.mxu0 %v1197
    %1459 = vmatpush2.bf16.msra.mxu0 %v1196
    %1460 = vmatprep.subr.bf16.mxu0 %v1193
    %1461 = vmatpush2.bf16.msra.mxu0 %v1192
    %1462 = vmatprep.mubr.bf16.mxu0 %v54
    %1463 = vmatmul.mubr.bf16.gmra.mxu0 %v53
    %v1464 = vpop.f32.mrf.mxu0
    %v1465 = vadd.f32 %v900, %v1464
    %v1466 = vpop.f32.mrf.mxu0
    %v1467 = vadd.f32 %v902, %v1466
    %v1468 = vpop.f32.mrf.mxu0
    %v1469 = vadd.f32 %v904, %v1468
    %v1470 = vpop.f32.mrf.mxu0
    %v1471 = vadd.f32 %v906, %v1470
    %1472 = vmatprep.mubr.bf16.mxu0 %v57
    %1473 = vmatmul.mubr.bf16.gmra.mxu0 %v56
    %v1474 = vpop.f32.mrf.mxu0
    %v1475 = vadd.f32 %v910, %v1474
    %v1476 = vpop.f32.mrf.mxu0
    %v1477 = vadd.f32 %v912, %v1476
    %v1478 = vpop.f32.mrf.mxu0
    %v1479 = vadd.f32 %v914, %v1478
    %v1480 = vpop.f32.mrf.mxu0
    %v1481 = vadd.f32 %v916, %v1480
    %1482 = vdwg.mxu0
    %1483 = vmatprep.subr.bf16.mxu0 0
    %1484 = vmatpush1.bf16.msra.mxu0 0
    %1485 = vmatprep.subr.bf16.mxu0 0
    %1486 = vmatpush1.bf16.msra.mxu0 0
    %1487 = vmatprep.subr.bf16.mxu0 0
    %1488 = vmatpush1.bf16.msra.mxu0 0
    %1489 = vmatprep.subr.bf16.mxu0 0
    %1490 = vmatpush1.bf16.msra.mxu0 0
    %1491 = vmatprep.subr.bf16.mxu0 %v1237
    %1492 = vmatpush1.bf16.msra.mxu0 %v1236
    %1493 = vmatprep.subr.bf16.mxu0 %v1233
    %1494 = vmatpush1.bf16.msra.mxu0 %v1232
    %1495 = vmatprep.subr.bf16.mxu0 %v1229
    %1496 = vmatpush1.bf16.msra.mxu0 %v1228
    %1497 = vmatprep.subr.bf16.mxu0 %v1225
    %1498 = vmatpush1.bf16.msra.mxu0 %v1224
    %1499 = vmatprep.subr.bf16.mxu0 0
    %1500 = vmatpush2.bf16.msra.mxu0 0
    %1501 = vmatprep.subr.bf16.mxu0 0
    %1502 = vmatpush2.bf16.msra.mxu0 0
    %1503 = vmatprep.subr.bf16.mxu0 0
    %1504 = vmatpush2.bf16.msra.mxu0 0
    %1505 = vmatprep.subr.bf16.mxu0 0
    %1506 = vmatpush2.bf16.msra.mxu0 0
    %1507 = vmatprep.subr.bf16.mxu0 0
    %1508 = vmatpush2.bf16.msra.mxu0 0
    %1509 = vmatprep.subr.bf16.mxu0 0
    %1510 = vmatpush2.bf16.msra.mxu0 0
    %1511 = vmatprep.subr.bf16.mxu0 0
    %1512 = vmatpush2.bf16.msra.mxu0 0
    %1513 = vmatprep.subr.bf16.mxu0 0
    %1514 = vmatpush2.bf16.msra.mxu0 0
    %1515 = vmatprep.mubr.bf16.mxu0 0
    %1516 = vmatmul.mubr.bf16.gmra.mxu0 %v1319
    %v1517 = vpop.f32.mrf.mxu0
    %v1518 = vadd.f32 %v1465, %v1517
    %v1519 = vpop.f32.mrf.mxu0
    %v1520 = vadd.f32 %v1467, %v1519
    %v1521 = vpop.f32.mrf.mxu0
    %v1522 = vadd.f32 %v1469, %v1521
    %v1523 = vpop.f32.mrf.mxu0
    %v1524 = vadd.f32 %v1471, %v1523
    %1525 = vmatprep.mubr.bf16.mxu0 0
    %1526 = vmatmul.mubr.bf16.gmra.mxu0 %v1322
    %v1527 = vpop.f32.mrf.mxu0
    %v1528 = vadd.f32 %v1475, %v1527
    %v1529 = vpop.f32.mrf.mxu0
    %v1530 = vadd.f32 %v1477, %v1529
    %v1531 = vpop.f32.mrf.mxu0
    %v1532 = vadd.f32 %v1479, %v1531
    %v1533 = vpop.f32.mrf.mxu0
    %v1534 = vadd.f32 %v1481, %v1533
    %1535 = vdwg.mxu0
    %v1536 = vld [vmem:[%s0] sm:$0xfc]
    %v1537 = vld [vmem:[%s0 + $0x8] sm:$0xfc]
    %v1538 = vld [vmem:[%s0 + $0x10] sm:$0xfc]
    %v1539 = vld [vmem:[%s0 + $0x30] sm:$0x3]
    %v1540 = vld [vmem:[%s0 + $0x38] sm:$0x3]
    %v1541 = vld [vmem:[%s0 + $0x40] sm:$0x3]
    %v1542 = vld [vmem:[%s0 + $0x48] sm:$0xfc]
    %v1543 = vld [vmem:[%s0 + $0x50] sm:$0xfc]
    %v1544 = vld [vmem:[%s0 + $0x58] sm:$0xfc]
    %v1545 = vld [vmem:[%s0 + $0x78] sm:$0x3]
    %v1546 = vld [vmem:[%s0 + $0x80] sm:$0x3]
    %v1547 = vld [vmem:[%s0 + $0x88] sm:$0x3]
    %vm1560 = vcmask 1045504
    %v1561 = vrot.slane %v1536, 2
    %v1562 = vrot.slane %v44, 2
    %v1563 = vsel %vm1560, %v1561, %v1562
    %v1564 = vrot.slane %v1537, 2
    %v1565 = vrot.slane %v45, 2
    %v1566 = vsel %vm1560, %v1564, %v1565
    %v1567 = vrot.slane %v1538, 2
    %v1568 = vrot.slane %v46, 2
    %v1569 = vsel %vm1560, %v1567, %v1568
    %v1570 = vrot.slane %v1539, 2
    %v1571 = vsel %vm1560, %v1562, %v1570
    %v1572 = vrot.slane %v1540, 2
    %v1573 = vsel %vm1560, %v1565, %v1572
    %v1574 = vrot.slane %v1541, 2
    %v1575 = vsel %vm1560, %v1568, %v1574
    %v1576 = vrot.slane %v1542, 2
    %v1577 = vrot.slane %v50, 2
    %v1578 = vsel %vm1560, %v1576, %v1577
    %v1579 = vrot.slane %v1543, 2
    %v1580 = vrot.slane %v51, 2
    %v1581 = vsel %vm1560, %v1579, %v1580
    %v1582 = vrot.slane %v1544, 2
    %v1583 = vrot.slane %v52, 2
    %v1584 = vsel %vm1560, %v1582, %v1583
    %v1585 = vrot.slane %v1545, 2
    %v1586 = vsel %vm1560, %v1577, %v1585
    %v1587 = vrot.slane %v1546, 2
    %v1588 = vsel %vm1560, %v1580, %v1587
    %v1589 = vrot.slane %v1547, 2
    %v1590 = vsel %vm1560, %v1583, %v1589
    %v1603 = vpack.c.bf16 %v1571, %v1563
    %v1604 = vpack.c.bf16 %v1573, %v1566
    %v1605 = vpack.c.bf16 %v1575, %v1569
    %v1606 = vpack.c.bf16 %v1586, %v1578
    %v1607 = vpack.c.bf16 %v1588, %v1581
    %v1608 = vpack.c.bf16 %v1590, %v1584
    %s1609 = scalar_lea.vmem [#allocation2], 1280
    %v1610 = vld [vmem:[%s1609] sm:$0xff]
    %v1611 = vld [vmem:[%s1609 + $0x8] sm:$0xff]
    %v1612 = vld [vmem:[%s1609 + $0x10] sm:$0xff]
    %v1613 = vld [vmem:[%s1609 + $0x18] sm:$0xff]
    %v1614 = vld [vmem:[%s1609 + $0x20] sm:$0xff]
    %v1615 = vld [vmem:[%s1609 + $0x28] sm:$0xff]
    %v1616 = vld [vmem:[%s1609 + $0x30] sm:$0xff]
    %v1617 = vld [vmem:[%s1609 + $0x38] sm:$0xff]
    %v1618 = vld [vmem:[%s1609 + $0x40] sm:$0xff]
    %v1619 = vld [vmem:[%s1609 + $0x48] sm:$0xff]
    %v1620 = vld [vmem:[%s1609 + $0x50] sm:$0xff]
    %v1621 = vld [vmem:[%s1609 + $0x58] sm:$0xff]
    %v1622 = vld [vmem:[%s1609 + $0x60] sm:$0xff]
    %v1623 = vld [vmem:[%s1609 + $0x68] sm:$0xff]
    %v1624 = vld [vmem:[%s1609 + $0x70] sm:$0xff]
    %v1625 = vld [vmem:[%s1609 + $0x78] sm:$0xff]
    %v1626 = vld [vmem:[%s1609 + $0x80] sm:$0xff]
    %v1627 = vld [vmem:[%s1609 + $0x88] sm:$0xff]
    %v1628 = vld [vmem:[%s1609 + $0x90] sm:$0xff]
    %v1629 = vld [vmem:[%s1609 + $0x98] sm:$0xff]
    %v1630 = vld [vmem:[%s1609 + $0xa0] sm:$0xff]
    %v1631 = vld [vmem:[%s1609 + $0xa8] sm:$0xff]
    %v1632 = vld [vmem:[%s1609 + $0xb0] sm:$0xff]
    %v1633 = vld [vmem:[%s1609 + $0xb8] sm:$0xff]
    %v1634 = vld [vmem:[%s1609 + $0xc0] sm:$0xff]
    %v1635 = vld [vmem:[%s1609 + $0xc8] sm:$0xff]
    %v1636 = vld [vmem:[%s1609 + $0xd0] sm:$0xff]
    %v1637 = vld [vmem:[%s1609 + $0xd8] sm:$0xff]
    %v1638 = vld [vmem:[%s1609 + $0xe0] sm:$0xff]
    %v1639 = vld [vmem:[%s1609 + $0xe8] sm:$0xff]
    %v1640 = vld [vmem:[%s1609 + $0xf0] sm:$0xff]
    %v1641 = vld [vmem:[%s1609 + $0xf8] sm:$0xff]
    %v1642 = vld [vmem:[%s1609 + $0x100] sm:$0xff]
    %v1643 = vld [vmem:[%s1609 + $0x108] sm:$0xff]
    %v1644 = vld [vmem:[%s1609 + $0x110] sm:$0xff]
    %v1645 = vld [vmem:[%s1609 + $0x118] sm:$0xff]
    %v1646 = vld [vmem:[%s1609 + $0x120] sm:$0xff]
    %v1647 = vld [vmem:[%s1609 + $0x128] sm:$0xff]
    %v1648 = vld [vmem:[%s1609 + $0x130] sm:$0xff]
    %v1649 = vld [vmem:[%s1609 + $0x138] sm:$0xff]
    %v1650 = vld [vmem:[%s1609 + $0x140] sm:$0xff]
    %v1651 = vld [vmem:[%s1609 + $0x148] sm:$0xff]
    %v1652 = vld [vmem:[%s1609 + $0x150] sm:$0xff]
    %v1653 = vld [vmem:[%s1609 + $0x158] sm:$0xff]
    %v1654 = vld [vmem:[%s1609 + $0x160] sm:$0xff]
    %v1655 = vld [vmem:[%s1609 + $0x168] sm:$0xff]
    %v1656 = vld [vmem:[%s1609 + $0x170] sm:$0xff]
    %v1657 = vld [vmem:[%s1609 + $0x178] sm:$0xff]
    %v1658 = vld [vmem:[%s1609 + $0x180] sm:$0xff]
    %v1659 = vld [vmem:[%s1609 + $0x188] sm:$0xff]
    %v1660 = vld [vmem:[%s1609 + $0x190] sm:$0xff]
    %v1661 = vld [vmem:[%s1609 + $0x198] sm:$0xff]
    %v1662 = vld [vmem:[%s1609 + $0x1a0] sm:$0xff]
    %v1663 = vld [vmem:[%s1609 + $0x1a8] sm:$0xff]
    %v1664 = vld [vmem:[%s1609 + $0x1b0] sm:$0xff]
    %v1665 = vld [vmem:[%s1609 + $0x1b8] sm:$0xff]
    %v1666 = vld [vmem:[%s1609 + $0x1c0] sm:$0xff]
    %v1667 = vld [vmem:[%s1609 + $0x1c8] sm:$0xff]
    %v1668 = vld [vmem:[%s1609 + $0x1d0] sm:$0xff]
    %v1669 = vld [vmem:[%s1609 + $0x1d8] sm:$0xff]
    %v1670 = vld [vmem:[%s1609 + $0x1e0] sm:$0xff]
    %v1671 = vld [vmem:[%s1609 + $0x1e8] sm:$0xff]
    %v1672 = vld [vmem:[%s1609 + $0x1f0] sm:$0xff]
    %v1673 = vld [vmem:[%s1609 + $0x1f8] sm:$0xff]
    %v1674 = vld [vmem:[%s1609 + $0x200] sm:$0xff]
    %v1675 = vld [vmem:[%s1609 + $0x208] sm:$0xff]
    %v1676 = vld [vmem:[%s1609 + $0x210] sm:$0xff]
    %v1677 = vld [vmem:[%s1609 + $0x218] sm:$0xff]
    %v1678 = vld [vmem:[%s1609 + $0x220] sm:$0xff]
    %v1679 = vld [vmem:[%s1609 + $0x228] sm:$0xff]
    %v1680 = vld [vmem:[%s1609 + $0x230] sm:$0xff]
    %v1681 = vld [vmem:[%s1609 + $0x238] sm:$0xff]
    %v1682 = vld [vmem:[%s1609 + $0x240] sm:$0xff]
    %v1683 = vld [vmem:[%s1609 + $0x248] sm:$0xff]
    %v1684 = vld [vmem:[%s1609 + $0x250] sm:$0xff]
    %v1685 = vld [vmem:[%s1609 + $0x258] sm:$0xff]
    %v1686 = vld [vmem:[%s1609 + $0x260] sm:$0xff]
    %v1687 = vld [vmem:[%s1609 + $0x268] sm:$0xff]
    %v1688 = vld [vmem:[%s1609 + $0x270] sm:$0xff]
    %v1689 = vld [vmem:[%s1609 + $0x278] sm:$0xff]
    %v1770 = vunpack.c.l.b16 %v1610
    %v1771 = vunpack.c.h.b16 %v1610
    %v1772 = vunpack.c.l.b16 %v1611
    %v1773 = vunpack.c.h.b16 %v1611
    %v1774 = vunpack.c.l.b16 %v1612
    %v1775 = vunpack.c.h.b16 %v1612
    %v1776 = vunpack.c.l.b16 %v1613
    %v1777 = vunpack.c.h.b16 %v1613
    %v1778 = vunpack.c.l.b16 %v1614
    %v1779 = vunpack.c.h.b16 %v1614
    %v1780 = vunpack.c.l.b16 %v1615
    %v1781 = vunpack.c.h.b16 %v1615
    %v1782 = vunpack.c.l.b16 %v1616
    %v1783 = vunpack.c.h.b16 %v1616
    %v1784 = vunpack.c.l.b16 %v1617
    %v1785 = vunpack.c.h.b16 %v1617
    %v1786 = vunpack.c.l.b16 %v1618
    %v1787 = vunpack.c.h.b16 %v1618
    %v1788 = vunpack.c.l.b16 %v1619
    %v1789 = vunpack.c.h.b16 %v1619
    %v1790 = vunpack.c.l.b16 %v1620
    %v1791 = vunpack.c.h.b16 %v1620
    %v1792 = vunpack.c.l.b16 %v1621
    %v1793 = vunpack.c.h.b16 %v1621
    %v1794 = vunpack.c.l.b16 %v1622
    %v1795 = vunpack.c.h.b16 %v1622
    %v1796 = vunpack.c.l.b16 %v1623
    %v1797 = vunpack.c.h.b16 %v1623
    %v1798 = vunpack.c.l.b16 %v1624
    %v1799 = vunpack.c.h.b16 %v1624
    %v1800 = vunpack.c.l.b16 %v1625
    %v1801 = vunpack.c.h.b16 %v1625
    %v1802 = vunpack.c.l.b16 %v1626
    %v1803 = vunpack.c.h.b16 %v1626
    %v1804 = vunpack.c.l.b16 %v1627
    %v1805 = vunpack.c.h.b16 %v1627
    %v1806 = vunpack.c.l.b16 %v1628
    %v1807 = vunpack.c.h.b16 %v1628
    %v1808 = vunpack.c.l.b16 %v1629
    %v1809 = vunpack.c.h.b16 %v1629
    %v1810 = vunpack.c.l.b16 %v1630
    %v1811 = vunpack.c.h.b16 %v1630
    %v1812 = vunpack.c.l.b16 %v1631
    %v1813 = vunpack.c.h.b16 %v1631
    %v1814 = vunpack.c.l.b16 %v1632
    %v1815 = vunpack.c.h.b16 %v1632
    %v1816 = vunpack.c.l.b16 %v1633
    %v1817 = vunpack.c.h.b16 %v1633
    %v1818 = vunpack.c.l.b16 %v1634
    %v1819 = vunpack.c.h.b16 %v1634
    %v1820 = vunpack.c.l.b16 %v1635
    %v1821 = vunpack.c.h.b16 %v1635
    %v1822 = vunpack.c.l.b16 %v1636
    %v1823 = vunpack.c.h.b16 %v1636
    %v1824 = vunpack.c.l.b16 %v1637
    %v1825 = vunpack.c.h.b16 %v1637
    %v1826 = vunpack.c.l.b16 %v1638
    %v1827 = vunpack.c.h.b16 %v1638
    %v1828 = vunpack.c.l.b16 %v1639
    %v1829 = vunpack.c.h.b16 %v1639
    %v1830 = vunpack.c.l.b16 %v1640
    %v1831 = vunpack.c.h.b16 %v1640
    %v1832 = vunpack.c.l.b16 %v1641
    %v1833 = vunpack.c.h.b16 %v1641
    %v1834 = vunpack.c.l.b16 %v1642
    %v1835 = vunpack.c.h.b16 %v1642
    %v1836 = vunpack.c.l.b16 %v1643
    %v1837 = vunpack.c.h.b16 %v1643
    %v1838 = vunpack.c.l.b16 %v1644
    %v1839 = vunpack.c.h.b16 %v1644
    %v1840 = vunpack.c.l.b16 %v1645
    %v1841 = vunpack.c.h.b16 %v1645
    %v1842 = vunpack.c.l.b16 %v1646
    %v1843 = vunpack.c.h.b16 %v1646
    %v1844 = vunpack.c.l.b16 %v1647
    %v1845 = vunpack.c.h.b16 %v1647
    %v1846 = vunpack.c.l.b16 %v1648
    %v1847 = vunpack.c.h.b16 %v1648
    %v1848 = vunpack.c.l.b16 %v1649
    %v1849 = vunpack.c.h.b16 %v1649
    %v1850 = vunpack.c.l.b16 %v1650
    %v1851 = vunpack.c.h.b16 %v1650
    %v1852 = vunpack.c.l.b16 %v1651
    %v1853 = vunpack.c.h.b16 %v1651
    %v1854 = vunpack.c.l.b16 %v1652
    %v1855 = vunpack.c.h.b16 %v1652
    %v1856 = vunpack.c.l.b16 %v1653
    %v1857 = vunpack.c.h.b16 %v1653
    %v1858 = vunpack.c.l.b16 %v1654
    %v1859 = vunpack.c.h.b16 %v1654
    %v1860 = vunpack.c.l.b16 %v1655
    %v1861 = vunpack.c.h.b16 %v1655
    %v1862 = vunpack.c.l.b16 %v1656
    %v1863 = vunpack.c.h.b16 %v1656
    %v1864 = vunpack.c.l.b16 %v1657
    %v1865 = vunpack.c.h.b16 %v1657
    %v1866 = vunpack.c.l.b16 %v1658
    %v1867 = vunpack.c.h.b16 %v1658
    %v1868 = vunpack.c.l.b16 %v1659
    %v1869 = vunpack.c.h.b16 %v1659
    %v1870 = vunpack.c.l.b16 %v1660
    %v1871 = vunpack.c.h.b16 %v1660
    %v1872 = vunpack.c.l.b16 %v1661
    %v1873 = vunpack.c.h.b16 %v1661
    %v1874 = vunpack.c.l.b16 %v1662
    %v1875 = vunpack.c.h.b16 %v1662
    %v1876 = vunpack.c.l.b16 %v1663
    %v1877 = vunpack.c.h.b16 %v1663
    %v1878 = vunpack.c.l.b16 %v1664
    %v1879 = vunpack.c.h.b16 %v1664
    %v1880 = vunpack.c.l.b16 %v1665
    %v1881 = vunpack.c.h.b16 %v1665
    %v1882 = vunpack.c.l.b16 %v1666
    %v1883 = vunpack.c.h.b16 %v1666
    %v1884 = vunpack.c.l.b16 %v1667
    %v1885 = vunpack.c.h.b16 %v1667
    %v1886 = vunpack.c.l.b16 %v1668
    %v1887 = vunpack.c.h.b16 %v1668
    %v1888 = vunpack.c.l.b16 %v1669
    %v1889 = vunpack.c.h.b16 %v1669
    %v1890 = vunpack.c.l.b16 %v1670
    %v1891 = vunpack.c.h.b16 %v1670
    %v1892 = vunpack.c.l.b16 %v1671
    %v1893 = vunpack.c.h.b16 %v1671
    %v1894 = vunpack.c.l.b16 %v1672
    %v1895 = vunpack.c.h.b16 %v1672
    %v1896 = vunpack.c.l.b16 %v1673
    %v1897 = vunpack.c.h.b16 %v1673
    %v1898 = vunpack.c.l.b16 %v1674
    %v1899 = vunpack.c.h.b16 %v1674
    %v1900 = vunpack.c.l.b16 %v1675
    %v1901 = vunpack.c.h.b16 %v1675
    %v1902 = vunpack.c.l.b16 %v1676
    %v1903 = vunpack.c.h.b16 %v1676
    %v1904 = vunpack.c.l.b16 %v1677
    %v1905 = vunpack.c.h.b16 %v1677
    %v1906 = vunpack.c.l.b16 %v1678
    %v1907 = vunpack.c.h.b16 %v1678
    %v1908 = vunpack.c.l.b16 %v1679
    %v1909 = vunpack.c.h.b16 %v1679
    %v1910 = vunpack.c.l.b16 %v1680
    %v1911 = vunpack.c.h.b16 %v1680
    %v1912 = vunpack.c.l.b16 %v1681
    %v1913 = vunpack.c.h.b16 %v1681
    %v1914 = vunpack.c.l.b16 %v1682
    %v1915 = vunpack.c.h.b16 %v1682
    %v1916 = vunpack.c.l.b16 %v1683
    %v1917 = vunpack.c.h.b16 %v1683
    %v1918 = vunpack.c.l.b16 %v1684
    %v1919 = vunpack.c.h.b16 %v1684
    %v1920 = vunpack.c.l.b16 %v1685
    %v1921 = vunpack.c.h.b16 %v1685
    %v1922 = vunpack.c.l.b16 %v1686
    %v1923 = vunpack.c.h.b16 %v1686
    %v1924 = vunpack.c.l.b16 %v1687
    %v1925 = vunpack.c.h.b16 %v1687
    %v1926 = vunpack.c.l.b16 %v1688
    %v1927 = vunpack.c.h.b16 %v1688
    %v1928 = vunpack.c.l.b16 %v1689
    %v1929 = vunpack.c.h.b16 %v1689
    %v1930 = vpack.c.b16 %v1774, %v1770
    %v1931 = vpack.c.b16 %v1775, %v1771
    %v1932 = vpack.c.b16 %v1776, %v1772
    %v1933 = vpack.c.b16 %v1777, %v1773
    %v1934 = vpack.c.b16 %v1782, %v1778
    %v1935 = vpack.c.b16 %v1783, %v1779
    %v1936 = vpack.c.b16 %v1784, %v1780
    %v1937 = vpack.c.b16 %v1785, %v1781
    %v1938 = vpack.c.b16 %v1790, %v1786
    %v1939 = vpack.c.b16 %v1791, %v1787
    %v1940 = vpack.c.b16 %v1792, %v1788
    %v1941 = vpack.c.b16 %v1793, %v1789
    %v1942 = vpack.c.b16 %v1798, %v1794
    %v1943 = vpack.c.b16 %v1799, %v1795
    %v1944 = vpack.c.b16 %v1800, %v1796
    %v1945 = vpack.c.b16 %v1801, %v1797
    %v1946 = vpack.c.b16 %v1806, %v1802
    %v1947 = vpack.c.b16 %v1807, %v1803
    %v1948 = vpack.c.b16 %v1808, %v1804
    %v1949 = vpack.c.b16 %v1809, %v1805
    %v1950 = vpack.c.b16 %v1814, %v1810
    %v1951 = vpack.c.b16 %v1815, %v1811
    %v1952 = vpack.c.b16 %v1816, %v1812
    %v1953 = vpack.c.b16 %v1817, %v1813
    %v1954 = vpack.c.b16 %v1822, %v1818
    %v1955 = vpack.c.b16 %v1823, %v1819
    %v1956 = vpack.c.b16 %v1824, %v1820
    %v1957 = vpack.c.b16 %v1825, %v1821
    %v1958 = vpack.c.b16 %v1830, %v1826
    %v1959 = vpack.c.b16 %v1831, %v1827
    %v1960 = vpack.c.b16 %v1832, %v1828
    %v1961 = vpack.c.b16 %v1833, %v1829
    %v1962 = vpack.c.b16 %v1838, %v1834
    %v1963 = vpack.c.b16 %v1839, %v1835
    %v1964 = vpack.c.b16 %v1840, %v1836
    %v1965 = vpack.c.b16 %v1841, %v1837
    %v1966 = vpack.c.b16 %v1846, %v1842
    %v1967 = vpack.c.b16 %v1847, %v1843
    %v1968 = vpack.c.b16 %v1848, %v1844
    %v1969 = vpack.c.b16 %v1849, %v1845
    %v1970 = vpack.c.b16 %v1854, %v1850
    %v1971 = vpack.c.b16 %v1855, %v1851
    %v1972 = vpack.c.b16 %v1856, %v1852
    %v1973 = vpack.c.b16 %v1857, %v1853
    %v1974 = vpack.c.b16 %v1862, %v1858
    %v1975 = vpack.c.b16 %v1863, %v1859
    %v1976 = vpack.c.b16 %v1864, %v1860
    %v1977 = vpack.c.b16 %v1865, %v1861
    %v1978 = vpack.c.b16 %v1870, %v1866
    %v1979 = vpack.c.b16 %v1871, %v1867
    %v1980 = vpack.c.b16 %v1872, %v1868
    %v1981 = vpack.c.b16 %v1873, %v1869
    %v1982 = vpack.c.b16 %v1878, %v1874
    %v1983 = vpack.c.b16 %v1879, %v1875
    %v1984 = vpack.c.b16 %v1880, %v1876
    %v1985 = vpack.c.b16 %v1881, %v1877
    %v1986 = vpack.c.b16 %v1886, %v1882
    %v1987 = vpack.c.b16 %v1887, %v1883
    %v1988 = vpack.c.b16 %v1888, %v1884
    %v1989 = vpack.c.b16 %v1889, %v1885
    %v1990 = vpack.c.b16 %v1894, %v1890
    %v1991 = vpack.c.b16 %v1895, %v1891
    %v1992 = vpack.c.b16 %v1896, %v1892
    %v1993 = vpack.c.b16 %v1897, %v1893
    %v1994 = vpack.c.b16 %v1902, %v1898
    %v1995 = vpack.c.b16 %v1903, %v1899
    %v1996 = vpack.c.b16 %v1904, %v1900
    %v1997 = vpack.c.b16 %v1905, %v1901
    %v1998 = vpack.c.b16 %v1910, %v1906
    %v1999 = vpack.c.b16 %v1911, %v1907
    %v2000 = vpack.c.b16 %v1912, %v1908
    %v2001 = vpack.c.b16 %v1913, %v1909
    %v2002 = vpack.c.b16 %v1918, %v1914
    %v2003 = vpack.c.b16 %v1919, %v1915
    %v2004 = vpack.c.b16 %v1920, %v1916
    %v2005 = vpack.c.b16 %v1921, %v1917
    %v2006 = vpack.c.b16 %v1926, %v1922
    %v2007 = vpack.c.b16 %v1927, %v1923
    %v2008 = vpack.c.b16 %v1928, %v1924
    %v2009 = vpack.c.b16 %v1929, %v1925
    %v2091 = vsel %vm699, %v1605, 0
    %v2094 = vsel %vm699, %v1608, 0
    %2096 = vmatprep.subr.bf16.mxu0 %v1959
    %2097 = vmatpush1.bf16.msra.mxu0 %v1958
    %2098 = vmatprep.subr.bf16.mxu0 %v1955
    %2099 = vmatpush1.bf16.msra.mxu0 %v1954
    %2100 = vmatprep.subr.bf16.mxu0 %v1951
    %2101 = vmatpush1.bf16.msra.mxu0 %v1950
    %2102 = vmatprep.subr.bf16.mxu0 %v1947
    %2103 = vmatpush1.bf16.msra.mxu0 %v1946
    %2104 = vmatprep.subr.bf16.mxu0 %v1943
    %2105 = vmatpush1.bf16.msra.mxu0 %v1942
    %2106 = vmatprep.subr.bf16.mxu0 %v1939
    %2107 = vmatpush1.bf16.msra.mxu0 %v1938
    %2108 = vmatprep.subr.bf16.mxu0 %v1935
    %2109 = vmatpush1.bf16.msra.mxu0 %v1934
    %2110 = vmatprep.subr.bf16.mxu0 %v1931
    %2111 = vmatpush1.bf16.msra.mxu0 %v1930
    %2112 = vmatprep.subr.bf16.mxu0 %v1991
    %2113 = vmatpush2.bf16.msra.mxu0 %v1990
    %2114 = vmatprep.subr.bf16.mxu0 %v1987
    %2115 = vmatpush2.bf16.msra.mxu0 %v1986
    %2116 = vmatprep.subr.bf16.mxu0 %v1983
    %2117 = vmatpush2.bf16.msra.mxu0 %v1982
    %2118 = vmatprep.subr.bf16.mxu0 %v1979
    %2119 = vmatpush2.bf16.msra.mxu0 %v1978
    %2120 = vmatprep.subr.bf16.mxu0 %v1975
    %2121 = vmatpush2.bf16.msra.mxu0 %v1974
    %2122 = vmatprep.subr.bf16.mxu0 %v1971
    %2123 = vmatpush2.bf16.msra.mxu0 %v1970
    %2124 = vmatprep.subr.bf16.mxu0 %v1967
    %2125 = vmatpush2.bf16.msra.mxu0 %v1966
    %2126 = vmatprep.subr.bf16.mxu0 %v1963
    %2127 = vmatpush2.bf16.msra.mxu0 %v1962
    %2128 = vmatprep.mubr.bf16.mxu0 %v1604
    %2129 = vmatmul.mubr.bf16.gmra.mxu0 %v1603
    %v2130 = vpop.f32.mrf.mxu0
    %v2131 = vadd.f32 0.0, %v2130
    %v2132 = vpop.f32.mrf.mxu0
    %v2133 = vadd.f32 0.0, %v2132
    %v2134 = vpop.f32.mrf.mxu0
    %v2135 = vadd.f32 0.0, %v2134
    %v2136 = vpop.f32.mrf.mxu0
    %v2137 = vadd.f32 0.0, %v2136
    %2138 = vmatprep.mubr.bf16.mxu0 %v1607
    %2139 = vmatmul.mubr.bf16.gmra.mxu0 %v1606
    %v2140 = vpop.f32.mrf.mxu0
    %v2141 = vadd.f32 0.0, %v2140
    %v2142 = vpop.f32.mrf.mxu0
    %v2143 = vadd.f32 0.0, %v2142
    %v2144 = vpop.f32.mrf.mxu0
    %v2145 = vadd.f32 0.0, %v2144
    %v2146 = vpop.f32.mrf.mxu0
    %v2147 = vadd.f32 0.0, %v2146
    %2148 = vdwg.mxu0
    %2149 = vmatprep.subr.bf16.mxu0 0
    %2150 = vmatpush1.bf16.msra.mxu0 0
    %2151 = vmatprep.subr.bf16.mxu0 0
    %2152 = vmatpush1.bf16.msra.mxu0 0
    %2153 = vmatprep.subr.bf16.mxu0 0
    %2154 = vmatpush1.bf16.msra.mxu0 0
    %2155 = vmatprep.subr.bf16.mxu0 0
    %2156 = vmatpush1.bf16.msra.mxu0 0
    %2157 = vmatprep.subr.bf16.mxu0 %v2007
    %2158 = vmatpush1.bf16.msra.mxu0 %v2006
    %2159 = vmatprep.subr.bf16.mxu0 %v2003
    %2160 = vmatpush1.bf16.msra.mxu0 %v2002
    %2161 = vmatprep.subr.bf16.mxu0 %v1999
    %2162 = vmatpush1.bf16.msra.mxu0 %v1998
    %2163 = vmatprep.subr.bf16.mxu0 %v1995
    %2164 = vmatpush1.bf16.msra.mxu0 %v1994
    %2165 = vmatprep.subr.bf16.mxu0 0
    %2166 = vmatpush2.bf16.msra.mxu0 0
    %2167 = vmatprep.subr.bf16.mxu0 0
    %2168 = vmatpush2.bf16.msra.mxu0 0
    %2169 = vmatprep.subr.bf16.mxu0 0
    %2170 = vmatpush2.bf16.msra.mxu0 0
    %2171 = vmatprep.subr.bf16.mxu0 0
    %2172 = vmatpush2.bf16.msra.mxu0 0
    %2173 = vmatprep.subr.bf16.mxu0 0
    %2174 = vmatpush2.bf16.msra.mxu0 0
    %2175 = vmatprep.subr.bf16.mxu0 0
    %2176 = vmatpush2.bf16.msra.mxu0 0
    %2177 = vmatprep.subr.bf16.mxu0 0
    %2178 = vmatpush2.bf16.msra.mxu0 0
    %2179 = vmatprep.subr.bf16.mxu0 0
    %2180 = vmatpush2.bf16.msra.mxu0 0
    %2181 = vmatprep.mubr.bf16.mxu0 0
    %2182 = vmatmul.mubr.bf16.gmra.mxu0 %v2091
    %v2183 = vpop.f32.mrf.mxu0
    %v2184 = vadd.f32 %v2131, %v2183
    %v2185 = vpop.f32.mrf.mxu0
    %v2186 = vadd.f32 %v2133, %v2185
    %v2187 = vpop.f32.mrf.mxu0
    %v2188 = vadd.f32 %v2135, %v2187
    %v2189 = vpop.f32.mrf.mxu0
    %v2190 = vadd.f32 %v2137, %v2189
    %2191 = vmatprep.mubr.bf16.mxu0 0
    %2192 = vmatmul.mubr.bf16.gmra.mxu0 %v2094
    %v2193 = vpop.f32.mrf.mxu0
    %v2194 = vadd.f32 %v2141, %v2193
    %v2195 = vpop.f32.mrf.mxu0
    %v2196 = vadd.f32 %v2143, %v2195
    %v2197 = vpop.f32.mrf.mxu0
    %v2198 = vadd.f32 %v2145, %v2197
    %v2199 = vpop.f32.mrf.mxu0
    %v2200 = vadd.f32 %v2147, %v2199
    %2201 = vdwg.mxu0
    %2202 = vmatprep.subr.bf16.mxu0 %v1961
    %2203 = vmatpush1.bf16.msra.mxu0 %v1960
    %2204 = vmatprep.subr.bf16.mxu0 %v1957
    %2205 = vmatpush1.bf16.msra.mxu0 %v1956
    %2206 = vmatprep.subr.bf16.mxu0 %v1953
    %2207 = vmatpush1.bf16.msra.mxu0 %v1952
    %2208 = vmatprep.subr.bf16.mxu0 %v1949
    %2209 = vmatpush1.bf16.msra.mxu0 %v1948
    %2210 = vmatprep.subr.bf16.mxu0 %v1945
    %2211 = vmatpush1.bf16.msra.mxu0 %v1944
    %2212 = vmatprep.subr.bf16.mxu0 %v1941
    %2213 = vmatpush1.bf16.msra.mxu0 %v1940
    %2214 = vmatprep.subr.bf16.mxu0 %v1937
    %2215 = vmatpush1.bf16.msra.mxu0 %v1936
    %2216 = vmatprep.subr.bf16.mxu0 %v1933
    %2217 = vmatpush1.bf16.msra.mxu0 %v1932
    %2218 = vmatprep.subr.bf16.mxu0 %v1993
    %2219 = vmatpush2.bf16.msra.mxu0 %v1992
    %2220 = vmatprep.subr.bf16.mxu0 %v1989
    %2221 = vmatpush2.bf16.msra.mxu0 %v1988
    %2222 = vmatprep.subr.bf16.mxu0 %v1985
    %2223 = vmatpush2.bf16.msra.mxu0 %v1984
    %2224 = vmatprep.subr.bf16.mxu0 %v1981
    %2225 = vmatpush2.bf16.msra.mxu0 %v1980
    %2226 = vmatprep.subr.bf16.mxu0 %v1977
    %2227 = vmatpush2.bf16.msra.mxu0 %v1976
    %2228 = vmatprep.subr.bf16.mxu0 %v1973
    %2229 = vmatpush2.bf16.msra.mxu0 %v1972
    %2230 = vmatprep.subr.bf16.mxu0 %v1969
    %2231 = vmatpush2.bf16.msra.mxu0 %v1968
    %2232 = vmatprep.subr.bf16.mxu0 %v1965
    %2233 = vmatpush2.bf16.msra.mxu0 %v1964
    %2234 = vmatprep.mubr.bf16.mxu0 %v1604
    %2235 = vmatmul.mubr.bf16.gmra.mxu0 %v1603
    %v2236 = vpop.f32.mrf.mxu0
    %v2237 = vadd.f32 0.0, %v2236
    %v2238 = vpop.f32.mrf.mxu0
    %v2239 = vadd.f32 0.0, %v2238
    %v2240 = vpop.f32.mrf.mxu0
    %v2241 = vadd.f32 0.0, %v2240
    %v2242 = vpop.f32.mrf.mxu0
    %v2243 = vadd.f32 0.0, %v2242
    %2244 = vmatprep.mubr.bf16.mxu0 %v1607
    %2245 = vmatmul.mubr.bf16.gmra.mxu0 %v1606
    %v2246 = vpop.f32.mrf.mxu0
    %v2247 = vadd.f32 0.0, %v2246
    %v2248 = vpop.f32.mrf.mxu0
    %v2249 = vadd.f32 0.0, %v2248
    %v2250 = vpop.f32.mrf.mxu0
    %v2251 = vadd.f32 0.0, %v2250
    %v2252 = vpop.f32.mrf.mxu0
    %v2253 = vadd.f32 0.0, %v2252
    %2254 = vdwg.mxu0
    %2255 = vmatprep.subr.bf16.mxu0 0
    %2256 = vmatpush1.bf16.msra.mxu0 0
    %2257 = vmatprep.subr.bf16.mxu0 0
    %2258 = vmatpush1.bf16.msra.mxu0 0
    %2259 = vmatprep.subr.bf16.mxu0 0
    %2260 = vmatpush1.bf16.msra.mxu0 0
    %2261 = vmatprep.subr.bf16.mxu0 0
    %2262 = vmatpush1.bf16.msra.mxu0 0
    %2263 = vmatprep.subr.bf16.mxu0 %v2009
    %2264 = vmatpush1.bf16.msra.mxu0 %v2008
    %2265 = vmatprep.subr.bf16.mxu0 %v2005
    %2266 = vmatpush1.bf16.msra.mxu0 %v2004
    %2267 = vmatprep.subr.bf16.mxu0 %v2001
    %2268 = vmatpush1.bf16.msra.mxu0 %v2000
    %2269 = vmatprep.subr.bf16.mxu0 %v1997
    %2270 = vmatpush1.bf16.msra.mxu0 %v1996
    %2271 = vmatprep.subr.bf16.mxu0 0
    %2272 = vmatpush2.bf16.msra.mxu0 0
    %2273 = vmatprep.subr.bf16.mxu0 0
    %2274 = vmatpush2.bf16.msra.mxu0 0
    %2275 = vmatprep.subr.bf16.mxu0 0
    %2276 = vmatpush2.bf16.msra.mxu0 0
    %2277 = vmatprep.subr.bf16.mxu0 0
    %2278 = vmatpush2.bf16.msra.mxu0 0
    %2279 = vmatprep.subr.bf16.mxu0 0
    %2280 = vmatpush2.bf16.msra.mxu0 0
    %2281 = vmatprep.subr.bf16.mxu0 0
    %2282 = vmatpush2.bf16.msra.mxu0 0
    %2283 = vmatprep.subr.bf16.mxu0 0
    %2284 = vmatpush2.bf16.msra.mxu0 0
    %2285 = vmatprep.subr.bf16.mxu0 0
    %2286 = vmatpush2.bf16.msra.mxu0 0
    %2287 = vmatprep.mubr.bf16.mxu0 0
    %2288 = vmatmul.mubr.bf16.gmra.mxu0 %v2091
    %v2289 = vpop.f32.mrf.mxu0
    %v2290 = vadd.f32 %v2237, %v2289
    %v2291 = vpop.f32.mrf.mxu0
    %v2292 = vadd.f32 %v2239, %v2291
    %v2293 = vpop.f32.mrf.mxu0
    %v2294 = vadd.f32 %v2241, %v2293
    %v2295 = vpop.f32.mrf.mxu0
    %v2296 = vadd.f32 %v2243, %v2295
    %2297 = vmatprep.mubr.bf16.mxu0 0
    %2298 = vmatmul.mubr.bf16.gmra.mxu0 %v2094
    %v2299 = vpop.f32.mrf.mxu0
    %v2300 = vadd.f32 %v2247, %v2299
    %v2301 = vpop.f32.mrf.mxu0
    %v2302 = vadd.f32 %v2249, %v2301
    %v2303 = vpop.f32.mrf.mxu0
    %v2304 = vadd.f32 %v2251, %v2303
    %v2305 = vpop.f32.mrf.mxu0
    %v2306 = vadd.f32 %v2253, %v2305
    %2307 = vdwg.mxu0
    %v2308 = vadd.f32 %v1412, %v2184
    %v2309 = vadd.f32 %v1414, %v2186
    %v2310 = vadd.f32 %v1518, %v2290
    %v2311 = vadd.f32 %v1520, %v2292
    %v2312 = vadd.f32 %v1416, %v2188
    %v2313 = vadd.f32 %v1418, %v2190
    %v2314 = vadd.f32 %v1522, %v2294
    %v2315 = vadd.f32 %v1524, %v2296
    %v2316 = vadd.f32 %v1422, %v2194
    %v2317 = vadd.f32 %v1424, %v2196
    %v2318 = vadd.f32 %v1528, %v2300
    %v2319 = vadd.f32 %v1530, %v2302
    %v2320 = vadd.f32 %v1426, %v2198
    %v2321 = vadd.f32 %v1428, %v2200
    %v2322 = vadd.f32 %v1532, %v2304
    %v2323 = vadd.f32 %v1534, %v2306
    %v2324 = vld [vmem:[%s0] sm:$0xf8]
    %v2325 = vld [vmem:[%s0 + $0x8] sm:$0xf8]
    %v2326 = vld [vmem:[%s0 + $0x10] sm:$0xf8]
    %v2327 = vld [vmem:[%s0 + $0x30] sm:$0x7]
    %v2328 = vld [vmem:[%s0 + $0x38] sm:$0x7]
    %v2329 = vld [vmem:[%s0 + $0x40] sm:$0x7]
    %v2330 = vld [vmem:[%s0 + $0x48] sm:$0xf8]
    %v2331 = vld [vmem:[%s0 + $0x50] sm:$0xf8]
    %v2332 = vld [vmem:[%s0 + $0x58] sm:$0xf8]
    %v2333 = vld [vmem:[%s0 + $0x78] sm:$0x7]
    %v2334 = vld [vmem:[%s0 + $0x80] sm:$0x7]
    %v2335 = vld [vmem:[%s0 + $0x88] sm:$0x7]
    %vm2348 = vcmask 1044480
    %v2349 = vrot.slane %v2324, 3
    %v2350 = vrot.slane %v44, 3
    %v2351 = vsel %vm2348, %v2349, %v2350
    %v2352 = vrot.slane %v2325, 3
    %v2353 = vrot.slane %v45, 3
    %v2354 = vsel %vm2348, %v2352, %v2353
    %v2355 = vrot.slane %v2326, 3
    %v2356 = vrot.slane %v46, 3
    %v2357 = vsel %vm2348, %v2355, %v2356
    %v2358 = vrot.slane %v2327, 3
    %v2359 = vsel %vm2348, %v2350, %v2358
    %v2360 = vrot.slane %v2328, 3
    %v2361 = vsel %vm2348, %v2353, %v2360
    %v2362 = vrot.slane %v2329, 3
    %v2363 = vsel %vm2348, %v2356, %v2362
    %v2364 = vrot.slane %v2330, 3
    %v2365 = vrot.slane %v50, 3
    %v2366 = vsel %vm2348, %v2364, %v2365
    %v2367 = vrot.slane %v2331, 3
    %v2368 = vrot.slane %v51, 3
    %v2369 = vsel %vm2348, %v2367, %v2368
    %v2370 = vrot.slane %v2332, 3
    %v2371 = vrot.slane %v52, 3
    %v2372 = vsel %vm2348, %v2370, %v2371
    %v2373 = vrot.slane %v2333, 3
    %v2374 = vsel %vm2348, %v2365, %v2373
    %v2375 = vrot.slane %v2334, 3
    %v2376 = vsel %vm2348, %v2368, %v2375
    %v2377 = vrot.slane %v2335, 3
    %v2378 = vsel %vm2348, %v2371, %v2377
    %v2391 = vpack.c.bf16 %v2359, %v2351
    %v2392 = vpack.c.bf16 %v2361, %v2354
    %v2393 = vpack.c.bf16 %v2363, %v2357
    %v2394 = vpack.c.bf16 %v2374, %v2366
    %v2395 = vpack.c.bf16 %v2376, %v2369
    %v2396 = vpack.c.bf16 %v2378, %v2372
    %s2397 = scalar_lea.vmem [#allocation2], 1920
    %v2398 = vld [vmem:[%s2397] sm:$0xff]
    %v2399 = vld [vmem:[%s2397 + $0x8] sm:$0xff]
    %v2400 = vld [vmem:[%s2397 + $0x10] sm:$0xff]
    %v2401 = vld [vmem:[%s2397 + $0x18] sm:$0xff]
    %v2402 = vld [vmem:[%s2397 + $0x20] sm:$0xff]
    %v2403 = vld [vmem:[%s2397 + $0x28] sm:$0xff]
    %v2404 = vld [vmem:[%s2397 + $0x30] sm:$0xff]
    %v2405 = vld [vmem:[%s2397 + $0x38] sm:$0xff]
    %v2406 = vld [vmem:[%s2397 + $0x40] sm:$0xff]
    %v2407 = vld [vmem:[%s2397 + $0x48] sm:$0xff]
    %v2408 = vld [vmem:[%s2397 + $0x50] sm:$0xff]
    %v2409 = vld [vmem:[%s2397 + $0x58] sm:$0xff]
    %v2410 = vld [vmem:[%s2397 + $0x60] sm:$0xff]
    %v2411 = vld [vmem:[%s2397 + $0x68] sm:$0xff]
    %v2412 = vld [vmem:[%s2397 + $0x70] sm:$0xff]
    %v2413 = vld [vmem:[%s2397 + $0x78] sm:$0xff]
    %v2414 = vld [vmem:[%s2397 + $0x80] sm:$0xff]
    %v2415 = vld [vmem:[%s2397 + $0x88] sm:$0xff]
    %v2416 = vld [vmem:[%s2397 + $0x90] sm:$0xff]
    %v2417 = vld [vmem:[%s2397 + $0x98] sm:$0xff]
    %v2418 = vld [vmem:[%s2397 + $0xa0] sm:$0xff]
    %v2419 = vld [vmem:[%s2397 + $0xa8] sm:$0xff]
    %v2420 = vld [vmem:[%s2397 + $0xb0] sm:$0xff]
    %v2421 = vld [vmem:[%s2397 + $0xb8] sm:$0xff]
    %v2422 = vld [vmem:[%s2397 + $0xc0] sm:$0xff]
    %v2423 = vld [vmem:[%s2397 + $0xc8] sm:$0xff]
    %v2424 = vld [vmem:[%s2397 + $0xd0] sm:$0xff]
    %v2425 = vld [vmem:[%s2397 + $0xd8] sm:$0xff]
    %v2426 = vld [vmem:[%s2397 + $0xe0] sm:$0xff]
    %v2427 = vld [vmem:[%s2397 + $0xe8] sm:$0xff]
    %v2428 = vld [vmem:[%s2397 + $0xf0] sm:$0xff]
    %v2429 = vld [vmem:[%s2397 + $0xf8] sm:$0xff]
    %v2430 = vld [vmem:[%s2397 + $0x100] sm:$0xff]
    %v2431 = vld [vmem:[%s2397 + $0x108] sm:$0xff]
    %v2432 = vld [vmem:[%s2397 + $0x110] sm:$0xff]
    %v2433 = vld [vmem:[%s2397 + $0x118] sm:$0xff]
    %v2434 = vld [vmem:[%s2397 + $0x120] sm:$0xff]
    %v2435 = vld [vmem:[%s2397 + $0x128] sm:$0xff]
    %v2436 = vld [vmem:[%s2397 + $0x130] sm:$0xff]
    %v2437 = vld [vmem:[%s2397 + $0x138] sm:$0xff]
    %v2438 = vld [vmem:[%s2397 + $0x140] sm:$0xff]
    %v2439 = vld [vmem:[%s2397 + $0x148] sm:$0xff]
    %v2440 = vld [vmem:[%s2397 + $0x150] sm:$0xff]
    %v2441 = vld [vmem:[%s2397 + $0x158] sm:$0xff]
    %v2442 = vld [vmem:[%s2397 + $0x160] sm:$0xff]
    %v2443 = vld [vmem:[%s2397 + $0x168] sm:$0xff]
    %v2444 = vld [vmem:[%s2397 + $0x170] sm:$0xff]
    %v2445 = vld [vmem:[%s2397 + $0x178] sm:$0xff]
    %v2446 = vld [vmem:[%s2397 + $0x180] sm:$0xff]
    %v2447 = vld [vmem:[%s2397 + $0x188] sm:$0xff]
    %v2448 = vld [vmem:[%s2397 + $0x190] sm:$0xff]
    %v2449 = vld [vmem:[%s2397 + $0x198] sm:$0xff]
    %v2450 = vld [vmem:[%s2397 + $0x1a0] sm:$0xff]
    %v2451 = vld [vmem:[%s2397 + $0x1a8] sm:$0xff]
    %v2452 = vld [vmem:[%s2397 + $0x1b0] sm:$0xff]
    %v2453 = vld [vmem:[%s2397 + $0x1b8] sm:$0xff]
    %v2454 = vld [vmem:[%s2397 + $0x1c0] sm:$0xff]
    %v2455 = vld [vmem:[%s2397 + $0x1c8] sm:$0xff]
    %v2456 = vld [vmem:[%s2397 + $0x1d0] sm:$0xff]
    %v2457 = vld [vmem:[%s2397 + $0x1d8] sm:$0xff]
    %v2458 = vld [vmem:[%s2397 + $0x1e0] sm:$0xff]
    %v2459 = vld [vmem:[%s2397 + $0x1e8] sm:$0xff]
    %v2460 = vld [vmem:[%s2397 + $0x1f0] sm:$0xff]
    %v2461 = vld [vmem:[%s2397 + $0x1f8] sm:$0xff]
    %v2462 = vld [vmem:[%s2397 + $0x200] sm:$0xff]
    %v2463 = vld [vmem:[%s2397 + $0x208] sm:$0xff]
    %v2464 = vld [vmem:[%s2397 + $0x210] sm:$0xff]
    %v2465 = vld [vmem:[%s2397 + $0x218] sm:$0xff]
    %v2466 = vld [vmem:[%s2397 + $0x220] sm:$0xff]
    %v2467 = vld [vmem:[%s2397 + $0x228] sm:$0xff]
    %v2468 = vld [vmem:[%s2397 + $0x230] sm:$0xff]
    %v2469 = vld [vmem:[%s2397 + $0x238] sm:$0xff]
    %v2470 = vld [vmem:[%s2397 + $0x240] sm:$0xff]
    %v2471 = vld [vmem:[%s2397 + $0x248] sm:$0xff]
    %v2472 = vld [vmem:[%s2397 + $0x250] sm:$0xff]
    %v2473 = vld [vmem:[%s2397 + $0x258] sm:$0xff]
    %v2474 = vld [vmem:[%s2397 + $0x260] sm:$0xff]
    %v2475 = vld [vmem:[%s2397 + $0x268] sm:$0xff]
    %v2476 = vld [vmem:[%s2397 + $0x270] sm:$0xff]
    %v2477 = vld [vmem:[%s2397 + $0x278] sm:$0xff]
    %v2558 = vunpack.c.l.b16 %v2398
    %v2559 = vunpack.c.h.b16 %v2398
    %v2560 = vunpack.c.l.b16 %v2399
    %v2561 = vunpack.c.h.b16 %v2399
    %v2562 = vunpack.c.l.b16 %v2400
    %v2563 = vunpack.c.h.b16 %v2400
    %v2564 = vunpack.c.l.b16 %v2401
    %v2565 = vunpack.c.h.b16 %v2401
    %v2566 = vunpack.c.l.b16 %v2402
    %v2567 = vunpack.c.h.b16 %v2402
    %v2568 = vunpack.c.l.b16 %v2403
    %v2569 = vunpack.c.h.b16 %v2403
    %v2570 = vunpack.c.l.b16 %v2404
    %v2571 = vunpack.c.h.b16 %v2404
    %v2572 = vunpack.c.l.b16 %v2405
    %v2573 = vunpack.c.h.b16 %v2405
    %v2574 = vunpack.c.l.b16 %v2406
    %v2575 = vunpack.c.h.b16 %v2406
    %v2576 = vunpack.c.l.b16 %v2407
    %v2577 = vunpack.c.h.b16 %v2407
    %v2578 = vunpack.c.l.b16 %v2408
    %v2579 = vunpack.c.h.b16 %v2408
    %v2580 = vunpack.c.l.b16 %v2409
    %v2581 = vunpack.c.h.b16 %v2409
    %v2582 = vunpack.c.l.b16 %v2410
    %v2583 = vunpack.c.h.b16 %v2410
    %v2584 = vunpack.c.l.b16 %v2411
    %v2585 = vunpack.c.h.b16 %v2411
    %v2586 = vunpack.c.l.b16 %v2412
    %v2587 = vunpack.c.h.b16 %v2412
    %v2588 = vunpack.c.l.b16 %v2413
    %v2589 = vunpack.c.h.b16 %v2413
    %v2590 = vunpack.c.l.b16 %v2414
    %v2591 = vunpack.c.h.b16 %v2414
    %v2592 = vunpack.c.l.b16 %v2415
    %v2593 = vunpack.c.h.b16 %v2415
    %v2594 = vunpack.c.l.b16 %v2416
    %v2595 = vunpack.c.h.b16 %v2416
    %v2596 = vunpack.c.l.b16 %v2417
    %v2597 = vunpack.c.h.b16 %v2417
    %v2598 = vunpack.c.l.b16 %v2418
    %v2599 = vunpack.c.h.b16 %v2418
    %v2600 = vunpack.c.l.b16 %v2419
    %v2601 = vunpack.c.h.b16 %v2419
    %v2602 = vunpack.c.l.b16 %v2420
    %v2603 = vunpack.c.h.b16 %v2420
    %v2604 = vunpack.c.l.b16 %v2421
    %v2605 = vunpack.c.h.b16 %v2421
    %v2606 = vunpack.c.l.b16 %v2422
    %v2607 = vunpack.c.h.b16 %v2422
    %v2608 = vunpack.c.l.b16 %v2423
    %v2609 = vunpack.c.h.b16 %v2423
    %v2610 = vunpack.c.l.b16 %v2424
    %v2611 = vunpack.c.h.b16 %v2424
    %v2612 = vunpack.c.l.b16 %v2425
    %v2613 = vunpack.c.h.b16 %v2425
    %v2614 = vunpack.c.l.b16 %v2426
    %v2615 = vunpack.c.h.b16 %v2426
    %v2616 = vunpack.c.l.b16 %v2427
    %v2617 = vunpack.c.h.b16 %v2427
    %v2618 = vunpack.c.l.b16 %v2428
    %v2619 = vunpack.c.h.b16 %v2428
    %v2620 = vunpack.c.l.b16 %v2429
    %v2621 = vunpack.c.h.b16 %v2429
    %v2622 = vunpack.c.l.b16 %v2430
    %v2623 = vunpack.c.h.b16 %v2430
    %v2624 = vunpack.c.l.b16 %v2431
    %v2625 = vunpack.c.h.b16 %v2431
    %v2626 = vunpack.c.l.b16 %v2432
    %v2627 = vunpack.c.h.b16 %v2432
    %v2628 = vunpack.c.l.b16 %v2433
    %v2629 = vunpack.c.h.b16 %v2433
    %v2630 = vunpack.c.l.b16 %v2434
    %v2631 = vunpack.c.h.b16 %v2434
    %v2632 = vunpack.c.l.b16 %v2435
    %v2633 = vunpack.c.h.b16 %v2435
    %v2634 = vunpack.c.l.b16 %v2436
    %v2635 = vunpack.c.h.b16 %v2436
    %v2636 = vunpack.c.l.b16 %v2437
    %v2637 = vunpack.c.h.b16 %v2437
    %v2638 = vunpack.c.l.b16 %v2438
    %v2639 = vunpack.c.h.b16 %v2438
    %v2640 = vunpack.c.l.b16 %v2439
    %v2641 = vunpack.c.h.b16 %v2439
    %v2642 = vunpack.c.l.b16 %v2440
    %v2643 = vunpack.c.h.b16 %v2440
    %v2644 = vunpack.c.l.b16 %v2441
    %v2645 = vunpack.c.h.b16 %v2441
    %v2646 = vunpack.c.l.b16 %v2442
    %v2647 = vunpack.c.h.b16 %v2442
    %v2648 = vunpack.c.l.b16 %v2443
    %v2649 = vunpack.c.h.b16 %v2443
    %v2650 = vunpack.c.l.b16 %v2444
    %v2651 = vunpack.c.h.b16 %v2444
    %v2652 = vunpack.c.l.b16 %v2445
    %v2653 = vunpack.c.h.b16 %v2445
    %v2654 = vunpack.c.l.b16 %v2446
    %v2655 = vunpack.c.h.b16 %v2446
    %v2656 = vunpack.c.l.b16 %v2447
    %v2657 = vunpack.c.h.b16 %v2447
    %v2658 = vunpack.c.l.b16 %v2448
    %v2659 = vunpack.c.h.b16 %v2448
    %v2660 = vunpack.c.l.b16 %v2449
    %v2661 = vunpack.c.h.b16 %v2449
    %v2662 = vunpack.c.l.b16 %v2450
    %v2663 = vunpack.c.h.b16 %v2450
    %v2664 = vunpack.c.l.b16 %v2451
    %v2665 = vunpack.c.h.b16 %v2451
    %v2666 = vunpack.c.l.b16 %v2452
    %v2667 = vunpack.c.h.b16 %v2452
    %v2668 = vunpack.c.l.b16 %v2453
    %v2669 = vunpack.c.h.b16 %v2453
    %v2670 = vunpack.c.l.b16 %v2454
    %v2671 = vunpack.c.h.b16 %v2454
    %v2672 = vunpack.c.l.b16 %v2455
    %v2673 = vunpack.c.h.b16 %v2455
    %v2674 = vunpack.c.l.b16 %v2456
    %v2675 = vunpack.c.h.b16 %v2456
    %v2676 = vunpack.c.l.b16 %v2457
    %v2677 = vunpack.c.h.b16 %v2457
    %v2678 = vunpack.c.l.b16 %v2458
    %v2679 = vunpack.c.h.b16 %v2458
    %v2680 = vunpack.c.l.b16 %v2459
    %v2681 = vunpack.c.h.b16 %v2459
    %v2682 = vunpack.c.l.b16 %v2460
    %v2683 = vunpack.c.h.b16 %v2460
    %v2684 = vunpack.c.l.b16 %v2461
    %v2685 = vunpack.c.h.b16 %v2461
    %v2686 = vunpack.c.l.b16 %v2462
    %v2687 = vunpack.c.h.b16 %v2462
    %v2688 = vunpack.c.l.b16 %v2463
    %v2689 = vunpack.c.h.b16 %v2463
    %v2690 = vunpack.c.l.b16 %v2464
    %v2691 = vunpack.c.h.b16 %v2464
    %v2692 = vunpack.c.l.b16 %v2465
    %v2693 = vunpack.c.h.b16 %v2465
    %v2694 = vunpack.c.l.b16 %v2466
    %v2695 = vunpack.c.h.b16 %v2466
    %v2696 = vunpack.c.l.b16 %v2467
    %v2697 = vunpack.c.h.b16 %v2467
    %v2698 = vunpack.c.l.b16 %v2468
    %v2699 = vunpack.c.h.b16 %v2468
    %v2700 = vunpack.c.l.b16 %v2469
    %v2701 = vunpack.c.h.b16 %v2469
    %v2702 = vunpack.c.l.b16 %v2470
    %v2703 = vunpack.c.h.b16 %v2470
    %v2704 = vunpack.c.l.b16 %v2471
    %v2705 = vunpack.c.h.b16 %v2471
    %v2706 = vunpack.c.l.b16 %v2472
    %v2707 = vunpack.c.h.b16 %v2472
    %v2708 = vunpack.c.l.b16 %v2473
    %v2709 = vunpack.c.h.b16 %v2473
    %v2710 = vunpack.c.l.b16 %v2474
    %v2711 = vunpack.c.h.b16 %v2474
    %v2712 = vunpack.c.l.b16 %v2475
    %v2713 = vunpack.c.h.b16 %v2475
    %v2714 = vunpack.c.l.b16 %v2476
    %v2715 = vunpack.c.h.b16 %v2476
    %v2716 = vunpack.c.l.b16 %v2477
    %v2717 = vunpack.c.h.b16 %v2477
    %v2718 = vpack.c.b16 %v2562, %v2558
    %v2719 = vpack.c.b16 %v2563, %v2559
    %v2720 = vpack.c.b16 %v2564, %v2560
    %v2721 = vpack.c.b16 %v2565, %v2561
    %v2722 = vpack.c.b16 %v2570, %v2566
    %v2723 = vpack.c.b16 %v2571, %v2567
    %v2724 = vpack.c.b16 %v2572, %v2568
    %v2725 = vpack.c.b16 %v2573, %v2569
    %v2726 = vpack.c.b16 %v2578, %v2574
    %v2727 = vpack.c.b16 %v2579, %v2575
    %v2728 = vpack.c.b16 %v2580, %v2576
    %v2729 = vpack.c.b16 %v2581, %v2577
    %v2730 = vpack.c.b16 %v2586, %v2582
    %v2731 = vpack.c.b16 %v2587, %v2583
    %v2732 = vpack.c.b16 %v2588, %v2584
    %v2733 = vpack.c.b16 %v2589, %v2585
    %v2734 = vpack.c.b16 %v2594, %v2590
    %v2735 = vpack.c.b16 %v2595, %v2591
    %v2736 = vpack.c.b16 %v2596, %v2592
    %v2737 = vpack.c.b16 %v2597, %v2593
    %v2738 = vpack.c.b16 %v2602, %v2598
    %v2739 = vpack.c.b16 %v2603, %v2599
    %v2740 = vpack.c.b16 %v2604, %v2600
    %v2741 = vpack.c.b16 %v2605, %v2601
    %v2742 = vpack.c.b16 %v2610, %v2606
    %v2743 = vpack.c.b16 %v2611, %v2607
    %v2744 = vpack.c.b16 %v2612, %v2608
    %v2745 = vpack.c.b16 %v2613, %v2609
    %v2746 = vpack.c.b16 %v2618, %v2614
    %v2747 = vpack.c.b16 %v2619, %v2615
    %v2748 = vpack.c.b16 %v2620, %v2616
    %v2749 = vpack.c.b16 %v2621, %v2617
    %v2750 = vpack.c.b16 %v2626, %v2622
    %v2751 = vpack.c.b16 %v2627, %v2623
    %v2752 = vpack.c.b16 %v2628, %v2624
    %v2753 = vpack.c.b16 %v2629, %v2625
    %v2754 = vpack.c.b16 %v2634, %v2630
    %v2755 = vpack.c.b16 %v2635, %v2631
    %v2756 = vpack.c.b16 %v2636, %v2632
    %v2757 = vpack.c.b16 %v2637, %v2633
    %v2758 = vpack.c.b16 %v2642, %v2638
    %v2759 = vpack.c.b16 %v2643, %v2639
    %v2760 = vpack.c.b16 %v2644, %v2640
    %v2761 = vpack.c.b16 %v2645, %v2641
    %v2762 = vpack.c.b16 %v2650, %v2646
    %v2763 = vpack.c.b16 %v2651, %v2647
    %v2764 = vpack.c.b16 %v2652, %v2648
    %v2765 = vpack.c.b16 %v2653, %v2649
    %v2766 = vpack.c.b16 %v2658, %v2654
    %v2767 = vpack.c.b16 %v2659, %v2655
    %v2768 = vpack.c.b16 %v2660, %v2656
    %v2769 = vpack.c.b16 %v2661, %v2657
    %v2770 = vpack.c.b16 %v2666, %v2662
    %v2771 = vpack.c.b16 %v2667, %v2663
    %v2772 = vpack.c.b16 %v2668, %v2664
    %v2773 = vpack.c.b16 %v2669, %v2665
    %v2774 = vpack.c.b16 %v2674, %v2670
    %v2775 = vpack.c.b16 %v2675, %v2671
    %v2776 = vpack.c.b16 %v2676, %v2672
    %v2777 = vpack.c.b16 %v2677, %v2673
    %v2778 = vpack.c.b16 %v2682, %v2678
    %v2779 = vpack.c.b16 %v2683, %v2679
    %v2780 = vpack.c.b16 %v2684, %v2680
    %v2781 = vpack.c.b16 %v2685, %v2681
    %v2782 = vpack.c.b16 %v2690, %v2686
    %v2783 = vpack.c.b16 %v2691, %v2687
    %v2784 = vpack.c.b16 %v2692, %v2688
    %v2785 = vpack.c.b16 %v2693, %v2689
    %v2786 = vpack.c.b16 %v2698, %v2694
    %v2787 = vpack.c.b16 %v2699, %v2695
    %v2788 = vpack.c.b16 %v2700, %v2696
    %v2789 = vpack.c.b16 %v2701, %v2697
    %v2790 = vpack.c.b16 %v2706, %v2702
    %v2791 = vpack.c.b16 %v2707, %v2703
    %v2792 = vpack.c.b16 %v2708, %v2704
    %v2793 = vpack.c.b16 %v2709, %v2705
    %v2794 = vpack.c.b16 %v2714, %v2710
    %v2795 = vpack.c.b16 %v2715, %v2711
    %v2796 = vpack.c.b16 %v2716, %v2712
    %v2797 = vpack.c.b16 %v2717, %v2713
    %v2879 = vsel %vm699, %v2393, 0
    %v2882 = vsel %vm699, %v2396, 0
    %2884 = vmatprep.subr.bf16.mxu0 %v2747
    %2885 = vmatpush1.bf16.msra.mxu0 %v2746
    %2886 = vmatprep.subr.bf16.mxu0 %v2743
    %2887 = vmatpush1.bf16.msra.mxu0 %v2742
    %2888 = vmatprep.subr.bf16.mxu0 %v2739
    %2889 = vmatpush1.bf16.msra.mxu0 %v2738
    %2890 = vmatprep.subr.bf16.mxu0 %v2735
    %2891 = vmatpush1.bf16.msra.mxu0 %v2734
    %2892 = vmatprep.subr.bf16.mxu0 %v2731
    %2893 = vmatpush1.bf16.msra.mxu0 %v2730
    %2894 = vmatprep.subr.bf16.mxu0 %v2727
    %2895 = vmatpush1.bf16.msra.mxu0 %v2726
    %2896 = vmatprep.subr.bf16.mxu0 %v2723
    %2897 = vmatpush1.bf16.msra.mxu0 %v2722
    %2898 = vmatprep.subr.bf16.mxu0 %v2719
    %2899 = vmatpush1.bf16.msra.mxu0 %v2718
    %2900 = vmatprep.subr.bf16.mxu0 %v2779
    %2901 = vmatpush2.bf16.msra.mxu0 %v2778
    %2902 = vmatprep.subr.bf16.mxu0 %v2775
    %2903 = vmatpush2.bf16.msra.mxu0 %v2774
    %2904 = vmatprep.subr.bf16.mxu0 %v2771
    %2905 = vmatpush2.bf16.msra.mxu0 %v2770
    %2906 = vmatprep.subr.bf16.mxu0 %v2767
    %2907 = vmatpush2.bf16.msra.mxu0 %v2766
    %2908 = vmatprep.subr.bf16.mxu0 %v2763
    %2909 = vmatpush2.bf16.msra.mxu0 %v2762
    %2910 = vmatprep.subr.bf16.mxu0 %v2759
    %2911 = vmatpush2.bf16.msra.mxu0 %v2758
    %2912 = vmatprep.subr.bf16.mxu0 %v2755
    %2913 = vmatpush2.bf16.msra.mxu0 %v2754
    %2914 = vmatprep.subr.bf16.mxu0 %v2751
    %2915 = vmatpush2.bf16.msra.mxu0 %v2750
    %2916 = vmatprep.mubr.bf16.mxu0 %v2392
    %2917 = vmatmul.mubr.bf16.gmra.mxu0 %v2391
    %v2918 = vpop.f32.mrf.mxu0
    %v2919 = vadd.f32 0.0, %v2918
    %v2920 = vpop.f32.mrf.mxu0
    %v2921 = vadd.f32 0.0, %v2920
    %v2922 = vpop.f32.mrf.mxu0
    %v2923 = vadd.f32 0.0, %v2922
    %v2924 = vpop.f32.mrf.mxu0
    %v2925 = vadd.f32 0.0, %v2924
    %2926 = vmatprep.mubr.bf16.mxu0 %v2395
    %2927 = vmatmul.mubr.bf16.gmra.mxu0 %v2394
    %v2928 = vpop.f32.mrf.mxu0
    %v2929 = vadd.f32 0.0, %v2928
    %v2930 = vpop.f32.mrf.mxu0
    %v2931 = vadd.f32 0.0, %v2930
    %v2932 = vpop.f32.mrf.mxu0
    %v2933 = vadd.f32 0.0, %v2932
    %v2934 = vpop.f32.mrf.mxu0
    %v2935 = vadd.f32 0.0, %v2934
    %2936 = vdwg.mxu0
    %2937 = vmatprep.subr.bf16.mxu0 0
    %2938 = vmatpush1.bf16.msra.mxu0 0
    %2939 = vmatprep.subr.bf16.mxu0 0
    %2940 = vmatpush1.bf16.msra.mxu0 0
    %2941 = vmatprep.subr.bf16.mxu0 0
    %2942 = vmatpush1.bf16.msra.mxu0 0
    %2943 = vmatprep.subr.bf16.mxu0 0
    %2944 = vmatpush1.bf16.msra.mxu0 0
    %2945 = vmatprep.subr.bf16.mxu0 %v2795
    %2946 = vmatpush1.bf16.msra.mxu0 %v2794
    %2947 = vmatprep.subr.bf16.mxu0 %v2791
    %2948 = vmatpush1.bf16.msra.mxu0 %v2790
    %2949 = vmatprep.subr.bf16.mxu0 %v2787
    %2950 = vmatpush1.bf16.msra.mxu0 %v2786
    %2951 = vmatprep.subr.bf16.mxu0 %v2783
    %2952 = vmatpush1.bf16.msra.mxu0 %v2782
    %2953 = vmatprep.subr.bf16.mxu0 0
    %2954 = vmatpush2.bf16.msra.mxu0 0
    %2955 = vmatprep.subr.bf16.mxu0 0
    %2956 = vmatpush2.bf16.msra.mxu0 0
    %2957 = vmatprep.subr.bf16.mxu0 0
    %2958 = vmatpush2.bf16.msra.mxu0 0
    %2959 = vmatprep.subr.bf16.mxu0 0
    %2960 = vmatpush2.bf16.msra.mxu0 0
    %2961 = vmatprep.subr.bf16.mxu0 0
    %2962 = vmatpush2.bf16.msra.mxu0 0
    %2963 = vmatprep.subr.bf16.mxu0 0
    %2964 = vmatpush2.bf16.msra.mxu0 0
    %2965 = vmatprep.subr.bf16.mxu0 0
    %2966 = vmatpush2.bf16.msra.mxu0 0
    %2967 = vmatprep.subr.bf16.mxu0 0
    %2968 = vmatpush2.bf16.msra.mxu0 0
    %2969 = vmatprep.mubr.bf16.mxu0 0
    %2970 = vmatmul.mubr.bf16.gmra.mxu0 %v2879
    %v2971 = vpop.f32.mrf.mxu0
    %v2972 = vadd.f32 %v2919, %v2971
    %v2973 = vpop.f32.mrf.mxu0
    %v2974 = vadd.f32 %v2921, %v2973
    %v2975 = vpop.f32.mrf.mxu0
    %v2976 = vadd.f32 %v2923, %v2975
    %v2977 = vpop.f32.mrf.mxu0
    %v2978 = vadd.f32 %v2925, %v2977
    %2979 = vmatprep.mubr.bf16.mxu0 0
    %2980 = vmatmul.mubr.bf16.gmra.mxu0 %v2882
    %v2981 = vpop.f32.mrf.mxu0
    %v2982 = vadd.f32 %v2929, %v2981
    %v2983 = vpop.f32.mrf.mxu0
    %v2984 = vadd.f32 %v2931, %v2983
    %v2985 = vpop.f32.mrf.mxu0
    %v2986 = vadd.f32 %v2933, %v2985
    %v2987 = vpop.f32.mrf.mxu0
    %v2988 = vadd.f32 %v2935, %v2987
    %2989 = vdwg.mxu0
    %2990 = vmatprep.subr.bf16.mxu0 %v2749
    %2991 = vmatpush1.bf16.msra.mxu0 %v2748
    %2992 = vmatprep.subr.bf16.mxu0 %v2745
    %2993 = vmatpush1.bf16.msra.mxu0 %v2744
    %2994 = vmatprep.subr.bf16.mxu0 %v2741
    %2995 = vmatpush1.bf16.msra.mxu0 %v2740
    %2996 = vmatprep.subr.bf16.mxu0 %v2737
    %2997 = vmatpush1.bf16.msra.mxu0 %v2736
    %2998 = vmatprep.subr.bf16.mxu0 %v2733
    %2999 = vmatpush1.bf16.msra.mxu0 %v2732
    %3000 = vmatprep.subr.bf16.mxu0 %v2729
    %3001 = vmatpush1.bf16.msra.mxu0 %v2728
    %3002 = vmatprep.subr.bf16.mxu0 %v2725
    %3003 = vmatpush1.bf16.msra.mxu0 %v2724
    %3004 = vmatprep.subr.bf16.mxu0 %v2721
    %3005 = vmatpush1.bf16.msra.mxu0 %v2720
    %3006 = vmatprep.subr.bf16.mxu0 %v2781
    %3007 = vmatpush2.bf16.msra.mxu0 %v2780
    %3008 = vmatprep.subr.bf16.mxu0 %v2777
    %3009 = vmatpush2.bf16.msra.mxu0 %v2776
    %3010 = vmatprep.subr.bf16.mxu0 %v2773
    %3011 = vmatpush2.bf16.msra.mxu0 %v2772
    %3012 = vmatprep.subr.bf16.mxu0 %v2769
    %3013 = vmatpush2.bf16.msra.mxu0 %v2768
    %3014 = vmatprep.subr.bf16.mxu0 %v2765
    %3015 = vmatpush2.bf16.msra.mxu0 %v2764
    %3016 = vmatprep.subr.bf16.mxu0 %v2761
    %3017 = vmatpush2.bf16.msra.mxu0 %v2760
    %3018 = vmatprep.subr.bf16.mxu0 %v2757
    %3019 = vmatpush2.bf16.msra.mxu0 %v2756
    %3020 = vmatprep.subr.bf16.mxu0 %v2753
    %3021 = vmatpush2.bf16.msra.mxu0 %v2752
    %3022 = vmatprep.mubr.bf16.mxu0 %v2392
    %3023 = vmatmul.mubr.bf16.gmra.mxu0 %v2391
    %v3024 = vpop.f32.mrf.mxu0
    %v3025 = vadd.f32 0.0, %v3024
    %v3026 = vpop.f32.mrf.mxu0
    %v3027 = vadd.f32 0.0, %v3026
    %v3028 = vpop.f32.mrf.mxu0
    %v3029 = vadd.f32 0.0, %v3028
    %v3030 = vpop.f32.mrf.mxu0
    %v3031 = vadd.f32 0.0, %v3030
    %3032 = vmatprep.mubr.bf16.mxu0 %v2395
    %3033 = vmatmul.mubr.bf16.gmra.mxu0 %v2394
    %v3034 = vpop.f32.mrf.mxu0
    %v3035 = vadd.f32 0.0, %v3034
    %v3036 = vpop.f32.mrf.mxu0
    %v3037 = vadd.f32 0.0, %v3036
    %v3038 = vpop.f32.mrf.mxu0
    %v3039 = vadd.f32 0.0, %v3038
    %v3040 = vpop.f32.mrf.mxu0
    %v3041 = vadd.f32 0.0, %v3040
    %3042 = vdwg.mxu0
    %3043 = vmatprep.subr.bf16.mxu0 0
    %3044 = vmatpush1.bf16.msra.mxu0 0
    %3045 = vmatprep.subr.bf16.mxu0 0
    %3046 = vmatpush1.bf16.msra.mxu0 0
    %3047 = vmatprep.subr.bf16.mxu0 0
    %3048 = vmatpush1.bf16.msra.mxu0 0
    %3049 = vmatprep.subr.bf16.mxu0 0
    %3050 = vmatpush1.bf16.msra.mxu0 0
    %3051 = vmatprep.subr.bf16.mxu0 %v2797
    %3052 = vmatpush1.bf16.msra.mxu0 %v2796
    %3053 = vmatprep.subr.bf16.mxu0 %v2793
    %3054 = vmatpush1.bf16.msra.mxu0 %v2792
    %3055 = vmatprep.subr.bf16.mxu0 %v2789
    %3056 = vmatpush1.bf16.msra.mxu0 %v2788
    %3057 = vmatprep.subr.bf16.mxu0 %v2785
    %3058 = vmatpush1.bf16.msra.mxu0 %v2784
    %3059 = vmatprep.subr.bf16.mxu0 0
    %3060 = vmatpush2.bf16.msra.mxu0 0
    %3061 = vmatprep.subr.bf16.mxu0 0
    %3062 = vmatpush2.bf16.msra.mxu0 0
    %3063 = vmatprep.subr.bf16.mxu0 0
    %3064 = vmatpush2.bf16.msra.mxu0 0
    %3065 = vmatprep.subr.bf16.mxu0 0
    %3066 = vmatpush2.bf16.msra.mxu0 0
    %3067 = vmatprep.subr.bf16.mxu0 0
    %3068 = vmatpush2.bf16.msra.mxu0 0
    %3069 = vmatprep.subr.bf16.mxu0 0
    %3070 = vmatpush2.bf16.msra.mxu0 0
    %3071 = vmatprep.subr.bf16.mxu0 0
    %3072 = vmatpush2.bf16.msra.mxu0 0
    %3073 = vmatprep.subr.bf16.mxu0 0
    %3074 = vmatpush2.bf16.msra.mxu0 0
    %3075 = vmatprep.mubr.bf16.mxu0 0
    %3076 = vmatmul.mubr.bf16.gmra.mxu0 %v2879
    %v3077 = vpop.f32.mrf.mxu0
    %v3078 = vadd.f32 %v3025, %v3077
    %v3079 = vpop.f32.mrf.mxu0
    %v3080 = vadd.f32 %v3027, %v3079
    %v3081 = vpop.f32.mrf.mxu0
    %v3082 = vadd.f32 %v3029, %v3081
    %v3083 = vpop.f32.mrf.mxu0
    %v3084 = vadd.f32 %v3031, %v3083
    %3085 = vmatprep.mubr.bf16.mxu0 0
    %3086 = vmatmul.mubr.bf16.gmra.mxu0 %v2882
    %v3087 = vpop.f32.mrf.mxu0
    %v3088 = vadd.f32 %v3035, %v3087
    %v3089 = vpop.f32.mrf.mxu0
    %v3090 = vadd.f32 %v3037, %v3089
    %v3091 = vpop.f32.mrf.mxu0
    %v3092 = vadd.f32 %v3039, %v3091
    %v3093 = vpop.f32.mrf.mxu0
    %v3094 = vadd.f32 %v3041, %v3093
    %3095 = vdwg.mxu0
    %v3096 = vadd.f32 %v2308, %v2972
    %v3097 = vadd.f32 %v2309, %v2974
    %v3098 = vadd.f32 %v2310, %v3078
    %v3099 = vadd.f32 %v2311, %v3080
    %v3100 = vadd.f32 %v2312, %v2976
    %v3101 = vadd.f32 %v2313, %v2978
    %v3102 = vadd.f32 %v2314, %v3082
    %v3103 = vadd.f32 %v2315, %v3084
    %v3104 = vadd.f32 %v2316, %v2982
    %v3105 = vadd.f32 %v2317, %v2984
    %v3106 = vadd.f32 %v2318, %v3088
    %v3107 = vadd.f32 %v2319, %v3090
    %v3108 = vadd.f32 %v2320, %v2986
    %v3109 = vadd.f32 %v2321, %v2988
    %v3110 = vadd.f32 %v2322, %v3092
    %v3111 = vadd.f32 %v2323, %v3094
    %v3112 = vld [vmem:[%s0] sm:$0xf0]
    %v3113 = vld [vmem:[%s0 + $0x8] sm:$0xf0]
    %v3114 = vld [vmem:[%s0 + $0x10] sm:$0xf0]
    %v3115 = vld [vmem:[%s0 + $0x30] sm:$0xf]
    %v3116 = vld [vmem:[%s0 + $0x38] sm:$0xf]
    %v3117 = vld [vmem:[%s0 + $0x40] sm:$0xf]
    %v3118 = vld [vmem:[%s0 + $0x48] sm:$0xf0]
    %v3119 = vld [vmem:[%s0 + $0x50] sm:$0xf0]
    %v3120 = vld [vmem:[%s0 + $0x58] sm:$0xf0]
    %v3121 = vld [vmem:[%s0 + $0x78] sm:$0xf]
    %v3122 = vld [vmem:[%s0 + $0x80] sm:$0xf]
    %v3123 = vld [vmem:[%s0 + $0x88] sm:$0xf]
    %vm3136 = vcmask 1043456
    %v3137 = vrot.slane %v3112, 4
    %v3138 = vrot.slane %v44, 4
    %v3139 = vsel %vm3136, %v3137, %v3138
    %v3140 = vrot.slane %v3113, 4
    %v3141 = vrot.slane %v45, 4
    %v3142 = vsel %vm3136, %v3140, %v3141
    %v3143 = vrot.slane %v3114, 4
    %v3144 = vrot.slane %v46, 4
    %v3145 = vsel %vm3136, %v3143, %v3144
    %v3146 = vrot.slane %v3115, 4
    %v3147 = vsel %vm3136, %v3138, %v3146
    %v3148 = vrot.slane %v3116, 4
    %v3149 = vsel %vm3136, %v3141, %v3148
    %v3150 = vrot.slane %v3117, 4
    %v3151 = vsel %vm3136, %v3144, %v3150
    %v3152 = vrot.slane %v3118, 4
    %v3153 = vrot.slane %v50, 4
    %v3154 = vsel %vm3136, %v3152, %v3153
    %v3155 = vrot.slane %v3119, 4
    %v3156 = vrot.slane %v51, 4
    %v3157 = vsel %vm3136, %v3155, %v3156
    %v3158 = vrot.slane %v3120, 4
    %v3159 = vrot.slane %v52, 4
    %v3160 = vsel %vm3136, %v3158, %v3159
    %v3161 = vrot.slane %v3121, 4
    %v3162 = vsel %vm3136, %v3153, %v3161
    %v3163 = vrot.slane %v3122, 4
    %v3164 = vsel %vm3136, %v3156, %v3163
    %v3165 = vrot.slane %v3123, 4
    %v3166 = vsel %vm3136, %v3159, %v3165
    %v3179 = vpack.c.bf16 %v3147, %v3139
    %v3180 = vpack.c.bf16 %v3149, %v3142
    %v3181 = vpack.c.bf16 %v3151, %v3145
    %v3182 = vpack.c.bf16 %v3162, %v3154
    %v3183 = vpack.c.bf16 %v3164, %v3157
    %v3184 = vpack.c.bf16 %v3166, %v3160
    %s3185 = scalar_lea.vmem [#allocation2], 2560
    %v3186 = vld [vmem:[%s3185] sm:$0xff]
    %v3187 = vld [vmem:[%s3185 + $0x8] sm:$0xff]
    %v3188 = vld [vmem:[%s3185 + $0x10] sm:$0xff]
    %v3189 = vld [vmem:[%s3185 + $0x18] sm:$0xff]
    %v3190 = vld [vmem:[%s3185 + $0x20] sm:$0xff]
    %v3191 = vld [vmem:[%s3185 + $0x28] sm:$0xff]
    %v3192 = vld [vmem:[%s3185 + $0x30] sm:$0xff]
    %v3193 = vld [vmem:[%s3185 + $0x38] sm:$0xff]
    %v3194 = vld [vmem:[%s3185 + $0x40] sm:$0xff]
    %v3195 = vld [vmem:[%s3185 + $0x48] sm:$0xff]
    %v3196 = vld [vmem:[%s3185 + $0x50] sm:$0xff]
    %v3197 = vld [vmem:[%s3185 + $0x58] sm:$0xff]
    %v3198 = vld [vmem:[%s3185 + $0x60] sm:$0xff]
    %v3199 = vld [vmem:[%s3185 + $0x68] sm:$0xff]
    %v3200 = vld [vmem:[%s3185 + $0x70] sm:$0xff]
    %v3201 = vld [vmem:[%s3185 + $0x78] sm:$0xff]
    %v3202 = vld [vmem:[%s3185 + $0x80] sm:$0xff]
    %v3203 = vld [vmem:[%s3185 + $0x88] sm:$0xff]
    %v3204 = vld [vmem:[%s3185 + $0x90] sm:$0xff]
    %v3205 = vld [vmem:[%s3185 + $0x98] sm:$0xff]
    %v3206 = vld [vmem:[%s3185 + $0xa0] sm:$0xff]
    %v3207 = vld [vmem:[%s3185 + $0xa8] sm:$0xff]
    %v3208 = vld [vmem:[%s3185 + $0xb0] sm:$0xff]
    %v3209 = vld [vmem:[%s3185 + $0xb8] sm:$0xff]
    %v3210 = vld [vmem:[%s3185 + $0xc0] sm:$0xff]
    %v3211 = vld [vmem:[%s3185 + $0xc8] sm:$0xff]
    %v3212 = vld [vmem:[%s3185 + $0xd0] sm:$0xff]
    %v3213 = vld [vmem:[%s3185 + $0xd8] sm:$0xff]
    %v3214 = vld [vmem:[%s3185 + $0xe0] sm:$0xff]
    %v3215 = vld [vmem:[%s3185 + $0xe8] sm:$0xff]
    %v3216 = vld [vmem:[%s3185 + $0xf0] sm:$0xff]
    %v3217 = vld [vmem:[%s3185 + $0xf8] sm:$0xff]
    %v3218 = vld [vmem:[%s3185 + $0x100] sm:$0xff]
    %v3219 = vld [vmem:[%s3185 + $0x108] sm:$0xff]
    %v3220 = vld [vmem:[%s3185 + $0x110] sm:$0xff]
    %v3221 = vld [vmem:[%s3185 + $0x118] sm:$0xff]
    %v3222 = vld [vmem:[%s3185 + $0x120] sm:$0xff]
    %v3223 = vld [vmem:[%s3185 + $0x128] sm:$0xff]
    %v3224 = vld [vmem:[%s3185 + $0x130] sm:$0xff]
    %v3225 = vld [vmem:[%s3185 + $0x138] sm:$0xff]
    %v3226 = vld [vmem:[%s3185 + $0x140] sm:$0xff]
    %v3227 = vld [vmem:[%s3185 + $0x148] sm:$0xff]
    %v3228 = vld [vmem:[%s3185 + $0x150] sm:$0xff]
    %v3229 = vld [vmem:[%s3185 + $0x158] sm:$0xff]
    %v3230 = vld [vmem:[%s3185 + $0x160] sm:$0xff]
    %v3231 = vld [vmem:[%s3185 + $0x168] sm:$0xff]
    %v3232 = vld [vmem:[%s3185 + $0x170] sm:$0xff]
    %v3233 = vld [vmem:[%s3185 + $0x178] sm:$0xff]
    %v3234 = vld [vmem:[%s3185 + $0x180] sm:$0xff]
    %v3235 = vld [vmem:[%s3185 + $0x188] sm:$0xff]
    %v3236 = vld [vmem:[%s3185 + $0x190] sm:$0xff]
    %v3237 = vld [vmem:[%s3185 + $0x198] sm:$0xff]
    %v3238 = vld [vmem:[%s3185 + $0x1a0] sm:$0xff]
    %v3239 = vld [vmem:[%s3185 + $0x1a8] sm:$0xff]
    %v3240 = vld [vmem:[%s3185 + $0x1b0] sm:$0xff]
    %v3241 = vld [vmem:[%s3185 + $0x1b8] sm:$0xff]
    %v3242 = vld [vmem:[%s3185 + $0x1c0] sm:$0xff]
    %v3243 = vld [vmem:[%s3185 + $0x1c8] sm:$0xff]
    %v3244 = vld [vmem:[%s3185 + $0x1d0] sm:$0xff]
    %v3245 = vld [vmem:[%s3185 + $0x1d8] sm:$0xff]
    %v3246 = vld [vmem:[%s3185 + $0x1e0] sm:$0xff]
    %v3247 = vld [vmem:[%s3185 + $0x1e8] sm:$0xff]
    %v3248 = vld [vmem:[%s3185 + $0x1f0] sm:$0xff]
    %v3249 = vld [vmem:[%s3185 + $0x1f8] sm:$0xff]
    %v3250 = vld [vmem:[%s3185 + $0x200] sm:$0xff]
    %v3251 = vld [vmem:[%s3185 + $0x208] sm:$0xff]
    %v3252 = vld [vmem:[%s3185 + $0x210] sm:$0xff]
    %v3253 = vld [vmem:[%s3185 + $0x218] sm:$0xff]
    %v3254 = vld [vmem:[%s3185 + $0x220] sm:$0xff]
    %v3255 = vld [vmem:[%s3185 + $0x228] sm:$0xff]
    %v3256 = vld [vmem:[%s3185 + $0x230] sm:$0xff]
    %v3257 = vld [vmem:[%s3185 + $0x238] sm:$0xff]
    %v3258 = vld [vmem:[%s3185 + $0x240] sm:$0xff]
    %v3259 = vld [vmem:[%s3185 + $0x248] sm:$0xff]
    %v3260 = vld [vmem:[%s3185 + $0x250] sm:$0xff]
    %v3261 = vld [vmem:[%s3185 + $0x258] sm:$0xff]
    %v3262 = vld [vmem:[%s3185 + $0x260] sm:$0xff]
    %v3263 = vld [vmem:[%s3185 + $0x268] sm:$0xff]
    %v3264 = vld [vmem:[%s3185 + $0x270] sm:$0xff]
    %v3265 = vld [vmem:[%s3185 + $0x278] sm:$0xff]
    %v3346 = vunpack.c.l.b16 %v3186
    %v3347 = vunpack.c.h.b16 %v3186
    %v3348 = vunpack.c.l.b16 %v3187
    %v3349 = vunpack.c.h.b16 %v3187
    %v3350 = vunpack.c.l.b16 %v3188
    %v3351 = vunpack.c.h.b16 %v3188
    %v3352 = vunpack.c.l.b16 %v3189
    %v3353 = vunpack.c.h.b16 %v3189
    %v3354 = vunpack.c.l.b16 %v3190
    %v3355 = vunpack.c.h.b16 %v3190
    %v3356 = vunpack.c.l.b16 %v3191
    %v3357 = vunpack.c.h.b16 %v3191
    %v3358 = vunpack.c.l.b16 %v3192
    %v3359 = vunpack.c.h.b16 %v3192
    %v3360 = vunpack.c.l.b16 %v3193
    %v3361 = vunpack.c.h.b16 %v3193
    %v3362 = vunpack.c.l.b16 %v3194
    %v3363 = vunpack.c.h.b16 %v3194
    %v3364 = vunpack.c.l.b16 %v3195
    %v3365 = vunpack.c.h.b16 %v3195
    %v3366 = vunpack.c.l.b16 %v3196
    %v3367 = vunpack.c.h.b16 %v3196
    %v3368 = vunpack.c.l.b16 %v3197
    %v3369 = vunpack.c.h.b16 %v3197
    %v3370 = vunpack.c.l.b16 %v3198
    %v3371 = vunpack.c.h.b16 %v3198
    %v3372 = vunpack.c.l.b16 %v3199
    %v3373 = vunpack.c.h.b16 %v3199
    %v3374 = vunpack.c.l.b16 %v3200
    %v3375 = vunpack.c.h.b16 %v3200
    %v3376 = vunpack.c.l.b16 %v3201
    %v3377 = vunpack.c.h.b16 %v3201
    %v3378 = vunpack.c.l.b16 %v3202
    %v3379 = vunpack.c.h.b16 %v3202
    %v3380 = vunpack.c.l.b16 %v3203
    %v3381 = vunpack.c.h.b16 %v3203
    %v3382 = vunpack.c.l.b16 %v3204
    %v3383 = vunpack.c.h.b16 %v3204
    %v3384 = vunpack.c.l.b16 %v3205
    %v3385 = vunpack.c.h.b16 %v3205
    %v3386 = vunpack.c.l.b16 %v3206
    %v3387 = vunpack.c.h.b16 %v3206
    %v3388 = vunpack.c.l.b16 %v3207
    %v3389 = vunpack.c.h.b16 %v3207
    %v3390 = vunpack.c.l.b16 %v3208
    %v3391 = vunpack.c.h.b16 %v3208
    %v3392 = vunpack.c.l.b16 %v3209
    %v3393 = vunpack.c.h.b16 %v3209
    %v3394 = vunpack.c.l.b16 %v3210
    %v3395 = vunpack.c.h.b16 %v3210
    %v3396 = vunpack.c.l.b16 %v3211
    %v3397 = vunpack.c.h.b16 %v3211
    %v3398 = vunpack.c.l.b16 %v3212
    %v3399 = vunpack.c.h.b16 %v3212
    %v3400 = vunpack.c.l.b16 %v3213
    %v3401 = vunpack.c.h.b16 %v3213
    %v3402 = vunpack.c.l.b16 %v3214
    %v3403 = vunpack.c.h.b16 %v3214
    %v3404 = vunpack.c.l.b16 %v3215
    %v3405 = vunpack.c.h.b16 %v3215
    %v3406 = vunpack.c.l.b16 %v3216
    %v3407 = vunpack.c.h.b16 %v3216
    %v3408 = vunpack.c.l.b16 %v3217
    %v3409 = vunpack.c.h.b16 %v3217
    %v3410 = vunpack.c.l.b16 %v3218
    %v3411 = vunpack.c.h.b16 %v3218
    %v3412 = vunpack.c.l.b16 %v3219
    %v3413 = vunpack.c.h.b16 %v3219
    %v3414 = vunpack.c.l.b16 %v3220
    %v3415 = vunpack.c.h.b16 %v3220
    %v3416 = vunpack.c.l.b16 %v3221
    %v3417 = vunpack.c.h.b16 %v3221
    %v3418 = vunpack.c.l.b16 %v3222
    %v3419 = vunpack.c.h.b16 %v3222
    %v3420 = vunpack.c.l.b16 %v3223
    %v3421 = vunpack.c.h.b16 %v3223
    %v3422 = vunpack.c.l.b16 %v3224
    %v3423 = vunpack.c.h.b16 %v3224
    %v3424 = vunpack.c.l.b16 %v3225
    %v3425 = vunpack.c.h.b16 %v3225
    %v3426 = vunpack.c.l.b16 %v3226
    %v3427 = vunpack.c.h.b16 %v3226
    %v3428 = vunpack.c.l.b16 %v3227
    %v3429 = vunpack.c.h.b16 %v3227
    %v3430 = vunpack.c.l.b16 %v3228
    %v3431 = vunpack.c.h.b16 %v3228
    %v3432 = vunpack.c.l.b16 %v3229
    %v3433 = vunpack.c.h.b16 %v3229
    %v3434 = vunpack.c.l.b16 %v3230
    %v3435 = vunpack.c.h.b16 %v3230
    %v3436 = vunpack.c.l.b16 %v3231
    %v3437 = vunpack.c.h.b16 %v3231
    %v3438 = vunpack.c.l.b16 %v3232
    %v3439 = vunpack.c.h.b16 %v3232
    %v3440 = vunpack.c.l.b16 %v3233
    %v3441 = vunpack.c.h.b16 %v3233
    %v3442 = vunpack.c.l.b16 %v3234
    %v3443 = vunpack.c.h.b16 %v3234
    %v3444 = vunpack.c.l.b16 %v3235
    %v3445 = vunpack.c.h.b16 %v3235
    %v3446 = vunpack.c.l.b16 %v3236
    %v3447 = vunpack.c.h.b16 %v3236
    %v3448 = vunpack.c.l.b16 %v3237
    %v3449 = vunpack.c.h.b16 %v3237
    %v3450 = vunpack.c.l.b16 %v3238
    %v3451 = vunpack.c.h.b16 %v3238
    %v3452 = vunpack.c.l.b16 %v3239
    %v3453 = vunpack.c.h.b16 %v3239
    %v3454 = vunpack.c.l.b16 %v3240
    %v3455 = vunpack.c.h.b16 %v3240
    %v3456 = vunpack.c.l.b16 %v3241
    %v3457 = vunpack.c.h.b16 %v3241
    %v3458 = vunpack.c.l.b16 %v3242
    %v3459 = vunpack.c.h.b16 %v3242
    %v3460 = vunpack.c.l.b16 %v3243
    %v3461 = vunpack.c.h.b16 %v3243
    %v3462 = vunpack.c.l.b16 %v3244
    %v3463 = vunpack.c.h.b16 %v3244
    %v3464 = vunpack.c.l.b16 %v3245
    %v3465 = vunpack.c.h.b16 %v3245
    %v3466 = vunpack.c.l.b16 %v3246
    %v3467 = vunpack.c.h.b16 %v3246
    %v3468 = vunpack.c.l.b16 %v3247
    %v3469 = vunpack.c.h.b16 %v3247
    %v3470 = vunpack.c.l.b16 %v3248
    %v3471 = vunpack.c.h.b16 %v3248
    %v3472 = vunpack.c.l.b16 %v3249
    %v3473 = vunpack.c.h.b16 %v3249
    %v3474 = vunpack.c.l.b16 %v3250
    %v3475 = vunpack.c.h.b16 %v3250
    %v3476 = vunpack.c.l.b16 %v3251
    %v3477 = vunpack.c.h.b16 %v3251
    %v3478 = vunpack.c.l.b16 %v3252
    %v3479 = vunpack.c.h.b16 %v3252
    %v3480 = vunpack.c.l.b16 %v3253
    %v3481 = vunpack.c.h.b16 %v3253
    %v3482 = vunpack.c.l.b16 %v3254
    %v3483 = vunpack.c.h.b16 %v3254
    %v3484 = vunpack.c.l.b16 %v3255
    %v3485 = vunpack.c.h.b16 %v3255
    %v3486 = vunpack.c.l.b16 %v3256
    %v3487 = vunpack.c.h.b16 %v3256
    %v3488 = vunpack.c.l.b16 %v3257
    %v3489 = vunpack.c.h.b16 %v3257
    %v3490 = vunpack.c.l.b16 %v3258
    %v3491 = vunpack.c.h.b16 %v3258
    %v3492 = vunpack.c.l.b16 %v3259
    %v3493 = vunpack.c.h.b16 %v3259
    %v3494 = vunpack.c.l.b16 %v3260
    %v3495 = vunpack.c.h.b16 %v3260
    %v3496 = vunpack.c.l.b16 %v3261
    %v3497 = vunpack.c.h.b16 %v3261
    %v3498 = vunpack.c.l.b16 %v3262
    %v3499 = vunpack.c.h.b16 %v3262
    %v3500 = vunpack.c.l.b16 %v3263
    %v3501 = vunpack.c.h.b16 %v3263
    %v3502 = vunpack.c.l.b16 %v3264
    %v3503 = vunpack.c.h.b16 %v3264
    %v3504 = vunpack.c.l.b16 %v3265
    %v3505 = vunpack.c.h.b16 %v3265
    %v3506 = vpack.c.b16 %v3350, %v3346
    %v3507 = vpack.c.b16 %v3351, %v3347
    %v3508 = vpack.c.b16 %v3352, %v3348
    %v3509 = vpack.c.b16 %v3353, %v3349
    %v3510 = vpack.c.b16 %v3358, %v3354
    %v3511 = vpack.c.b16 %v3359, %v3355
    %v3512 = vpack.c.b16 %v3360, %v3356
    %v3513 = vpack.c.b16 %v3361, %v3357
    %v3514 = vpack.c.b16 %v3366, %v3362
    %v3515 = vpack.c.b16 %v3367, %v3363
    %v3516 = vpack.c.b16 %v3368, %v3364
    %v3517 = vpack.c.b16 %v3369, %v3365
    %v3518 = vpack.c.b16 %v3374, %v3370
    %v3519 = vpack.c.b16 %v3375, %v3371
    %v3520 = vpack.c.b16 %v3376, %v3372
    %v3521 = vpack.c.b16 %v3377, %v3373
    %v3522 = vpack.c.b16 %v3382, %v3378
    %v3523 = vpack.c.b16 %v3383, %v3379
    %v3524 = vpack.c.b16 %v3384, %v3380
    %v3525 = vpack.c.b16 %v3385, %v3381
    %v3526 = vpack.c.b16 %v3390, %v3386
    %v3527 = vpack.c.b16 %v3391, %v3387
    %v3528 = vpack.c.b16 %v3392, %v3388
    %v3529 = vpack.c.b16 %v3393, %v3389
    %v3530 = vpack.c.b16 %v3398, %v3394
    %v3531 = vpack.c.b16 %v3399, %v3395
    %v3532 = vpack.c.b16 %v3400, %v3396
    %v3533 = vpack.c.b16 %v3401, %v3397
    %v3534 = vpack.c.b16 %v3406, %v3402
    %v3535 = vpack.c.b16 %v3407, %v3403
    %v3536 = vpack.c.b16 %v3408, %v3404
    %v3537 = vpack.c.b16 %v3409, %v3405
    %v3538 = vpack.c.b16 %v3414, %v3410
    %v3539 = vpack.c.b16 %v3415, %v3411
    %v3540 = vpack.c.b16 %v3416, %v3412
    %v3541 = vpack.c.b16 %v3417, %v3413
    %v3542 = vpack.c.b16 %v3422, %v3418
    %v3543 = vpack.c.b16 %v3423, %v3419
    %v3544 = vpack.c.b16 %v3424, %v3420
    %v3545 = vpack.c.b16 %v3425, %v3421
    %v3546 = vpack.c.b16 %v3430, %v3426
    %v3547 = vpack.c.b16 %v3431, %v3427
    %v3548 = vpack.c.b16 %v3432, %v3428
    %v3549 = vpack.c.b16 %v3433, %v3429
    %v3550 = vpack.c.b16 %v3438, %v3434
    %v3551 = vpack.c.b16 %v3439, %v3435
    %v3552 = vpack.c.b16 %v3440, %v3436
    %v3553 = vpack.c.b16 %v3441, %v3437
    %v3554 = vpack.c.b16 %v3446, %v3442
    %v3555 = vpack.c.b16 %v3447, %v3443
    %v3556 = vpack.c.b16 %v3448, %v3444
    %v3557 = vpack.c.b16 %v3449, %v3445
    %v3558 = vpack.c.b16 %v3454, %v3450
    %v3559 = vpack.c.b16 %v3455, %v3451
    %v3560 = vpack.c.b16 %v3456, %v3452
    %v3561 = vpack.c.b16 %v3457, %v3453
    %v3562 = vpack.c.b16 %v3462, %v3458
    %v3563 = vpack.c.b16 %v3463, %v3459
    %v3564 = vpack.c.b16 %v3464, %v3460
    %v3565 = vpack.c.b16 %v3465, %v3461
    %v3566 = vpack.c.b16 %v3470, %v3466
    %v3567 = vpack.c.b16 %v3471, %v3467
    %v3568 = vpack.c.b16 %v3472, %v3468
    %v3569 = vpack.c.b16 %v3473, %v3469
    %v3570 = vpack.c.b16 %v3478, %v3474
    %v3571 = vpack.c.b16 %v3479, %v3475
    %v3572 = vpack.c.b16 %v3480, %v3476
    %v3573 = vpack.c.b16 %v3481, %v3477
    %v3574 = vpack.c.b16 %v3486, %v3482
    %v3575 = vpack.c.b16 %v3487, %v3483
    %v3576 = vpack.c.b16 %v3488, %v3484
    %v3577 = vpack.c.b16 %v3489, %v3485
    %v3578 = vpack.c.b16 %v3494, %v3490
    %v3579 = vpack.c.b16 %v3495, %v3491
    %v3580 = vpack.c.b16 %v3496, %v3492
    %v3581 = vpack.c.b16 %v3497, %v3493
    %v3582 = vpack.c.b16 %v3502, %v3498
    %v3583 = vpack.c.b16 %v3503, %v3499
    %v3584 = vpack.c.b16 %v3504, %v3500
    %v3585 = vpack.c.b16 %v3505, %v3501
    %v3667 = vsel %vm699, %v3181, 0
    %v3670 = vsel %vm699, %v3184, 0
    %3672 = vmatprep.subr.bf16.mxu0 %v3535
    %3673 = vmatpush1.bf16.msra.mxu0 %v3534
    %3674 = vmatprep.subr.bf16.mxu0 %v3531
    %3675 = vmatpush1.bf16.msra.mxu0 %v3530
    %3676 = vmatprep.subr.bf16.mxu0 %v3527
    %3677 = vmatpush1.bf16.msra.mxu0 %v3526
    %3678 = vmatprep.subr.bf16.mxu0 %v3523
    %3679 = vmatpush1.bf16.msra.mxu0 %v3522
    %3680 = vmatprep.subr.bf16.mxu0 %v3519
    %3681 = vmatpush1.bf16.msra.mxu0 %v3518
    %3682 = vmatprep.subr.bf16.mxu0 %v3515
    %3683 = vmatpush1.bf16.msra.mxu0 %v3514
    %3684 = vmatprep.subr.bf16.mxu0 %v3511
    %3685 = vmatpush1.bf16.msra.mxu0 %v3510
    %3686 = vmatprep.subr.bf16.mxu0 %v3507
    %3687 = vmatpush1.bf16.msra.mxu0 %v3506
    %3688 = vmatprep.subr.bf16.mxu0 %v3567
    %3689 = vmatpush2.bf16.msra.mxu0 %v3566
    %3690 = vmatprep.subr.bf16.mxu0 %v3563
    %3691 = vmatpush2.bf16.msra.mxu0 %v3562
    %3692 = vmatprep.subr.bf16.mxu0 %v3559
    %3693 = vmatpush2.bf16.msra.mxu0 %v3558
    %3694 = vmatprep.subr.bf16.mxu0 %v3555
    %3695 = vmatpush2.bf16.msra.mxu0 %v3554
    %3696 = vmatprep.subr.bf16.mxu0 %v3551
    %3697 = vmatpush2.bf16.msra.mxu0 %v3550
    %3698 = vmatprep.subr.bf16.mxu0 %v3547
    %3699 = vmatpush2.bf16.msra.mxu0 %v3546
    %3700 = vmatprep.subr.bf16.mxu0 %v3543
    %3701 = vmatpush2.bf16.msra.mxu0 %v3542
    %3702 = vmatprep.subr.bf16.mxu0 %v3539
    %3703 = vmatpush2.bf16.msra.mxu0 %v3538
    %3704 = vmatprep.mubr.bf16.mxu0 %v3180
    %3705 = vmatmul.mubr.bf16.gmra.mxu0 %v3179
    %v3706 = vpop.f32.mrf.mxu0
    %v3707 = vadd.f32 0.0, %v3706
    %v3708 = vpop.f32.mrf.mxu0
    %v3709 = vadd.f32 0.0, %v3708
    %v3710 = vpop.f32.mrf.mxu0
    %v3711 = vadd.f32 0.0, %v3710
    %v3712 = vpop.f32.mrf.mxu0
    %v3713 = vadd.f32 0.0, %v3712
    %3714 = vmatprep.mubr.bf16.mxu0 %v3183
    %3715 = vmatmul.mubr.bf16.gmra.mxu0 %v3182
    %v3716 = vpop.f32.mrf.mxu0
    %v3717 = vadd.f32 0.0, %v3716
    %v3718 = vpop.f32.mrf.mxu0
    %v3719 = vadd.f32 0.0, %v3718
    %v3720 = vpop.f32.mrf.mxu0
    %v3721 = vadd.f32 0.0, %v3720
    %v3722 = vpop.f32.mrf.mxu0
    %v3723 = vadd.f32 0.0, %v3722
    %3724 = vdwg.mxu0
    %3725 = vmatprep.subr.bf16.mxu0 0
    %3726 = vmatpush1.bf16.msra.mxu0 0
    %3727 = vmatprep.subr.bf16.mxu0 0
    %3728 = vmatpush1.bf16.msra.mxu0 0
    %3729 = vmatprep.subr.bf16.mxu0 0
    %3730 = vmatpush1.bf16.msra.mxu0 0
    %3731 = vmatprep.subr.bf16.mxu0 0
    %3732 = vmatpush1.bf16.msra.mxu0 0
    %3733 = vmatprep.subr.bf16.mxu0 %v3583
    %3734 = vmatpush1.bf16.msra.mxu0 %v3582
    %3735 = vmatprep.subr.bf16.mxu0 %v3579
    %3736 = vmatpush1.bf16.msra.mxu0 %v3578
    %3737 = vmatprep.subr.bf16.mxu0 %v3575
    %3738 = vmatpush1.bf16.msra.mxu0 %v3574
    %3739 = vmatprep.subr.bf16.mxu0 %v3571
    %3740 = vmatpush1.bf16.msra.mxu0 %v3570
    %3741 = vmatprep.subr.bf16.mxu0 0
    %3742 = vmatpush2.bf16.msra.mxu0 0
    %3743 = vmatprep.subr.bf16.mxu0 0
    %3744 = vmatpush2.bf16.msra.mxu0 0
    %3745 = vmatprep.subr.bf16.mxu0 0
    %3746 = vmatpush2.bf16.msra.mxu0 0
    %3747 = vmatprep.subr.bf16.mxu0 0
    %3748 = vmatpush2.bf16.msra.mxu0 0
    %3749 = vmatprep.subr.bf16.mxu0 0
    %3750 = vmatpush2.bf16.msra.mxu0 0
    %3751 = vmatprep.subr.bf16.mxu0 0
    %3752 = vmatpush2.bf16.msra.mxu0 0
    %3753 = vmatprep.subr.bf16.mxu0 0
    %3754 = vmatpush2.bf16.msra.mxu0 0
    %3755 = vmatprep.subr.bf16.mxu0 0
    %3756 = vmatpush2.bf16.msra.mxu0 0
    %3757 = vmatprep.mubr.bf16.mxu0 0
    %3758 = vmatmul.mubr.bf16.gmra.mxu0 %v3667
    %v3759 = vpop.f32.mrf.mxu0
    %v3760 = vadd.f32 %v3707, %v3759
    %v3761 = vpop.f32.mrf.mxu0
    %v3762 = vadd.f32 %v3709, %v3761
    %v3763 = vpop.f32.mrf.mxu0
    %v3764 = vadd.f32 %v3711, %v3763
    %v3765 = vpop.f32.mrf.mxu0
    %v3766 = vadd.f32 %v3713, %v3765
    %3767 = vmatprep.mubr.bf16.mxu0 0
    %3768 = vmatmul.mubr.bf16.gmra.mxu0 %v3670
    %v3769 = vpop.f32.mrf.mxu0
    %v3770 = vadd.f32 %v3717, %v3769
    %v3771 = vpop.f32.mrf.mxu0
    %v3772 = vadd.f32 %v3719, %v3771
    %v3773 = vpop.f32.mrf.mxu0
    %v3774 = vadd.f32 %v3721, %v3773
    %v3775 = vpop.f32.mrf.mxu0
    %v3776 = vadd.f32 %v3723, %v3775
    %3777 = vdwg.mxu0
    %3778 = vmatprep.subr.bf16.mxu0 %v3537
    %3779 = vmatpush1.bf16.msra.mxu0 %v3536
    %3780 = vmatprep.subr.bf16.mxu0 %v3533
    %3781 = vmatpush1.bf16.msra.mxu0 %v3532
    %3782 = vmatprep.subr.bf16.mxu0 %v3529
    %3783 = vmatpush1.bf16.msra.mxu0 %v3528
    %3784 = vmatprep.subr.bf16.mxu0 %v3525
    %3785 = vmatpush1.bf16.msra.mxu0 %v3524
    %3786 = vmatprep.subr.bf16.mxu0 %v3521
    %3787 = vmatpush1.bf16.msra.mxu0 %v3520
    %3788 = vmatprep.subr.bf16.mxu0 %v3517
    %3789 = vmatpush1.bf16.msra.mxu0 %v3516
    %3790 = vmatprep.subr.bf16.mxu0 %v3513
    %3791 = vmatpush1.bf16.msra.mxu0 %v3512
    %3792 = vmatprep.subr.bf16.mxu0 %v3509
    %3793 = vmatpush1.bf16.msra.mxu0 %v3508
    %3794 = vmatprep.subr.bf16.mxu0 %v3569
    %3795 = vmatpush2.bf16.msra.mxu0 %v3568
    %3796 = vmatprep.subr.bf16.mxu0 %v3565
    %3797 = vmatpush2.bf16.msra.mxu0 %v3564
    %3798 = vmatprep.subr.bf16.mxu0 %v3561
    %3799 = vmatpush2.bf16.msra.mxu0 %v3560
    %3800 = vmatprep.subr.bf16.mxu0 %v3557
    %3801 = vmatpush2.bf16.msra.mxu0 %v3556
    %3802 = vmatprep.subr.bf16.mxu0 %v3553
    %3803 = vmatpush2.bf16.msra.mxu0 %v3552
    %3804 = vmatprep.subr.bf16.mxu0 %v3549
    %3805 = vmatpush2.bf16.msra.mxu0 %v3548
    %3806 = vmatprep.subr.bf16.mxu0 %v3545
    %3807 = vmatpush2.bf16.msra.mxu0 %v3544
    %3808 = vmatprep.subr.bf16.mxu0 %v3541
    %3809 = vmatpush2.bf16.msra.mxu0 %v3540
    %3810 = vmatprep.mubr.bf16.mxu0 %v3180
    %3811 = vmatmul.mubr.bf16.gmra.mxu0 %v3179
    %v3812 = vpop.f32.mrf.mxu0
    %v3813 = vadd.f32 0.0, %v3812
    %v3814 = vpop.f32.mrf.mxu0
    %v3815 = vadd.f32 0.0, %v3814
    %v3816 = vpop.f32.mrf.mxu0
    %v3817 = vadd.f32 0.0, %v3816
    %v3818 = vpop.f32.mrf.mxu0
    %v3819 = vadd.f32 0.0, %v3818
    %3820 = vmatprep.mubr.bf16.mxu0 %v3183
    %3821 = vmatmul.mubr.bf16.gmra.mxu0 %v3182
    %v3822 = vpop.f32.mrf.mxu0
    %v3823 = vadd.f32 0.0, %v3822
    %v3824 = vpop.f32.mrf.mxu0
    %v3825 = vadd.f32 0.0, %v3824
    %v3826 = vpop.f32.mrf.mxu0
    %v3827 = vadd.f32 0.0, %v3826
    %v3828 = vpop.f32.mrf.mxu0
    %v3829 = vadd.f32 0.0, %v3828
    %3830 = vdwg.mxu0
    %3831 = vmatprep.subr.bf16.mxu0 0
    %3832 = vmatpush1.bf16.msra.mxu0 0
    %3833 = vmatprep.subr.bf16.mxu0 0
    %3834 = vmatpush1.bf16.msra.mxu0 0
    %3835 = vmatprep.subr.bf16.mxu0 0
    %3836 = vmatpush1.bf16.msra.mxu0 0
    %3837 = vmatprep.subr.bf16.mxu0 0
    %3838 = vmatpush1.bf16.msra.mxu0 0
    %3839 = vmatprep.subr.bf16.mxu0 %v3585
    %3840 = vmatpush1.bf16.msra.mxu0 %v3584
    %3841 = vmatprep.subr.bf16.mxu0 %v3581
    %3842 = vmatpush1.bf16.msra.mxu0 %v3580
    %3843 = vmatprep.subr.bf16.mxu0 %v3577
    %3844 = vmatpush1.bf16.msra.mxu0 %v3576
    %3845 = vmatprep.subr.bf16.mxu0 %v3573
    %3846 = vmatpush1.bf16.msra.mxu0 %v3572
    %3847 = vmatprep.subr.bf16.mxu0 0
    %3848 = vmatpush2.bf16.msra.mxu0 0
    %3849 = vmatprep.subr.bf16.mxu0 0
    %3850 = vmatpush2.bf16.msra.mxu0 0
    %3851 = vmatprep.subr.bf16.mxu0 0
    %3852 = vmatpush2.bf16.msra.mxu0 0
    %3853 = vmatprep.subr.bf16.mxu0 0
    %3854 = vmatpush2.bf16.msra.mxu0 0
    %3855 = vmatprep.subr.bf16.mxu0 0
    %3856 = vmatpush2.bf16.msra.mxu0 0
    %3857 = vmatprep.subr.bf16.mxu0 0
    %3858 = vmatpush2.bf16.msra.mxu0 0
    %3859 = vmatprep.subr.bf16.mxu0 0
    %3860 = vmatpush2.bf16.msra.mxu0 0
    %3861 = vmatprep.subr.bf16.mxu0 0
    %3862 = vmatpush2.bf16.msra.mxu0 0
    %3863 = vmatprep.mubr.bf16.mxu0 0
    %3864 = vmatmul.mubr.bf16.gmra.mxu0 %v3667
    %v3865 = vpop.f32.mrf.mxu0
    %v3866 = vadd.f32 %v3813, %v3865
    %v3867 = vpop.f32.mrf.mxu0
    %v3868 = vadd.f32 %v3815, %v3867
    %v3869 = vpop.f32.mrf.mxu0
    %v3870 = vadd.f32 %v3817, %v3869
    %v3871 = vpop.f32.mrf.mxu0
    %v3872 = vadd.f32 %v3819, %v3871
    %3873 = vmatprep.mubr.bf16.mxu0 0
    %3874 = vmatmul.mubr.bf16.gmra.mxu0 %v3670
    %v3875 = vpop.f32.mrf.mxu0
    %v3876 = vadd.f32 %v3823, %v3875
    %v3877 = vpop.f32.mrf.mxu0
    %v3878 = vadd.f32 %v3825, %v3877
    %v3879 = vpop.f32.mrf.mxu0
    %v3880 = vadd.f32 %v3827, %v3879
    %v3881 = vpop.f32.mrf.mxu0
    %v3882 = vadd.f32 %v3829, %v3881
    %3883 = vdwg.mxu0
    %v3884 = vadd.f32 %v3096, %v3760
    %v3885 = vadd.f32 %v3097, %v3762
    %v3886 = vadd.f32 %v3098, %v3866
    %v3887 = vadd.f32 %v3099, %v3868
    %v3888 = vadd.f32 %v3100, %v3764
    %v3889 = vadd.f32 %v3101, %v3766
    %v3890 = vadd.f32 %v3102, %v3870
    %v3891 = vadd.f32 %v3103, %v3872
    %v3892 = vadd.f32 %v3104, %v3770
    %v3893 = vadd.f32 %v3105, %v3772
    %v3894 = vadd.f32 %v3106, %v3876
    %v3895 = vadd.f32 %v3107, %v3878
    %v3896 = vadd.f32 %v3108, %v3774
    %v3897 = vadd.f32 %v3109, %v3776
    %v3898 = vadd.f32 %v3110, %v3880
    %v3899 = vadd.f32 %v3111, %v3882
    %v3900 = vld [vmem:[#allocation4] sm:$0xf]
    %v3902 = vlaneseq
    %v3903 = vshrl.u32 %v3902, 7
    %v3904 = vsub.s32 0, %v3903
    %v3905 = vrot.slane %v3900, %v3904
    %v3906 = vlaneseq
    %v3907 = vshrl.u32 %v3906, 7
    %v3908 = vsub.s32 1, %v3907
    %v3909 = vrot.slane %v3900, %v3908
    %v3910 = vlaneseq
    %v3911 = vshrl.u32 %v3910, 7
    %v3912 = vsub.s32 2, %v3911
    %v3913 = vrot.slane %v3900, %v3912
    %v3914 = vlaneseq
    %v3915 = vshrl.u32 %v3914, 7
    %v3916 = vsub.s32 3, %v3915
    %v3917 = vrot.slane %v3900, %v3916
    %v3922 = vadd.f32 %v3884, %v3905
    %v3923 = vadd.f32 %v3885, %v3909
    %v3924 = vadd.f32 %v3886, %v3913
    %v3925 = vadd.f32 %v3887, %v3917
    %v3926 = vadd.f32 %v3888, %v3905
    %v3927 = vadd.f32 %v3889, %v3909
    %v3928 = vadd.f32 %v3890, %v3913
    %v3929 = vadd.f32 %v3891, %v3917
    %v3930 = vadd.f32 %v3892, %v3905
    %v3931 = vadd.f32 %v3893, %v3909
    %v3932 = vadd.f32 %v3894, %v3913
    %v3933 = vadd.f32 %v3895, %v3917
    %v3934 = vadd.f32 %v3896, %v3905
    %v3935 = vadd.f32 %v3897, %v3909
    %v3936 = vadd.f32 %v3898, %v3913
    %v3937 = vadd.f32 %v3899, %v3917
    %v3938 = vmax.f32 %v3922, 0.0
    %v3939 = vmax.f32 %v3923, 0.0
    %v3940 = vmax.f32 %v3924, 0.0
    %v3941 = vmax.f32 %v3925, 0.0
    %v3942 = vmax.f32 %v3926, 0.0
    %v3943 = vmax.f32 %v3927, 0.0
    %v3944 = vmax.f32 %v3928, 0.0
    %v3945 = vmax.f32 %v3929, 0.0
    %v3946 = vmax.f32 %v3930, 0.0
    %v3947 = vmax.f32 %v3931, 0.0
    %v3948 = vmax.f32 %v3932, 0.0
    %v3949 = vmax.f32 %v3933, 0.0
    %v3950 = vmax.f32 %v3934, 0.0
    %v3951 = vmax.f32 %v3935, 0.0
    %v3952 = vmax.f32 %v3936, 0.0
    %v3953 = vmax.f32 %v3937, 0.0
    %v3954 = vmax.f32 %v3938, %v3940
    %v3955 = vmax.f32 %v3939, %v3941
    %v3956 = vmax.f32 %v3942, %v3944
    %v3957 = vmax.f32 %v3943, %v3945
    %v3958 = vmax.f32 %v3946, %v3948
    %v3959 = vmax.f32 %v3947, %v3949
    %v3960 = vmax.f32 %v3950, %v3952
    %v3961 = vmax.f32 %v3951, %v3953
    %v3970 = vcombine.low %v3954, %v3955
    %v3971 = vcombine.high %v3954, %v3955
    %v3973 = vunpack.c.l.s4 1983009808
    %v3974 = vunpack.c.0.s8 %v3973
    %v3975 = vlaneseq
    %v3976 = vshrl.u32 %v3975, 7
    %v3977 = vsub.s32 %v3974, %v3976
    %v3978 = vrot.slane %v3970, %v3977
    %v3980 = vunpack.c.l.s4 1983009808
    %v3981 = vunpack.c.0.s8 %v3980
    %v3982 = vlaneseq
    %v3983 = vshrl.u32 %v3982, 7
    %v3984 = vsub.s32 %v3981, %v3983
    %v3985 = vrot.slane %v3971, %v3984
    %v3986 = vcombine.high %v3978, %v3978
    %v3987 = vcombine.high %v3985, %v3985
    %v3988 = vcombine.low %v3956, %v3957
    %v3989 = vcombine.high %v3956, %v3957
    %v3991 = vunpack.c.l.s4 1983009808
    %v3992 = vunpack.c.0.s8 %v3991
    %v3993 = vlaneseq
    %v3994 = vshrl.u32 %v3993, 7
    %v3995 = vsub.s32 %v3992, %v3994
    %v3996 = vrot.slane %v3988, %v3995
    %v3998 = vunpack.c.l.s4 1983009808
    %v3999 = vunpack.c.0.s8 %v3998
    %v4000 = vlaneseq
    %v4001 = vshrl.u32 %v4000, 7
    %v4002 = vsub.s32 %v3999, %v4001
    %v4003 = vrot.slane %v3989, %v4002
    %v4004 = vcombine.high %v3996, %v3996
    %v4005 = vcombine.high %v4003, %v4003
    %v4006 = vcombine.low %v3958, %v3959
    %v4007 = vcombine.high %v3958, %v3959
    %v4009 = vunpack.c.l.s4 1983009808
    %v4010 = vunpack.c.0.s8 %v4009
    %v4011 = vlaneseq
    %v4012 = vshrl.u32 %v4011, 7
    %v4013 = vsub.s32 %v4010, %v4012
    %v4014 = vrot.slane %v4006, %v4013
    %v4016 = vunpack.c.l.s4 1983009808
    %v4017 = vunpack.c.0.s8 %v4016
    %v4018 = vlaneseq
    %v4019 = vshrl.u32 %v4018, 7
    %v4020 = vsub.s32 %v4017, %v4019
    %v4021 = vrot.slane %v4007, %v4020
    %v4022 = vcombine.high %v4014, %v4014
    %v4023 = vcombine.high %v4021, %v4021
    %v4024 = vcombine.low %v3960, %v3961
    %v4025 = vcombine.high %v3960, %v3961
    %v4027 = vunpack.c.l.s4 1983009808
    %v4028 = vunpack.c.0.s8 %v4027
    %v4029 = vlaneseq
    %v4030 = vshrl.u32 %v4029, 7
    %v4031 = vsub.s32 %v4028, %v4030
    %v4032 = vrot.slane %v4024, %v4031
    %v4034 = vunpack.c.l.s4 1983009808
    %v4035 = vunpack.c.0.s8 %v4034
    %v4036 = vlaneseq
    %v4037 = vshrl.u32 %v4036, 7
    %v4038 = vsub.s32 %v4035, %v4037
    %v4039 = vrot.slane %v4025, %v4038
    %v4040 = vcombine.high %v4032, %v4032
    %v4041 = vcombine.high %v4039, %v4039
    %v4058 = vrot.slane %v3978, 7
    %v4059 = vrot.slane %v4058, 2
    %v4060 = vrot.slane %v3986, 7
    %v4061 = vrot.slane %v4060, 2
    %v4062 = vrot.slane %v3985, 7
    %v4063 = vrot.slane %v4062, 2
    %v4064 = vrot.slane %v3987, 7
    %v4065 = vrot.slane %v4064, 2
    %v4066 = vrot.slane %v3996, 7
    %v4067 = vrot.slane %v4066, 2
    %v4068 = vrot.slane %v4004, 7
    %v4069 = vrot.slane %v4068, 2
    %v4070 = vrot.slane %v4003, 7
    %v4071 = vrot.slane %v4070, 2
    %v4072 = vrot.slane %v4005, 7
    %v4073 = vrot.slane %v4072, 2
    %v4074 = vrot.slane %v4014, 7
    %v4075 = vrot.slane %v4074, 2
    %v4076 = vrot.slane %v4022, 7
    %v4077 = vrot.slane %v4076, 2
    %v4078 = vrot.slane %v4021, 7
    %v4079 = vrot.slane %v4078, 2
    %v4080 = vrot.slane %v4023, 7
    %v4081 = vrot.slane %v4080, 2
    %v4082 = vrot.slane %v4032, 7
    %v4083 = vrot.slane %v4082, 2
    %v4084 = vrot.slane %v4040, 7
    %v4085 = vrot.slane %v4084, 2
    %v4086 = vrot.slane %v4039, 7
    %v4087 = vrot.slane %v4086, 2
    %v4088 = vrot.slane %v4041, 7
    %v4089 = vrot.slane %v4088, 2
    %v4106 = vmax.f32 %v3978, %v4059
    %v4107 = vmax.f32 %v3986, %v4061
    %v4108 = vmax.f32 %v3985, %v4063
    %v4109 = vmax.f32 %v3987, %v4065
    %v4110 = vmax.f32 %v3996, %v4067
    %v4111 = vmax.f32 %v4004, %v4069
    %v4112 = vmax.f32 %v4003, %v4071
    %v4113 = vmax.f32 %v4005, %v4073
    %v4114 = vmax.f32 %v4014, %v4075
    %v4115 = vmax.f32 %v4022, %v4077
    %v4116 = vmax.f32 %v4021, %v4079
    %v4117 = vmax.f32 %v4023, %v4081
    %v4118 = vmax.f32 %v4032, %v4083
    %v4119 = vmax.f32 %v4040, %v4085
    %v4120 = vmax.f32 %v4039, %v4087
    %v4121 = vmax.f32 %v4041, %v4089
    %v4138 = vlaneseq
    %v4139 = vshrl.u32 %v4138, 7
    %v4140 = vsub.s32 0, %v4139
    %v4141 = vrot.slane %v4106, %v4140
    %v4142 = vlaneseq
    %v4143 = vshrl.u32 %v4142, 7
    %v4144 = vsub.s32 2, %v4143
    %v4145 = vrot.slane %v4106, %v4144
    %v4146 = vlaneseq
    %v4147 = vshrl.u32 %v4146, 7
    %v4148 = vsub.s32 0, %v4147
    %v4149 = vrot.slane %v4107, %v4148
    %v4150 = vlaneseq
    %v4151 = vshrl.u32 %v4150, 7
    %v4152 = vsub.s32 2, %v4151
    %v4153 = vrot.slane %v4107, %v4152
    %v4154 = vlaneseq
    %v4155 = vshrl.u32 %v4154, 7
    %v4156 = vsub.s32 0, %v4155
    %v4157 = vrot.slane %v4108, %v4156
    %v4158 = vlaneseq
    %v4159 = vshrl.u32 %v4158, 7
    %v4160 = vsub.s32 2, %v4159
    %v4161 = vrot.slane %v4108, %v4160
    %v4162 = vlaneseq
    %v4163 = vshrl.u32 %v4162, 7
    %v4164 = vsub.s32 0, %v4163
    %v4165 = vrot.slane %v4109, %v4164
    %v4166 = vlaneseq
    %v4167 = vshrl.u32 %v4166, 7
    %v4168 = vsub.s32 2, %v4167
    %v4169 = vrot.slane %v4109, %v4168
    %v4170 = vlaneseq
    %v4171 = vshrl.u32 %v4170, 7
    %v4172 = vsub.s32 0, %v4171
    %v4173 = vrot.slane %v4110, %v4172
    %v4174 = vlaneseq
    %v4175 = vshrl.u32 %v4174, 7
    %v4176 = vsub.s32 2, %v4175
    %v4177 = vrot.slane %v4110, %v4176
    %v4178 = vlaneseq
    %v4179 = vshrl.u32 %v4178, 7
    %v4180 = vsub.s32 0, %v4179
    %v4181 = vrot.slane %v4111, %v4180
    %v4182 = vlaneseq
    %v4183 = vshrl.u32 %v4182, 7
    %v4184 = vsub.s32 2, %v4183
    %v4185 = vrot.slane %v4111, %v4184
    %v4186 = vlaneseq
    %v4187 = vshrl.u32 %v4186, 7
    %v4188 = vsub.s32 0, %v4187
    %v4189 = vrot.slane %v4112, %v4188
    %v4190 = vlaneseq
    %v4191 = vshrl.u32 %v4190, 7
    %v4192 = vsub.s32 2, %v4191
    %v4193 = vrot.slane %v4112, %v4192
    %v4194 = vlaneseq
    %v4195 = vshrl.u32 %v4194, 7
    %v4196 = vsub.s32 0, %v4195
    %v4197 = vrot.slane %v4113, %v4196
    %v4198 = vlaneseq
    %v4199 = vshrl.u32 %v4198, 7
    %v4200 = vsub.s32 2, %v4199
    %v4201 = vrot.slane %v4113, %v4200
    %v4202 = vlaneseq
    %v4203 = vshrl.u32 %v4202, 7
    %v4204 = vsub.s32 0, %v4203
    %v4205 = vrot.slane %v4114, %v4204
    %v4206 = vlaneseq
    %v4207 = vshrl.u32 %v4206, 7
    %v4208 = vsub.s32 2, %v4207
    %v4209 = vrot.slane %v4114, %v4208
    %v4210 = vlaneseq
    %v4211 = vshrl.u32 %v4210, 7
    %v4212 = vsub.s32 0, %v4211
    %v4213 = vrot.slane %v4115, %v4212
    %v4214 = vlaneseq
    %v4215 = vshrl.u32 %v4214, 7
    %v4216 = vsub.s32 2, %v4215
    %v4217 = vrot.slane %v4115, %v4216
    %v4218 = vlaneseq
    %v4219 = vshrl.u32 %v4218, 7
    %v4220 = vsub.s32 0, %v4219
    %v4221 = vrot.slane %v4116, %v4220
    %v4222 = vlaneseq
    %v4223 = vshrl.u32 %v4222, 7
    %v4224 = vsub.s32 2, %v4223
    %v4225 = vrot.slane %v4116, %v4224
    %v4226 = vlaneseq
    %v4227 = vshrl.u32 %v4226, 7
    %v4228 = vsub.s32 0, %v4227
    %v4229 = vrot.slane %v4117, %v4228
    %v4230 = vlaneseq
    %v4231 = vshrl.u32 %v4230, 7
    %v4232 = vsub.s32 2, %v4231
    %v4233 = vrot.slane %v4117, %v4232
    %v4234 = vlaneseq
    %v4235 = vshrl.u32 %v4234, 7
    %v4236 = vsub.s32 0, %v4235
    %v4237 = vrot.slane %v4118, %v4236
    %v4238 = vlaneseq
    %v4239 = vshrl.u32 %v4238, 7
    %v4240 = vsub.s32 2, %v4239
    %v4241 = vrot.slane %v4118, %v4240
    %v4242 = vlaneseq
    %v4243 = vshrl.u32 %v4242, 7
    %v4244 = vsub.s32 0, %v4243
    %v4245 = vrot.slane %v4119, %v4244
    %v4246 = vlaneseq
    %v4247 = vshrl.u32 %v4246, 7
    %v4248 = vsub.s32 2, %v4247
    %v4249 = vrot.slane %v4119, %v4248
    %v4250 = vlaneseq
    %v4251 = vshrl.u32 %v4250, 7
    %v4252 = vsub.s32 0, %v4251
    %v4253 = vrot.slane %v4120, %v4252
    %v4254 = vlaneseq
    %v4255 = vshrl.u32 %v4254, 7
    %v4256 = vsub.s32 2, %v4255
    %v4257 = vrot.slane %v4120, %v4256
    %v4258 = vlaneseq
    %v4259 = vshrl.u32 %v4258, 7
    %v4260 = vsub.s32 0, %v4259
    %v4261 = vrot.slane %v4121, %v4260
    %v4262 = vlaneseq
    %v4263 = vshrl.u32 %v4262, 7
    %v4264 = vsub.s32 2, %v4263
    %v4265 = vrot.slane %v4121, %v4264
    %vm4266 = vcmask 1041409
    %v4267 = vsel %vm4266, %v4149, %v4141
    %vm4268 = vcmask 1042434
    %v4269 = vsel %vm4268, %v4157, %v4267
    %vm4270 = vcmask 1043459
    %v4271 = vsel %vm4270, %v4165, %v4269
    %vm4272 = vcmask 1044484
    %v4273 = vsel %vm4272, %v4173, %v4271
    %vm4274 = vcmask 1045509
    %v4275 = vsel %vm4274, %v4181, %v4273
    %vm4276 = vcmask 1046534
    %v4277 = vsel %vm4276, %v4189, %v4275
    %vm4278 = vcmask 1047559
    %v4279 = vsel %vm4278, %v4197, %v4277
    %v4280 = vsel %vm4266, %v4153, %v4145
    %v4281 = vsel %vm4268, %v4161, %v4280
    %v4282 = vsel %vm4270, %v4169, %v4281
    %v4283 = vsel %vm4272, %v4177, %v4282
    %v4284 = vsel %vm4274, %v4185, %v4283
    %v4285 = vsel %vm4276, %v4193, %v4284
    %v4286 = vsel %vm4278, %v4201, %v4285
    %v4287 = vsel %vm4266, %v4213, %v4205
    %v4288 = vsel %vm4268, %v4221, %v4287
    %v4289 = vsel %vm4270, %v4229, %v4288
    %v4290 = vsel %vm4272, %v4237, %v4289
    %v4291 = vsel %vm4274, %v4245, %v4290
    %v4292 = vsel %vm4276, %v4253, %v4291
    %v4293 = vsel %vm4278, %v4261, %v4292
    %v4294 = vsel %vm4266, %v4217, %v4209
    %v4295 = vsel %vm4268, %v4225, %v4294
    %v4296 = vsel %vm4270, %v4233, %v4295
    %v4297 = vsel %vm4272, %v4241, %v4296
    %v4298 = vsel %vm4274, %v4249, %v4297
    %v4299 = vsel %vm4276, %v4257, %v4298
    %v4300 = vsel %vm4278, %v4265, %v4299
    %4305 = vst [vmem:[%s3] sm:$0xff] %v4279
    %4306 = vst [vmem:[%s3 + $0x8] sm:$0xff] %v4286
    %4307 = vst [vmem:[%s3 + $0x10] sm:$0xff] %v4293
    %4308 = vst [vmem:[%s3 + $0x18] sm:$0xff] %v4300
    // Predicated region
    $region22: #{binary_classifier_cnn.4} parent=1 // pred_check
      _
    $region23: #{binary_classifier_cnn.4} parent=1 // pred_check_branch
      %4310 = sbr.rel (0) target = $region25
    $region24: #{binary_classifier_cnn.4} parent=1 // pred_region
      _
    $region25: #{binary_classifier_cnn.4} parent=1 // pred_fallthru
      _
    // Predicated region
    $region26: #{binary_classifier_cnn.4} parent=1 // pred_check
      _
    $region27: #{binary_classifier_cnn.4} parent=1 // pred_check_branch
      %4312 = sbr.rel (0) target = $region29
    $region28: #{binary_classifier_cnn.4} parent=1 // pred_region
      _
    $region29: #{binary_classifier_cnn.4} parent=1 // pred_fallthru
      _
    %4313 = vsyncpa [#allocation3], 1
    %4314 = vsyncpa [#allocation5], 1

</llo_original>
